<compile_context>
chip_gen: v5e
topology: v5e:2x2
jax: 0.10.0
libtpu: 0.0.40
codegen_flags: <defaults>
</compile_context>

<pallas_src>
import functools

import jax
import jax.numpy as jnp
from jax.experimental import pallas as pl
from jax.experimental.pallas import tpu as pltpu

EPS = 1e-5
_MM_PRECISION = jax.lax.Precision.HIGHEST   # full-precision f32 MXU passes


# ------------------------------ fused kernel ------------------------------- #

def _preact_block_kernel(x_ref, g1_ref, b1_ref, g2_ref, b2_ref,
                         w1_ref, w2_ref, o_ref, *, H, W, HW):
    """Fused PreActBlock forward on a channel-major lane-dense (C, N*H*W) layout.

    x_ref, o_ref   : (C, N*H*W) f32  VMEM  (N images contiguous along lanes)
    g*/b* refs     : (C, 1)      f32  VMEM
    w1_ref, w2_ref : (9, Cout, Cin) f32 VMEM  (tap-major, tap = ky*3 + kx)
    """
    c_in, nhw = x_ref.shape
    inv_count = 1.0 / float(nhw)          # BN averages over N*H*W per channel

    # ---- halo masks, built once and shared by both convs ------------------ #
    lane = jax.lax.broadcasted_iota(jnp.int32, (1, nhw), 1)
    p = lane & (HW - 1) if (HW & (HW - 1)) == 0 else lane % HW    # pos in image
    col = lane & (W - 1) if (W & (W - 1)) == 0 else p % W         # column
    has_above = p >= W                    # a row above exists (ky == 0 taps)
    has_below = p < (H - 1) * W           # a row below exists (ky == 2 taps)
    has_left = col >= 1                   # kx == 0 taps
    has_right = col < (W - 1)             # kx == 2 taps
    tap_masks = {}
    for ky in range(3):
        for kx in range(3):
            conds = []
            if ky == 0:
                conds.append(has_above)
            if ky == 2:
                conds.append(has_below)
            if kx == 0:
                conds.append(has_left)
            if kx == 2:
                conds.append(has_right)
            m = None
            for cnd in conds:
                m = cnd if m is None else (m & cnd)
            tap_masks[(ky, kx)] = m

    def bn_relu(t, g_ref, b_ref):
        # Training-mode BN, one pass: sum and sum-of-squares together.
        s = jnp.sum(t, axis=1, keepdims=True)            # (C, 1) lane reduce
        ss = jnp.sum(t * t, axis=1, keepdims=True)       # (C, 1) lane reduce
        mean = s * inv_count
        var = ss * inv_count - mean * mean               # biased variance
        scale = g_ref[...] * jax.lax.rsqrt(var + EPS)
        shift = b_ref[...] - mean * scale
        return jnp.maximum(t * scale + shift, 0.0)

    def conv3x3(src, w_ref):
        # 3x3 'same' conv, stride 1: 9 masked lane-shifted taps, each consumed
        # by one MXU matmul (Cout, Cin) x (Cin, NHW); f32 accumulation in vregs.
        acc = None
        for ky in range(3):
            for kx in range(3):
                off = (ky - 1) * W + (kx - 1)
                tap = src if off == 0 else jnp.roll(src, -off, axis=1)
                m = tap_masks[(ky, kx)]
                if m is not None:
                    tap = jnp.where(m, tap, 0.0)
                contrib = jnp.dot(w_ref[ky * 3 + kx], tap,
                                  preferred_element_type=jnp.float32,
                                  precision=_MM_PRECISION)
                acc = contrib if acc is None else acc + contrib
        return acc                                        # (Cout, NHW) value

    x = x_ref[...]                                        # (C, NHW)
    act1 = bn_relu(x, g1_ref, b1_ref)                     # relu(bn1(x))
    y1 = conv3x3(act1, w1_ref)                            # conv1 (stays in vregs)
    act2 = bn_relu(y1, g2_ref, b2_ref)                    # relu(bn2(conv1))
    y2 = conv3x3(act2, w2_ref)                            # conv2
    o_ref[...] = y2 + x                                   # residual + one dense store


# --------------------------------- wrapper ---------------------------------- #

def preact_block_pallas(x_nchw, params):
    """PreActBlock forward (stride=1, in_planes == planes -> identity shortcut).

    x_nchw: (N, C, H, W).  params = (gamma1, beta1, w1_hwio, gamma2, beta2, w2_hwio).
    """
    g1, b1, w1, g2, b2, w2 = params
    n, c, h, w = x_nchw.shape
    planes = w1.shape[-1]
    if w1.shape[2] != c or planes != c or w2.shape[2] != planes or w2.shape[3] != planes:
        # TODO(synk): 1x1 strided shortcut (stride != 1 / in_planes != planes) unsupported.
        raise NotImplementedError("only stride=1, in_planes == planes is supported")
    hw = h * w
    nhw = n * hw

    # Layout plumbing (plain XLA, outside the kernel): channel-major, all N
    # images flattened onto the lane axis.
    x2d = jnp.transpose(x_nchw, (1, 0, 2, 3)).reshape(c, nhw).astype(jnp.float32)
    g1r = g1.reshape(c, 1).astype(jnp.float32)
    b1r = b1.reshape(c, 1).astype(jnp.float32)
    g2r = g2.reshape(planes, 1).astype(jnp.float32)
    b2r = b2.reshape(planes, 1).astype(jnp.float32)
    # HWIO (ky,kx,ci,co) -> (tap, co, ci) so each tap slice is a (Cout, Cin) matmul LHS.
    w1m = w1.astype(jnp.float32).reshape(9, c, planes).transpose(0, 2, 1)
    w2m = w2.astype(jnp.float32).reshape(9, planes, planes).transpose(0, 2, 1)

    kernel = functools.partial(_preact_block_kernel, H=h, W=w, HW=hw)
    vmem = pl.BlockSpec(memory_space=pltpu.MemorySpace.VMEM)

    out2d = pl.pallas_call(
        kernel,
        out_shape=jax.ShapeDtypeStruct((planes, nhw), jnp.float32),
        in_specs=[vmem, vmem, vmem, vmem, vmem, vmem, vmem],
        out_specs=vmem,
    )(x2d, g1r, b1r, g2r, b2r, w1m, w2m)

    return jnp.transpose(out2d.reshape(planes, n, h, w), (1, 0, 2, 3))


# ----------------------------- pure-JAX reference --------------------------- #

def preact_block_ref(x_nchw, params):
    g1, b1, w1, g2, b2, w2 = params
    x = x_nchw.astype(jnp.float32)

    def bn_relu(t, g, b):
        m = jnp.mean(t, axis=(0, 2, 3), keepdims=True)
        v = jnp.var(t, axis=(0, 2, 3), keepdims=True)          # biased, as torch
        gg = g.reshape(1, -1, 1, 1)
        bb = b.reshape(1, -1, 1, 1)
        return jnp.maximum((t - m) * jax.lax.rsqrt(v + EPS) * gg + bb, 0.0)

    def conv(t, w_hwio):
        return jax.lax.conv_general_dilated(
            t, w_hwio, window_strides=(1, 1), padding=((1, 1), (1, 1)),
            dimension_numbers=("NCHW", "HWIO", "NCHW"),
            precision=jax.lax.Precision.HIGHEST)

    out = bn_relu(x, g1, b1)
    shortcut = x
    out = conv(out, w1)
    out = conv(bn_relu(out, g2, b2), w2)
    return out + shortcut


# ----------------------------------- main ------------------------------------ #

if __name__ == "__main__":
    N, C_IN, PLANES, H, W = 2, 4, 4, 16, 16     # stride = 1 -> identity shortcut

    key = jax.random.PRNGKey(0)
    kx, kw1, kw2, kg1, kb1, kg2, kb2 = jax.random.split(key, 7)

    x_nchw = jax.random.normal(kx, (N, C_IN, H, W), dtype=jnp.float32)

    gamma1 = 1.0 + 0.1 * jax.random.normal(kg1, (C_IN,), jnp.float32)        # bn1.weight
    beta1 = 0.1 * jax.random.normal(kb1, (C_IN,), jnp.float32)               # bn1.bias
    w1 = 0.1 * jax.random.normal(kw1, (3, 3, C_IN, PLANES), jnp.float32)     # conv1 (HWIO)
    gamma2 = 1.0 + 0.1 * jax.random.normal(kg2, (PLANES,), jnp.float32)      # bn2.weight
    beta2 = 0.1 * jax.random.normal(kb2, (PLANES,), jnp.float32)             # bn2.bias
    w2 = 0.1 * jax.random.normal(kw2, (3, 3, PLANES, PLANES), jnp.float32)   # conv2 (HWIO)

    params = (gamma1, beta1, w1, gamma2, beta2, w2)

    out = jax.jit(preact_block_pallas)(x_nchw, params)
    out = jax.block_until_ready(out)

    ref = preact_block_ref(x_nchw, params)
    assert out.shape == (N, PLANES, H, W), out.shape
    max_err = float(jnp.max(jnp.abs(out - ref)))
    assert jnp.allclose(out, ref, atol=2e-4, rtol=2e-4), max_err

    print("KERNEL_OK")
</pallas_src>

<mosaic_0001>
module attributes {stable_mosaic.version = 11 : i64} {
  func.func @_preact_block_kernel(%arg0: memref<4x512xf32, #tpu.memory_space<vmem>>, %arg1: memref<4x1xf32, #tpu.memory_space<vmem>>, %arg2: memref<4x1xf32, #tpu.memory_space<vmem>>, %arg3: memref<4x1xf32, #tpu.memory_space<vmem>>, %arg4: memref<4x1xf32, #tpu.memory_space<vmem>>, %arg5: memref<9x4x4xf32, #tpu.memory_space<vmem>>, %arg6: memref<9x4x4xf32, #tpu.memory_space<vmem>>, %arg7: memref<4x512xf32, #tpu.memory_space<vmem>>) attributes {dimension_semantics = [], scalar_prefetch = 0 : i64, scratch_operands = 0 : i64, tpu.core_type = #tpu.core_type<tc>} {
    %0 = tpu.iota {dimensions = array<i32: 1>} : vector<1x512xi32>
    %c255_i32 = arith.constant 255 : i32
    %1 = vector.broadcast %c255_i32 : i32 to vector<1x512xi32>
    %2 = arith.andi %0, %1 : vector<1x512xi32>
    %c15_i32 = arith.constant 15 : i32
    %3 = vector.broadcast %c15_i32 : i32 to vector<1x512xi32>
    %4 = arith.andi %0, %3 : vector<1x512xi32>
    %c16_i32 = arith.constant 16 : i32
    %5 = vector.broadcast %c16_i32 : i32 to vector<1x512xi32>
    %6 = arith.cmpi sge, %2, %5 : vector<1x512xi32>
    %c240_i32 = arith.constant 240 : i32
    %7 = vector.broadcast %c240_i32 : i32 to vector<1x512xi32>
    %8 = arith.cmpi slt, %2, %7 : vector<1x512xi32>
    %c1_i32 = arith.constant 1 : i32
    %9 = vector.broadcast %c1_i32 : i32 to vector<1x512xi32>
    %10 = arith.cmpi sge, %4, %9 : vector<1x512xi32>
    %c15_i32_0 = arith.constant 15 : i32
    %11 = vector.broadcast %c15_i32_0 : i32 to vector<1x512xi32>
    %12 = arith.cmpi slt, %4, %11 : vector<1x512xi32>
    %13 = arith.andi %6, %10 : vector<1x512xi1>
    %14 = arith.andi %6, %12 : vector<1x512xi1>
    %15 = arith.andi %8, %10 : vector<1x512xi1>
    %16 = arith.andi %8, %12 : vector<1x512xi1>
    %c0 = arith.constant 0 : index
    %c0_1 = arith.constant 0 : index
    %17 = vector.load %arg0[%c0, %c0_1] : memref<4x512xf32, #tpu.memory_space<vmem>>, vector<4x512xf32>
    %cst = arith.constant dense<0.000000e+00> : vector<4xf32>
    %18 = vector.multi_reduction <add>, %17, %cst [1] : vector<4x512xf32> to vector<4xf32>
    %19 = vector.shape_cast %18 : vector<4xf32> to vector<4x1xf32>
    %20 = arith.mulf %17, %17 : vector<4x512xf32>
    %cst_2 = arith.constant dense<0.000000e+00> : vector<4xf32>
    %21 = vector.multi_reduction <add>, %20, %cst_2 [1] : vector<4x512xf32> to vector<4xf32>
    %22 = vector.shape_cast %21 : vector<4xf32> to vector<4x1xf32>
    %cst_3 = arith.constant 0.001953125 : f32
    %23 = vector.broadcast %cst_3 : f32 to vector<4x1xf32>
    %24 = arith.mulf %19, %23 : vector<4x1xf32>
    %cst_4 = arith.constant 0.001953125 : f32
    %25 = vector.broadcast %cst_4 : f32 to vector<4x1xf32>
    %26 = arith.mulf %22, %25 : vector<4x1xf32>
    %27 = arith.mulf %24, %24 : vector<4x1xf32>
    %28 = arith.subf %26, %27 : vector<4x1xf32>
    %c0_5 = arith.constant 0 : index
    %c0_6 = arith.constant 0 : index
    %29 = vector.load %arg1[%c0_5, %c0_6] : memref<4x1xf32, #tpu.memory_space<vmem>>, vector<4x1xf32>
    %cst_7 = arith.constant 9.99999974E-6 : f32
    %30 = vector.broadcast %cst_7 : f32 to vector<4x1xf32>
    %31 = arith.addf %28, %30 : vector<4x1xf32>
    %32 = math.rsqrt %31 : vector<4x1xf32>
    %33 = arith.mulf %29, %32 : vector<4x1xf32>
    %c0_8 = arith.constant 0 : index
    %c0_9 = arith.constant 0 : index
    %34 = vector.load %arg2[%c0_8, %c0_9] : memref<4x1xf32, #tpu.memory_space<vmem>>, vector<4x1xf32>
    %35 = arith.mulf %24, %33 : vector<4x1xf32>
    %36 = arith.subf %34, %35 : vector<4x1xf32>
    %37 = vector.broadcast %33 : vector<4x1xf32> to vector<4x512xf32>
    %38 = arith.mulf %17, %37 : vector<4x512xf32>
    %39 = vector.broadcast %36 : vector<4x1xf32> to vector<4x512xf32>
    %40 = arith.addf %38, %39 : vector<4x512xf32>
    %cst_10 = arith.constant 0.000000e+00 : f32
    %41 = vector.broadcast %cst_10 : f32 to vector<4x512xf32>
    %42 = arith.maximumf %40, %41 : vector<4x512xf32>
    %43 = vector.extract_strided_slice %42 {offsets = [0, 495], sizes = [4, 17], strides = [1, 1]} : vector<4x512xf32> to vector<4x17xf32>
    %44 = vector.extract_strided_slice %42 {offsets = [0, 0], sizes = [4, 495], strides = [1, 1]} : vector<4x512xf32> to vector<4x495xf32>
    %45 = tpu.concatenate %43, %44 in 1 : vector<4x17xf32>, vector<4x495xf32> -> vector<4x512xf32>
    %cst_11 = arith.constant 0.000000e+00 : f32
    %46 = vector.shape_cast %13 : vector<1x512xi1> to vector<1x512xi1>
    %47 = vector.broadcast %46 : vector<1x512xi1> to vector<4x512xi1>
    %48 = vector.broadcast %cst_11 : f32 to vector<4x512xf32>
    %49 = arith.select %47, %45, %48 : vector<4x512xi1>, vector<4x512xf32>
    %c0_12 = arith.constant 0 : index
    %c0_13 = arith.constant 0 : index
    %c0_14 = arith.constant 0 : index
    %50 = vector.load %arg5[%c0_12, %c0_13, %c0_14] : memref<9x4x4xf32, #tpu.memory_space<vmem>>, vector<1x4x4xf32>
    %51 = vector.shape_cast %50 : vector<1x4x4xf32> to vector<4x4xf32>
    %cst_15 = arith.constant dense<0.000000e+00> : vector<4x512xf32>
    %52 = tpu.matmul %51, %49, %cst_15 {dimension_numbers = #tpu.dot_dimension_numbers<[1], [0], [0], [1], [0, 0, 1, 1], [], []>, precision = #tpu.contract_precision<fp32>} : vector<4x4xf32>, vector<4x512xf32>, vector<4x512xf32> -> vector<4x512xf32>
    %53 = vector.extract_strided_slice %42 {offsets = [0, 496], sizes = [4, 16], strides = [1, 1]} : vector<4x512xf32> to vector<4x16xf32>
    %54 = vector.extract_strided_slice %42 {offsets = [0, 0], sizes = [4, 496], strides = [1, 1]} : vector<4x512xf32> to vector<4x496xf32>
    %55 = tpu.concatenate %53, %54 in 1 : vector<4x16xf32>, vector<4x496xf32> -> vector<4x512xf32>
    %cst_16 = arith.constant 0.000000e+00 : f32
    %56 = vector.shape_cast %6 : vector<1x512xi1> to vector<1x512xi1>
    %57 = vector.broadcast %56 : vector<1x512xi1> to vector<4x512xi1>
    %58 = vector.broadcast %cst_16 : f32 to vector<4x512xf32>
    %59 = arith.select %57, %55, %58 : vector<4x512xi1>, vector<4x512xf32>
    %c1 = arith.constant 1 : index
    %c0_17 = arith.constant 0 : index
    %c0_18 = arith.constant 0 : index
    %60 = vector.load %arg5[%c1, %c0_17, %c0_18] : memref<9x4x4xf32, #tpu.memory_space<vmem>>, vector<1x4x4xf32>
    %61 = vector.shape_cast %60 : vector<1x4x4xf32> to vector<4x4xf32>
    %cst_19 = arith.constant dense<0.000000e+00> : vector<4x512xf32>
    %62 = tpu.matmul %61, %59, %cst_19 {dimension_numbers = #tpu.dot_dimension_numbers<[1], [0], [0], [1], [0, 0, 1, 1], [], []>, precision = #tpu.contract_precision<fp32>} : vector<4x4xf32>, vector<4x512xf32>, vector<4x512xf32> -> vector<4x512xf32>
    %63 = arith.addf %52, %62 : vector<4x512xf32>
    %64 = vector.extract_strided_slice %42 {offsets = [0, 497], sizes = [4, 15], strides = [1, 1]} : vector<4x512xf32> to vector<4x15xf32>
    %65 = vector.extract_strided_slice %42 {offsets = [0, 0], sizes = [4, 497], strides = [1, 1]} : vector<4x512xf32> to vector<4x497xf32>
    %66 = tpu.concatenate %64, %65 in 1 : vector<4x15xf32>, vector<4x497xf32> -> vector<4x512xf32>
    %cst_20 = arith.constant 0.000000e+00 : f32
    %67 = vector.shape_cast %14 : vector<1x512xi1> to vector<1x512xi1>
    %68 = vector.broadcast %67 : vector<1x512xi1> to vector<4x512xi1>
    %69 = vector.broadcast %cst_20 : f32 to vector<4x512xf32>
    %70 = arith.select %68, %66, %69 : vector<4x512xi1>, vector<4x512xf32>
    %c2 = arith.constant 2 : index
    %c0_21 = arith.constant 0 : index
    %c0_22 = arith.constant 0 : index
    %71 = vector.load %arg5[%c2, %c0_21, %c0_22] : memref<9x4x4xf32, #tpu.memory_space<vmem>>, vector<1x4x4xf32>
    %72 = vector.shape_cast %71 : vector<1x4x4xf32> to vector<4x4xf32>
    %cst_23 = arith.constant dense<0.000000e+00> : vector<4x512xf32>
    %73 = tpu.matmul %72, %70, %cst_23 {dimension_numbers = #tpu.dot_dimension_numbers<[1], [0], [0], [1], [0, 0, 1, 1], [], []>, precision = #tpu.contract_precision<fp32>} : vector<4x4xf32>, vector<4x512xf32>, vector<4x512xf32> -> vector<4x512xf32>
    %74 = arith.addf %63, %73 : vector<4x512xf32>
    %75 = vector.extract_strided_slice %42 {offsets = [0, 511], sizes = [4, 1], strides = [1, 1]} : vector<4x512xf32> to vector<4x1xf32>
    %76 = vector.extract_strided_slice %42 {offsets = [0, 0], sizes = [4, 511], strides = [1, 1]} : vector<4x512xf32> to vector<4x511xf32>
    %77 = tpu.concatenate %75, %76 in 1 : vector<4x1xf32>, vector<4x511xf32> -> vector<4x512xf32>
    %cst_24 = arith.constant 0.000000e+00 : f32
    %78 = vector.shape_cast %10 : vector<1x512xi1> to vector<1x512xi1>
    %79 = vector.broadcast %78 : vector<1x512xi1> to vector<4x512xi1>
    %80 = vector.broadcast %cst_24 : f32 to vector<4x512xf32>
    %81 = arith.select %79, %77, %80 : vector<4x512xi1>, vector<4x512xf32>
    %c3 = arith.constant 3 : index
    %c0_25 = arith.constant 0 : index
    %c0_26 = arith.constant 0 : index
    %82 = vector.load %arg5[%c3, %c0_25, %c0_26] : memref<9x4x4xf32, #tpu.memory_space<vmem>>, vector<1x4x4xf32>
    %83 = vector.shape_cast %82 : vector<1x4x4xf32> to vector<4x4xf32>
    %cst_27 = arith.constant dense<0.000000e+00> : vector<4x512xf32>
    %84 = tpu.matmul %83, %81, %cst_27 {dimension_numbers = #tpu.dot_dimension_numbers<[1], [0], [0], [1], [0, 0, 1, 1], [], []>, precision = #tpu.contract_precision<fp32>} : vector<4x4xf32>, vector<4x512xf32>, vector<4x512xf32> -> vector<4x512xf32>
    %85 = arith.addf %74, %84 : vector<4x512xf32>
    %c4 = arith.constant 4 : index
    %c0_28 = arith.constant 0 : index
    %c0_29 = arith.constant 0 : index
    %86 = vector.load %arg5[%c4, %c0_28, %c0_29] : memref<9x4x4xf32, #tpu.memory_space<vmem>>, vector<1x4x4xf32>
    %87 = vector.shape_cast %86 : vector<1x4x4xf32> to vector<4x4xf32>
    %cst_30 = arith.constant dense<0.000000e+00> : vector<4x512xf32>
    %88 = tpu.matmul %87, %42, %cst_30 {dimension_numbers = #tpu.dot_dimension_numbers<[1], [0], [0], [1], [0, 0, 1, 1], [], []>, precision = #tpu.contract_precision<fp32>} : vector<4x4xf32>, vector<4x512xf32>, vector<4x512xf32> -> vector<4x512xf32>
    %89 = arith.addf %85, %88 : vector<4x512xf32>
    %90 = vector.extract_strided_slice %42 {offsets = [0, 1], sizes = [4, 511], strides = [1, 1]} : vector<4x512xf32> to vector<4x511xf32>
    %91 = vector.extract_strided_slice %42 {offsets = [0, 0], sizes = [4, 1], strides = [1, 1]} : vector<4x512xf32> to vector<4x1xf32>
    %92 = tpu.concatenate %90, %91 in 1 : vector<4x511xf32>, vector<4x1xf32> -> vector<4x512xf32>
    %cst_31 = arith.constant 0.000000e+00 : f32
    %93 = vector.shape_cast %12 : vector<1x512xi1> to vector<1x512xi1>
    %94 = vector.broadcast %93 : vector<1x512xi1> to vector<4x512xi1>
    %95 = vector.broadcast %cst_31 : f32 to vector<4x512xf32>
    %96 = arith.select %94, %92, %95 : vector<4x512xi1>, vector<4x512xf32>
    %c5 = arith.constant 5 : index
    %c0_32 = arith.constant 0 : index
    %c0_33 = arith.constant 0 : index
    %97 = vector.load %arg5[%c5, %c0_32, %c0_33] : memref<9x4x4xf32, #tpu.memory_space<vmem>>, vector<1x4x4xf32>
    %98 = vector.shape_cast %97 : vector<1x4x4xf32> to vector<4x4xf32>
    %cst_34 = arith.constant dense<0.000000e+00> : vector<4x512xf32>
    %99 = tpu.matmul %98, %96, %cst_34 {dimension_numbers = #tpu.dot_dimension_numbers<[1], [0], [0], [1], [0, 0, 1, 1], [], []>, precision = #tpu.contract_precision<fp32>} : vector<4x4xf32>, vector<4x512xf32>, vector<4x512xf32> -> vector<4x512xf32>
    %100 = arith.addf %89, %99 : vector<4x512xf32>
    %101 = vector.extract_strided_slice %42 {offsets = [0, 15], sizes = [4, 497], strides = [1, 1]} : vector<4x512xf32> to vector<4x497xf32>
    %102 = vector.extract_strided_slice %42 {offsets = [0, 0], sizes = [4, 15], strides = [1, 1]} : vector<4x512xf32> to vector<4x15xf32>
    %103 = tpu.concatenate %101, %102 in 1 : vector<4x497xf32>, vector<4x15xf32> -> vector<4x512xf32>
    %cst_35 = arith.constant 0.000000e+00 : f32
    %104 = vector.shape_cast %15 : vector<1x512xi1> to vector<1x512xi1>
    %105 = vector.broadcast %104 : vector<1x512xi1> to vector<4x512xi1>
    %106 = vector.broadcast %cst_35 : f32 to vector<4x512xf32>
    %107 = arith.select %105, %103, %106 : vector<4x512xi1>, vector<4x512xf32>
    %c6 = arith.constant 6 : index
    %c0_36 = arith.constant 0 : index
    %c0_37 = arith.constant 0 : index
    %108 = vector.load %arg5[%c6, %c0_36, %c0_37] : memref<9x4x4xf32, #tpu.memory_space<vmem>>, vector<1x4x4xf32>
    %109 = vector.shape_cast %108 : vector<1x4x4xf32> to vector<4x4xf32>
    %cst_38 = arith.constant dense<0.000000e+00> : vector<4x512xf32>
    %110 = tpu.matmul %109, %107, %cst_38 {dimension_numbers = #tpu.dot_dimension_numbers<[1], [0], [0], [1], [0, 0, 1, 1], [], []>, precision = #tpu.contract_precision<fp32>} : vector<4x4xf32>, vector<4x512xf32>, vector<4x512xf32> -> vector<4x512xf32>
    %111 = arith.addf %100, %110 : vector<4x512xf32>
    %112 = vector.extract_strided_slice %42 {offsets = [0, 16], sizes = [4, 496], strides = [1, 1]} : vector<4x512xf32> to vector<4x496xf32>
    %113 = vector.extract_strided_slice %42 {offsets = [0, 0], sizes = [4, 16], strides = [1, 1]} : vector<4x512xf32> to vector<4x16xf32>
    %114 = tpu.concatenate %112, %113 in 1 : vector<4x496xf32>, vector<4x16xf32> -> vector<4x512xf32>
    %cst_39 = arith.constant 0.000000e+00 : f32
    %115 = vector.shape_cast %8 : vector<1x512xi1> to vector<1x512xi1>
    %116 = vector.broadcast %115 : vector<1x512xi1> to vector<4x512xi1>
    %117 = vector.broadcast %cst_39 : f32 to vector<4x512xf32>
    %118 = arith.select %116, %114, %117 : vector<4x512xi1>, vector<4x512xf32>
    %c7 = arith.constant 7 : index
    %c0_40 = arith.constant 0 : index
    %c0_41 = arith.constant 0 : index
    %119 = vector.load %arg5[%c7, %c0_40, %c0_41] : memref<9x4x4xf32, #tpu.memory_space<vmem>>, vector<1x4x4xf32>
    %120 = vector.shape_cast %119 : vector<1x4x4xf32> to vector<4x4xf32>
    %cst_42 = arith.constant dense<0.000000e+00> : vector<4x512xf32>
    %121 = tpu.matmul %120, %118, %cst_42 {dimension_numbers = #tpu.dot_dimension_numbers<[1], [0], [0], [1], [0, 0, 1, 1], [], []>, precision = #tpu.contract_precision<fp32>} : vector<4x4xf32>, vector<4x512xf32>, vector<4x512xf32> -> vector<4x512xf32>
    %122 = arith.addf %111, %121 : vector<4x512xf32>
    %123 = vector.extract_strided_slice %42 {offsets = [0, 17], sizes = [4, 495], strides = [1, 1]} : vector<4x512xf32> to vector<4x495xf32>
    %124 = vector.extract_strided_slice %42 {offsets = [0, 0], sizes = [4, 17], strides = [1, 1]} : vector<4x512xf32> to vector<4x17xf32>
    %125 = tpu.concatenate %123, %124 in 1 : vector<4x495xf32>, vector<4x17xf32> -> vector<4x512xf32>
    %cst_43 = arith.constant 0.000000e+00 : f32
    %126 = vector.shape_cast %16 : vector<1x512xi1> to vector<1x512xi1>
    %127 = vector.broadcast %126 : vector<1x512xi1> to vector<4x512xi1>
    %128 = vector.broadcast %cst_43 : f32 to vector<4x512xf32>
    %129 = arith.select %127, %125, %128 : vector<4x512xi1>, vector<4x512xf32>
    %c8 = arith.constant 8 : index
    %c0_44 = arith.constant 0 : index
    %c0_45 = arith.constant 0 : index
    %130 = vector.load %arg5[%c8, %c0_44, %c0_45] : memref<9x4x4xf32, #tpu.memory_space<vmem>>, vector<1x4x4xf32>
    %131 = vector.shape_cast %130 : vector<1x4x4xf32> to vector<4x4xf32>
    %cst_46 = arith.constant dense<0.000000e+00> : vector<4x512xf32>
    %132 = tpu.matmul %131, %129, %cst_46 {dimension_numbers = #tpu.dot_dimension_numbers<[1], [0], [0], [1], [0, 0, 1, 1], [], []>, precision = #tpu.contract_precision<fp32>} : vector<4x4xf32>, vector<4x512xf32>, vector<4x512xf32> -> vector<4x512xf32>
    %133 = arith.addf %122, %132 : vector<4x512xf32>
    %cst_47 = arith.constant dense<0.000000e+00> : vector<4xf32>
    %134 = vector.multi_reduction <add>, %133, %cst_47 [1] : vector<4x512xf32> to vector<4xf32>
    %135 = vector.shape_cast %134 : vector<4xf32> to vector<4x1xf32>
    %136 = arith.mulf %133, %133 : vector<4x512xf32>
    %cst_48 = arith.constant dense<0.000000e+00> : vector<4xf32>
    %137 = vector.multi_reduction <add>, %136, %cst_48 [1] : vector<4x512xf32> to vector<4xf32>
    %138 = vector.shape_cast %137 : vector<4xf32> to vector<4x1xf32>
    %cst_49 = arith.constant 0.001953125 : f32
    %139 = vector.broadcast %cst_49 : f32 to vector<4x1xf32>
    %140 = arith.mulf %135, %139 : vector<4x1xf32>
    %cst_50 = arith.constant 0.001953125 : f32
    %141 = vector.broadcast %cst_50 : f32 to vector<4x1xf32>
    %142 = arith.mulf %138, %141 : vector<4x1xf32>
    %143 = arith.mulf %140, %140 : vector<4x1xf32>
    %144 = arith.subf %142, %143 : vector<4x1xf32>
    %c0_51 = arith.constant 0 : index
    %c0_52 = arith.constant 0 : index
    %145 = vector.load %arg3[%c0_51, %c0_52] : memref<4x1xf32, #tpu.memory_space<vmem>>, vector<4x1xf32>
    %cst_53 = arith.constant 9.99999974E-6 : f32
    %146 = vector.broadcast %cst_53 : f32 to vector<4x1xf32>
    %147 = arith.addf %144, %146 : vector<4x1xf32>
    %148 = math.rsqrt %147 : vector<4x1xf32>
    %149 = arith.mulf %145, %148 : vector<4x1xf32>
    %c0_54 = arith.constant 0 : index
    %c0_55 = arith.constant 0 : index
    %150 = vector.load %arg4[%c0_54, %c0_55] : memref<4x1xf32, #tpu.memory_space<vmem>>, vector<4x1xf32>
    %151 = arith.mulf %140, %149 : vector<4x1xf32>
    %152 = arith.subf %150, %151 : vector<4x1xf32>
    %153 = vector.broadcast %149 : vector<4x1xf32> to vector<4x512xf32>
    %154 = arith.mulf %133, %153 : vector<4x512xf32>
    %155 = vector.broadcast %152 : vector<4x1xf32> to vector<4x512xf32>
    %156 = arith.addf %154, %155 : vector<4x512xf32>
    %cst_56 = arith.constant 0.000000e+00 : f32
    %157 = vector.broadcast %cst_56 : f32 to vector<4x512xf32>
    %158 = arith.maximumf %156, %157 : vector<4x512xf32>
    %159 = vector.extract_strided_slice %158 {offsets = [0, 495], sizes = [4, 17], strides = [1, 1]} : vector<4x512xf32> to vector<4x17xf32>
    %160 = vector.extract_strided_slice %158 {offsets = [0, 0], sizes = [4, 495], strides = [1, 1]} : vector<4x512xf32> to vector<4x495xf32>
    %161 = tpu.concatenate %159, %160 in 1 : vector<4x17xf32>, vector<4x495xf32> -> vector<4x512xf32>
    %cst_57 = arith.constant 0.000000e+00 : f32
    %162 = vector.shape_cast %13 : vector<1x512xi1> to vector<1x512xi1>
    %163 = vector.broadcast %162 : vector<1x512xi1> to vector<4x512xi1>
    %164 = vector.broadcast %cst_57 : f32 to vector<4x512xf32>
    %165 = arith.select %163, %161, %164 : vector<4x512xi1>, vector<4x512xf32>
    %c0_58 = arith.constant 0 : index
    %c0_59 = arith.constant 0 : index
    %c0_60 = arith.constant 0 : index
    %166 = vector.load %arg6[%c0_58, %c0_59, %c0_60] : memref<9x4x4xf32, #tpu.memory_space<vmem>>, vector<1x4x4xf32>
    %167 = vector.shape_cast %166 : vector<1x4x4xf32> to vector<4x4xf32>
    %cst_61 = arith.constant dense<0.000000e+00> : vector<4x512xf32>
    %168 = tpu.matmul %167, %165, %cst_61 {dimension_numbers = #tpu.dot_dimension_numbers<[1], [0], [0], [1], [0, 0, 1, 1], [], []>, precision = #tpu.contract_precision<fp32>} : vector<4x4xf32>, vector<4x512xf32>, vector<4x512xf32> -> vector<4x512xf32>
    %169 = vector.extract_strided_slice %158 {offsets = [0, 496], sizes = [4, 16], strides = [1, 1]} : vector<4x512xf32> to vector<4x16xf32>
    %170 = vector.extract_strided_slice %158 {offsets = [0, 0], sizes = [4, 496], strides = [1, 1]} : vector<4x512xf32> to vector<4x496xf32>
    %171 = tpu.concatenate %169, %170 in 1 : vector<4x16xf32>, vector<4x496xf32> -> vector<4x512xf32>
    %cst_62 = arith.constant 0.000000e+00 : f32
    %172 = vector.shape_cast %6 : vector<1x512xi1> to vector<1x512xi1>
    %173 = vector.broadcast %172 : vector<1x512xi1> to vector<4x512xi1>
    %174 = vector.broadcast %cst_62 : f32 to vector<4x512xf32>
    %175 = arith.select %173, %171, %174 : vector<4x512xi1>, vector<4x512xf32>
    %c1_63 = arith.constant 1 : index
    %c0_64 = arith.constant 0 : index
    %c0_65 = arith.constant 0 : index
    %176 = vector.load %arg6[%c1_63, %c0_64, %c0_65] : memref<9x4x4xf32, #tpu.memory_space<vmem>>, vector<1x4x4xf32>
    %177 = vector.shape_cast %176 : vector<1x4x4xf32> to vector<4x4xf32>
    %cst_66 = arith.constant dense<0.000000e+00> : vector<4x512xf32>
    %178 = tpu.matmul %177, %175, %cst_66 {dimension_numbers = #tpu.dot_dimension_numbers<[1], [0], [0], [1], [0, 0, 1, 1], [], []>, precision = #tpu.contract_precision<fp32>} : vector<4x4xf32>, vector<4x512xf32>, vector<4x512xf32> -> vector<4x512xf32>
    %179 = arith.addf %168, %178 : vector<4x512xf32>
    %180 = vector.extract_strided_slice %158 {offsets = [0, 497], sizes = [4, 15], strides = [1, 1]} : vector<4x512xf32> to vector<4x15xf32>
    %181 = vector.extract_strided_slice %158 {offsets = [0, 0], sizes = [4, 497], strides = [1, 1]} : vector<4x512xf32> to vector<4x497xf32>
    %182 = tpu.concatenate %180, %181 in 1 : vector<4x15xf32>, vector<4x497xf32> -> vector<4x512xf32>
    %cst_67 = arith.constant 0.000000e+00 : f32
    %183 = vector.shape_cast %14 : vector<1x512xi1> to vector<1x512xi1>
    %184 = vector.broadcast %183 : vector<1x512xi1> to vector<4x512xi1>
    %185 = vector.broadcast %cst_67 : f32 to vector<4x512xf32>
    %186 = arith.select %184, %182, %185 : vector<4x512xi1>, vector<4x512xf32>
    %c2_68 = arith.constant 2 : index
    %c0_69 = arith.constant 0 : index
    %c0_70 = arith.constant 0 : index
    %187 = vector.load %arg6[%c2_68, %c0_69, %c0_70] : memref<9x4x4xf32, #tpu.memory_space<vmem>>, vector<1x4x4xf32>
    %188 = vector.shape_cast %187 : vector<1x4x4xf32> to vector<4x4xf32>
    %cst_71 = arith.constant dense<0.000000e+00> : vector<4x512xf32>
    %189 = tpu.matmul %188, %186, %cst_71 {dimension_numbers = #tpu.dot_dimension_numbers<[1], [0], [0], [1], [0, 0, 1, 1], [], []>, precision = #tpu.contract_precision<fp32>} : vector<4x4xf32>, vector<4x512xf32>, vector<4x512xf32> -> vector<4x512xf32>
    %190 = arith.addf %179, %189 : vector<4x512xf32>
    %191 = vector.extract_strided_slice %158 {offsets = [0, 511], sizes = [4, 1], strides = [1, 1]} : vector<4x512xf32> to vector<4x1xf32>
    %192 = vector.extract_strided_slice %158 {offsets = [0, 0], sizes = [4, 511], strides = [1, 1]} : vector<4x512xf32> to vector<4x511xf32>
    %193 = tpu.concatenate %191, %192 in 1 : vector<4x1xf32>, vector<4x511xf32> -> vector<4x512xf32>
    %cst_72 = arith.constant 0.000000e+00 : f32
    %194 = vector.shape_cast %10 : vector<1x512xi1> to vector<1x512xi1>
    %195 = vector.broadcast %194 : vector<1x512xi1> to vector<4x512xi1>
    %196 = vector.broadcast %cst_72 : f32 to vector<4x512xf32>
    %197 = arith.select %195, %193, %196 : vector<4x512xi1>, vector<4x512xf32>
    %c3_73 = arith.constant 3 : index
    %c0_74 = arith.constant 0 : index
    %c0_75 = arith.constant 0 : index
    %198 = vector.load %arg6[%c3_73, %c0_74, %c0_75] : memref<9x4x4xf32, #tpu.memory_space<vmem>>, vector<1x4x4xf32>
    %199 = vector.shape_cast %198 : vector<1x4x4xf32> to vector<4x4xf32>
    %cst_76 = arith.constant dense<0.000000e+00> : vector<4x512xf32>
    %200 = tpu.matmul %199, %197, %cst_76 {dimension_numbers = #tpu.dot_dimension_numbers<[1], [0], [0], [1], [0, 0, 1, 1], [], []>, precision = #tpu.contract_precision<fp32>} : vector<4x4xf32>, vector<4x512xf32>, vector<4x512xf32> -> vector<4x512xf32>
    %201 = arith.addf %190, %200 : vector<4x512xf32>
    %c4_77 = arith.constant 4 : index
    %c0_78 = arith.constant 0 : index
    %c0_79 = arith.constant 0 : index
    %202 = vector.load %arg6[%c4_77, %c0_78, %c0_79] : memref<9x4x4xf32, #tpu.memory_space<vmem>>, vector<1x4x4xf32>
    %203 = vector.shape_cast %202 : vector<1x4x4xf32> to vector<4x4xf32>
    %cst_80 = arith.constant dense<0.000000e+00> : vector<4x512xf32>
    %204 = tpu.matmul %203, %158, %cst_80 {dimension_numbers = #tpu.dot_dimension_numbers<[1], [0], [0], [1], [0, 0, 1, 1], [], []>, precision = #tpu.contract_precision<fp32>} : vector<4x4xf32>, vector<4x512xf32>, vector<4x512xf32> -> vector<4x512xf32>
    %205 = arith.addf %201, %204 : vector<4x512xf32>
    %206 = vector.extract_strided_slice %158 {offsets = [0, 1], sizes = [4, 511], strides = [1, 1]} : vector<4x512xf32> to vector<4x511xf32>
    %207 = vector.extract_strided_slice %158 {offsets = [0, 0], sizes = [4, 1], strides = [1, 1]} : vector<4x512xf32> to vector<4x1xf32>
    %208 = tpu.concatenate %206, %207 in 1 : vector<4x511xf32>, vector<4x1xf32> -> vector<4x512xf32>
    %cst_81 = arith.constant 0.000000e+00 : f32
    %209 = vector.shape_cast %12 : vector<1x512xi1> to vector<1x512xi1>
    %210 = vector.broadcast %209 : vector<1x512xi1> to vector<4x512xi1>
    %211 = vector.broadcast %cst_81 : f32 to vector<4x512xf32>
    %212 = arith.select %210, %208, %211 : vector<4x512xi1>, vector<4x512xf32>
    %c5_82 = arith.constant 5 : index
    %c0_83 = arith.constant 0 : index
    %c0_84 = arith.constant 0 : index
    %213 = vector.load %arg6[%c5_82, %c0_83, %c0_84] : memref<9x4x4xf32, #tpu.memory_space<vmem>>, vector<1x4x4xf32>
    %214 = vector.shape_cast %213 : vector<1x4x4xf32> to vector<4x4xf32>
    %cst_85 = arith.constant dense<0.000000e+00> : vector<4x512xf32>
    %215 = tpu.matmul %214, %212, %cst_85 {dimension_numbers = #tpu.dot_dimension_numbers<[1], [0], [0], [1], [0, 0, 1, 1], [], []>, precision = #tpu.contract_precision<fp32>} : vector<4x4xf32>, vector<4x512xf32>, vector<4x512xf32> -> vector<4x512xf32>
    %216 = arith.addf %205, %215 : vector<4x512xf32>
    %217 = vector.extract_strided_slice %158 {offsets = [0, 15], sizes = [4, 497], strides = [1, 1]} : vector<4x512xf32> to vector<4x497xf32>
    %218 = vector.extract_strided_slice %158 {offsets = [0, 0], sizes = [4, 15], strides = [1, 1]} : vector<4x512xf32> to vector<4x15xf32>
    %219 = tpu.concatenate %217, %218 in 1 : vector<4x497xf32>, vector<4x15xf32> -> vector<4x512xf32>
    %cst_86 = arith.constant 0.000000e+00 : f32
    %220 = vector.shape_cast %15 : vector<1x512xi1> to vector<1x512xi1>
    %221 = vector.broadcast %220 : vector<1x512xi1> to vector<4x512xi1>
    %222 = vector.broadcast %cst_86 : f32 to vector<4x512xf32>
    %223 = arith.select %221, %219, %222 : vector<4x512xi1>, vector<4x512xf32>
    %c6_87 = arith.constant 6 : index
    %c0_88 = arith.constant 0 : index
    %c0_89 = arith.constant 0 : index
    %224 = vector.load %arg6[%c6_87, %c0_88, %c0_89] : memref<9x4x4xf32, #tpu.memory_space<vmem>>, vector<1x4x4xf32>
    %225 = vector.shape_cast %224 : vector<1x4x4xf32> to vector<4x4xf32>
    %cst_90 = arith.constant dense<0.000000e+00> : vector<4x512xf32>
    %226 = tpu.matmul %225, %223, %cst_90 {dimension_numbers = #tpu.dot_dimension_numbers<[1], [0], [0], [1], [0, 0, 1, 1], [], []>, precision = #tpu.contract_precision<fp32>} : vector<4x4xf32>, vector<4x512xf32>, vector<4x512xf32> -> vector<4x512xf32>
    %227 = arith.addf %216, %226 : vector<4x512xf32>
    %228 = vector.extract_strided_slice %158 {offsets = [0, 16], sizes = [4, 496], strides = [1, 1]} : vector<4x512xf32> to vector<4x496xf32>
    %229 = vector.extract_strided_slice %158 {offsets = [0, 0], sizes = [4, 16], strides = [1, 1]} : vector<4x512xf32> to vector<4x16xf32>
    %230 = tpu.concatenate %228, %229 in 1 : vector<4x496xf32>, vector<4x16xf32> -> vector<4x512xf32>
    %cst_91 = arith.constant 0.000000e+00 : f32
    %231 = vector.shape_cast %8 : vector<1x512xi1> to vector<1x512xi1>
    %232 = vector.broadcast %231 : vector<1x512xi1> to vector<4x512xi1>
    %233 = vector.broadcast %cst_91 : f32 to vector<4x512xf32>
    %234 = arith.select %232, %230, %233 : vector<4x512xi1>, vector<4x512xf32>
    %c7_92 = arith.constant 7 : index
    %c0_93 = arith.constant 0 : index
    %c0_94 = arith.constant 0 : index
    %235 = vector.load %arg6[%c7_92, %c0_93, %c0_94] : memref<9x4x4xf32, #tpu.memory_space<vmem>>, vector<1x4x4xf32>
    %236 = vector.shape_cast %235 : vector<1x4x4xf32> to vector<4x4xf32>
    %cst_95 = arith.constant dense<0.000000e+00> : vector<4x512xf32>
    %237 = tpu.matmul %236, %234, %cst_95 {dimension_numbers = #tpu.dot_dimension_numbers<[1], [0], [0], [1], [0, 0, 1, 1], [], []>, precision = #tpu.contract_precision<fp32>} : vector<4x4xf32>, vector<4x512xf32>, vector<4x512xf32> -> vector<4x512xf32>
    %238 = arith.addf %227, %237 : vector<4x512xf32>
    %239 = vector.extract_strided_slice %158 {offsets = [0, 17], sizes = [4, 495], strides = [1, 1]} : vector<4x512xf32> to vector<4x495xf32>
    %240 = vector.extract_strided_slice %158 {offsets = [0, 0], sizes = [4, 17], strides = [1, 1]} : vector<4x512xf32> to vector<4x17xf32>
    %241 = tpu.concatenate %239, %240 in 1 : vector<4x495xf32>, vector<4x17xf32> -> vector<4x512xf32>
    %cst_96 = arith.constant 0.000000e+00 : f32
    %242 = vector.shape_cast %16 : vector<1x512xi1> to vector<1x512xi1>
    %243 = vector.broadcast %242 : vector<1x512xi1> to vector<4x512xi1>
    %244 = vector.broadcast %cst_96 : f32 to vector<4x512xf32>
    %245 = arith.select %243, %241, %244 : vector<4x512xi1>, vector<4x512xf32>
    %c8_97 = arith.constant 8 : index
    %c0_98 = arith.constant 0 : index
    %c0_99 = arith.constant 0 : index
    %246 = vector.load %arg6[%c8_97, %c0_98, %c0_99] : memref<9x4x4xf32, #tpu.memory_space<vmem>>, vector<1x4x4xf32>
    %247 = vector.shape_cast %246 : vector<1x4x4xf32> to vector<4x4xf32>
    %cst_100 = arith.constant dense<0.000000e+00> : vector<4x512xf32>
    %248 = tpu.matmul %247, %245, %cst_100 {dimension_numbers = #tpu.dot_dimension_numbers<[1], [0], [0], [1], [0, 0, 1, 1], [], []>, precision = #tpu.contract_precision<fp32>} : vector<4x4xf32>, vector<4x512xf32>, vector<4x512xf32> -> vector<4x512xf32>
    %249 = arith.addf %238, %248 : vector<4x512xf32>
    %250 = arith.addf %249, %17 : vector<4x512xf32>
    %c0_101 = arith.constant 0 : index
    %c0_102 = arith.constant 0 : index
    %251 = vector.load %arg7[%c0_101, %c0_102] : memref<4x512xf32, #tpu.memory_space<vmem>>, vector<4x512xf32>
    tpu.vector_store %arg7[%c0_101, %c0_102], %250 {strides = array<i32>} : memref<4x512xf32, #tpu.memory_space<vmem>>, vector<4x512xf32>,
    return
  }
}

</mosaic_0001>

<llo_original>
// kernel: preact_block_pallas.1
$region0: #{preact_block_pallas.1}
  #allocation0 [shape = 'u32[]', space=smem, size = 0x4, offset = 0x4, fixed_abs, tag = 'smem constant byte address 0x4 - core index']
  #allocation1 [shape = 'u32[72,128]{1,0:T(1,128)}', space=vmem, size = 0x9000, scoped, tag = 'internal scratch']
  %s0 = inlined_call_operand.vmem [shape: f32[4,512], index: 0, kind: input, shape index: {}]
  %s1 = inlined_call_operand.vmem [shape: f32[4,1], index: 1, kind: input, shape index: {}]
  %s2 = inlined_call_operand.vmem [shape: f32[4,1], index: 2, kind: input, shape index: {}]
  %s3 = inlined_call_operand.vmem [shape: f32[4,1], index: 3, kind: input, shape index: {}]
  %s4 = inlined_call_operand.vmem [shape: f32[4,1], index: 4, kind: input, shape index: {}]
  %s5 = inlined_call_operand.vmem [shape: f32[9,4,4], index: 5, kind: input, shape index: {}]
  %s6 = inlined_call_operand.vmem [shape: f32[9,4,4], index: 6, kind: input, shape index: {}]
  %s7 = inlined_call_operand.vmem [shape: f32[4,512], index: 7, kind: output, shape index: {}]
  %s8 = sld [smem:[#allocation0]]
  $region38: #{preact_block_pallas.1} parent=0
    _
  %s10 = ssub.s32 1, %s8
  %s11 = scalar_select 0, %s10, %s8
  // Predicated region
  $region2: #{preact_block_pallas.1} parent=0 // pred_check
    _
  $region3: #{preact_block_pallas.1} parent=0 // pred_check_branch
    %13 = sbr.rel (0) target = $region5
  $region4: #{preact_block_pallas.1} parent=0 // pred_region
    _
  $region5: #{preact_block_pallas.1} parent=0 // pred_fallthru
    _
  // Predicated region
  $region6: #{preact_block_pallas.1} parent=0 // pred_check
    _
  $region7: #{preact_block_pallas.1} parent=0 // pred_check_branch
    %15 = sbr.rel (0) target = $region9
  $region8: #{preact_block_pallas.1} parent=0 // pred_region
    _
  $region9: #{preact_block_pallas.1} parent=0 // pred_fallthru
    _
  // Predicated region
  $region10: #{preact_block_pallas.1} parent=0 // pred_check
    _
  $region11: #{preact_block_pallas.1} parent=0 // pred_check_branch
    %17 = sbr.rel (0) target = $region13
  $region12: #{preact_block_pallas.1} parent=0 // pred_region
    _
  $region13: #{preact_block_pallas.1} parent=0 // pred_fallthru
    _
  // Predicated region
  $region14: #{preact_block_pallas.1} parent=0 // pred_check
    _
  $region15: #{preact_block_pallas.1} parent=0 // pred_check_branch
    %19 = sbr.rel (0) target = $region17
  $region16: #{preact_block_pallas.1} parent=0 // pred_region
    _
  $region17: #{preact_block_pallas.1} parent=0 // pred_fallthru
    _
  // Predicated region
  $region18: #{preact_block_pallas.1} parent=0 // pred_check
    _
  $region19: #{preact_block_pallas.1} parent=0 // pred_check_branch
    %21 = sbr.rel (0) target = $region21
  $region20: #{preact_block_pallas.1} parent=0 // pred_region
    _
  $region21: #{preact_block_pallas.1} parent=0 // pred_fallthru
    _
  // Predicated region
  $region22: #{preact_block_pallas.1} parent=0 // pred_check
    _
  $region23: #{preact_block_pallas.1} parent=0 // pred_check_branch
    %23 = sbr.rel (0) target = $region25
  $region24: #{preact_block_pallas.1} parent=0 // pred_region
    _
  $region25: #{preact_block_pallas.1} parent=0 // pred_fallthru
    _
  // Predicated region
  $region26: #{preact_block_pallas.1} parent=0 // pred_check
    _
  $region27: #{preact_block_pallas.1} parent=0 // pred_check_branch
    %25 = sbr.rel (0) target = $region29
  $region28: #{preact_block_pallas.1} parent=0 // pred_region
    _
  $region29: #{preact_block_pallas.1} parent=0 // pred_fallthru
    _
  %v26 = vlaneseq
  %v27 = vand.u32 %v26, 127
  %v28 = vadd.s32 %v27, 128
  %v29 = vadd.s32 %v27, 256
  %v30 = vadd.s32 %v27, 384
  %v31 = vand.u32 %v27, 255
  %v32 = vand.u32 %v28, 255
  %v33 = vand.u32 %v29, 255
  %v34 = vand.u32 %v30, 255
  %v35 = vand.u32 %v27, 15
  %v36 = vand.u32 %v28, 15
  %v37 = vand.u32 %v29, 15
  %v38 = vand.u32 %v30, 15
  %vm39 = vcmp.ge.s32.totalorder %v31, 16
  %vm40 = vcmp.ge.s32.totalorder %v32, 16
  %vm41 = vcmp.ge.s32.totalorder %v33, 16
  %vm42 = vcmp.ge.s32.totalorder %v34, 16
  %vm43 = vcmp.lt.s32.totalorder %v31, 240
  %vm44 = vcmp.lt.s32.totalorder %v32, 240
  %vm45 = vcmp.lt.s32.totalorder %v33, 240
  %vm46 = vcmp.lt.s32.totalorder %v34, 240
  %vm47 = vcmp.ge.s32.totalorder %v35, 1
  %vm48 = vcmp.ge.s32.totalorder %v36, 1
  %vm49 = vcmp.ge.s32.totalorder %v37, 1
  %vm50 = vcmp.ge.s32.totalorder %v38, 1
  %vm51 = vcmp.lt.s32.totalorder %v35, 15
  %vm52 = vcmp.lt.s32.totalorder %v36, 15
  %vm53 = vcmp.lt.s32.totalorder %v37, 15
  %vm54 = vcmp.lt.s32.totalorder %v38, 15
  %vm55 = vmand %vm39, %vm47
  %vm56 = vmand %vm40, %vm48
  %vm57 = vmand %vm41, %vm49
  %vm58 = vmand %vm42, %vm50
  %vm59 = vmand %vm39, %vm51
  %vm60 = vmand %vm40, %vm52
  %vm61 = vmand %vm41, %vm53
  %vm62 = vmand %vm42, %vm54
  %vm63 = vmand %vm43, %vm47
  %vm64 = vmand %vm44, %vm48
  %vm65 = vmand %vm45, %vm49
  %vm66 = vmand %vm46, %vm50
  %vm67 = vmand %vm43, %vm51
  %vm68 = vmand %vm44, %vm52
  %vm69 = vmand %vm45, %vm53
  %vm70 = vmand %vm46, %vm54
  %v71 = vld [vmem:[%s0] sm:$0xff]
  %v72 = vld [vmem:[%s0 + $0x8] sm:$0xff]
  %75 = vst [vmem:[#allocation1] ss:$2 sm:$0xff] %v71
  %s76 = scalar_lea.vmem [#allocation1], 16
  %77 = vst [vmem:[%s76] ss:$2 sm:$0xff] %v72
  %v78 = vld.sshfl [vmem:[#allocation1] sm:$0xff pattern:$0x75316420]
  %v79 = vld.sshfl [vmem:[#allocation1 + $0x8] sm:$0xff pattern:$0x75316420]
  %v80 = vld.sshfl [vmem:[#allocation1 + $0x10] sm:$0xff pattern:$0x75316420]
  %v81 = vld.sshfl [vmem:[#allocation1 + $0x18] sm:$0xff pattern:$0x75316420]
  %vm86 = vcmask 1043456
  %v87 = vsel %vm86, %v78, 0.0
  %v88 = vsel %vm86, %v79, 0.0
  %v89 = vadd.f32 %v87, %v88
  %v90 = vsel %vm86, %v80, 0.0
  %v91 = vadd.f32 %v89, %v90
  %v92 = vsel %vm86, %v81, 0.0
  %v93 = vadd.f32 %v91, %v92
  %94 = vadd.xlane.f32.xlu0 %v93
  %v95 = vpop.xlane.xlu0 %94
  %v96 = vmul.f32 %v71, %v71
  %v97 = vmul.f32 %v72, %v72
  %100 = vst [vmem:[#allocation1] ss:$2 sm:$0xff] %v96
  %s101 = scalar_lea.vmem [#allocation1], 16
  %102 = vst [vmem:[%s101] ss:$2 sm:$0xff] %v97
  %v103 = vld.sshfl [vmem:[#allocation1] sm:$0xff pattern:$0x75316420]
  %v104 = vld.sshfl [vmem:[#allocation1 + $0x8] sm:$0xff pattern:$0x75316420]
  %v105 = vld.sshfl [vmem:[#allocation1 + $0x10] sm:$0xff pattern:$0x75316420]
  %v106 = vld.sshfl [vmem:[#allocation1 + $0x18] sm:$0xff pattern:$0x75316420]
  %v111 = vsel %vm86, %v103, 0.0
  %v112 = vsel %vm86, %v104, 0.0
  %v113 = vadd.f32 %v111, %v112
  %v114 = vsel %vm86, %v105, 0.0
  %v115 = vadd.f32 %v113, %v114
  %v116 = vsel %vm86, %v106, 0.0
  %v117 = vadd.f32 %v115, %v116
  %118 = vadd.xlane.f32.xlu0 %v117
  %v119 = vpop.xlane.xlu0 %118
  %v120 = vmul.f32 %v95, 0.001953125
  %v121 = vmul.f32 %v119, 0.001953125
  %v122 = vmul.f32 %v120, %v120
  %v123 = vsub.f32 %v121, %v122
  %v124 = vld [vmem:[%s1] sm:$0xf]
  %v125 = vadd.f32 %v123, 1e-05
  %v126 = vrsqrt.pop %v125
  %v127 = vmul.f32 %v126, %v125
  %v128 = vmul.f32 %v127, %v126
  %v129 = vmul.f32 0.5, %v128
  %v130 = vsub.f32 1.5, %v129
  %v131 = vmul.f32 %v126, %v130
  %vm132 = vweird.f32 %v125
  %vm133 = vweird.f32 %v126
  %vm134 = vmor %vm132, %vm133
  %v135 = vsel %vm134, %v126, %v131
  %v136 = vmul.f32 %v124, %v135
  %v137 = vld [vmem:[%s2] sm:$0xf]
  %v138 = vmul.f32 %v120, %v136
  %v139 = vsub.f32 %v137, %v138
  %141 = vset.pattern.permute.xlu0 0
  %142 = vperm.xlu0 %141, %v136
  %v143 = vpop.permute.xlu0 %142
  %v145 = vunpack.c.l.s4 839922192
  %v146 = vunpack.c.0.s8 %v145
  %v147 = vperm.slane %v143, %v146
  %v149 = vmul.f32 %v71, %v147
  %v150 = vmul.f32 %v72, %v147
  %152 = vset.pattern.permute.xlu0 0
  %153 = vperm.xlu0 %152, %v139
  %v154 = vpop.permute.xlu0 %153
  %v156 = vunpack.c.l.s4 839922192
  %v157 = vunpack.c.0.s8 %v156
  %v158 = vperm.slane %v154, %v157
  %v160 = vadd.f32 %v149, %v158
  %v161 = vadd.f32 %v150, %v158
  %v162 = vmax.f32 %v160, 0.0
  %v163 = vmax.f32 %v161, 0.0
  %165 = vst [vmem:[#allocation1] ss:$2 sm:$0xff] %v163
  %v166 = vld.sshfl [vmem:[#allocation1 + $0x8] sm:$0xff pattern:$0x75316420]
  %167 = vrot.lane.b32.xlu0 %v166, 17
  %v168 = vpop.permute.xlu0 %167
  %171 = vst [vmem:[#allocation1] ss:$2 sm:$0xff] %v162
  %s172 = scalar_lea.vmem [#allocation1], 16
  %173 = vst [vmem:[%s172] ss:$2 sm:$0xff] %v163
  %v174 = vld.sshfl [vmem:[#allocation1] sm:$0xff pattern:$0x75316420]
  %v175 = vld.sshfl [vmem:[#allocation1 + $0x8] sm:$0xff pattern:$0x75316420]
  %v176 = vld.sshfl [vmem:[#allocation1 + $0x10] sm:$0xff pattern:$0x75316420]
  %v177 = vld.sshfl [vmem:[#allocation1 + $0x18] sm:$0xff pattern:$0x75316420]
  %178 = vrot.lane.b32.xlu0 %v174, 17
  %v179 = vpop.permute.xlu0 %178
  %180 = vrot.lane.b32.xlu0 %v175, 17
  %v181 = vpop.permute.xlu0 %180
  %182 = vrot.lane.b32.xlu0 %v176, 17
  %v183 = vpop.permute.xlu0 %182
  %184 = vrot.lane.b32.xlu0 %v177, 17
  %v185 = vpop.permute.xlu0 %184
  %vm186 = vcmask 138240
  %v187 = vsel %vm186, %v179, %v181
  %v188 = vsel %vm186, %v181, %v183
  %v189 = vsel %vm186, %v183, %v185
  %v194 = vsel %vm186, %v168, %v179
  %v195 = vsel %vm55, 1, 0
  %v196 = vsel %vm56, 1, 0
  %v197 = vsel %vm57, 1, 0
  %v198 = vsel %vm58, 1, 0
  %vm199 = vcmp.eq.s32.totalorder %v195, 1
  %vm200 = vcmp.eq.s32.totalorder %v196, 1
  %vm201 = vcmp.eq.s32.totalorder %v197, 1
  %vm202 = vcmp.eq.s32.totalorder %v198, 1
  %v203 = vsel %vm199, %v194, 0.0
  %v204 = vsel %vm200, %v187, 0.0
  %v205 = vsel %vm201, %v188, 0.0
  %v206 = vsel %vm202, %v189, 0.0
  %v207 = vld [vmem:[%s5] sm:$0xf]
  %208 = vst [vmem:[#allocation1] ss:$2 sm:$0xff] %v163
  %v209 = vld.sshfl [vmem:[#allocation1 + $0x8] sm:$0xff pattern:$0x75316420]
  %210 = vrot.lane.b32.xlu0 %v209, 16
  %v211 = vpop.permute.xlu0 %210
  %213 = vst [vmem:[#allocation1] ss:$2 sm:$0xff] %v162
  %s214 = scalar_lea.vmem [#allocation1], 16
  %215 = vst [vmem:[%s214] ss:$2 sm:$0xff] %v163
  %v216 = vld.sshfl [vmem:[#allocation1] sm:$0xff pattern:$0x75316420]
  %v217 = vld.sshfl [vmem:[#allocation1 + $0x8] sm:$0xff pattern:$0x75316420]
  %v218 = vld.sshfl [vmem:[#allocation1 + $0x10] sm:$0xff pattern:$0x75316420]
  %v219 = vld.sshfl [vmem:[#allocation1 + $0x18] sm:$0xff pattern:$0x75316420]
  %220 = vrot.lane.b32.xlu0 %v216, 16
  %v221 = vpop.permute.xlu0 %220
  %222 = vrot.lane.b32.xlu0 %v217, 16
  %v223 = vpop.permute.xlu0 %222
  %224 = vrot.lane.b32.xlu0 %v218, 16
  %v225 = vpop.permute.xlu0 %224
  %226 = vrot.lane.b32.xlu0 %v219, 16
  %v227 = vpop.permute.xlu0 %226
  %vm228 = vcmask 130048
  %v229 = vsel %vm228, %v221, %v223
  %v230 = vsel %vm228, %v223, %v225
  %v231 = vsel %vm228, %v225, %v227
  %v236 = vsel %vm228, %v211, %v221
  %v237 = vsel %vm39, 1, 0
  %v238 = vsel %vm40, 1, 0
  %v239 = vsel %vm41, 1, 0
  %v240 = vsel %vm42, 1, 0
  %vm241 = vcmp.eq.s32.totalorder %v237, 1
  %vm242 = vcmp.eq.s32.totalorder %v238, 1
  %vm243 = vcmp.eq.s32.totalorder %v239, 1
  %vm244 = vcmp.eq.s32.totalorder %v240, 1
  %v245 = vsel %vm241, %v236, 0.0
  %v246 = vsel %vm242, %v229, 0.0
  %v247 = vsel %vm243, %v230, 0.0
  %v248 = vsel %vm244, %v231, 0.0
  %s249 = scalar_lea.vmem %s5, 4
  %v250 = vld [vmem:[%s249] sm:$0xf]
  %vm251 = vcmask 31744
  %v253 = vsel %vm251, %v250, 0
  %v256 = vsel %vm86, %v245, 0
  %v259 = vsel %vm86, %v246, 0
  %v262 = vsel %vm86, %v247, 0
  %v265 = vsel %vm86, %v248, 0
  %267 = vmatpush.msra.mxu0 0.0
  %268 = vmatpush.msra.mxu0 0.0
  %269 = vmatpush.msra.mxu0 0.0
  %270 = vmatpush.msra.mxu0 0.0
  %271 = vmatpush.msra.mxu0 0.0
  %272 = vmatpush.msra.mxu0 0.0
  %273 = vmatpush.msra.mxu0 0.0
  %274 = vmatpush.msra.mxu0 0.0
  %275 = vmatpush.msra.mxu0 0.0
  %276 = vmatpush.msra.mxu0 0.0
  %277 = vmatpush.msra.mxu0 0.0
  %278 = vmatpush.msra.mxu0 0.0
  %279 = vmatpush.msra.mxu0 0.0
  %280 = vmatpush.msra.mxu0 0.0
  %281 = vmatpush.msra.mxu0 0.0
  %v282 = vand.u32 %v256, 4294901760
  %283 = vmatpush.msra.mxu0 %v282
  %v284 = vand.u32 %v253, 4294901760
  %v285 = vsub.f32 %v253, %v284
  %v286 = vand.u32 %v285, 4294901760
  %v287 = vsub.f32 %v285, %v286
  %v288 = vand.u32 %v287, 4294901760
  %289 = vmatmul.f32.gmra.mxu0 %v288
  %v290 = vpop.f32.mrf.mxu0
  %v291 = vadd.f32 0.0, %v290
  %292 = vdwg.mxu0
  %293 = vmatpush.msra.mxu0 0.0
  %294 = vmatpush.msra.mxu0 0.0
  %295 = vmatpush.msra.mxu0 0.0
  %296 = vmatpush.msra.mxu0 0.0
  %297 = vmatpush.msra.mxu0 0.0
  %298 = vmatpush.msra.mxu0 0.0
  %299 = vmatpush.msra.mxu0 0.0
  %300 = vmatpush.msra.mxu0 0.0
  %301 = vmatpush.msra.mxu0 0.0
  %302 = vmatpush.msra.mxu0 0.0
  %303 = vmatpush.msra.mxu0 0.0
  %304 = vmatpush.msra.mxu0 0.0
  %305 = vmatpush.msra.mxu0 0.0
  %306 = vmatpush.msra.mxu0 0.0
  %307 = vmatpush.msra.mxu0 0.0
  %v308 = vand.u32 %v256, 4294901760
  %v309 = vsub.f32 %v256, %v308
  %v310 = vand.u32 %v309, 4294901760
  %v311 = vsub.f32 %v309, %v310
  %v312 = vand.u32 %v311, 4294901760
  %313 = vmatpush.msra.mxu0 %v312
  %v314 = vand.u32 %v253, 4294901760
  %315 = vmatmul.f32.gmra.mxu0 %v314
  %v316 = vpop.f32.mrf.mxu0
  %v317 = vadd.f32 %v291, %v316
  %318 = vdwg.mxu0
  %319 = vmatpush.msra.mxu0 0.0
  %320 = vmatpush.msra.mxu0 0.0
  %321 = vmatpush.msra.mxu0 0.0
  %322 = vmatpush.msra.mxu0 0.0
  %323 = vmatpush.msra.mxu0 0.0
  %324 = vmatpush.msra.mxu0 0.0
  %325 = vmatpush.msra.mxu0 0.0
  %326 = vmatpush.msra.mxu0 0.0
  %327 = vmatpush.msra.mxu0 0.0
  %328 = vmatpush.msra.mxu0 0.0
  %329 = vmatpush.msra.mxu0 0.0
  %330 = vmatpush.msra.mxu0 0.0
  %331 = vmatpush.msra.mxu0 0.0
  %332 = vmatpush.msra.mxu0 0.0
  %333 = vmatpush.msra.mxu0 0.0
  %v334 = vand.u32 %v256, 4294901760
  %v335 = vsub.f32 %v256, %v334
  %336 = vmatpush.msra.mxu0 %v335
  %v337 = vand.u32 %v253, 4294901760
  %v338 = vsub.f32 %v253, %v337
  %339 = vmatmul.f32.gmra.mxu0 %v338
  %v340 = vpop.f32.mrf.mxu0
  %v341 = vadd.f32 %v317, %v340
  %342 = vdwg.mxu0
  %343 = vmatpush.msra.mxu0 0.0
  %344 = vmatpush.msra.mxu0 0.0
  %345 = vmatpush.msra.mxu0 0.0
  %346 = vmatpush.msra.mxu0 0.0
  %347 = vmatpush.msra.mxu0 0.0
  %348 = vmatpush.msra.mxu0 0.0
  %349 = vmatpush.msra.mxu0 0.0
  %350 = vmatpush.msra.mxu0 0.0
  %351 = vmatpush.msra.mxu0 0.0
  %352 = vmatpush.msra.mxu0 0.0
  %353 = vmatpush.msra.mxu0 0.0
  %354 = vmatpush.msra.mxu0 0.0
  %355 = vmatpush.msra.mxu0 0.0
  %356 = vmatpush.msra.mxu0 0.0
  %357 = vmatpush.msra.mxu0 0.0
  %v358 = vand.u32 %v256, 4294901760
  %359 = vmatpush.msra.mxu0 %v358
  %v360 = vand.u32 %v253, 4294901760
  %v361 = vsub.f32 %v253, %v360
  %v362 = vand.u32 %v361, 4294901760
  %363 = vmatmul.f32.gmra.mxu0 %v362
  %v364 = vpop.f32.mrf.mxu0
  %v365 = vadd.f32 %v341, %v364
  %366 = vdwg.mxu0
  %367 = vmatpush.msra.mxu0 0.0
  %368 = vmatpush.msra.mxu0 0.0
  %369 = vmatpush.msra.mxu0 0.0
  %370 = vmatpush.msra.mxu0 0.0
  %371 = vmatpush.msra.mxu0 0.0
  %372 = vmatpush.msra.mxu0 0.0
  %373 = vmatpush.msra.mxu0 0.0
  %374 = vmatpush.msra.mxu0 0.0
  %375 = vmatpush.msra.mxu0 0.0
  %376 = vmatpush.msra.mxu0 0.0
  %377 = vmatpush.msra.mxu0 0.0
  %378 = vmatpush.msra.mxu0 0.0
  %379 = vmatpush.msra.mxu0 0.0
  %380 = vmatpush.msra.mxu0 0.0
  %381 = vmatpush.msra.mxu0 0.0
  %v382 = vand.u32 %v256, 4294901760
  %v383 = vsub.f32 %v256, %v382
  %v384 = vand.u32 %v383, 4294901760
  %385 = vmatpush.msra.mxu0 %v384
  %v386 = vand.u32 %v253, 4294901760
  %387 = vmatmul.f32.gmra.mxu0 %v386
  %v388 = vpop.f32.mrf.mxu0
  %v389 = vadd.f32 %v365, %v388
  %390 = vdwg.mxu0
  %391 = vmatpush.msra.mxu0 0.0
  %392 = vmatpush.msra.mxu0 0.0
  %393 = vmatpush.msra.mxu0 0.0
  %394 = vmatpush.msra.mxu0 0.0
  %395 = vmatpush.msra.mxu0 0.0
  %396 = vmatpush.msra.mxu0 0.0
  %397 = vmatpush.msra.mxu0 0.0
  %398 = vmatpush.msra.mxu0 0.0
  %399 = vmatpush.msra.mxu0 0.0
  %400 = vmatpush.msra.mxu0 0.0
  %401 = vmatpush.msra.mxu0 0.0
  %402 = vmatpush.msra.mxu0 0.0
  %403 = vmatpush.msra.mxu0 0.0
  %404 = vmatpush.msra.mxu0 0.0
  %405 = vmatpush.msra.mxu0 0.0
  %v406 = vand.u32 %v256, 4294901760
  %407 = vmatpush.msra.mxu0 %v406
  %v408 = vand.u32 %v253, 4294901760
  %409 = vmatmul.f32.gmra.mxu0 %v408
  %v410 = vpop.f32.mrf.mxu0
  %v411 = vadd.f32 %v389, %v410
  %412 = vdwg.mxu0
  %413 = vmatpush.msra.mxu0 0.0
  %414 = vmatpush.msra.mxu0 0.0
  %415 = vmatpush.msra.mxu0 0.0
  %416 = vmatpush.msra.mxu0 0.0
  %417 = vmatpush.msra.mxu0 0.0
  %418 = vmatpush.msra.mxu0 0.0
  %419 = vmatpush.msra.mxu0 0.0
  %420 = vmatpush.msra.mxu0 0.0
  %421 = vmatpush.msra.mxu0 0.0
  %422 = vmatpush.msra.mxu0 0.0
  %423 = vmatpush.msra.mxu0 0.0
  %424 = vmatpush.msra.mxu0 0.0
  %425 = vmatpush.msra.mxu0 0.0
  %426 = vmatpush.msra.mxu0 0.0
  %427 = vmatpush.msra.mxu0 0.0
  %v428 = vand.u32 %v259, 4294901760
  %429 = vmatpush.msra.mxu0 %v428
  %v430 = vand.u32 %v253, 4294901760
  %v431 = vsub.f32 %v253, %v430
  %v432 = vand.u32 %v431, 4294901760
  %v433 = vsub.f32 %v431, %v432
  %v434 = vand.u32 %v433, 4294901760
  %435 = vmatmul.f32.gmra.mxu0 %v434
  %v436 = vpop.f32.mrf.mxu0
  %v437 = vadd.f32 0.0, %v436
  %438 = vdwg.mxu0
  %439 = vmatpush.msra.mxu0 0.0
  %440 = vmatpush.msra.mxu0 0.0
  %441 = vmatpush.msra.mxu0 0.0
  %442 = vmatpush.msra.mxu0 0.0
  %443 = vmatpush.msra.mxu0 0.0
  %444 = vmatpush.msra.mxu0 0.0
  %445 = vmatpush.msra.mxu0 0.0
  %446 = vmatpush.msra.mxu0 0.0
  %447 = vmatpush.msra.mxu0 0.0
  %448 = vmatpush.msra.mxu0 0.0
  %449 = vmatpush.msra.mxu0 0.0
  %450 = vmatpush.msra.mxu0 0.0
  %451 = vmatpush.msra.mxu0 0.0
  %452 = vmatpush.msra.mxu0 0.0
  %453 = vmatpush.msra.mxu0 0.0
  %v454 = vand.u32 %v259, 4294901760
  %v455 = vsub.f32 %v259, %v454
  %v456 = vand.u32 %v455, 4294901760
  %v457 = vsub.f32 %v455, %v456
  %v458 = vand.u32 %v457, 4294901760
  %459 = vmatpush.msra.mxu0 %v458
  %v460 = vand.u32 %v253, 4294901760
  %461 = vmatmul.f32.gmra.mxu0 %v460
  %v462 = vpop.f32.mrf.mxu0
  %v463 = vadd.f32 %v437, %v462
  %464 = vdwg.mxu0
  %465 = vmatpush.msra.mxu0 0.0
  %466 = vmatpush.msra.mxu0 0.0
  %467 = vmatpush.msra.mxu0 0.0
  %468 = vmatpush.msra.mxu0 0.0
  %469 = vmatpush.msra.mxu0 0.0
  %470 = vmatpush.msra.mxu0 0.0
  %471 = vmatpush.msra.mxu0 0.0
  %472 = vmatpush.msra.mxu0 0.0
  %473 = vmatpush.msra.mxu0 0.0
  %474 = vmatpush.msra.mxu0 0.0
  %475 = vmatpush.msra.mxu0 0.0
  %476 = vmatpush.msra.mxu0 0.0
  %477 = vmatpush.msra.mxu0 0.0
  %478 = vmatpush.msra.mxu0 0.0
  %479 = vmatpush.msra.mxu0 0.0
  %v480 = vand.u32 %v259, 4294901760
  %v481 = vsub.f32 %v259, %v480
  %482 = vmatpush.msra.mxu0 %v481
  %v483 = vand.u32 %v253, 4294901760
  %v484 = vsub.f32 %v253, %v483
  %485 = vmatmul.f32.gmra.mxu0 %v484
  %v486 = vpop.f32.mrf.mxu0
  %v487 = vadd.f32 %v463, %v486
  %488 = vdwg.mxu0
  %489 = vmatpush.msra.mxu0 0.0
  %490 = vmatpush.msra.mxu0 0.0
  %491 = vmatpush.msra.mxu0 0.0
  %492 = vmatpush.msra.mxu0 0.0
  %493 = vmatpush.msra.mxu0 0.0
  %494 = vmatpush.msra.mxu0 0.0
  %495 = vmatpush.msra.mxu0 0.0
  %496 = vmatpush.msra.mxu0 0.0
  %497 = vmatpush.msra.mxu0 0.0
  %498 = vmatpush.msra.mxu0 0.0
  %499 = vmatpush.msra.mxu0 0.0
  %500 = vmatpush.msra.mxu0 0.0
  %501 = vmatpush.msra.mxu0 0.0
  %502 = vmatpush.msra.mxu0 0.0
  %503 = vmatpush.msra.mxu0 0.0
  %v504 = vand.u32 %v259, 4294901760
  %505 = vmatpush.msra.mxu0 %v504
  %v506 = vand.u32 %v253, 4294901760
  %v507 = vsub.f32 %v253, %v506
  %v508 = vand.u32 %v507, 4294901760
  %509 = vmatmul.f32.gmra.mxu0 %v508
  %v510 = vpop.f32.mrf.mxu0
  %v511 = vadd.f32 %v487, %v510
  %512 = vdwg.mxu0
  %513 = vmatpush.msra.mxu0 0.0
  %514 = vmatpush.msra.mxu0 0.0
  %515 = vmatpush.msra.mxu0 0.0
  %516 = vmatpush.msra.mxu0 0.0
  %517 = vmatpush.msra.mxu0 0.0
  %518 = vmatpush.msra.mxu0 0.0
  %519 = vmatpush.msra.mxu0 0.0
  %520 = vmatpush.msra.mxu0 0.0
  %521 = vmatpush.msra.mxu0 0.0
  %522 = vmatpush.msra.mxu0 0.0
  %523 = vmatpush.msra.mxu0 0.0
  %524 = vmatpush.msra.mxu0 0.0
  %525 = vmatpush.msra.mxu0 0.0
  %526 = vmatpush.msra.mxu0 0.0
  %527 = vmatpush.msra.mxu0 0.0
  %v528 = vand.u32 %v259, 4294901760
  %v529 = vsub.f32 %v259, %v528
  %v530 = vand.u32 %v529, 4294901760
  %531 = vmatpush.msra.mxu0 %v530
  %v532 = vand.u32 %v253, 4294901760
  %533 = vmatmul.f32.gmra.mxu0 %v532
  %v534 = vpop.f32.mrf.mxu0
  %v535 = vadd.f32 %v511, %v534
  %536 = vdwg.mxu0
  %537 = vmatpush.msra.mxu0 0.0
  %538 = vmatpush.msra.mxu0 0.0
  %539 = vmatpush.msra.mxu0 0.0
  %540 = vmatpush.msra.mxu0 0.0
  %541 = vmatpush.msra.mxu0 0.0
  %542 = vmatpush.msra.mxu0 0.0
  %543 = vmatpush.msra.mxu0 0.0
  %544 = vmatpush.msra.mxu0 0.0
  %545 = vmatpush.msra.mxu0 0.0
  %546 = vmatpush.msra.mxu0 0.0
  %547 = vmatpush.msra.mxu0 0.0
  %548 = vmatpush.msra.mxu0 0.0
  %549 = vmatpush.msra.mxu0 0.0
  %550 = vmatpush.msra.mxu0 0.0
  %551 = vmatpush.msra.mxu0 0.0
  %v552 = vand.u32 %v259, 4294901760
  %553 = vmatpush.msra.mxu0 %v552
  %v554 = vand.u32 %v253, 4294901760
  %555 = vmatmul.f32.gmra.mxu0 %v554
  %v556 = vpop.f32.mrf.mxu0
  %v557 = vadd.f32 %v535, %v556
  %558 = vdwg.mxu0
  %559 = vmatpush.msra.mxu0 0.0
  %560 = vmatpush.msra.mxu0 0.0
  %561 = vmatpush.msra.mxu0 0.0
  %562 = vmatpush.msra.mxu0 0.0
  %563 = vmatpush.msra.mxu0 0.0
  %564 = vmatpush.msra.mxu0 0.0
  %565 = vmatpush.msra.mxu0 0.0
  %566 = vmatpush.msra.mxu0 0.0
  %567 = vmatpush.msra.mxu0 0.0
  %568 = vmatpush.msra.mxu0 0.0
  %569 = vmatpush.msra.mxu0 0.0
  %570 = vmatpush.msra.mxu0 0.0
  %571 = vmatpush.msra.mxu0 0.0
  %572 = vmatpush.msra.mxu0 0.0
  %573 = vmatpush.msra.mxu0 0.0
  %v574 = vand.u32 %v262, 4294901760
  %575 = vmatpush.msra.mxu0 %v574
  %v576 = vand.u32 %v253, 4294901760
  %v577 = vsub.f32 %v253, %v576
  %v578 = vand.u32 %v577, 4294901760
  %v579 = vsub.f32 %v577, %v578
  %v580 = vand.u32 %v579, 4294901760
  %581 = vmatmul.f32.gmra.mxu0 %v580
  %v582 = vpop.f32.mrf.mxu0
  %v583 = vadd.f32 0.0, %v582
  %584 = vdwg.mxu0
  %585 = vmatpush.msra.mxu0 0.0
  %586 = vmatpush.msra.mxu0 0.0
  %587 = vmatpush.msra.mxu0 0.0
  %588 = vmatpush.msra.mxu0 0.0
  %589 = vmatpush.msra.mxu0 0.0
  %590 = vmatpush.msra.mxu0 0.0
  %591 = vmatpush.msra.mxu0 0.0
  %592 = vmatpush.msra.mxu0 0.0
  %593 = vmatpush.msra.mxu0 0.0
  %594 = vmatpush.msra.mxu0 0.0
  %595 = vmatpush.msra.mxu0 0.0
  %596 = vmatpush.msra.mxu0 0.0
  %597 = vmatpush.msra.mxu0 0.0
  %598 = vmatpush.msra.mxu0 0.0
  %599 = vmatpush.msra.mxu0 0.0
  %v600 = vand.u32 %v262, 4294901760
  %v601 = vsub.f32 %v262, %v600
  %v602 = vand.u32 %v601, 4294901760
  %v603 = vsub.f32 %v601, %v602
  %v604 = vand.u32 %v603, 4294901760
  %605 = vmatpush.msra.mxu0 %v604
  %v606 = vand.u32 %v253, 4294901760
  %607 = vmatmul.f32.gmra.mxu0 %v606
  %v608 = vpop.f32.mrf.mxu0
  %v609 = vadd.f32 %v583, %v608
  %610 = vdwg.mxu0
  %611 = vmatpush.msra.mxu0 0.0
  %612 = vmatpush.msra.mxu0 0.0
  %613 = vmatpush.msra.mxu0 0.0
  %614 = vmatpush.msra.mxu0 0.0
  %615 = vmatpush.msra.mxu0 0.0
  %616 = vmatpush.msra.mxu0 0.0
  %617 = vmatpush.msra.mxu0 0.0
  %618 = vmatpush.msra.mxu0 0.0
  %619 = vmatpush.msra.mxu0 0.0
  %620 = vmatpush.msra.mxu0 0.0
  %621 = vmatpush.msra.mxu0 0.0
  %622 = vmatpush.msra.mxu0 0.0
  %623 = vmatpush.msra.mxu0 0.0
  %624 = vmatpush.msra.mxu0 0.0
  %625 = vmatpush.msra.mxu0 0.0
  %v626 = vand.u32 %v262, 4294901760
  %v627 = vsub.f32 %v262, %v626
  %628 = vmatpush.msra.mxu0 %v627
  %v629 = vand.u32 %v253, 4294901760
  %v630 = vsub.f32 %v253, %v629
  %631 = vmatmul.f32.gmra.mxu0 %v630
  %v632 = vpop.f32.mrf.mxu0
  %v633 = vadd.f32 %v609, %v632
  %634 = vdwg.mxu0
  %635 = vmatpush.msra.mxu0 0.0
  %636 = vmatpush.msra.mxu0 0.0
  %637 = vmatpush.msra.mxu0 0.0
  %638 = vmatpush.msra.mxu0 0.0
  %639 = vmatpush.msra.mxu0 0.0
  %640 = vmatpush.msra.mxu0 0.0
  %641 = vmatpush.msra.mxu0 0.0
  %642 = vmatpush.msra.mxu0 0.0
  %643 = vmatpush.msra.mxu0 0.0
  %644 = vmatpush.msra.mxu0 0.0
  %645 = vmatpush.msra.mxu0 0.0
  %646 = vmatpush.msra.mxu0 0.0
  %647 = vmatpush.msra.mxu0 0.0
  %648 = vmatpush.msra.mxu0 0.0
  %649 = vmatpush.msra.mxu0 0.0
  %v650 = vand.u32 %v262, 4294901760
  %651 = vmatpush.msra.mxu0 %v650
  %v652 = vand.u32 %v253, 4294901760
  %v653 = vsub.f32 %v253, %v652
  %v654 = vand.u32 %v653, 4294901760
  %655 = vmatmul.f32.gmra.mxu0 %v654
  %v656 = vpop.f32.mrf.mxu0
  %v657 = vadd.f32 %v633, %v656
  %658 = vdwg.mxu0
  %659 = vmatpush.msra.mxu0 0.0
  %660 = vmatpush.msra.mxu0 0.0
  %661 = vmatpush.msra.mxu0 0.0
  %662 = vmatpush.msra.mxu0 0.0
  %663 = vmatpush.msra.mxu0 0.0
  %664 = vmatpush.msra.mxu0 0.0
  %665 = vmatpush.msra.mxu0 0.0
  %666 = vmatpush.msra.mxu0 0.0
  %667 = vmatpush.msra.mxu0 0.0
  %668 = vmatpush.msra.mxu0 0.0
  %669 = vmatpush.msra.mxu0 0.0
  %670 = vmatpush.msra.mxu0 0.0
  %671 = vmatpush.msra.mxu0 0.0
  %672 = vmatpush.msra.mxu0 0.0
  %673 = vmatpush.msra.mxu0 0.0
  %v674 = vand.u32 %v262, 4294901760
  %v675 = vsub.f32 %v262, %v674
  %v676 = vand.u32 %v675, 4294901760
  %677 = vmatpush.msra.mxu0 %v676
  %v678 = vand.u32 %v253, 4294901760
  %679 = vmatmul.f32.gmra.mxu0 %v678
  %v680 = vpop.f32.mrf.mxu0
  %v681 = vadd.f32 %v657, %v680
  %682 = vdwg.mxu0
  %683 = vmatpush.msra.mxu0 0.0
  %684 = vmatpush.msra.mxu0 0.0
  %685 = vmatpush.msra.mxu0 0.0
  %686 = vmatpush.msra.mxu0 0.0
  %687 = vmatpush.msra.mxu0 0.0
  %688 = vmatpush.msra.mxu0 0.0
  %689 = vmatpush.msra.mxu0 0.0
  %690 = vmatpush.msra.mxu0 0.0
  %691 = vmatpush.msra.mxu0 0.0
  %692 = vmatpush.msra.mxu0 0.0
  %693 = vmatpush.msra.mxu0 0.0
  %694 = vmatpush.msra.mxu0 0.0
  %695 = vmatpush.msra.mxu0 0.0
  %696 = vmatpush.msra.mxu0 0.0
  %697 = vmatpush.msra.mxu0 0.0
  %v698 = vand.u32 %v262, 4294901760
  %699 = vmatpush.msra.mxu0 %v698
  %v700 = vand.u32 %v253, 4294901760
  %701 = vmatmul.f32.gmra.mxu0 %v700
  %v702 = vpop.f32.mrf.mxu0
  %v703 = vadd.f32 %v681, %v702
  %704 = vdwg.mxu0
  %705 = vmatpush.msra.mxu0 0.0
  %706 = vmatpush.msra.mxu0 0.0
  %707 = vmatpush.msra.mxu0 0.0
  %708 = vmatpush.msra.mxu0 0.0
  %709 = vmatpush.msra.mxu0 0.0
  %710 = vmatpush.msra.mxu0 0.0
  %711 = vmatpush.msra.mxu0 0.0
  %712 = vmatpush.msra.mxu0 0.0
  %713 = vmatpush.msra.mxu0 0.0
  %714 = vmatpush.msra.mxu0 0.0
  %715 = vmatpush.msra.mxu0 0.0
  %716 = vmatpush.msra.mxu0 0.0
  %717 = vmatpush.msra.mxu0 0.0
  %718 = vmatpush.msra.mxu0 0.0
  %719 = vmatpush.msra.mxu0 0.0
  %v720 = vand.u32 %v265, 4294901760
  %721 = vmatpush.msra.mxu0 %v720
  %v722 = vand.u32 %v253, 4294901760
  %v723 = vsub.f32 %v253, %v722
  %v724 = vand.u32 %v723, 4294901760
  %v725 = vsub.f32 %v723, %v724
  %v726 = vand.u32 %v725, 4294901760
  %727 = vmatmul.f32.gmra.mxu0 %v726
  %v728 = vpop.f32.mrf.mxu0
  %v729 = vadd.f32 0.0, %v728
  %730 = vdwg.mxu0
  %731 = vmatpush.msra.mxu0 0.0
  %732 = vmatpush.msra.mxu0 0.0
  %733 = vmatpush.msra.mxu0 0.0
  %734 = vmatpush.msra.mxu0 0.0
  %735 = vmatpush.msra.mxu0 0.0
  %736 = vmatpush.msra.mxu0 0.0
  %737 = vmatpush.msra.mxu0 0.0
  %738 = vmatpush.msra.mxu0 0.0
  %739 = vmatpush.msra.mxu0 0.0
  %740 = vmatpush.msra.mxu0 0.0
  %741 = vmatpush.msra.mxu0 0.0
  %742 = vmatpush.msra.mxu0 0.0
  %743 = vmatpush.msra.mxu0 0.0
  %744 = vmatpush.msra.mxu0 0.0
  %745 = vmatpush.msra.mxu0 0.0
  %v746 = vand.u32 %v265, 4294901760
  %v747 = vsub.f32 %v265, %v746
  %v748 = vand.u32 %v747, 4294901760
  %v749 = vsub.f32 %v747, %v748
  %v750 = vand.u32 %v749, 4294901760
  %751 = vmatpush.msra.mxu0 %v750
  %v752 = vand.u32 %v253, 4294901760
  %753 = vmatmul.f32.gmra.mxu0 %v752
  %v754 = vpop.f32.mrf.mxu0
  %v755 = vadd.f32 %v729, %v754
  %756 = vdwg.mxu0
  %757 = vmatpush.msra.mxu0 0.0
  %758 = vmatpush.msra.mxu0 0.0
  %759 = vmatpush.msra.mxu0 0.0
  %760 = vmatpush.msra.mxu0 0.0
  %761 = vmatpush.msra.mxu0 0.0
  %762 = vmatpush.msra.mxu0 0.0
  %763 = vmatpush.msra.mxu0 0.0
  %764 = vmatpush.msra.mxu0 0.0
  %765 = vmatpush.msra.mxu0 0.0
  %766 = vmatpush.msra.mxu0 0.0
  %767 = vmatpush.msra.mxu0 0.0
  %768 = vmatpush.msra.mxu0 0.0
  %769 = vmatpush.msra.mxu0 0.0
  %770 = vmatpush.msra.mxu0 0.0
  %771 = vmatpush.msra.mxu0 0.0
  %v772 = vand.u32 %v265, 4294901760
  %v773 = vsub.f32 %v265, %v772
  %774 = vmatpush.msra.mxu0 %v773
  %v775 = vand.u32 %v253, 4294901760
  %v776 = vsub.f32 %v253, %v775
  %777 = vmatmul.f32.gmra.mxu0 %v776
  %v778 = vpop.f32.mrf.mxu0
  %v779 = vadd.f32 %v755, %v778
  %780 = vdwg.mxu0
  %781 = vmatpush.msra.mxu0 0.0
  %782 = vmatpush.msra.mxu0 0.0
  %783 = vmatpush.msra.mxu0 0.0
  %784 = vmatpush.msra.mxu0 0.0
  %785 = vmatpush.msra.mxu0 0.0
  %786 = vmatpush.msra.mxu0 0.0
  %787 = vmatpush.msra.mxu0 0.0
  %788 = vmatpush.msra.mxu0 0.0
  %789 = vmatpush.msra.mxu0 0.0
  %790 = vmatpush.msra.mxu0 0.0
  %791 = vmatpush.msra.mxu0 0.0
  %792 = vmatpush.msra.mxu0 0.0
  %793 = vmatpush.msra.mxu0 0.0
  %794 = vmatpush.msra.mxu0 0.0
  %795 = vmatpush.msra.mxu0 0.0
  %v796 = vand.u32 %v265, 4294901760
  %797 = vmatpush.msra.mxu0 %v796
  %v798 = vand.u32 %v253, 4294901760
  %v799 = vsub.f32 %v253, %v798
  %v800 = vand.u32 %v799, 4294901760
  %801 = vmatmul.f32.gmra.mxu0 %v800
  %v802 = vpop.f32.mrf.mxu0
  %v803 = vadd.f32 %v779, %v802
  %804 = vdwg.mxu0
  %805 = vmatpush.msra.mxu0 0.0
  %806 = vmatpush.msra.mxu0 0.0
  %807 = vmatpush.msra.mxu0 0.0
  %808 = vmatpush.msra.mxu0 0.0
  %809 = vmatpush.msra.mxu0 0.0
  %810 = vmatpush.msra.mxu0 0.0
  %811 = vmatpush.msra.mxu0 0.0
  %812 = vmatpush.msra.mxu0 0.0
  %813 = vmatpush.msra.mxu0 0.0
  %814 = vmatpush.msra.mxu0 0.0
  %815 = vmatpush.msra.mxu0 0.0
  %816 = vmatpush.msra.mxu0 0.0
  %817 = vmatpush.msra.mxu0 0.0
  %818 = vmatpush.msra.mxu0 0.0
  %819 = vmatpush.msra.mxu0 0.0
  %v820 = vand.u32 %v265, 4294901760
  %v821 = vsub.f32 %v265, %v820
  %v822 = vand.u32 %v821, 4294901760
  %823 = vmatpush.msra.mxu0 %v822
  %v824 = vand.u32 %v253, 4294901760
  %825 = vmatmul.f32.gmra.mxu0 %v824
  %v826 = vpop.f32.mrf.mxu0
  %v827 = vadd.f32 %v803, %v826
  %828 = vdwg.mxu0
  %829 = vmatpush.msra.mxu0 0.0
  %830 = vmatpush.msra.mxu0 0.0
  %831 = vmatpush.msra.mxu0 0.0
  %832 = vmatpush.msra.mxu0 0.0
  %833 = vmatpush.msra.mxu0 0.0
  %834 = vmatpush.msra.mxu0 0.0
  %835 = vmatpush.msra.mxu0 0.0
  %836 = vmatpush.msra.mxu0 0.0
  %837 = vmatpush.msra.mxu0 0.0
  %838 = vmatpush.msra.mxu0 0.0
  %839 = vmatpush.msra.mxu0 0.0
  %840 = vmatpush.msra.mxu0 0.0
  %841 = vmatpush.msra.mxu0 0.0
  %842 = vmatpush.msra.mxu0 0.0
  %843 = vmatpush.msra.mxu0 0.0
  %v844 = vand.u32 %v265, 4294901760
  %845 = vmatpush.msra.mxu0 %v844
  %v846 = vand.u32 %v253, 4294901760
  %847 = vmatmul.f32.gmra.mxu0 %v846
  %v848 = vpop.f32.mrf.mxu0
  %v849 = vadd.f32 %v827, %v848
  %850 = vdwg.mxu0
  %v852 = vsel %vm251, %v207, 0
  %v855 = vsel %vm86, %v203, 0
  %v858 = vsel %vm86, %v204, 0
  %v861 = vsel %vm86, %v205, 0
  %v864 = vsel %vm86, %v206, 0
  %866 = vmatpush.msra.mxu0 0.0
  %867 = vmatpush.msra.mxu0 0.0
  %868 = vmatpush.msra.mxu0 0.0
  %869 = vmatpush.msra.mxu0 0.0
  %870 = vmatpush.msra.mxu0 0.0
  %871 = vmatpush.msra.mxu0 0.0
  %872 = vmatpush.msra.mxu0 0.0
  %873 = vmatpush.msra.mxu0 0.0
  %874 = vmatpush.msra.mxu0 0.0
  %875 = vmatpush.msra.mxu0 0.0
  %876 = vmatpush.msra.mxu0 0.0
  %877 = vmatpush.msra.mxu0 0.0
  %878 = vmatpush.msra.mxu0 0.0
  %879 = vmatpush.msra.mxu0 0.0
  %880 = vmatpush.msra.mxu0 0.0
  %v881 = vand.u32 %v855, 4294901760
  %882 = vmatpush.msra.mxu0 %v881
  %v883 = vand.u32 %v852, 4294901760
  %v884 = vsub.f32 %v852, %v883
  %v885 = vand.u32 %v884, 4294901760
  %v886 = vsub.f32 %v884, %v885
  %v887 = vand.u32 %v886, 4294901760
  %888 = vmatmul.f32.gmra.mxu0 %v887
  %v889 = vpop.f32.mrf.mxu0
  %v890 = vadd.f32 %v411, %v889
  %891 = vdwg.mxu0
  %892 = vmatpush.msra.mxu0 0.0
  %893 = vmatpush.msra.mxu0 0.0
  %894 = vmatpush.msra.mxu0 0.0
  %895 = vmatpush.msra.mxu0 0.0
  %896 = vmatpush.msra.mxu0 0.0
  %897 = vmatpush.msra.mxu0 0.0
  %898 = vmatpush.msra.mxu0 0.0
  %899 = vmatpush.msra.mxu0 0.0
  %900 = vmatpush.msra.mxu0 0.0
  %901 = vmatpush.msra.mxu0 0.0
  %902 = vmatpush.msra.mxu0 0.0
  %903 = vmatpush.msra.mxu0 0.0
  %904 = vmatpush.msra.mxu0 0.0
  %905 = vmatpush.msra.mxu0 0.0
  %906 = vmatpush.msra.mxu0 0.0
  %v907 = vand.u32 %v855, 4294901760
  %v908 = vsub.f32 %v855, %v907
  %v909 = vand.u32 %v908, 4294901760
  %v910 = vsub.f32 %v908, %v909
  %v911 = vand.u32 %v910, 4294901760
  %912 = vmatpush.msra.mxu0 %v911
  %v913 = vand.u32 %v852, 4294901760
  %914 = vmatmul.f32.gmra.mxu0 %v913
  %v915 = vpop.f32.mrf.mxu0
  %v916 = vadd.f32 %v890, %v915
  %917 = vdwg.mxu0
  %918 = vmatpush.msra.mxu0 0.0
  %919 = vmatpush.msra.mxu0 0.0
  %920 = vmatpush.msra.mxu0 0.0
  %921 = vmatpush.msra.mxu0 0.0
  %922 = vmatpush.msra.mxu0 0.0
  %923 = vmatpush.msra.mxu0 0.0
  %924 = vmatpush.msra.mxu0 0.0
  %925 = vmatpush.msra.mxu0 0.0
  %926 = vmatpush.msra.mxu0 0.0
  %927 = vmatpush.msra.mxu0 0.0
  %928 = vmatpush.msra.mxu0 0.0
  %929 = vmatpush.msra.mxu0 0.0
  %930 = vmatpush.msra.mxu0 0.0
  %931 = vmatpush.msra.mxu0 0.0
  %932 = vmatpush.msra.mxu0 0.0
  %v933 = vand.u32 %v855, 4294901760
  %v934 = vsub.f32 %v855, %v933
  %935 = vmatpush.msra.mxu0 %v934
  %v936 = vand.u32 %v852, 4294901760
  %v937 = vsub.f32 %v852, %v936
  %938 = vmatmul.f32.gmra.mxu0 %v937
  %v939 = vpop.f32.mrf.mxu0
  %v940 = vadd.f32 %v916, %v939
  %941 = vdwg.mxu0
  %942 = vmatpush.msra.mxu0 0.0
  %943 = vmatpush.msra.mxu0 0.0
  %944 = vmatpush.msra.mxu0 0.0
  %945 = vmatpush.msra.mxu0 0.0
  %946 = vmatpush.msra.mxu0 0.0
  %947 = vmatpush.msra.mxu0 0.0
  %948 = vmatpush.msra.mxu0 0.0
  %949 = vmatpush.msra.mxu0 0.0
  %950 = vmatpush.msra.mxu0 0.0
  %951 = vmatpush.msra.mxu0 0.0
  %952 = vmatpush.msra.mxu0 0.0
  %953 = vmatpush.msra.mxu0 0.0
  %954 = vmatpush.msra.mxu0 0.0
  %955 = vmatpush.msra.mxu0 0.0
  %956 = vmatpush.msra.mxu0 0.0
  %v957 = vand.u32 %v855, 4294901760
  %958 = vmatpush.msra.mxu0 %v957
  %v959 = vand.u32 %v852, 4294901760
  %v960 = vsub.f32 %v852, %v959
  %v961 = vand.u32 %v960, 4294901760
  %962 = vmatmul.f32.gmra.mxu0 %v961
  %v963 = vpop.f32.mrf.mxu0
  %v964 = vadd.f32 %v940, %v963
  %965 = vdwg.mxu0
  %966 = vmatpush.msra.mxu0 0.0
  %967 = vmatpush.msra.mxu0 0.0
  %968 = vmatpush.msra.mxu0 0.0
  %969 = vmatpush.msra.mxu0 0.0
  %970 = vmatpush.msra.mxu0 0.0
  %971 = vmatpush.msra.mxu0 0.0
  %972 = vmatpush.msra.mxu0 0.0
  %973 = vmatpush.msra.mxu0 0.0
  %974 = vmatpush.msra.mxu0 0.0
  %975 = vmatpush.msra.mxu0 0.0
  %976 = vmatpush.msra.mxu0 0.0
  %977 = vmatpush.msra.mxu0 0.0
  %978 = vmatpush.msra.mxu0 0.0
  %979 = vmatpush.msra.mxu0 0.0
  %980 = vmatpush.msra.mxu0 0.0
  %v981 = vand.u32 %v855, 4294901760
  %v982 = vsub.f32 %v855, %v981
  %v983 = vand.u32 %v982, 4294901760
  %984 = vmatpush.msra.mxu0 %v983
  %v985 = vand.u32 %v852, 4294901760
  %986 = vmatmul.f32.gmra.mxu0 %v985
  %v987 = vpop.f32.mrf.mxu0
  %v988 = vadd.f32 %v964, %v987
  %989 = vdwg.mxu0
  %990 = vmatpush.msra.mxu0 0.0
  %991 = vmatpush.msra.mxu0 0.0
  %992 = vmatpush.msra.mxu0 0.0
  %993 = vmatpush.msra.mxu0 0.0
  %994 = vmatpush.msra.mxu0 0.0
  %995 = vmatpush.msra.mxu0 0.0
  %996 = vmatpush.msra.mxu0 0.0
  %997 = vmatpush.msra.mxu0 0.0
  %998 = vmatpush.msra.mxu0 0.0
  %999 = vmatpush.msra.mxu0 0.0
  %1000 = vmatpush.msra.mxu0 0.0
  %1001 = vmatpush.msra.mxu0 0.0
  %1002 = vmatpush.msra.mxu0 0.0
  %1003 = vmatpush.msra.mxu0 0.0
  %1004 = vmatpush.msra.mxu0 0.0
  %v1005 = vand.u32 %v855, 4294901760
  %1006 = vmatpush.msra.mxu0 %v1005
  %v1007 = vand.u32 %v852, 4294901760
  %1008 = vmatmul.f32.gmra.mxu0 %v1007
  %v1009 = vpop.f32.mrf.mxu0
  %v1010 = vadd.f32 %v988, %v1009
  %1011 = vdwg.mxu0
  %1012 = vmatpush.msra.mxu0 0.0
  %1013 = vmatpush.msra.mxu0 0.0
  %1014 = vmatpush.msra.mxu0 0.0
  %1015 = vmatpush.msra.mxu0 0.0
  %1016 = vmatpush.msra.mxu0 0.0
  %1017 = vmatpush.msra.mxu0 0.0
  %1018 = vmatpush.msra.mxu0 0.0
  %1019 = vmatpush.msra.mxu0 0.0
  %1020 = vmatpush.msra.mxu0 0.0
  %1021 = vmatpush.msra.mxu0 0.0
  %1022 = vmatpush.msra.mxu0 0.0
  %1023 = vmatpush.msra.mxu0 0.0
  %1024 = vmatpush.msra.mxu0 0.0
  %1025 = vmatpush.msra.mxu0 0.0
  %1026 = vmatpush.msra.mxu0 0.0
  %v1027 = vand.u32 %v858, 4294901760
  %1028 = vmatpush.msra.mxu0 %v1027
  %v1029 = vand.u32 %v852, 4294901760
  %v1030 = vsub.f32 %v852, %v1029
  %v1031 = vand.u32 %v1030, 4294901760
  %v1032 = vsub.f32 %v1030, %v1031
  %v1033 = vand.u32 %v1032, 4294901760
  %1034 = vmatmul.f32.gmra.mxu0 %v1033
  %v1035 = vpop.f32.mrf.mxu0
  %v1036 = vadd.f32 %v557, %v1035
  %1037 = vdwg.mxu0
  %1038 = vmatpush.msra.mxu0 0.0
  %1039 = vmatpush.msra.mxu0 0.0
  %1040 = vmatpush.msra.mxu0 0.0
  %1041 = vmatpush.msra.mxu0 0.0
  %1042 = vmatpush.msra.mxu0 0.0
  %1043 = vmatpush.msra.mxu0 0.0
  %1044 = vmatpush.msra.mxu0 0.0
  %1045 = vmatpush.msra.mxu0 0.0
  %1046 = vmatpush.msra.mxu0 0.0
  %1047 = vmatpush.msra.mxu0 0.0
  %1048 = vmatpush.msra.mxu0 0.0
  %1049 = vmatpush.msra.mxu0 0.0
  %1050 = vmatpush.msra.mxu0 0.0
  %1051 = vmatpush.msra.mxu0 0.0
  %1052 = vmatpush.msra.mxu0 0.0
  %v1053 = vand.u32 %v858, 4294901760
  %v1054 = vsub.f32 %v858, %v1053
  %v1055 = vand.u32 %v1054, 4294901760
  %v1056 = vsub.f32 %v1054, %v1055
  %v1057 = vand.u32 %v1056, 4294901760
  %1058 = vmatpush.msra.mxu0 %v1057
  %v1059 = vand.u32 %v852, 4294901760
  %1060 = vmatmul.f32.gmra.mxu0 %v1059
  %v1061 = vpop.f32.mrf.mxu0
  %v1062 = vadd.f32 %v1036, %v1061
  %1063 = vdwg.mxu0
  %1064 = vmatpush.msra.mxu0 0.0
  %1065 = vmatpush.msra.mxu0 0.0
  %1066 = vmatpush.msra.mxu0 0.0
  %1067 = vmatpush.msra.mxu0 0.0
  %1068 = vmatpush.msra.mxu0 0.0
  %1069 = vmatpush.msra.mxu0 0.0
  %1070 = vmatpush.msra.mxu0 0.0
  %1071 = vmatpush.msra.mxu0 0.0
  %1072 = vmatpush.msra.mxu0 0.0
  %1073 = vmatpush.msra.mxu0 0.0
  %1074 = vmatpush.msra.mxu0 0.0
  %1075 = vmatpush.msra.mxu0 0.0
  %1076 = vmatpush.msra.mxu0 0.0
  %1077 = vmatpush.msra.mxu0 0.0
  %1078 = vmatpush.msra.mxu0 0.0
  %v1079 = vand.u32 %v858, 4294901760
  %v1080 = vsub.f32 %v858, %v1079
  %1081 = vmatpush.msra.mxu0 %v1080
  %v1082 = vand.u32 %v852, 4294901760
  %v1083 = vsub.f32 %v852, %v1082
  %1084 = vmatmul.f32.gmra.mxu0 %v1083
  %v1085 = vpop.f32.mrf.mxu0
  %v1086 = vadd.f32 %v1062, %v1085
  %1087 = vdwg.mxu0
  %1088 = vmatpush.msra.mxu0 0.0
  %1089 = vmatpush.msra.mxu0 0.0
  %1090 = vmatpush.msra.mxu0 0.0
  %1091 = vmatpush.msra.mxu0 0.0
  %1092 = vmatpush.msra.mxu0 0.0
  %1093 = vmatpush.msra.mxu0 0.0
  %1094 = vmatpush.msra.mxu0 0.0
  %1095 = vmatpush.msra.mxu0 0.0
  %1096 = vmatpush.msra.mxu0 0.0
  %1097 = vmatpush.msra.mxu0 0.0
  %1098 = vmatpush.msra.mxu0 0.0
  %1099 = vmatpush.msra.mxu0 0.0
  %1100 = vmatpush.msra.mxu0 0.0
  %1101 = vmatpush.msra.mxu0 0.0
  %1102 = vmatpush.msra.mxu0 0.0
  %v1103 = vand.u32 %v858, 4294901760
  %1104 = vmatpush.msra.mxu0 %v1103
  %v1105 = vand.u32 %v852, 4294901760
  %v1106 = vsub.f32 %v852, %v1105
  %v1107 = vand.u32 %v1106, 4294901760
  %1108 = vmatmul.f32.gmra.mxu0 %v1107
  %v1109 = vpop.f32.mrf.mxu0
  %v1110 = vadd.f32 %v1086, %v1109
  %1111 = vdwg.mxu0
  %1112 = vmatpush.msra.mxu0 0.0
  %1113 = vmatpush.msra.mxu0 0.0
  %1114 = vmatpush.msra.mxu0 0.0
  %1115 = vmatpush.msra.mxu0 0.0
  %1116 = vmatpush.msra.mxu0 0.0
  %1117 = vmatpush.msra.mxu0 0.0
  %1118 = vmatpush.msra.mxu0 0.0
  %1119 = vmatpush.msra.mxu0 0.0
  %1120 = vmatpush.msra.mxu0 0.0
  %1121 = vmatpush.msra.mxu0 0.0
  %1122 = vmatpush.msra.mxu0 0.0
  %1123 = vmatpush.msra.mxu0 0.0
  %1124 = vmatpush.msra.mxu0 0.0
  %1125 = vmatpush.msra.mxu0 0.0
  %1126 = vmatpush.msra.mxu0 0.0
  %v1127 = vand.u32 %v858, 4294901760
  %v1128 = vsub.f32 %v858, %v1127
  %v1129 = vand.u32 %v1128, 4294901760
  %1130 = vmatpush.msra.mxu0 %v1129
  %v1131 = vand.u32 %v852, 4294901760
  %1132 = vmatmul.f32.gmra.mxu0 %v1131
  %v1133 = vpop.f32.mrf.mxu0
  %v1134 = vadd.f32 %v1110, %v1133
  %1135 = vdwg.mxu0
  %1136 = vmatpush.msra.mxu0 0.0
  %1137 = vmatpush.msra.mxu0 0.0
  %1138 = vmatpush.msra.mxu0 0.0
  %1139 = vmatpush.msra.mxu0 0.0
  %1140 = vmatpush.msra.mxu0 0.0
  %1141 = vmatpush.msra.mxu0 0.0
  %1142 = vmatpush.msra.mxu0 0.0
  %1143 = vmatpush.msra.mxu0 0.0
  %1144 = vmatpush.msra.mxu0 0.0
  %1145 = vmatpush.msra.mxu0 0.0
  %1146 = vmatpush.msra.mxu0 0.0
  %1147 = vmatpush.msra.mxu0 0.0
  %1148 = vmatpush.msra.mxu0 0.0
  %1149 = vmatpush.msra.mxu0 0.0
  %1150 = vmatpush.msra.mxu0 0.0
  %v1151 = vand.u32 %v858, 4294901760
  %1152 = vmatpush.msra.mxu0 %v1151
  %v1153 = vand.u32 %v852, 4294901760
  %1154 = vmatmul.f32.gmra.mxu0 %v1153
  %v1155 = vpop.f32.mrf.mxu0
  %v1156 = vadd.f32 %v1134, %v1155
  %1157 = vdwg.mxu0
  %1158 = vmatpush.msra.mxu0 0.0
  %1159 = vmatpush.msra.mxu0 0.0
  %1160 = vmatpush.msra.mxu0 0.0
  %1161 = vmatpush.msra.mxu0 0.0
  %1162 = vmatpush.msra.mxu0 0.0
  %1163 = vmatpush.msra.mxu0 0.0
  %1164 = vmatpush.msra.mxu0 0.0
  %1165 = vmatpush.msra.mxu0 0.0
  %1166 = vmatpush.msra.mxu0 0.0
  %1167 = vmatpush.msra.mxu0 0.0
  %1168 = vmatpush.msra.mxu0 0.0
  %1169 = vmatpush.msra.mxu0 0.0
  %1170 = vmatpush.msra.mxu0 0.0
  %1171 = vmatpush.msra.mxu0 0.0
  %1172 = vmatpush.msra.mxu0 0.0
  %v1173 = vand.u32 %v861, 4294901760
  %1174 = vmatpush.msra.mxu0 %v1173
  %v1175 = vand.u32 %v852, 4294901760
  %v1176 = vsub.f32 %v852, %v1175
  %v1177 = vand.u32 %v1176, 4294901760
  %v1178 = vsub.f32 %v1176, %v1177
  %v1179 = vand.u32 %v1178, 4294901760
  %1180 = vmatmul.f32.gmra.mxu0 %v1179
  %v1181 = vpop.f32.mrf.mxu0
  %v1182 = vadd.f32 %v703, %v1181
  %1183 = vdwg.mxu0
  %1184 = vmatpush.msra.mxu0 0.0
  %1185 = vmatpush.msra.mxu0 0.0
  %1186 = vmatpush.msra.mxu0 0.0
  %1187 = vmatpush.msra.mxu0 0.0
  %1188 = vmatpush.msra.mxu0 0.0
  %1189 = vmatpush.msra.mxu0 0.0
  %1190 = vmatpush.msra.mxu0 0.0
  %1191 = vmatpush.msra.mxu0 0.0
  %1192 = vmatpush.msra.mxu0 0.0
  %1193 = vmatpush.msra.mxu0 0.0
  %1194 = vmatpush.msra.mxu0 0.0
  %1195 = vmatpush.msra.mxu0 0.0
  %1196 = vmatpush.msra.mxu0 0.0
  %1197 = vmatpush.msra.mxu0 0.0
  %1198 = vmatpush.msra.mxu0 0.0
  %v1199 = vand.u32 %v861, 4294901760
  %v1200 = vsub.f32 %v861, %v1199
  %v1201 = vand.u32 %v1200, 4294901760
  %v1202 = vsub.f32 %v1200, %v1201
  %v1203 = vand.u32 %v1202, 4294901760
  %1204 = vmatpush.msra.mxu0 %v1203
  %v1205 = vand.u32 %v852, 4294901760
  %1206 = vmatmul.f32.gmra.mxu0 %v1205
  %v1207 = vpop.f32.mrf.mxu0
  %v1208 = vadd.f32 %v1182, %v1207
  %1209 = vdwg.mxu0
  %1210 = vmatpush.msra.mxu0 0.0
  %1211 = vmatpush.msra.mxu0 0.0
  %1212 = vmatpush.msra.mxu0 0.0
  %1213 = vmatpush.msra.mxu0 0.0
  %1214 = vmatpush.msra.mxu0 0.0
  %1215 = vmatpush.msra.mxu0 0.0
  %1216 = vmatpush.msra.mxu0 0.0
  %1217 = vmatpush.msra.mxu0 0.0
  %1218 = vmatpush.msra.mxu0 0.0
  %1219 = vmatpush.msra.mxu0 0.0
  %1220 = vmatpush.msra.mxu0 0.0
  %1221 = vmatpush.msra.mxu0 0.0
  %1222 = vmatpush.msra.mxu0 0.0
  %1223 = vmatpush.msra.mxu0 0.0
  %1224 = vmatpush.msra.mxu0 0.0
  %v1225 = vand.u32 %v861, 4294901760
  %v1226 = vsub.f32 %v861, %v1225
  %1227 = vmatpush.msra.mxu0 %v1226
  %v1228 = vand.u32 %v852, 4294901760
  %v1229 = vsub.f32 %v852, %v1228
  %1230 = vmatmul.f32.gmra.mxu0 %v1229
  %v1231 = vpop.f32.mrf.mxu0
  %v1232 = vadd.f32 %v1208, %v1231
  %1233 = vdwg.mxu0
  %1234 = vmatpush.msra.mxu0 0.0
  %1235 = vmatpush.msra.mxu0 0.0
  %1236 = vmatpush.msra.mxu0 0.0
  %1237 = vmatpush.msra.mxu0 0.0
  %1238 = vmatpush.msra.mxu0 0.0
  %1239 = vmatpush.msra.mxu0 0.0
  %1240 = vmatpush.msra.mxu0 0.0
  %1241 = vmatpush.msra.mxu0 0.0
  %1242 = vmatpush.msra.mxu0 0.0
  %1243 = vmatpush.msra.mxu0 0.0
  %1244 = vmatpush.msra.mxu0 0.0
  %1245 = vmatpush.msra.mxu0 0.0
  %1246 = vmatpush.msra.mxu0 0.0
  %1247 = vmatpush.msra.mxu0 0.0
  %1248 = vmatpush.msra.mxu0 0.0
  %v1249 = vand.u32 %v861, 4294901760
  %1250 = vmatpush.msra.mxu0 %v1249
  %v1251 = vand.u32 %v852, 4294901760
  %v1252 = vsub.f32 %v852, %v1251
  %v1253 = vand.u32 %v1252, 4294901760
  %1254 = vmatmul.f32.gmra.mxu0 %v1253
  %v1255 = vpop.f32.mrf.mxu0
  %v1256 = vadd.f32 %v1232, %v1255
  %1257 = vdwg.mxu0
  %1258 = vmatpush.msra.mxu0 0.0
  %1259 = vmatpush.msra.mxu0 0.0
  %1260 = vmatpush.msra.mxu0 0.0
  %1261 = vmatpush.msra.mxu0 0.0
  %1262 = vmatpush.msra.mxu0 0.0
  %1263 = vmatpush.msra.mxu0 0.0
  %1264 = vmatpush.msra.mxu0 0.0
  %1265 = vmatpush.msra.mxu0 0.0
  %1266 = vmatpush.msra.mxu0 0.0
  %1267 = vmatpush.msra.mxu0 0.0
  %1268 = vmatpush.msra.mxu0 0.0
  %1269 = vmatpush.msra.mxu0 0.0
  %1270 = vmatpush.msra.mxu0 0.0
  %1271 = vmatpush.msra.mxu0 0.0
  %1272 = vmatpush.msra.mxu0 0.0
  %v1273 = vand.u32 %v861, 4294901760
  %v1274 = vsub.f32 %v861, %v1273
  %v1275 = vand.u32 %v1274, 4294901760
  %1276 = vmatpush.msra.mxu0 %v1275
  %v1277 = vand.u32 %v852, 4294901760
  %1278 = vmatmul.f32.gmra.mxu0 %v1277
  %v1279 = vpop.f32.mrf.mxu0
  %v1280 = vadd.f32 %v1256, %v1279
  %1281 = vdwg.mxu0
  %1282 = vmatpush.msra.mxu0 0.0
  %1283 = vmatpush.msra.mxu0 0.0
  %1284 = vmatpush.msra.mxu0 0.0
  %1285 = vmatpush.msra.mxu0 0.0
  %1286 = vmatpush.msra.mxu0 0.0
  %1287 = vmatpush.msra.mxu0 0.0
  %1288 = vmatpush.msra.mxu0 0.0
  %1289 = vmatpush.msra.mxu0 0.0
  %1290 = vmatpush.msra.mxu0 0.0
  %1291 = vmatpush.msra.mxu0 0.0
  %1292 = vmatpush.msra.mxu0 0.0
  %1293 = vmatpush.msra.mxu0 0.0
  %1294 = vmatpush.msra.mxu0 0.0
  %1295 = vmatpush.msra.mxu0 0.0
  %1296 = vmatpush.msra.mxu0 0.0
  %v1297 = vand.u32 %v861, 4294901760
  %1298 = vmatpush.msra.mxu0 %v1297
  %v1299 = vand.u32 %v852, 4294901760
  %1300 = vmatmul.f32.gmra.mxu0 %v1299
  %v1301 = vpop.f32.mrf.mxu0
  %v1302 = vadd.f32 %v1280, %v1301
  %1303 = vdwg.mxu0
  %1304 = vmatpush.msra.mxu0 0.0
  %1305 = vmatpush.msra.mxu0 0.0
  %1306 = vmatpush.msra.mxu0 0.0
  %1307 = vmatpush.msra.mxu0 0.0
  %1308 = vmatpush.msra.mxu0 0.0
  %1309 = vmatpush.msra.mxu0 0.0
  %1310 = vmatpush.msra.mxu0 0.0
  %1311 = vmatpush.msra.mxu0 0.0
  %1312 = vmatpush.msra.mxu0 0.0
  %1313 = vmatpush.msra.mxu0 0.0
  %1314 = vmatpush.msra.mxu0 0.0
  %1315 = vmatpush.msra.mxu0 0.0
  %1316 = vmatpush.msra.mxu0 0.0
  %1317 = vmatpush.msra.mxu0 0.0
  %1318 = vmatpush.msra.mxu0 0.0
  %v1319 = vand.u32 %v864, 4294901760
  %1320 = vmatpush.msra.mxu0 %v1319
  %v1321 = vand.u32 %v852, 4294901760
  %v1322 = vsub.f32 %v852, %v1321
  %v1323 = vand.u32 %v1322, 4294901760
  %v1324 = vsub.f32 %v1322, %v1323
  %v1325 = vand.u32 %v1324, 4294901760
  %1326 = vmatmul.f32.gmra.mxu0 %v1325
  %v1327 = vpop.f32.mrf.mxu0
  %v1328 = vadd.f32 %v849, %v1327
  %1329 = vdwg.mxu0
  %1330 = vmatpush.msra.mxu0 0.0
  %1331 = vmatpush.msra.mxu0 0.0
  %1332 = vmatpush.msra.mxu0 0.0
  %1333 = vmatpush.msra.mxu0 0.0
  %1334 = vmatpush.msra.mxu0 0.0
  %1335 = vmatpush.msra.mxu0 0.0
  %1336 = vmatpush.msra.mxu0 0.0
  %1337 = vmatpush.msra.mxu0 0.0
  %1338 = vmatpush.msra.mxu0 0.0
  %1339 = vmatpush.msra.mxu0 0.0
  %1340 = vmatpush.msra.mxu0 0.0
  %1341 = vmatpush.msra.mxu0 0.0
  %1342 = vmatpush.msra.mxu0 0.0
  %1343 = vmatpush.msra.mxu0 0.0
  %1344 = vmatpush.msra.mxu0 0.0
  %v1345 = vand.u32 %v864, 4294901760
  %v1346 = vsub.f32 %v864, %v1345
  %v1347 = vand.u32 %v1346, 4294901760
  %v1348 = vsub.f32 %v1346, %v1347
  %v1349 = vand.u32 %v1348, 4294901760
  %1350 = vmatpush.msra.mxu0 %v1349
  %v1351 = vand.u32 %v852, 4294901760
  %1352 = vmatmul.f32.gmra.mxu0 %v1351
  %v1353 = vpop.f32.mrf.mxu0
  %v1354 = vadd.f32 %v1328, %v1353
  %1355 = vdwg.mxu0
  %1356 = vmatpush.msra.mxu0 0.0
  %1357 = vmatpush.msra.mxu0 0.0
  %1358 = vmatpush.msra.mxu0 0.0
  %1359 = vmatpush.msra.mxu0 0.0
  %1360 = vmatpush.msra.mxu0 0.0
  %1361 = vmatpush.msra.mxu0 0.0
  %1362 = vmatpush.msra.mxu0 0.0
  %1363 = vmatpush.msra.mxu0 0.0
  %1364 = vmatpush.msra.mxu0 0.0
  %1365 = vmatpush.msra.mxu0 0.0
  %1366 = vmatpush.msra.mxu0 0.0
  %1367 = vmatpush.msra.mxu0 0.0
  %1368 = vmatpush.msra.mxu0 0.0
  %1369 = vmatpush.msra.mxu0 0.0
  %1370 = vmatpush.msra.mxu0 0.0
  %v1371 = vand.u32 %v864, 4294901760
  %v1372 = vsub.f32 %v864, %v1371
  %1373 = vmatpush.msra.mxu0 %v1372
  %v1374 = vand.u32 %v852, 4294901760
  %v1375 = vsub.f32 %v852, %v1374
  %1376 = vmatmul.f32.gmra.mxu0 %v1375
  %v1377 = vpop.f32.mrf.mxu0
  %v1378 = vadd.f32 %v1354, %v1377
  %1379 = vdwg.mxu0
  %1380 = vmatpush.msra.mxu0 0.0
  %1381 = vmatpush.msra.mxu0 0.0
  %1382 = vmatpush.msra.mxu0 0.0
  %1383 = vmatpush.msra.mxu0 0.0
  %1384 = vmatpush.msra.mxu0 0.0
  %1385 = vmatpush.msra.mxu0 0.0
  %1386 = vmatpush.msra.mxu0 0.0
  %1387 = vmatpush.msra.mxu0 0.0
  %1388 = vmatpush.msra.mxu0 0.0
  %1389 = vmatpush.msra.mxu0 0.0
  %1390 = vmatpush.msra.mxu0 0.0
  %1391 = vmatpush.msra.mxu0 0.0
  %1392 = vmatpush.msra.mxu0 0.0
  %1393 = vmatpush.msra.mxu0 0.0
  %1394 = vmatpush.msra.mxu0 0.0
  %v1395 = vand.u32 %v864, 4294901760
  %1396 = vmatpush.msra.mxu0 %v1395
  %v1397 = vand.u32 %v852, 4294901760
  %v1398 = vsub.f32 %v852, %v1397
  %v1399 = vand.u32 %v1398, 4294901760
  %1400 = vmatmul.f32.gmra.mxu0 %v1399
  %v1401 = vpop.f32.mrf.mxu0
  %v1402 = vadd.f32 %v1378, %v1401
  %1403 = vdwg.mxu0
  %1404 = vmatpush.msra.mxu0 0.0
  %1405 = vmatpush.msra.mxu0 0.0
  %1406 = vmatpush.msra.mxu0 0.0
  %1407 = vmatpush.msra.mxu0 0.0
  %1408 = vmatpush.msra.mxu0 0.0
  %1409 = vmatpush.msra.mxu0 0.0
  %1410 = vmatpush.msra.mxu0 0.0
  %1411 = vmatpush.msra.mxu0 0.0
  %1412 = vmatpush.msra.mxu0 0.0
  %1413 = vmatpush.msra.mxu0 0.0
  %1414 = vmatpush.msra.mxu0 0.0
  %1415 = vmatpush.msra.mxu0 0.0
  %1416 = vmatpush.msra.mxu0 0.0
  %1417 = vmatpush.msra.mxu0 0.0
  %1418 = vmatpush.msra.mxu0 0.0
  %v1419 = vand.u32 %v864, 4294901760
  %v1420 = vsub.f32 %v864, %v1419
  %v1421 = vand.u32 %v1420, 4294901760
  %1422 = vmatpush.msra.mxu0 %v1421
  %v1423 = vand.u32 %v852, 4294901760
  %1424 = vmatmul.f32.gmra.mxu0 %v1423
  %v1425 = vpop.f32.mrf.mxu0
  %v1426 = vadd.f32 %v1402, %v1425
  %1427 = vdwg.mxu0
  %1428 = vmatpush.msra.mxu0 0.0
  %1429 = vmatpush.msra.mxu0 0.0
  %1430 = vmatpush.msra.mxu0 0.0
  %1431 = vmatpush.msra.mxu0 0.0
  %1432 = vmatpush.msra.mxu0 0.0
  %1433 = vmatpush.msra.mxu0 0.0
  %1434 = vmatpush.msra.mxu0 0.0
  %1435 = vmatpush.msra.mxu0 0.0
  %1436 = vmatpush.msra.mxu0 0.0
  %1437 = vmatpush.msra.mxu0 0.0
  %1438 = vmatpush.msra.mxu0 0.0
  %1439 = vmatpush.msra.mxu0 0.0
  %1440 = vmatpush.msra.mxu0 0.0
  %1441 = vmatpush.msra.mxu0 0.0
  %1442 = vmatpush.msra.mxu0 0.0
  %v1443 = vand.u32 %v864, 4294901760
  %1444 = vmatpush.msra.mxu0 %v1443
  %v1445 = vand.u32 %v852, 4294901760
  %1446 = vmatmul.f32.gmra.mxu0 %v1445
  %v1447 = vpop.f32.mrf.mxu0
  %v1448 = vadd.f32 %v1426, %v1447
  %1449 = vdwg.mxu0
  %1450 = vst [vmem:[#allocation1] ss:$2 sm:$0xff] %v163
  %v1451 = vld.sshfl [vmem:[#allocation1 + $0x8] sm:$0xff pattern:$0x75316420]
  %1452 = vrot.lane.b32.xlu0 %v1451, 15
  %v1453 = vpop.permute.xlu0 %1452
  %1455 = vst [vmem:[#allocation1] ss:$2 sm:$0xff] %v162
  %s1456 = scalar_lea.vmem [#allocation1], 16
  %1457 = vst [vmem:[%s1456] ss:$2 sm:$0xff] %v163
  %v1458 = vld.sshfl [vmem:[#allocation1] sm:$0xff pattern:$0x75316420]
  %v1459 = vld.sshfl [vmem:[#allocation1 + $0x8] sm:$0xff pattern:$0x75316420]
  %v1460 = vld.sshfl [vmem:[#allocation1 + $0x10] sm:$0xff pattern:$0x75316420]
  %v1461 = vld.sshfl [vmem:[#allocation1 + $0x18] sm:$0xff pattern:$0x75316420]
  %1462 = vrot.lane.b32.xlu0 %v1458, 15
  %v1463 = vpop.permute.xlu0 %1462
  %1464 = vrot.lane.b32.xlu0 %v1459, 15
  %v1465 = vpop.permute.xlu0 %1464
  %1466 = vrot.lane.b32.xlu0 %v1460, 15
  %v1467 = vpop.permute.xlu0 %1466
  %1468 = vrot.lane.b32.xlu0 %v1461, 15
  %v1469 = vpop.permute.xlu0 %1468
  %vm1470 = vcmask 121856
  %v1471 = vsel %vm1470, %v1463, %v1465
  %v1472 = vsel %vm1470, %v1465, %v1467
  %v1473 = vsel %vm1470, %v1467, %v1469
  %v1478 = vsel %vm1470, %v1453, %v1463
  %v1479 = vsel %vm59, 1, 0
  %v1480 = vsel %vm60, 1, 0
  %v1481 = vsel %vm61, 1, 0
  %v1482 = vsel %vm62, 1, 0
  %vm1483 = vcmp.eq.s32.totalorder %v1479, 1
  %vm1484 = vcmp.eq.s32.totalorder %v1480, 1
  %vm1485 = vcmp.eq.s32.totalorder %v1481, 1
  %vm1486 = vcmp.eq.s32.totalorder %v1482, 1
  %v1487 = vsel %vm1483, %v1478, 0.0
  %v1488 = vsel %vm1484, %v1471, 0.0
  %v1489 = vsel %vm1485, %v1472, 0.0
  %v1490 = vsel %vm1486, %v1473, 0.0
  %s1491 = scalar_lea.vmem %s5, 8
  %v1492 = vld [vmem:[%s1491] sm:$0xf]
  %v1494 = vsel %vm251, %v1492, 0
  %v1497 = vsel %vm86, %v1487, 0
  %v1500 = vsel %vm86, %v1488, 0
  %v1503 = vsel %vm86, %v1489, 0
  %v1506 = vsel %vm86, %v1490, 0
  %1508 = vmatpush.msra.mxu0 0.0
  %1509 = vmatpush.msra.mxu0 0.0
  %1510 = vmatpush.msra.mxu0 0.0
  %1511 = vmatpush.msra.mxu0 0.0
  %1512 = vmatpush.msra.mxu0 0.0
  %1513 = vmatpush.msra.mxu0 0.0
  %1514 = vmatpush.msra.mxu0 0.0
  %1515 = vmatpush.msra.mxu0 0.0
  %1516 = vmatpush.msra.mxu0 0.0
  %1517 = vmatpush.msra.mxu0 0.0
  %1518 = vmatpush.msra.mxu0 0.0
  %1519 = vmatpush.msra.mxu0 0.0
  %1520 = vmatpush.msra.mxu0 0.0
  %1521 = vmatpush.msra.mxu0 0.0
  %1522 = vmatpush.msra.mxu0 0.0
  %v1523 = vand.u32 %v1497, 4294901760
  %1524 = vmatpush.msra.mxu0 %v1523
  %v1525 = vand.u32 %v1494, 4294901760
  %v1526 = vsub.f32 %v1494, %v1525
  %v1527 = vand.u32 %v1526, 4294901760
  %v1528 = vsub.f32 %v1526, %v1527
  %v1529 = vand.u32 %v1528, 4294901760
  %1530 = vmatmul.f32.gmra.mxu0 %v1529
  %v1531 = vpop.f32.mrf.mxu0
  %v1532 = vadd.f32 0.0, %v1531
  %1533 = vdwg.mxu0
  %1534 = vmatpush.msra.mxu0 0.0
  %1535 = vmatpush.msra.mxu0 0.0
  %1536 = vmatpush.msra.mxu0 0.0
  %1537 = vmatpush.msra.mxu0 0.0
  %1538 = vmatpush.msra.mxu0 0.0
  %1539 = vmatpush.msra.mxu0 0.0
  %1540 = vmatpush.msra.mxu0 0.0
  %1541 = vmatpush.msra.mxu0 0.0
  %1542 = vmatpush.msra.mxu0 0.0
  %1543 = vmatpush.msra.mxu0 0.0
  %1544 = vmatpush.msra.mxu0 0.0
  %1545 = vmatpush.msra.mxu0 0.0
  %1546 = vmatpush.msra.mxu0 0.0
  %1547 = vmatpush.msra.mxu0 0.0
  %1548 = vmatpush.msra.mxu0 0.0
  %v1549 = vand.u32 %v1497, 4294901760
  %v1550 = vsub.f32 %v1497, %v1549
  %v1551 = vand.u32 %v1550, 4294901760
  %v1552 = vsub.f32 %v1550, %v1551
  %v1553 = vand.u32 %v1552, 4294901760
  %1554 = vmatpush.msra.mxu0 %v1553
  %v1555 = vand.u32 %v1494, 4294901760
  %1556 = vmatmul.f32.gmra.mxu0 %v1555
  %v1557 = vpop.f32.mrf.mxu0
  %v1558 = vadd.f32 %v1532, %v1557
  %1559 = vdwg.mxu0
  %1560 = vmatpush.msra.mxu0 0.0
  %1561 = vmatpush.msra.mxu0 0.0
  %1562 = vmatpush.msra.mxu0 0.0
  %1563 = vmatpush.msra.mxu0 0.0
  %1564 = vmatpush.msra.mxu0 0.0
  %1565 = vmatpush.msra.mxu0 0.0
  %1566 = vmatpush.msra.mxu0 0.0
  %1567 = vmatpush.msra.mxu0 0.0
  %1568 = vmatpush.msra.mxu0 0.0
  %1569 = vmatpush.msra.mxu0 0.0
  %1570 = vmatpush.msra.mxu0 0.0
  %1571 = vmatpush.msra.mxu0 0.0
  %1572 = vmatpush.msra.mxu0 0.0
  %1573 = vmatpush.msra.mxu0 0.0
  %1574 = vmatpush.msra.mxu0 0.0
  %v1575 = vand.u32 %v1497, 4294901760
  %v1576 = vsub.f32 %v1497, %v1575
  %1577 = vmatpush.msra.mxu0 %v1576
  %v1578 = vand.u32 %v1494, 4294901760
  %v1579 = vsub.f32 %v1494, %v1578
  %1580 = vmatmul.f32.gmra.mxu0 %v1579
  %v1581 = vpop.f32.mrf.mxu0
  %v1582 = vadd.f32 %v1558, %v1581
  %1583 = vdwg.mxu0
  %1584 = vmatpush.msra.mxu0 0.0
  %1585 = vmatpush.msra.mxu0 0.0
  %1586 = vmatpush.msra.mxu0 0.0
  %1587 = vmatpush.msra.mxu0 0.0
  %1588 = vmatpush.msra.mxu0 0.0
  %1589 = vmatpush.msra.mxu0 0.0
  %1590 = vmatpush.msra.mxu0 0.0
  %1591 = vmatpush.msra.mxu0 0.0
  %1592 = vmatpush.msra.mxu0 0.0
  %1593 = vmatpush.msra.mxu0 0.0
  %1594 = vmatpush.msra.mxu0 0.0
  %1595 = vmatpush.msra.mxu0 0.0
  %1596 = vmatpush.msra.mxu0 0.0
  %1597 = vmatpush.msra.mxu0 0.0
  %1598 = vmatpush.msra.mxu0 0.0
  %v1599 = vand.u32 %v1497, 4294901760
  %1600 = vmatpush.msra.mxu0 %v1599
  %v1601 = vand.u32 %v1494, 4294901760
  %v1602 = vsub.f32 %v1494, %v1601
  %v1603 = vand.u32 %v1602, 4294901760
  %1604 = vmatmul.f32.gmra.mxu0 %v1603
  %v1605 = vpop.f32.mrf.mxu0
  %v1606 = vadd.f32 %v1582, %v1605
  %1607 = vdwg.mxu0
  %1608 = vmatpush.msra.mxu0 0.0
  %1609 = vmatpush.msra.mxu0 0.0
  %1610 = vmatpush.msra.mxu0 0.0
  %1611 = vmatpush.msra.mxu0 0.0
  %1612 = vmatpush.msra.mxu0 0.0
  %1613 = vmatpush.msra.mxu0 0.0
  %1614 = vmatpush.msra.mxu0 0.0
  %1615 = vmatpush.msra.mxu0 0.0
  %1616 = vmatpush.msra.mxu0 0.0
  %1617 = vmatpush.msra.mxu0 0.0
  %1618 = vmatpush.msra.mxu0 0.0
  %1619 = vmatpush.msra.mxu0 0.0
  %1620 = vmatpush.msra.mxu0 0.0
  %1621 = vmatpush.msra.mxu0 0.0
  %1622 = vmatpush.msra.mxu0 0.0
  %v1623 = vand.u32 %v1497, 4294901760
  %v1624 = vsub.f32 %v1497, %v1623
  %v1625 = vand.u32 %v1624, 4294901760
  %1626 = vmatpush.msra.mxu0 %v1625
  %v1627 = vand.u32 %v1494, 4294901760
  %1628 = vmatmul.f32.gmra.mxu0 %v1627
  %v1629 = vpop.f32.mrf.mxu0
  %v1630 = vadd.f32 %v1606, %v1629
  %1631 = vdwg.mxu0
  %1632 = vmatpush.msra.mxu0 0.0
  %1633 = vmatpush.msra.mxu0 0.0
  %1634 = vmatpush.msra.mxu0 0.0
  %1635 = vmatpush.msra.mxu0 0.0
  %1636 = vmatpush.msra.mxu0 0.0
  %1637 = vmatpush.msra.mxu0 0.0
  %1638 = vmatpush.msra.mxu0 0.0
  %1639 = vmatpush.msra.mxu0 0.0
  %1640 = vmatpush.msra.mxu0 0.0
  %1641 = vmatpush.msra.mxu0 0.0
  %1642 = vmatpush.msra.mxu0 0.0
  %1643 = vmatpush.msra.mxu0 0.0
  %1644 = vmatpush.msra.mxu0 0.0
  %1645 = vmatpush.msra.mxu0 0.0
  %1646 = vmatpush.msra.mxu0 0.0
  %v1647 = vand.u32 %v1497, 4294901760
  %1648 = vmatpush.msra.mxu0 %v1647
  %v1649 = vand.u32 %v1494, 4294901760
  %1650 = vmatmul.f32.gmra.mxu0 %v1649
  %v1651 = vpop.f32.mrf.mxu0
  %v1652 = vadd.f32 %v1630, %v1651
  %1653 = vdwg.mxu0
  %1654 = vmatpush.msra.mxu0 0.0
  %1655 = vmatpush.msra.mxu0 0.0
  %1656 = vmatpush.msra.mxu0 0.0
  %1657 = vmatpush.msra.mxu0 0.0
  %1658 = vmatpush.msra.mxu0 0.0
  %1659 = vmatpush.msra.mxu0 0.0
  %1660 = vmatpush.msra.mxu0 0.0
  %1661 = vmatpush.msra.mxu0 0.0
  %1662 = vmatpush.msra.mxu0 0.0
  %1663 = vmatpush.msra.mxu0 0.0
  %1664 = vmatpush.msra.mxu0 0.0
  %1665 = vmatpush.msra.mxu0 0.0
  %1666 = vmatpush.msra.mxu0 0.0
  %1667 = vmatpush.msra.mxu0 0.0
  %1668 = vmatpush.msra.mxu0 0.0
  %v1669 = vand.u32 %v1500, 4294901760
  %1670 = vmatpush.msra.mxu0 %v1669
  %v1671 = vand.u32 %v1494, 4294901760
  %v1672 = vsub.f32 %v1494, %v1671
  %v1673 = vand.u32 %v1672, 4294901760
  %v1674 = vsub.f32 %v1672, %v1673
  %v1675 = vand.u32 %v1674, 4294901760
  %1676 = vmatmul.f32.gmra.mxu0 %v1675
  %v1677 = vpop.f32.mrf.mxu0
  %v1678 = vadd.f32 0.0, %v1677
  %1679 = vdwg.mxu0
  %1680 = vmatpush.msra.mxu0 0.0
  %1681 = vmatpush.msra.mxu0 0.0
  %1682 = vmatpush.msra.mxu0 0.0
  %1683 = vmatpush.msra.mxu0 0.0
  %1684 = vmatpush.msra.mxu0 0.0
  %1685 = vmatpush.msra.mxu0 0.0
  %1686 = vmatpush.msra.mxu0 0.0
  %1687 = vmatpush.msra.mxu0 0.0
  %1688 = vmatpush.msra.mxu0 0.0
  %1689 = vmatpush.msra.mxu0 0.0
  %1690 = vmatpush.msra.mxu0 0.0
  %1691 = vmatpush.msra.mxu0 0.0
  %1692 = vmatpush.msra.mxu0 0.0
  %1693 = vmatpush.msra.mxu0 0.0
  %1694 = vmatpush.msra.mxu0 0.0
  %v1695 = vand.u32 %v1500, 4294901760
  %v1696 = vsub.f32 %v1500, %v1695
  %v1697 = vand.u32 %v1696, 4294901760
  %v1698 = vsub.f32 %v1696, %v1697
  %v1699 = vand.u32 %v1698, 4294901760
  %1700 = vmatpush.msra.mxu0 %v1699
  %v1701 = vand.u32 %v1494, 4294901760
  %1702 = vmatmul.f32.gmra.mxu0 %v1701
  %v1703 = vpop.f32.mrf.mxu0
  %v1704 = vadd.f32 %v1678, %v1703
  %1705 = vdwg.mxu0
  %1706 = vmatpush.msra.mxu0 0.0
  %1707 = vmatpush.msra.mxu0 0.0
  %1708 = vmatpush.msra.mxu0 0.0
  %1709 = vmatpush.msra.mxu0 0.0
  %1710 = vmatpush.msra.mxu0 0.0
  %1711 = vmatpush.msra.mxu0 0.0
  %1712 = vmatpush.msra.mxu0 0.0
  %1713 = vmatpush.msra.mxu0 0.0
  %1714 = vmatpush.msra.mxu0 0.0
  %1715 = vmatpush.msra.mxu0 0.0
  %1716 = vmatpush.msra.mxu0 0.0
  %1717 = vmatpush.msra.mxu0 0.0
  %1718 = vmatpush.msra.mxu0 0.0
  %1719 = vmatpush.msra.mxu0 0.0
  %1720 = vmatpush.msra.mxu0 0.0
  %v1721 = vand.u32 %v1500, 4294901760
  %v1722 = vsub.f32 %v1500, %v1721
  %1723 = vmatpush.msra.mxu0 %v1722
  %v1724 = vand.u32 %v1494, 4294901760
  %v1725 = vsub.f32 %v1494, %v1724
  %1726 = vmatmul.f32.gmra.mxu0 %v1725
  %v1727 = vpop.f32.mrf.mxu0
  %v1728 = vadd.f32 %v1704, %v1727
  %1729 = vdwg.mxu0
  %1730 = vmatpush.msra.mxu0 0.0
  %1731 = vmatpush.msra.mxu0 0.0
  %1732 = vmatpush.msra.mxu0 0.0
  %1733 = vmatpush.msra.mxu0 0.0
  %1734 = vmatpush.msra.mxu0 0.0
  %1735 = vmatpush.msra.mxu0 0.0
  %1736 = vmatpush.msra.mxu0 0.0
  %1737 = vmatpush.msra.mxu0 0.0
  %1738 = vmatpush.msra.mxu0 0.0
  %1739 = vmatpush.msra.mxu0 0.0
  %1740 = vmatpush.msra.mxu0 0.0
  %1741 = vmatpush.msra.mxu0 0.0
  %1742 = vmatpush.msra.mxu0 0.0
  %1743 = vmatpush.msra.mxu0 0.0
  %1744 = vmatpush.msra.mxu0 0.0
  %v1745 = vand.u32 %v1500, 4294901760
  %1746 = vmatpush.msra.mxu0 %v1745
  %v1747 = vand.u32 %v1494, 4294901760
  %v1748 = vsub.f32 %v1494, %v1747
  %v1749 = vand.u32 %v1748, 4294901760
  %1750 = vmatmul.f32.gmra.mxu0 %v1749
  %v1751 = vpop.f32.mrf.mxu0
  %v1752 = vadd.f32 %v1728, %v1751
  %1753 = vdwg.mxu0
  %1754 = vmatpush.msra.mxu0 0.0
  %1755 = vmatpush.msra.mxu0 0.0
  %1756 = vmatpush.msra.mxu0 0.0
  %1757 = vmatpush.msra.mxu0 0.0
  %1758 = vmatpush.msra.mxu0 0.0
  %1759 = vmatpush.msra.mxu0 0.0
  %1760 = vmatpush.msra.mxu0 0.0
  %1761 = vmatpush.msra.mxu0 0.0
  %1762 = vmatpush.msra.mxu0 0.0
  %1763 = vmatpush.msra.mxu0 0.0
  %1764 = vmatpush.msra.mxu0 0.0
  %1765 = vmatpush.msra.mxu0 0.0
  %1766 = vmatpush.msra.mxu0 0.0
  %1767 = vmatpush.msra.mxu0 0.0
  %1768 = vmatpush.msra.mxu0 0.0
  %v1769 = vand.u32 %v1500, 4294901760
  %v1770 = vsub.f32 %v1500, %v1769
  %v1771 = vand.u32 %v1770, 4294901760
  %1772 = vmatpush.msra.mxu0 %v1771
  %v1773 = vand.u32 %v1494, 4294901760
  %1774 = vmatmul.f32.gmra.mxu0 %v1773
  %v1775 = vpop.f32.mrf.mxu0
  %v1776 = vadd.f32 %v1752, %v1775
  %1777 = vdwg.mxu0
  %1778 = vmatpush.msra.mxu0 0.0
  %1779 = vmatpush.msra.mxu0 0.0
  %1780 = vmatpush.msra.mxu0 0.0
  %1781 = vmatpush.msra.mxu0 0.0
  %1782 = vmatpush.msra.mxu0 0.0
  %1783 = vmatpush.msra.mxu0 0.0
  %1784 = vmatpush.msra.mxu0 0.0
  %1785 = vmatpush.msra.mxu0 0.0
  %1786 = vmatpush.msra.mxu0 0.0
  %1787 = vmatpush.msra.mxu0 0.0
  %1788 = vmatpush.msra.mxu0 0.0
  %1789 = vmatpush.msra.mxu0 0.0
  %1790 = vmatpush.msra.mxu0 0.0
  %1791 = vmatpush.msra.mxu0 0.0
  %1792 = vmatpush.msra.mxu0 0.0
  %v1793 = vand.u32 %v1500, 4294901760
  %1794 = vmatpush.msra.mxu0 %v1793
  %v1795 = vand.u32 %v1494, 4294901760
  %1796 = vmatmul.f32.gmra.mxu0 %v1795
  %v1797 = vpop.f32.mrf.mxu0
  %v1798 = vadd.f32 %v1776, %v1797
  %1799 = vdwg.mxu0
  %1800 = vmatpush.msra.mxu0 0.0
  %1801 = vmatpush.msra.mxu0 0.0
  %1802 = vmatpush.msra.mxu0 0.0
  %1803 = vmatpush.msra.mxu0 0.0
  %1804 = vmatpush.msra.mxu0 0.0
  %1805 = vmatpush.msra.mxu0 0.0
  %1806 = vmatpush.msra.mxu0 0.0
  %1807 = vmatpush.msra.mxu0 0.0
  %1808 = vmatpush.msra.mxu0 0.0
  %1809 = vmatpush.msra.mxu0 0.0
  %1810 = vmatpush.msra.mxu0 0.0
  %1811 = vmatpush.msra.mxu0 0.0
  %1812 = vmatpush.msra.mxu0 0.0
  %1813 = vmatpush.msra.mxu0 0.0
  %1814 = vmatpush.msra.mxu0 0.0
  %v1815 = vand.u32 %v1503, 4294901760
  %1816 = vmatpush.msra.mxu0 %v1815
  %v1817 = vand.u32 %v1494, 4294901760
  %v1818 = vsub.f32 %v1494, %v1817
  %v1819 = vand.u32 %v1818, 4294901760
  %v1820 = vsub.f32 %v1818, %v1819
  %v1821 = vand.u32 %v1820, 4294901760
  %1822 = vmatmul.f32.gmra.mxu0 %v1821
  %v1823 = vpop.f32.mrf.mxu0
  %v1824 = vadd.f32 0.0, %v1823
  %1825 = vdwg.mxu0
  %1826 = vmatpush.msra.mxu0 0.0
  %1827 = vmatpush.msra.mxu0 0.0
  %1828 = vmatpush.msra.mxu0 0.0
  %1829 = vmatpush.msra.mxu0 0.0
  %1830 = vmatpush.msra.mxu0 0.0
  %1831 = vmatpush.msra.mxu0 0.0
  %1832 = vmatpush.msra.mxu0 0.0
  %1833 = vmatpush.msra.mxu0 0.0
  %1834 = vmatpush.msra.mxu0 0.0
  %1835 = vmatpush.msra.mxu0 0.0
  %1836 = vmatpush.msra.mxu0 0.0
  %1837 = vmatpush.msra.mxu0 0.0
  %1838 = vmatpush.msra.mxu0 0.0
  %1839 = vmatpush.msra.mxu0 0.0
  %1840 = vmatpush.msra.mxu0 0.0
  %v1841 = vand.u32 %v1503, 4294901760
  %v1842 = vsub.f32 %v1503, %v1841
  %v1843 = vand.u32 %v1842, 4294901760
  %v1844 = vsub.f32 %v1842, %v1843
  %v1845 = vand.u32 %v1844, 4294901760
  %1846 = vmatpush.msra.mxu0 %v1845
  %v1847 = vand.u32 %v1494, 4294901760
  %1848 = vmatmul.f32.gmra.mxu0 %v1847
  %v1849 = vpop.f32.mrf.mxu0
  %v1850 = vadd.f32 %v1824, %v1849
  %1851 = vdwg.mxu0
  %1852 = vmatpush.msra.mxu0 0.0
  %1853 = vmatpush.msra.mxu0 0.0
  %1854 = vmatpush.msra.mxu0 0.0
  %1855 = vmatpush.msra.mxu0 0.0
  %1856 = vmatpush.msra.mxu0 0.0
  %1857 = vmatpush.msra.mxu0 0.0
  %1858 = vmatpush.msra.mxu0 0.0
  %1859 = vmatpush.msra.mxu0 0.0
  %1860 = vmatpush.msra.mxu0 0.0
  %1861 = vmatpush.msra.mxu0 0.0
  %1862 = vmatpush.msra.mxu0 0.0
  %1863 = vmatpush.msra.mxu0 0.0
  %1864 = vmatpush.msra.mxu0 0.0
  %1865 = vmatpush.msra.mxu0 0.0
  %1866 = vmatpush.msra.mxu0 0.0
  %v1867 = vand.u32 %v1503, 4294901760
  %v1868 = vsub.f32 %v1503, %v1867
  %1869 = vmatpush.msra.mxu0 %v1868
  %v1870 = vand.u32 %v1494, 4294901760
  %v1871 = vsub.f32 %v1494, %v1870
  %1872 = vmatmul.f32.gmra.mxu0 %v1871
  %v1873 = vpop.f32.mrf.mxu0
  %v1874 = vadd.f32 %v1850, %v1873
  %1875 = vdwg.mxu0
  %1876 = vmatpush.msra.mxu0 0.0
  %1877 = vmatpush.msra.mxu0 0.0
  %1878 = vmatpush.msra.mxu0 0.0
  %1879 = vmatpush.msra.mxu0 0.0
  %1880 = vmatpush.msra.mxu0 0.0
  %1881 = vmatpush.msra.mxu0 0.0
  %1882 = vmatpush.msra.mxu0 0.0
  %1883 = vmatpush.msra.mxu0 0.0
  %1884 = vmatpush.msra.mxu0 0.0
  %1885 = vmatpush.msra.mxu0 0.0
  %1886 = vmatpush.msra.mxu0 0.0
  %1887 = vmatpush.msra.mxu0 0.0
  %1888 = vmatpush.msra.mxu0 0.0
  %1889 = vmatpush.msra.mxu0 0.0
  %1890 = vmatpush.msra.mxu0 0.0
  %v1891 = vand.u32 %v1503, 4294901760
  %1892 = vmatpush.msra.mxu0 %v1891
  %v1893 = vand.u32 %v1494, 4294901760
  %v1894 = vsub.f32 %v1494, %v1893
  %v1895 = vand.u32 %v1894, 4294901760
  %1896 = vmatmul.f32.gmra.mxu0 %v1895
  %v1897 = vpop.f32.mrf.mxu0
  %v1898 = vadd.f32 %v1874, %v1897
  %1899 = vdwg.mxu0
  %1900 = vmatpush.msra.mxu0 0.0
  %1901 = vmatpush.msra.mxu0 0.0
  %1902 = vmatpush.msra.mxu0 0.0
  %1903 = vmatpush.msra.mxu0 0.0
  %1904 = vmatpush.msra.mxu0 0.0
  %1905 = vmatpush.msra.mxu0 0.0
  %1906 = vmatpush.msra.mxu0 0.0
  %1907 = vmatpush.msra.mxu0 0.0
  %1908 = vmatpush.msra.mxu0 0.0
  %1909 = vmatpush.msra.mxu0 0.0
  %1910 = vmatpush.msra.mxu0 0.0
  %1911 = vmatpush.msra.mxu0 0.0
  %1912 = vmatpush.msra.mxu0 0.0
  %1913 = vmatpush.msra.mxu0 0.0
  %1914 = vmatpush.msra.mxu0 0.0
  %v1915 = vand.u32 %v1503, 4294901760
  %v1916 = vsub.f32 %v1503, %v1915
  %v1917 = vand.u32 %v1916, 4294901760
  %1918 = vmatpush.msra.mxu0 %v1917
  %v1919 = vand.u32 %v1494, 4294901760
  %1920 = vmatmul.f32.gmra.mxu0 %v1919
  %v1921 = vpop.f32.mrf.mxu0
  %v1922 = vadd.f32 %v1898, %v1921
  %1923 = vdwg.mxu0
  %1924 = vmatpush.msra.mxu0 0.0
  %1925 = vmatpush.msra.mxu0 0.0
  %1926 = vmatpush.msra.mxu0 0.0
  %1927 = vmatpush.msra.mxu0 0.0
  %1928 = vmatpush.msra.mxu0 0.0
  %1929 = vmatpush.msra.mxu0 0.0
  %1930 = vmatpush.msra.mxu0 0.0
  %1931 = vmatpush.msra.mxu0 0.0
  %1932 = vmatpush.msra.mxu0 0.0
  %1933 = vmatpush.msra.mxu0 0.0
  %1934 = vmatpush.msra.mxu0 0.0
  %1935 = vmatpush.msra.mxu0 0.0
  %1936 = vmatpush.msra.mxu0 0.0
  %1937 = vmatpush.msra.mxu0 0.0
  %1938 = vmatpush.msra.mxu0 0.0
  %v1939 = vand.u32 %v1503, 4294901760
  %1940 = vmatpush.msra.mxu0 %v1939
  %v1941 = vand.u32 %v1494, 4294901760
  %1942 = vmatmul.f32.gmra.mxu0 %v1941
  %v1943 = vpop.f32.mrf.mxu0
  %v1944 = vadd.f32 %v1922, %v1943
  %1945 = vdwg.mxu0
  %1946 = vmatpush.msra.mxu0 0.0
  %1947 = vmatpush.msra.mxu0 0.0
  %1948 = vmatpush.msra.mxu0 0.0
  %1949 = vmatpush.msra.mxu0 0.0
  %1950 = vmatpush.msra.mxu0 0.0
  %1951 = vmatpush.msra.mxu0 0.0
  %1952 = vmatpush.msra.mxu0 0.0
  %1953 = vmatpush.msra.mxu0 0.0
  %1954 = vmatpush.msra.mxu0 0.0
  %1955 = vmatpush.msra.mxu0 0.0
  %1956 = vmatpush.msra.mxu0 0.0
  %1957 = vmatpush.msra.mxu0 0.0
  %1958 = vmatpush.msra.mxu0 0.0
  %1959 = vmatpush.msra.mxu0 0.0
  %1960 = vmatpush.msra.mxu0 0.0
  %v1961 = vand.u32 %v1506, 4294901760
  %1962 = vmatpush.msra.mxu0 %v1961
  %v1963 = vand.u32 %v1494, 4294901760
  %v1964 = vsub.f32 %v1494, %v1963
  %v1965 = vand.u32 %v1964, 4294901760
  %v1966 = vsub.f32 %v1964, %v1965
  %v1967 = vand.u32 %v1966, 4294901760
  %1968 = vmatmul.f32.gmra.mxu0 %v1967
  %v1969 = vpop.f32.mrf.mxu0
  %v1970 = vadd.f32 0.0, %v1969
  %1971 = vdwg.mxu0
  %1972 = vmatpush.msra.mxu0 0.0
  %1973 = vmatpush.msra.mxu0 0.0
  %1974 = vmatpush.msra.mxu0 0.0
  %1975 = vmatpush.msra.mxu0 0.0
  %1976 = vmatpush.msra.mxu0 0.0
  %1977 = vmatpush.msra.mxu0 0.0
  %1978 = vmatpush.msra.mxu0 0.0
  %1979 = vmatpush.msra.mxu0 0.0
  %1980 = vmatpush.msra.mxu0 0.0
  %1981 = vmatpush.msra.mxu0 0.0
  %1982 = vmatpush.msra.mxu0 0.0
  %1983 = vmatpush.msra.mxu0 0.0
  %1984 = vmatpush.msra.mxu0 0.0
  %1985 = vmatpush.msra.mxu0 0.0
  %1986 = vmatpush.msra.mxu0 0.0
  %v1987 = vand.u32 %v1506, 4294901760
  %v1988 = vsub.f32 %v1506, %v1987
  %v1989 = vand.u32 %v1988, 4294901760
  %v1990 = vsub.f32 %v1988, %v1989
  %v1991 = vand.u32 %v1990, 4294901760
  %1992 = vmatpush.msra.mxu0 %v1991
  %v1993 = vand.u32 %v1494, 4294901760
  %1994 = vmatmul.f32.gmra.mxu0 %v1993
  %v1995 = vpop.f32.mrf.mxu0
  %v1996 = vadd.f32 %v1970, %v1995
  %1997 = vdwg.mxu0
  %1998 = vmatpush.msra.mxu0 0.0
  %1999 = vmatpush.msra.mxu0 0.0
  %2000 = vmatpush.msra.mxu0 0.0
  %2001 = vmatpush.msra.mxu0 0.0
  %2002 = vmatpush.msra.mxu0 0.0
  %2003 = vmatpush.msra.mxu0 0.0
  %2004 = vmatpush.msra.mxu0 0.0
  %2005 = vmatpush.msra.mxu0 0.0
  %2006 = vmatpush.msra.mxu0 0.0
  %2007 = vmatpush.msra.mxu0 0.0
  %2008 = vmatpush.msra.mxu0 0.0
  %2009 = vmatpush.msra.mxu0 0.0
  %2010 = vmatpush.msra.mxu0 0.0
  %2011 = vmatpush.msra.mxu0 0.0
  %2012 = vmatpush.msra.mxu0 0.0
  %v2013 = vand.u32 %v1506, 4294901760
  %v2014 = vsub.f32 %v1506, %v2013
  %2015 = vmatpush.msra.mxu0 %v2014
  %v2016 = vand.u32 %v1494, 4294901760
  %v2017 = vsub.f32 %v1494, %v2016
  %2018 = vmatmul.f32.gmra.mxu0 %v2017
  %v2019 = vpop.f32.mrf.mxu0
  %v2020 = vadd.f32 %v1996, %v2019
  %2021 = vdwg.mxu0
  %2022 = vmatpush.msra.mxu0 0.0
  %2023 = vmatpush.msra.mxu0 0.0
  %2024 = vmatpush.msra.mxu0 0.0
  %2025 = vmatpush.msra.mxu0 0.0
  %2026 = vmatpush.msra.mxu0 0.0
  %2027 = vmatpush.msra.mxu0 0.0
  %2028 = vmatpush.msra.mxu0 0.0
  %2029 = vmatpush.msra.mxu0 0.0
  %2030 = vmatpush.msra.mxu0 0.0
  %2031 = vmatpush.msra.mxu0 0.0
  %2032 = vmatpush.msra.mxu0 0.0
  %2033 = vmatpush.msra.mxu0 0.0
  %2034 = vmatpush.msra.mxu0 0.0
  %2035 = vmatpush.msra.mxu0 0.0
  %2036 = vmatpush.msra.mxu0 0.0
  %v2037 = vand.u32 %v1506, 4294901760
  %2038 = vmatpush.msra.mxu0 %v2037
  %v2039 = vand.u32 %v1494, 4294901760
  %v2040 = vsub.f32 %v1494, %v2039
  %v2041 = vand.u32 %v2040, 4294901760
  %2042 = vmatmul.f32.gmra.mxu0 %v2041
  %v2043 = vpop.f32.mrf.mxu0
  %v2044 = vadd.f32 %v2020, %v2043
  %2045 = vdwg.mxu0
  %2046 = vmatpush.msra.mxu0 0.0
  %2047 = vmatpush.msra.mxu0 0.0
  %2048 = vmatpush.msra.mxu0 0.0
  %2049 = vmatpush.msra.mxu0 0.0
  %2050 = vmatpush.msra.mxu0 0.0
  %2051 = vmatpush.msra.mxu0 0.0
  %2052 = vmatpush.msra.mxu0 0.0
  %2053 = vmatpush.msra.mxu0 0.0
  %2054 = vmatpush.msra.mxu0 0.0
  %2055 = vmatpush.msra.mxu0 0.0
  %2056 = vmatpush.msra.mxu0 0.0
  %2057 = vmatpush.msra.mxu0 0.0
  %2058 = vmatpush.msra.mxu0 0.0
  %2059 = vmatpush.msra.mxu0 0.0
  %2060 = vmatpush.msra.mxu0 0.0
  %v2061 = vand.u32 %v1506, 4294901760
  %v2062 = vsub.f32 %v1506, %v2061
  %v2063 = vand.u32 %v2062, 4294901760
  %2064 = vmatpush.msra.mxu0 %v2063
  %v2065 = vand.u32 %v1494, 4294901760
  %2066 = vmatmul.f32.gmra.mxu0 %v2065
  %v2067 = vpop.f32.mrf.mxu0
  %v2068 = vadd.f32 %v2044, %v2067
  %2069 = vdwg.mxu0
  %2070 = vmatpush.msra.mxu0 0.0
  %2071 = vmatpush.msra.mxu0 0.0
  %2072 = vmatpush.msra.mxu0 0.0
  %2073 = vmatpush.msra.mxu0 0.0
  %2074 = vmatpush.msra.mxu0 0.0
  %2075 = vmatpush.msra.mxu0 0.0
  %2076 = vmatpush.msra.mxu0 0.0
  %2077 = vmatpush.msra.mxu0 0.0
  %2078 = vmatpush.msra.mxu0 0.0
  %2079 = vmatpush.msra.mxu0 0.0
  %2080 = vmatpush.msra.mxu0 0.0
  %2081 = vmatpush.msra.mxu0 0.0
  %2082 = vmatpush.msra.mxu0 0.0
  %2083 = vmatpush.msra.mxu0 0.0
  %2084 = vmatpush.msra.mxu0 0.0
  %v2085 = vand.u32 %v1506, 4294901760
  %2086 = vmatpush.msra.mxu0 %v2085
  %v2087 = vand.u32 %v1494, 4294901760
  %2088 = vmatmul.f32.gmra.mxu0 %v2087
  %v2089 = vpop.f32.mrf.mxu0
  %v2090 = vadd.f32 %v2068, %v2089
  %2091 = vdwg.mxu0
  %v2092 = vadd.f32 %v1010, %v1652
  %v2093 = vadd.f32 %v1156, %v1798
  %v2094 = vadd.f32 %v1302, %v1944
  %v2095 = vadd.f32 %v1448, %v2090
  %2096 = vst [vmem:[#allocation1] ss:$2 sm:$0xff] %v163
  %v2097 = vld.sshfl [vmem:[#allocation1 + $0x8] sm:$0xff pattern:$0x75316420]
  %2098 = vrot.lane.b32.xlu0 %v2097, 1
  %v2099 = vpop.permute.xlu0 %2098
  %2101 = vst [vmem:[#allocation1] ss:$2 sm:$0xff] %v162
  %s2102 = scalar_lea.vmem [#allocation1], 16
  %2103 = vst [vmem:[%s2102] ss:$2 sm:$0xff] %v163
  %v2104 = vld.sshfl [vmem:[#allocation1] sm:$0xff pattern:$0x75316420]
  %v2105 = vld.sshfl [vmem:[#allocation1 + $0x8] sm:$0xff pattern:$0x75316420]
  %v2106 = vld.sshfl [vmem:[#allocation1 + $0x10] sm:$0xff pattern:$0x75316420]
  %v2107 = vld.sshfl [vmem:[#allocation1 + $0x18] sm:$0xff pattern:$0x75316420]
  %2108 = vrot.lane.b32.xlu0 %v2104, 1
  %v2109 = vpop.permute.xlu0 %2108
  %2110 = vrot.lane.b32.xlu0 %v2105, 1
  %v2111 = vpop.permute.xlu0 %2110
  %2112 = vrot.lane.b32.xlu0 %v2106, 1
  %v2113 = vpop.permute.xlu0 %2112
  %2114 = vrot.lane.b32.xlu0 %v2107, 1
  %v2115 = vpop.permute.xlu0 %2114
  %vm2116 = vcmask 7168
  %v2117 = vsel %vm2116, %v2109, %v2111
  %v2118 = vsel %vm2116, %v2111, %v2113
  %v2119 = vsel %vm2116, %v2113, %v2115
  %v2124 = vsel %vm2116, %v2099, %v2109
  %v2125 = vsel %vm47, 1, 0
  %v2126 = vsel %vm48, 1, 0
  %v2127 = vsel %vm49, 1, 0
  %v2128 = vsel %vm50, 1, 0
  %vm2129 = vcmp.eq.s32.totalorder %v2125, 1
  %vm2130 = vcmp.eq.s32.totalorder %v2126, 1
  %vm2131 = vcmp.eq.s32.totalorder %v2127, 1
  %vm2132 = vcmp.eq.s32.totalorder %v2128, 1
  %v2133 = vsel %vm2129, %v2124, 0.0
  %v2134 = vsel %vm2130, %v2117, 0.0
  %v2135 = vsel %vm2131, %v2118, 0.0
  %v2136 = vsel %vm2132, %v2119, 0.0
  %s2137 = scalar_lea.vmem %s5, 12
  %v2138 = vld [vmem:[%s2137] sm:$0xf]
  %v2140 = vsel %vm251, %v2138, 0
  %v2143 = vsel %vm86, %v2133, 0
  %v2146 = vsel %vm86, %v2134, 0
  %v2149 = vsel %vm86, %v2135, 0
  %v2152 = vsel %vm86, %v2136, 0
  %2154 = vmatpush.msra.mxu0 0.0
  %2155 = vmatpush.msra.mxu0 0.0
  %2156 = vmatpush.msra.mxu0 0.0
  %2157 = vmatpush.msra.mxu0 0.0
  %2158 = vmatpush.msra.mxu0 0.0
  %2159 = vmatpush.msra.mxu0 0.0
  %2160 = vmatpush.msra.mxu0 0.0
  %2161 = vmatpush.msra.mxu0 0.0
  %2162 = vmatpush.msra.mxu0 0.0
  %2163 = vmatpush.msra.mxu0 0.0
  %2164 = vmatpush.msra.mxu0 0.0
  %2165 = vmatpush.msra.mxu0 0.0
  %2166 = vmatpush.msra.mxu0 0.0
  %2167 = vmatpush.msra.mxu0 0.0
  %2168 = vmatpush.msra.mxu0 0.0
  %v2169 = vand.u32 %v2143, 4294901760
  %2170 = vmatpush.msra.mxu0 %v2169
  %v2171 = vand.u32 %v2140, 4294901760
  %v2172 = vsub.f32 %v2140, %v2171
  %v2173 = vand.u32 %v2172, 4294901760
  %v2174 = vsub.f32 %v2172, %v2173
  %v2175 = vand.u32 %v2174, 4294901760
  %2176 = vmatmul.f32.gmra.mxu0 %v2175
  %v2177 = vpop.f32.mrf.mxu0
  %v2178 = vadd.f32 0.0, %v2177
  %2179 = vdwg.mxu0
  %2180 = vmatpush.msra.mxu0 0.0
  %2181 = vmatpush.msra.mxu0 0.0
  %2182 = vmatpush.msra.mxu0 0.0
  %2183 = vmatpush.msra.mxu0 0.0
  %2184 = vmatpush.msra.mxu0 0.0
  %2185 = vmatpush.msra.mxu0 0.0
  %2186 = vmatpush.msra.mxu0 0.0
  %2187 = vmatpush.msra.mxu0 0.0
  %2188 = vmatpush.msra.mxu0 0.0
  %2189 = vmatpush.msra.mxu0 0.0
  %2190 = vmatpush.msra.mxu0 0.0
  %2191 = vmatpush.msra.mxu0 0.0
  %2192 = vmatpush.msra.mxu0 0.0
  %2193 = vmatpush.msra.mxu0 0.0
  %2194 = vmatpush.msra.mxu0 0.0
  %v2195 = vand.u32 %v2143, 4294901760
  %v2196 = vsub.f32 %v2143, %v2195
  %v2197 = vand.u32 %v2196, 4294901760
  %v2198 = vsub.f32 %v2196, %v2197
  %v2199 = vand.u32 %v2198, 4294901760
  %2200 = vmatpush.msra.mxu0 %v2199
  %v2201 = vand.u32 %v2140, 4294901760
  %2202 = vmatmul.f32.gmra.mxu0 %v2201
  %v2203 = vpop.f32.mrf.mxu0
  %v2204 = vadd.f32 %v2178, %v2203
  %2205 = vdwg.mxu0
  %2206 = vmatpush.msra.mxu0 0.0
  %2207 = vmatpush.msra.mxu0 0.0
  %2208 = vmatpush.msra.mxu0 0.0
  %2209 = vmatpush.msra.mxu0 0.0
  %2210 = vmatpush.msra.mxu0 0.0
  %2211 = vmatpush.msra.mxu0 0.0
  %2212 = vmatpush.msra.mxu0 0.0
  %2213 = vmatpush.msra.mxu0 0.0
  %2214 = vmatpush.msra.mxu0 0.0
  %2215 = vmatpush.msra.mxu0 0.0
  %2216 = vmatpush.msra.mxu0 0.0
  %2217 = vmatpush.msra.mxu0 0.0
  %2218 = vmatpush.msra.mxu0 0.0
  %2219 = vmatpush.msra.mxu0 0.0
  %2220 = vmatpush.msra.mxu0 0.0
  %v2221 = vand.u32 %v2143, 4294901760
  %v2222 = vsub.f32 %v2143, %v2221
  %2223 = vmatpush.msra.mxu0 %v2222
  %v2224 = vand.u32 %v2140, 4294901760
  %v2225 = vsub.f32 %v2140, %v2224
  %2226 = vmatmul.f32.gmra.mxu0 %v2225
  %v2227 = vpop.f32.mrf.mxu0
  %v2228 = vadd.f32 %v2204, %v2227
  %2229 = vdwg.mxu0
  %2230 = vmatpush.msra.mxu0 0.0
  %2231 = vmatpush.msra.mxu0 0.0
  %2232 = vmatpush.msra.mxu0 0.0
  %2233 = vmatpush.msra.mxu0 0.0
  %2234 = vmatpush.msra.mxu0 0.0
  %2235 = vmatpush.msra.mxu0 0.0
  %2236 = vmatpush.msra.mxu0 0.0
  %2237 = vmatpush.msra.mxu0 0.0
  %2238 = vmatpush.msra.mxu0 0.0
  %2239 = vmatpush.msra.mxu0 0.0
  %2240 = vmatpush.msra.mxu0 0.0
  %2241 = vmatpush.msra.mxu0 0.0
  %2242 = vmatpush.msra.mxu0 0.0
  %2243 = vmatpush.msra.mxu0 0.0
  %2244 = vmatpush.msra.mxu0 0.0
  %v2245 = vand.u32 %v2143, 4294901760
  %2246 = vmatpush.msra.mxu0 %v2245
  %v2247 = vand.u32 %v2140, 4294901760
  %v2248 = vsub.f32 %v2140, %v2247
  %v2249 = vand.u32 %v2248, 4294901760
  %2250 = vmatmul.f32.gmra.mxu0 %v2249
  %v2251 = vpop.f32.mrf.mxu0
  %v2252 = vadd.f32 %v2228, %v2251
  %2253 = vdwg.mxu0
  %2254 = vmatpush.msra.mxu0 0.0
  %2255 = vmatpush.msra.mxu0 0.0
  %2256 = vmatpush.msra.mxu0 0.0
  %2257 = vmatpush.msra.mxu0 0.0
  %2258 = vmatpush.msra.mxu0 0.0
  %2259 = vmatpush.msra.mxu0 0.0
  %2260 = vmatpush.msra.mxu0 0.0
  %2261 = vmatpush.msra.mxu0 0.0
  %2262 = vmatpush.msra.mxu0 0.0
  %2263 = vmatpush.msra.mxu0 0.0
  %2264 = vmatpush.msra.mxu0 0.0
  %2265 = vmatpush.msra.mxu0 0.0
  %2266 = vmatpush.msra.mxu0 0.0
  %2267 = vmatpush.msra.mxu0 0.0
  %2268 = vmatpush.msra.mxu0 0.0
  %v2269 = vand.u32 %v2143, 4294901760
  %v2270 = vsub.f32 %v2143, %v2269
  %v2271 = vand.u32 %v2270, 4294901760
  %2272 = vmatpush.msra.mxu0 %v2271
  %v2273 = vand.u32 %v2140, 4294901760
  %2274 = vmatmul.f32.gmra.mxu0 %v2273
  %v2275 = vpop.f32.mrf.mxu0
  %v2276 = vadd.f32 %v2252, %v2275
  %2277 = vdwg.mxu0
  %2278 = vmatpush.msra.mxu0 0.0
  %2279 = vmatpush.msra.mxu0 0.0
  %2280 = vmatpush.msra.mxu0 0.0
  %2281 = vmatpush.msra.mxu0 0.0
  %2282 = vmatpush.msra.mxu0 0.0
  %2283 = vmatpush.msra.mxu0 0.0
  %2284 = vmatpush.msra.mxu0 0.0
  %2285 = vmatpush.msra.mxu0 0.0
  %2286 = vmatpush.msra.mxu0 0.0
  %2287 = vmatpush.msra.mxu0 0.0
  %2288 = vmatpush.msra.mxu0 0.0
  %2289 = vmatpush.msra.mxu0 0.0
  %2290 = vmatpush.msra.mxu0 0.0
  %2291 = vmatpush.msra.mxu0 0.0
  %2292 = vmatpush.msra.mxu0 0.0
  %v2293 = vand.u32 %v2143, 4294901760
  %2294 = vmatpush.msra.mxu0 %v2293
  %v2295 = vand.u32 %v2140, 4294901760
  %2296 = vmatmul.f32.gmra.mxu0 %v2295
  %v2297 = vpop.f32.mrf.mxu0
  %v2298 = vadd.f32 %v2276, %v2297
  %2299 = vdwg.mxu0
  %2300 = vmatpush.msra.mxu0 0.0
  %2301 = vmatpush.msra.mxu0 0.0
  %2302 = vmatpush.msra.mxu0 0.0
  %2303 = vmatpush.msra.mxu0 0.0
  %2304 = vmatpush.msra.mxu0 0.0
  %2305 = vmatpush.msra.mxu0 0.0
  %2306 = vmatpush.msra.mxu0 0.0
  %2307 = vmatpush.msra.mxu0 0.0
  %2308 = vmatpush.msra.mxu0 0.0
  %2309 = vmatpush.msra.mxu0 0.0
  %2310 = vmatpush.msra.mxu0 0.0
  %2311 = vmatpush.msra.mxu0 0.0
  %2312 = vmatpush.msra.mxu0 0.0
  %2313 = vmatpush.msra.mxu0 0.0
  %2314 = vmatpush.msra.mxu0 0.0
  %v2315 = vand.u32 %v2146, 4294901760
  %2316 = vmatpush.msra.mxu0 %v2315
  %v2317 = vand.u32 %v2140, 4294901760
  %v2318 = vsub.f32 %v2140, %v2317
  %v2319 = vand.u32 %v2318, 4294901760
  %v2320 = vsub.f32 %v2318, %v2319
  %v2321 = vand.u32 %v2320, 4294901760
  %2322 = vmatmul.f32.gmra.mxu0 %v2321
  %v2323 = vpop.f32.mrf.mxu0
  %v2324 = vadd.f32 0.0, %v2323
  %2325 = vdwg.mxu0
  %2326 = vmatpush.msra.mxu0 0.0
  %2327 = vmatpush.msra.mxu0 0.0
  %2328 = vmatpush.msra.mxu0 0.0
  %2329 = vmatpush.msra.mxu0 0.0
  %2330 = vmatpush.msra.mxu0 0.0
  %2331 = vmatpush.msra.mxu0 0.0
  %2332 = vmatpush.msra.mxu0 0.0
  %2333 = vmatpush.msra.mxu0 0.0
  %2334 = vmatpush.msra.mxu0 0.0
  %2335 = vmatpush.msra.mxu0 0.0
  %2336 = vmatpush.msra.mxu0 0.0
  %2337 = vmatpush.msra.mxu0 0.0
  %2338 = vmatpush.msra.mxu0 0.0
  %2339 = vmatpush.msra.mxu0 0.0
  %2340 = vmatpush.msra.mxu0 0.0
  %v2341 = vand.u32 %v2146, 4294901760
  %v2342 = vsub.f32 %v2146, %v2341
  %v2343 = vand.u32 %v2342, 4294901760
  %v2344 = vsub.f32 %v2342, %v2343
  %v2345 = vand.u32 %v2344, 4294901760
  %2346 = vmatpush.msra.mxu0 %v2345
  %v2347 = vand.u32 %v2140, 4294901760
  %2348 = vmatmul.f32.gmra.mxu0 %v2347
  %v2349 = vpop.f32.mrf.mxu0
  %v2350 = vadd.f32 %v2324, %v2349
  %2351 = vdwg.mxu0
  %2352 = vmatpush.msra.mxu0 0.0
  %2353 = vmatpush.msra.mxu0 0.0
  %2354 = vmatpush.msra.mxu0 0.0
  %2355 = vmatpush.msra.mxu0 0.0
  %2356 = vmatpush.msra.mxu0 0.0
  %2357 = vmatpush.msra.mxu0 0.0
  %2358 = vmatpush.msra.mxu0 0.0
  %2359 = vmatpush.msra.mxu0 0.0
  %2360 = vmatpush.msra.mxu0 0.0
  %2361 = vmatpush.msra.mxu0 0.0
  %2362 = vmatpush.msra.mxu0 0.0
  %2363 = vmatpush.msra.mxu0 0.0
  %2364 = vmatpush.msra.mxu0 0.0
  %2365 = vmatpush.msra.mxu0 0.0
  %2366 = vmatpush.msra.mxu0 0.0
  %v2367 = vand.u32 %v2146, 4294901760
  %v2368 = vsub.f32 %v2146, %v2367
  %2369 = vmatpush.msra.mxu0 %v2368
  %v2370 = vand.u32 %v2140, 4294901760
  %v2371 = vsub.f32 %v2140, %v2370
  %2372 = vmatmul.f32.gmra.mxu0 %v2371
  %v2373 = vpop.f32.mrf.mxu0
  %v2374 = vadd.f32 %v2350, %v2373
  %2375 = vdwg.mxu0
  %2376 = vmatpush.msra.mxu0 0.0
  %2377 = vmatpush.msra.mxu0 0.0
  %2378 = vmatpush.msra.mxu0 0.0
  %2379 = vmatpush.msra.mxu0 0.0
  %2380 = vmatpush.msra.mxu0 0.0
  %2381 = vmatpush.msra.mxu0 0.0
  %2382 = vmatpush.msra.mxu0 0.0
  %2383 = vmatpush.msra.mxu0 0.0
  %2384 = vmatpush.msra.mxu0 0.0
  %2385 = vmatpush.msra.mxu0 0.0
  %2386 = vmatpush.msra.mxu0 0.0
  %2387 = vmatpush.msra.mxu0 0.0
  %2388 = vmatpush.msra.mxu0 0.0
  %2389 = vmatpush.msra.mxu0 0.0
  %2390 = vmatpush.msra.mxu0 0.0
  %v2391 = vand.u32 %v2146, 4294901760
  %2392 = vmatpush.msra.mxu0 %v2391
  %v2393 = vand.u32 %v2140, 4294901760
  %v2394 = vsub.f32 %v2140, %v2393
  %v2395 = vand.u32 %v2394, 4294901760
  %2396 = vmatmul.f32.gmra.mxu0 %v2395
  %v2397 = vpop.f32.mrf.mxu0
  %v2398 = vadd.f32 %v2374, %v2397
  %2399 = vdwg.mxu0
  %2400 = vmatpush.msra.mxu0 0.0
  %2401 = vmatpush.msra.mxu0 0.0
  %2402 = vmatpush.msra.mxu0 0.0
  %2403 = vmatpush.msra.mxu0 0.0
  %2404 = vmatpush.msra.mxu0 0.0
  %2405 = vmatpush.msra.mxu0 0.0
  %2406 = vmatpush.msra.mxu0 0.0
  %2407 = vmatpush.msra.mxu0 0.0
  %2408 = vmatpush.msra.mxu0 0.0
  %2409 = vmatpush.msra.mxu0 0.0
  %2410 = vmatpush.msra.mxu0 0.0
  %2411 = vmatpush.msra.mxu0 0.0
  %2412 = vmatpush.msra.mxu0 0.0
  %2413 = vmatpush.msra.mxu0 0.0
  %2414 = vmatpush.msra.mxu0 0.0
  %v2415 = vand.u32 %v2146, 4294901760
  %v2416 = vsub.f32 %v2146, %v2415
  %v2417 = vand.u32 %v2416, 4294901760
  %2418 = vmatpush.msra.mxu0 %v2417
  %v2419 = vand.u32 %v2140, 4294901760
  %2420 = vmatmul.f32.gmra.mxu0 %v2419
  %v2421 = vpop.f32.mrf.mxu0
  %v2422 = vadd.f32 %v2398, %v2421
  %2423 = vdwg.mxu0
  %2424 = vmatpush.msra.mxu0 0.0
  %2425 = vmatpush.msra.mxu0 0.0
  %2426 = vmatpush.msra.mxu0 0.0
  %2427 = vmatpush.msra.mxu0 0.0
  %2428 = vmatpush.msra.mxu0 0.0
  %2429 = vmatpush.msra.mxu0 0.0
  %2430 = vmatpush.msra.mxu0 0.0
  %2431 = vmatpush.msra.mxu0 0.0
  %2432 = vmatpush.msra.mxu0 0.0
  %2433 = vmatpush.msra.mxu0 0.0
  %2434 = vmatpush.msra.mxu0 0.0
  %2435 = vmatpush.msra.mxu0 0.0
  %2436 = vmatpush.msra.mxu0 0.0
  %2437 = vmatpush.msra.mxu0 0.0
  %2438 = vmatpush.msra.mxu0 0.0
  %v2439 = vand.u32 %v2146, 4294901760
  %2440 = vmatpush.msra.mxu0 %v2439
  %v2441 = vand.u32 %v2140, 4294901760
  %2442 = vmatmul.f32.gmra.mxu0 %v2441
  %v2443 = vpop.f32.mrf.mxu0
  %v2444 = vadd.f32 %v2422, %v2443
  %2445 = vdwg.mxu0
  %2446 = vmatpush.msra.mxu0 0.0
  %2447 = vmatpush.msra.mxu0 0.0
  %2448 = vmatpush.msra.mxu0 0.0
  %2449 = vmatpush.msra.mxu0 0.0
  %2450 = vmatpush.msra.mxu0 0.0
  %2451 = vmatpush.msra.mxu0 0.0
  %2452 = vmatpush.msra.mxu0 0.0
  %2453 = vmatpush.msra.mxu0 0.0
  %2454 = vmatpush.msra.mxu0 0.0
  %2455 = vmatpush.msra.mxu0 0.0
  %2456 = vmatpush.msra.mxu0 0.0
  %2457 = vmatpush.msra.mxu0 0.0
  %2458 = vmatpush.msra.mxu0 0.0
  %2459 = vmatpush.msra.mxu0 0.0
  %2460 = vmatpush.msra.mxu0 0.0
  %v2461 = vand.u32 %v2149, 4294901760
  %2462 = vmatpush.msra.mxu0 %v2461
  %v2463 = vand.u32 %v2140, 4294901760
  %v2464 = vsub.f32 %v2140, %v2463
  %v2465 = vand.u32 %v2464, 4294901760
  %v2466 = vsub.f32 %v2464, %v2465
  %v2467 = vand.u32 %v2466, 4294901760
  %2468 = vmatmul.f32.gmra.mxu0 %v2467
  %v2469 = vpop.f32.mrf.mxu0
  %v2470 = vadd.f32 0.0, %v2469
  %2471 = vdwg.mxu0
  %2472 = vmatpush.msra.mxu0 0.0
  %2473 = vmatpush.msra.mxu0 0.0
  %2474 = vmatpush.msra.mxu0 0.0
  %2475 = vmatpush.msra.mxu0 0.0
  %2476 = vmatpush.msra.mxu0 0.0
  %2477 = vmatpush.msra.mxu0 0.0
  %2478 = vmatpush.msra.mxu0 0.0
  %2479 = vmatpush.msra.mxu0 0.0
  %2480 = vmatpush.msra.mxu0 0.0
  %2481 = vmatpush.msra.mxu0 0.0
  %2482 = vmatpush.msra.mxu0 0.0
  %2483 = vmatpush.msra.mxu0 0.0
  %2484 = vmatpush.msra.mxu0 0.0
  %2485 = vmatpush.msra.mxu0 0.0
  %2486 = vmatpush.msra.mxu0 0.0
  %v2487 = vand.u32 %v2149, 4294901760
  %v2488 = vsub.f32 %v2149, %v2487
  %v2489 = vand.u32 %v2488, 4294901760
  %v2490 = vsub.f32 %v2488, %v2489
  %v2491 = vand.u32 %v2490, 4294901760
  %2492 = vmatpush.msra.mxu0 %v2491
  %v2493 = vand.u32 %v2140, 4294901760
  %2494 = vmatmul.f32.gmra.mxu0 %v2493
  %v2495 = vpop.f32.mrf.mxu0
  %v2496 = vadd.f32 %v2470, %v2495
  %2497 = vdwg.mxu0
  %2498 = vmatpush.msra.mxu0 0.0
  %2499 = vmatpush.msra.mxu0 0.0
  %2500 = vmatpush.msra.mxu0 0.0
  %2501 = vmatpush.msra.mxu0 0.0
  %2502 = vmatpush.msra.mxu0 0.0
  %2503 = vmatpush.msra.mxu0 0.0
  %2504 = vmatpush.msra.mxu0 0.0
  %2505 = vmatpush.msra.mxu0 0.0
  %2506 = vmatpush.msra.mxu0 0.0
  %2507 = vmatpush.msra.mxu0 0.0
  %2508 = vmatpush.msra.mxu0 0.0
  %2509 = vmatpush.msra.mxu0 0.0
  %2510 = vmatpush.msra.mxu0 0.0
  %2511 = vmatpush.msra.mxu0 0.0
  %2512 = vmatpush.msra.mxu0 0.0
  %v2513 = vand.u32 %v2149, 4294901760
  %v2514 = vsub.f32 %v2149, %v2513
  %2515 = vmatpush.msra.mxu0 %v2514
  %v2516 = vand.u32 %v2140, 4294901760
  %v2517 = vsub.f32 %v2140, %v2516
  %2518 = vmatmul.f32.gmra.mxu0 %v2517
  %v2519 = vpop.f32.mrf.mxu0
  %v2520 = vadd.f32 %v2496, %v2519
  %2521 = vdwg.mxu0
  %2522 = vmatpush.msra.mxu0 0.0
  %2523 = vmatpush.msra.mxu0 0.0
  %2524 = vmatpush.msra.mxu0 0.0
  %2525 = vmatpush.msra.mxu0 0.0
  %2526 = vmatpush.msra.mxu0 0.0
  %2527 = vmatpush.msra.mxu0 0.0
  %2528 = vmatpush.msra.mxu0 0.0
  %2529 = vmatpush.msra.mxu0 0.0
  %2530 = vmatpush.msra.mxu0 0.0
  %2531 = vmatpush.msra.mxu0 0.0
  %2532 = vmatpush.msra.mxu0 0.0
  %2533 = vmatpush.msra.mxu0 0.0
  %2534 = vmatpush.msra.mxu0 0.0
  %2535 = vmatpush.msra.mxu0 0.0
  %2536 = vmatpush.msra.mxu0 0.0
  %v2537 = vand.u32 %v2149, 4294901760
  %2538 = vmatpush.msra.mxu0 %v2537
  %v2539 = vand.u32 %v2140, 4294901760
  %v2540 = vsub.f32 %v2140, %v2539
  %v2541 = vand.u32 %v2540, 4294901760
  %2542 = vmatmul.f32.gmra.mxu0 %v2541
  %v2543 = vpop.f32.mrf.mxu0
  %v2544 = vadd.f32 %v2520, %v2543
  %2545 = vdwg.mxu0
  %2546 = vmatpush.msra.mxu0 0.0
  %2547 = vmatpush.msra.mxu0 0.0
  %2548 = vmatpush.msra.mxu0 0.0
  %2549 = vmatpush.msra.mxu0 0.0
  %2550 = vmatpush.msra.mxu0 0.0
  %2551 = vmatpush.msra.mxu0 0.0
  %2552 = vmatpush.msra.mxu0 0.0
  %2553 = vmatpush.msra.mxu0 0.0
  %2554 = vmatpush.msra.mxu0 0.0
  %2555 = vmatpush.msra.mxu0 0.0
  %2556 = vmatpush.msra.mxu0 0.0
  %2557 = vmatpush.msra.mxu0 0.0
  %2558 = vmatpush.msra.mxu0 0.0
  %2559 = vmatpush.msra.mxu0 0.0
  %2560 = vmatpush.msra.mxu0 0.0
  %v2561 = vand.u32 %v2149, 4294901760
  %v2562 = vsub.f32 %v2149, %v2561
  %v2563 = vand.u32 %v2562, 4294901760
  %2564 = vmatpush.msra.mxu0 %v2563
  %v2565 = vand.u32 %v2140, 4294901760
  %2566 = vmatmul.f32.gmra.mxu0 %v2565
  %v2567 = vpop.f32.mrf.mxu0
  %v2568 = vadd.f32 %v2544, %v2567
  %2569 = vdwg.mxu0
  %2570 = vmatpush.msra.mxu0 0.0
  %2571 = vmatpush.msra.mxu0 0.0
  %2572 = vmatpush.msra.mxu0 0.0
  %2573 = vmatpush.msra.mxu0 0.0
  %2574 = vmatpush.msra.mxu0 0.0
  %2575 = vmatpush.msra.mxu0 0.0
  %2576 = vmatpush.msra.mxu0 0.0
  %2577 = vmatpush.msra.mxu0 0.0
  %2578 = vmatpush.msra.mxu0 0.0
  %2579 = vmatpush.msra.mxu0 0.0
  %2580 = vmatpush.msra.mxu0 0.0
  %2581 = vmatpush.msra.mxu0 0.0
  %2582 = vmatpush.msra.mxu0 0.0
  %2583 = vmatpush.msra.mxu0 0.0
  %2584 = vmatpush.msra.mxu0 0.0
  %v2585 = vand.u32 %v2149, 4294901760
  %2586 = vmatpush.msra.mxu0 %v2585
  %v2587 = vand.u32 %v2140, 4294901760
  %2588 = vmatmul.f32.gmra.mxu0 %v2587
  %v2589 = vpop.f32.mrf.mxu0
  %v2590 = vadd.f32 %v2568, %v2589
  %2591 = vdwg.mxu0
  %2592 = vmatpush.msra.mxu0 0.0
  %2593 = vmatpush.msra.mxu0 0.0
  %2594 = vmatpush.msra.mxu0 0.0
  %2595 = vmatpush.msra.mxu0 0.0
  %2596 = vmatpush.msra.mxu0 0.0
  %2597 = vmatpush.msra.mxu0 0.0
  %2598 = vmatpush.msra.mxu0 0.0
  %2599 = vmatpush.msra.mxu0 0.0
  %2600 = vmatpush.msra.mxu0 0.0
  %2601 = vmatpush.msra.mxu0 0.0
  %2602 = vmatpush.msra.mxu0 0.0
  %2603 = vmatpush.msra.mxu0 0.0
  %2604 = vmatpush.msra.mxu0 0.0
  %2605 = vmatpush.msra.mxu0 0.0
  %2606 = vmatpush.msra.mxu0 0.0
  %v2607 = vand.u32 %v2152, 4294901760
  %2608 = vmatpush.msra.mxu0 %v2607
  %v2609 = vand.u32 %v2140, 4294901760
  %v2610 = vsub.f32 %v2140, %v2609
  %v2611 = vand.u32 %v2610, 4294901760
  %v2612 = vsub.f32 %v2610, %v2611
  %v2613 = vand.u32 %v2612, 4294901760
  %2614 = vmatmul.f32.gmra.mxu0 %v2613
  %v2615 = vpop.f32.mrf.mxu0
  %v2616 = vadd.f32 0.0, %v2615
  %2617 = vdwg.mxu0
  %2618 = vmatpush.msra.mxu0 0.0
  %2619 = vmatpush.msra.mxu0 0.0
  %2620 = vmatpush.msra.mxu0 0.0
  %2621 = vmatpush.msra.mxu0 0.0
  %2622 = vmatpush.msra.mxu0 0.0
  %2623 = vmatpush.msra.mxu0 0.0
  %2624 = vmatpush.msra.mxu0 0.0
  %2625 = vmatpush.msra.mxu0 0.0
  %2626 = vmatpush.msra.mxu0 0.0
  %2627 = vmatpush.msra.mxu0 0.0
  %2628 = vmatpush.msra.mxu0 0.0
  %2629 = vmatpush.msra.mxu0 0.0
  %2630 = vmatpush.msra.mxu0 0.0
  %2631 = vmatpush.msra.mxu0 0.0
  %2632 = vmatpush.msra.mxu0 0.0
  %v2633 = vand.u32 %v2152, 4294901760
  %v2634 = vsub.f32 %v2152, %v2633
  %v2635 = vand.u32 %v2634, 4294901760
  %v2636 = vsub.f32 %v2634, %v2635
  %v2637 = vand.u32 %v2636, 4294901760
  %2638 = vmatpush.msra.mxu0 %v2637
  %v2639 = vand.u32 %v2140, 4294901760
  %2640 = vmatmul.f32.gmra.mxu0 %v2639
  %v2641 = vpop.f32.mrf.mxu0
  %v2642 = vadd.f32 %v2616, %v2641
  %2643 = vdwg.mxu0
  %2644 = vmatpush.msra.mxu0 0.0
  %2645 = vmatpush.msra.mxu0 0.0
  %2646 = vmatpush.msra.mxu0 0.0
  %2647 = vmatpush.msra.mxu0 0.0
  %2648 = vmatpush.msra.mxu0 0.0
  %2649 = vmatpush.msra.mxu0 0.0
  %2650 = vmatpush.msra.mxu0 0.0
  %2651 = vmatpush.msra.mxu0 0.0
  %2652 = vmatpush.msra.mxu0 0.0
  %2653 = vmatpush.msra.mxu0 0.0
  %2654 = vmatpush.msra.mxu0 0.0
  %2655 = vmatpush.msra.mxu0 0.0
  %2656 = vmatpush.msra.mxu0 0.0
  %2657 = vmatpush.msra.mxu0 0.0
  %2658 = vmatpush.msra.mxu0 0.0
  %v2659 = vand.u32 %v2152, 4294901760
  %v2660 = vsub.f32 %v2152, %v2659
  %2661 = vmatpush.msra.mxu0 %v2660
  %v2662 = vand.u32 %v2140, 4294901760
  %v2663 = vsub.f32 %v2140, %v2662
  %2664 = vmatmul.f32.gmra.mxu0 %v2663
  %v2665 = vpop.f32.mrf.mxu0
  %v2666 = vadd.f32 %v2642, %v2665
  %2667 = vdwg.mxu0
  %2668 = vmatpush.msra.mxu0 0.0
  %2669 = vmatpush.msra.mxu0 0.0
  %2670 = vmatpush.msra.mxu0 0.0
  %2671 = vmatpush.msra.mxu0 0.0
  %2672 = vmatpush.msra.mxu0 0.0
  %2673 = vmatpush.msra.mxu0 0.0
  %2674 = vmatpush.msra.mxu0 0.0
  %2675 = vmatpush.msra.mxu0 0.0
  %2676 = vmatpush.msra.mxu0 0.0
  %2677 = vmatpush.msra.mxu0 0.0
  %2678 = vmatpush.msra.mxu0 0.0
  %2679 = vmatpush.msra.mxu0 0.0
  %2680 = vmatpush.msra.mxu0 0.0
  %2681 = vmatpush.msra.mxu0 0.0
  %2682 = vmatpush.msra.mxu0 0.0
  %v2683 = vand.u32 %v2152, 4294901760
  %2684 = vmatpush.msra.mxu0 %v2683
  %v2685 = vand.u32 %v2140, 4294901760
  %v2686 = vsub.f32 %v2140, %v2685
  %v2687 = vand.u32 %v2686, 4294901760
  %2688 = vmatmul.f32.gmra.mxu0 %v2687
  %v2689 = vpop.f32.mrf.mxu0
  %v2690 = vadd.f32 %v2666, %v2689
  %2691 = vdwg.mxu0
  %2692 = vmatpush.msra.mxu0 0.0
  %2693 = vmatpush.msra.mxu0 0.0
  %2694 = vmatpush.msra.mxu0 0.0
  %2695 = vmatpush.msra.mxu0 0.0
  %2696 = vmatpush.msra.mxu0 0.0
  %2697 = vmatpush.msra.mxu0 0.0
  %2698 = vmatpush.msra.mxu0 0.0
  %2699 = vmatpush.msra.mxu0 0.0
  %2700 = vmatpush.msra.mxu0 0.0
  %2701 = vmatpush.msra.mxu0 0.0
  %2702 = vmatpush.msra.mxu0 0.0
  %2703 = vmatpush.msra.mxu0 0.0
  %2704 = vmatpush.msra.mxu0 0.0
  %2705 = vmatpush.msra.mxu0 0.0
  %2706 = vmatpush.msra.mxu0 0.0
  %v2707 = vand.u32 %v2152, 4294901760
  %v2708 = vsub.f32 %v2152, %v2707
  %v2709 = vand.u32 %v2708, 4294901760
  %2710 = vmatpush.msra.mxu0 %v2709
  %v2711 = vand.u32 %v2140, 4294901760
  %2712 = vmatmul.f32.gmra.mxu0 %v2711
  %v2713 = vpop.f32.mrf.mxu0
  %v2714 = vadd.f32 %v2690, %v2713
  %2715 = vdwg.mxu0
  %2716 = vmatpush.msra.mxu0 0.0
  %2717 = vmatpush.msra.mxu0 0.0
  %2718 = vmatpush.msra.mxu0 0.0
  %2719 = vmatpush.msra.mxu0 0.0
  %2720 = vmatpush.msra.mxu0 0.0
  %2721 = vmatpush.msra.mxu0 0.0
  %2722 = vmatpush.msra.mxu0 0.0
  %2723 = vmatpush.msra.mxu0 0.0
  %2724 = vmatpush.msra.mxu0 0.0
  %2725 = vmatpush.msra.mxu0 0.0
  %2726 = vmatpush.msra.mxu0 0.0
  %2727 = vmatpush.msra.mxu0 0.0
  %2728 = vmatpush.msra.mxu0 0.0
  %2729 = vmatpush.msra.mxu0 0.0
  %2730 = vmatpush.msra.mxu0 0.0
  %v2731 = vand.u32 %v2152, 4294901760
  %2732 = vmatpush.msra.mxu0 %v2731
  %v2733 = vand.u32 %v2140, 4294901760
  %2734 = vmatmul.f32.gmra.mxu0 %v2733
  %v2735 = vpop.f32.mrf.mxu0
  %v2736 = vadd.f32 %v2714, %v2735
  %2737 = vdwg.mxu0
  %v2738 = vadd.f32 %v2092, %v2298
  %v2739 = vadd.f32 %v2093, %v2444
  %v2740 = vadd.f32 %v2094, %v2590
  %v2741 = vadd.f32 %v2095, %v2736
  %s2742 = scalar_lea.vmem %s5, 16
  %v2743 = vld [vmem:[%s2742] sm:$0xf]
  %2744 = vst [vmem:[#allocation1] ss:$2 sm:$0xff] %v162
  %s2745 = scalar_lea.vmem [#allocation1], 16
  %2746 = vst [vmem:[%s2745] ss:$2 sm:$0xff] %v163
  %v2747 = vld.sshfl [vmem:[#allocation1] sm:$0xff pattern:$0x75316420]
  %v2748 = vld.sshfl [vmem:[#allocation1 + $0x8] sm:$0xff pattern:$0x75316420]
  %v2749 = vld.sshfl [vmem:[#allocation1 + $0x10] sm:$0xff pattern:$0x75316420]
  %v2750 = vld.sshfl [vmem:[#allocation1 + $0x18] sm:$0xff pattern:$0x75316420]
  %v2752 = vsel %vm251, %v2743, 0
  %v2754 = vsel %vm86, %v2747, 0
  %v2756 = vsel %vm86, %v2748, 0
  %v2758 = vsel %vm86, %v2749, 0
  %v2760 = vsel %vm86, %v2750, 0
  %2762 = vmatpush.msra.mxu0 0.0
  %2763 = vmatpush.msra.mxu0 0.0
  %2764 = vmatpush.msra.mxu0 0.0
  %2765 = vmatpush.msra.mxu0 0.0
  %2766 = vmatpush.msra.mxu0 0.0
  %2767 = vmatpush.msra.mxu0 0.0
  %2768 = vmatpush.msra.mxu0 0.0
  %2769 = vmatpush.msra.mxu0 0.0
  %2770 = vmatpush.msra.mxu0 0.0
  %2771 = vmatpush.msra.mxu0 0.0
  %2772 = vmatpush.msra.mxu0 0.0
  %2773 = vmatpush.msra.mxu0 0.0
  %2774 = vmatpush.msra.mxu0 0.0
  %2775 = vmatpush.msra.mxu0 0.0
  %2776 = vmatpush.msra.mxu0 0.0
  %v2777 = vand.u32 %v2754, 4294901760
  %2778 = vmatpush.msra.mxu0 %v2777
  %v2779 = vand.u32 %v2752, 4294901760
  %v2780 = vsub.f32 %v2752, %v2779
  %v2781 = vand.u32 %v2780, 4294901760
  %v2782 = vsub.f32 %v2780, %v2781
  %v2783 = vand.u32 %v2782, 4294901760
  %2784 = vmatmul.f32.gmra.mxu0 %v2783
  %v2785 = vpop.f32.mrf.mxu0
  %v2786 = vadd.f32 0.0, %v2785
  %2787 = vdwg.mxu0
  %2788 = vmatpush.msra.mxu0 0.0
  %2789 = vmatpush.msra.mxu0 0.0
  %2790 = vmatpush.msra.mxu0 0.0
  %2791 = vmatpush.msra.mxu0 0.0
  %2792 = vmatpush.msra.mxu0 0.0
  %2793 = vmatpush.msra.mxu0 0.0
  %2794 = vmatpush.msra.mxu0 0.0
  %2795 = vmatpush.msra.mxu0 0.0
  %2796 = vmatpush.msra.mxu0 0.0
  %2797 = vmatpush.msra.mxu0 0.0
  %2798 = vmatpush.msra.mxu0 0.0
  %2799 = vmatpush.msra.mxu0 0.0
  %2800 = vmatpush.msra.mxu0 0.0
  %2801 = vmatpush.msra.mxu0 0.0
  %2802 = vmatpush.msra.mxu0 0.0
  %v2803 = vand.u32 %v2754, 4294901760
  %v2804 = vsub.f32 %v2754, %v2803
  %v2805 = vand.u32 %v2804, 4294901760
  %v2806 = vsub.f32 %v2804, %v2805
  %v2807 = vand.u32 %v2806, 4294901760
  %2808 = vmatpush.msra.mxu0 %v2807
  %v2809 = vand.u32 %v2752, 4294901760
  %2810 = vmatmul.f32.gmra.mxu0 %v2809
  %v2811 = vpop.f32.mrf.mxu0
  %v2812 = vadd.f32 %v2786, %v2811
  %2813 = vdwg.mxu0
  %2814 = vmatpush.msra.mxu0 0.0
  %2815 = vmatpush.msra.mxu0 0.0
  %2816 = vmatpush.msra.mxu0 0.0
  %2817 = vmatpush.msra.mxu0 0.0
  %2818 = vmatpush.msra.mxu0 0.0
  %2819 = vmatpush.msra.mxu0 0.0
  %2820 = vmatpush.msra.mxu0 0.0
  %2821 = vmatpush.msra.mxu0 0.0
  %2822 = vmatpush.msra.mxu0 0.0
  %2823 = vmatpush.msra.mxu0 0.0
  %2824 = vmatpush.msra.mxu0 0.0
  %2825 = vmatpush.msra.mxu0 0.0
  %2826 = vmatpush.msra.mxu0 0.0
  %2827 = vmatpush.msra.mxu0 0.0
  %2828 = vmatpush.msra.mxu0 0.0
  %v2829 = vand.u32 %v2754, 4294901760
  %v2830 = vsub.f32 %v2754, %v2829
  %2831 = vmatpush.msra.mxu0 %v2830
  %v2832 = vand.u32 %v2752, 4294901760
  %v2833 = vsub.f32 %v2752, %v2832
  %2834 = vmatmul.f32.gmra.mxu0 %v2833
  %v2835 = vpop.f32.mrf.mxu0
  %v2836 = vadd.f32 %v2812, %v2835
  %2837 = vdwg.mxu0
  %2838 = vmatpush.msra.mxu0 0.0
  %2839 = vmatpush.msra.mxu0 0.0
  %2840 = vmatpush.msra.mxu0 0.0
  %2841 = vmatpush.msra.mxu0 0.0
  %2842 = vmatpush.msra.mxu0 0.0
  %2843 = vmatpush.msra.mxu0 0.0
  %2844 = vmatpush.msra.mxu0 0.0
  %2845 = vmatpush.msra.mxu0 0.0
  %2846 = vmatpush.msra.mxu0 0.0
  %2847 = vmatpush.msra.mxu0 0.0
  %2848 = vmatpush.msra.mxu0 0.0
  %2849 = vmatpush.msra.mxu0 0.0
  %2850 = vmatpush.msra.mxu0 0.0
  %2851 = vmatpush.msra.mxu0 0.0
  %2852 = vmatpush.msra.mxu0 0.0
  %v2853 = vand.u32 %v2754, 4294901760
  %2854 = vmatpush.msra.mxu0 %v2853
  %v2855 = vand.u32 %v2752, 4294901760
  %v2856 = vsub.f32 %v2752, %v2855
  %v2857 = vand.u32 %v2856, 4294901760
  %2858 = vmatmul.f32.gmra.mxu0 %v2857
  %v2859 = vpop.f32.mrf.mxu0
  %v2860 = vadd.f32 %v2836, %v2859
  %2861 = vdwg.mxu0
  %2862 = vmatpush.msra.mxu0 0.0
  %2863 = vmatpush.msra.mxu0 0.0
  %2864 = vmatpush.msra.mxu0 0.0
  %2865 = vmatpush.msra.mxu0 0.0
  %2866 = vmatpush.msra.mxu0 0.0
  %2867 = vmatpush.msra.mxu0 0.0
  %2868 = vmatpush.msra.mxu0 0.0
  %2869 = vmatpush.msra.mxu0 0.0
  %2870 = vmatpush.msra.mxu0 0.0
  %2871 = vmatpush.msra.mxu0 0.0
  %2872 = vmatpush.msra.mxu0 0.0
  %2873 = vmatpush.msra.mxu0 0.0
  %2874 = vmatpush.msra.mxu0 0.0
  %2875 = vmatpush.msra.mxu0 0.0
  %2876 = vmatpush.msra.mxu0 0.0
  %v2877 = vand.u32 %v2754, 4294901760
  %v2878 = vsub.f32 %v2754, %v2877
  %v2879 = vand.u32 %v2878, 4294901760
  %2880 = vmatpush.msra.mxu0 %v2879
  %v2881 = vand.u32 %v2752, 4294901760
  %2882 = vmatmul.f32.gmra.mxu0 %v2881
  %v2883 = vpop.f32.mrf.mxu0
  %v2884 = vadd.f32 %v2860, %v2883
  %2885 = vdwg.mxu0
  %2886 = vmatpush.msra.mxu0 0.0
  %2887 = vmatpush.msra.mxu0 0.0
  %2888 = vmatpush.msra.mxu0 0.0
  %2889 = vmatpush.msra.mxu0 0.0
  %2890 = vmatpush.msra.mxu0 0.0
  %2891 = vmatpush.msra.mxu0 0.0
  %2892 = vmatpush.msra.mxu0 0.0
  %2893 = vmatpush.msra.mxu0 0.0
  %2894 = vmatpush.msra.mxu0 0.0
  %2895 = vmatpush.msra.mxu0 0.0
  %2896 = vmatpush.msra.mxu0 0.0
  %2897 = vmatpush.msra.mxu0 0.0
  %2898 = vmatpush.msra.mxu0 0.0
  %2899 = vmatpush.msra.mxu0 0.0
  %2900 = vmatpush.msra.mxu0 0.0
  %v2901 = vand.u32 %v2754, 4294901760
  %2902 = vmatpush.msra.mxu0 %v2901
  %v2903 = vand.u32 %v2752, 4294901760
  %2904 = vmatmul.f32.gmra.mxu0 %v2903
  %v2905 = vpop.f32.mrf.mxu0
  %v2906 = vadd.f32 %v2884, %v2905
  %2907 = vdwg.mxu0
  %2908 = vmatpush.msra.mxu0 0.0
  %2909 = vmatpush.msra.mxu0 0.0
  %2910 = vmatpush.msra.mxu0 0.0
  %2911 = vmatpush.msra.mxu0 0.0
  %2912 = vmatpush.msra.mxu0 0.0
  %2913 = vmatpush.msra.mxu0 0.0
  %2914 = vmatpush.msra.mxu0 0.0
  %2915 = vmatpush.msra.mxu0 0.0
  %2916 = vmatpush.msra.mxu0 0.0
  %2917 = vmatpush.msra.mxu0 0.0
  %2918 = vmatpush.msra.mxu0 0.0
  %2919 = vmatpush.msra.mxu0 0.0
  %2920 = vmatpush.msra.mxu0 0.0
  %2921 = vmatpush.msra.mxu0 0.0
  %2922 = vmatpush.msra.mxu0 0.0
  %v2923 = vand.u32 %v2756, 4294901760
  %2924 = vmatpush.msra.mxu0 %v2923
  %v2925 = vand.u32 %v2752, 4294901760
  %v2926 = vsub.f32 %v2752, %v2925
  %v2927 = vand.u32 %v2926, 4294901760
  %v2928 = vsub.f32 %v2926, %v2927
  %v2929 = vand.u32 %v2928, 4294901760
  %2930 = vmatmul.f32.gmra.mxu0 %v2929
  %v2931 = vpop.f32.mrf.mxu0
  %v2932 = vadd.f32 0.0, %v2931
  %2933 = vdwg.mxu0
  %2934 = vmatpush.msra.mxu0 0.0
  %2935 = vmatpush.msra.mxu0 0.0
  %2936 = vmatpush.msra.mxu0 0.0
  %2937 = vmatpush.msra.mxu0 0.0
  %2938 = vmatpush.msra.mxu0 0.0
  %2939 = vmatpush.msra.mxu0 0.0
  %2940 = vmatpush.msra.mxu0 0.0
  %2941 = vmatpush.msra.mxu0 0.0
  %2942 = vmatpush.msra.mxu0 0.0
  %2943 = vmatpush.msra.mxu0 0.0
  %2944 = vmatpush.msra.mxu0 0.0
  %2945 = vmatpush.msra.mxu0 0.0
  %2946 = vmatpush.msra.mxu0 0.0
  %2947 = vmatpush.msra.mxu0 0.0
  %2948 = vmatpush.msra.mxu0 0.0
  %v2949 = vand.u32 %v2756, 4294901760
  %v2950 = vsub.f32 %v2756, %v2949
  %v2951 = vand.u32 %v2950, 4294901760
  %v2952 = vsub.f32 %v2950, %v2951
  %v2953 = vand.u32 %v2952, 4294901760
  %2954 = vmatpush.msra.mxu0 %v2953
  %v2955 = vand.u32 %v2752, 4294901760
  %2956 = vmatmul.f32.gmra.mxu0 %v2955
  %v2957 = vpop.f32.mrf.mxu0
  %v2958 = vadd.f32 %v2932, %v2957
  %2959 = vdwg.mxu0
  %2960 = vmatpush.msra.mxu0 0.0
  %2961 = vmatpush.msra.mxu0 0.0
  %2962 = vmatpush.msra.mxu0 0.0
  %2963 = vmatpush.msra.mxu0 0.0
  %2964 = vmatpush.msra.mxu0 0.0
  %2965 = vmatpush.msra.mxu0 0.0
  %2966 = vmatpush.msra.mxu0 0.0
  %2967 = vmatpush.msra.mxu0 0.0
  %2968 = vmatpush.msra.mxu0 0.0
  %2969 = vmatpush.msra.mxu0 0.0
  %2970 = vmatpush.msra.mxu0 0.0
  %2971 = vmatpush.msra.mxu0 0.0
  %2972 = vmatpush.msra.mxu0 0.0
  %2973 = vmatpush.msra.mxu0 0.0
  %2974 = vmatpush.msra.mxu0 0.0
  %v2975 = vand.u32 %v2756, 4294901760
  %v2976 = vsub.f32 %v2756, %v2975
  %2977 = vmatpush.msra.mxu0 %v2976
  %v2978 = vand.u32 %v2752, 4294901760
  %v2979 = vsub.f32 %v2752, %v2978
  %2980 = vmatmul.f32.gmra.mxu0 %v2979
  %v2981 = vpop.f32.mrf.mxu0
  %v2982 = vadd.f32 %v2958, %v2981
  %2983 = vdwg.mxu0
  %2984 = vmatpush.msra.mxu0 0.0
  %2985 = vmatpush.msra.mxu0 0.0
  %2986 = vmatpush.msra.mxu0 0.0
  %2987 = vmatpush.msra.mxu0 0.0
  %2988 = vmatpush.msra.mxu0 0.0
  %2989 = vmatpush.msra.mxu0 0.0
  %2990 = vmatpush.msra.mxu0 0.0
  %2991 = vmatpush.msra.mxu0 0.0
  %2992 = vmatpush.msra.mxu0 0.0
  %2993 = vmatpush.msra.mxu0 0.0
  %2994 = vmatpush.msra.mxu0 0.0
  %2995 = vmatpush.msra.mxu0 0.0
  %2996 = vmatpush.msra.mxu0 0.0
  %2997 = vmatpush.msra.mxu0 0.0
  %2998 = vmatpush.msra.mxu0 0.0
  %v2999 = vand.u32 %v2756, 4294901760
  %3000 = vmatpush.msra.mxu0 %v2999
  %v3001 = vand.u32 %v2752, 4294901760
  %v3002 = vsub.f32 %v2752, %v3001
  %v3003 = vand.u32 %v3002, 4294901760
  %3004 = vmatmul.f32.gmra.mxu0 %v3003
  %v3005 = vpop.f32.mrf.mxu0
  %v3006 = vadd.f32 %v2982, %v3005
  %3007 = vdwg.mxu0
  %3008 = vmatpush.msra.mxu0 0.0
  %3009 = vmatpush.msra.mxu0 0.0
  %3010 = vmatpush.msra.mxu0 0.0
  %3011 = vmatpush.msra.mxu0 0.0
  %3012 = vmatpush.msra.mxu0 0.0
  %3013 = vmatpush.msra.mxu0 0.0
  %3014 = vmatpush.msra.mxu0 0.0
  %3015 = vmatpush.msra.mxu0 0.0
  %3016 = vmatpush.msra.mxu0 0.0
  %3017 = vmatpush.msra.mxu0 0.0
  %3018 = vmatpush.msra.mxu0 0.0
  %3019 = vmatpush.msra.mxu0 0.0
  %3020 = vmatpush.msra.mxu0 0.0
  %3021 = vmatpush.msra.mxu0 0.0
  %3022 = vmatpush.msra.mxu0 0.0
  %v3023 = vand.u32 %v2756, 4294901760
  %v3024 = vsub.f32 %v2756, %v3023
  %v3025 = vand.u32 %v3024, 4294901760
  %3026 = vmatpush.msra.mxu0 %v3025
  %v3027 = vand.u32 %v2752, 4294901760
  %3028 = vmatmul.f32.gmra.mxu0 %v3027
  %v3029 = vpop.f32.mrf.mxu0
  %v3030 = vadd.f32 %v3006, %v3029
  %3031 = vdwg.mxu0
  %3032 = vmatpush.msra.mxu0 0.0
  %3033 = vmatpush.msra.mxu0 0.0
  %3034 = vmatpush.msra.mxu0 0.0
  %3035 = vmatpush.msra.mxu0 0.0
  %3036 = vmatpush.msra.mxu0 0.0
  %3037 = vmatpush.msra.mxu0 0.0
  %3038 = vmatpush.msra.mxu0 0.0
  %3039 = vmatpush.msra.mxu0 0.0
  %3040 = vmatpush.msra.mxu0 0.0
  %3041 = vmatpush.msra.mxu0 0.0
  %3042 = vmatpush.msra.mxu0 0.0
  %3043 = vmatpush.msra.mxu0 0.0
  %3044 = vmatpush.msra.mxu0 0.0
  %3045 = vmatpush.msra.mxu0 0.0
  %3046 = vmatpush.msra.mxu0 0.0
  %v3047 = vand.u32 %v2756, 4294901760
  %3048 = vmatpush.msra.mxu0 %v3047
  %v3049 = vand.u32 %v2752, 4294901760
  %3050 = vmatmul.f32.gmra.mxu0 %v3049
  %v3051 = vpop.f32.mrf.mxu0
  %v3052 = vadd.f32 %v3030, %v3051
  %3053 = vdwg.mxu0
  %3054 = vmatpush.msra.mxu0 0.0
  %3055 = vmatpush.msra.mxu0 0.0
  %3056 = vmatpush.msra.mxu0 0.0
  %3057 = vmatpush.msra.mxu0 0.0
  %3058 = vmatpush.msra.mxu0 0.0
  %3059 = vmatpush.msra.mxu0 0.0
  %3060 = vmatpush.msra.mxu0 0.0
  %3061 = vmatpush.msra.mxu0 0.0
  %3062 = vmatpush.msra.mxu0 0.0
  %3063 = vmatpush.msra.mxu0 0.0
  %3064 = vmatpush.msra.mxu0 0.0
  %3065 = vmatpush.msra.mxu0 0.0
  %3066 = vmatpush.msra.mxu0 0.0
  %3067 = vmatpush.msra.mxu0 0.0
  %3068 = vmatpush.msra.mxu0 0.0
  %v3069 = vand.u32 %v2758, 4294901760
  %3070 = vmatpush.msra.mxu0 %v3069
  %v3071 = vand.u32 %v2752, 4294901760
  %v3072 = vsub.f32 %v2752, %v3071
  %v3073 = vand.u32 %v3072, 4294901760
  %v3074 = vsub.f32 %v3072, %v3073
  %v3075 = vand.u32 %v3074, 4294901760
  %3076 = vmatmul.f32.gmra.mxu0 %v3075
  %v3077 = vpop.f32.mrf.mxu0
  %v3078 = vadd.f32 0.0, %v3077
  %3079 = vdwg.mxu0
  %3080 = vmatpush.msra.mxu0 0.0
  %3081 = vmatpush.msra.mxu0 0.0
  %3082 = vmatpush.msra.mxu0 0.0
  %3083 = vmatpush.msra.mxu0 0.0
  %3084 = vmatpush.msra.mxu0 0.0
  %3085 = vmatpush.msra.mxu0 0.0
  %3086 = vmatpush.msra.mxu0 0.0
  %3087 = vmatpush.msra.mxu0 0.0
  %3088 = vmatpush.msra.mxu0 0.0
  %3089 = vmatpush.msra.mxu0 0.0
  %3090 = vmatpush.msra.mxu0 0.0
  %3091 = vmatpush.msra.mxu0 0.0
  %3092 = vmatpush.msra.mxu0 0.0
  %3093 = vmatpush.msra.mxu0 0.0
  %3094 = vmatpush.msra.mxu0 0.0
  %v3095 = vand.u32 %v2758, 4294901760
  %v3096 = vsub.f32 %v2758, %v3095
  %v3097 = vand.u32 %v3096, 4294901760
  %v3098 = vsub.f32 %v3096, %v3097
  %v3099 = vand.u32 %v3098, 4294901760
  %3100 = vmatpush.msra.mxu0 %v3099
  %v3101 = vand.u32 %v2752, 4294901760
  %3102 = vmatmul.f32.gmra.mxu0 %v3101
  %v3103 = vpop.f32.mrf.mxu0
  %v3104 = vadd.f32 %v3078, %v3103
  %3105 = vdwg.mxu0
  %3106 = vmatpush.msra.mxu0 0.0
  %3107 = vmatpush.msra.mxu0 0.0
  %3108 = vmatpush.msra.mxu0 0.0
  %3109 = vmatpush.msra.mxu0 0.0
  %3110 = vmatpush.msra.mxu0 0.0
  %3111 = vmatpush.msra.mxu0 0.0
  %3112 = vmatpush.msra.mxu0 0.0
  %3113 = vmatpush.msra.mxu0 0.0
  %3114 = vmatpush.msra.mxu0 0.0
  %3115 = vmatpush.msra.mxu0 0.0
  %3116 = vmatpush.msra.mxu0 0.0
  %3117 = vmatpush.msra.mxu0 0.0
  %3118 = vmatpush.msra.mxu0 0.0
  %3119 = vmatpush.msra.mxu0 0.0
  %3120 = vmatpush.msra.mxu0 0.0
  %v3121 = vand.u32 %v2758, 4294901760
  %v3122 = vsub.f32 %v2758, %v3121
  %3123 = vmatpush.msra.mxu0 %v3122
  %v3124 = vand.u32 %v2752, 4294901760
  %v3125 = vsub.f32 %v2752, %v3124
  %3126 = vmatmul.f32.gmra.mxu0 %v3125
  %v3127 = vpop.f32.mrf.mxu0
  %v3128 = vadd.f32 %v3104, %v3127
  %3129 = vdwg.mxu0
  %3130 = vmatpush.msra.mxu0 0.0
  %3131 = vmatpush.msra.mxu0 0.0
  %3132 = vmatpush.msra.mxu0 0.0
  %3133 = vmatpush.msra.mxu0 0.0
  %3134 = vmatpush.msra.mxu0 0.0
  %3135 = vmatpush.msra.mxu0 0.0
  %3136 = vmatpush.msra.mxu0 0.0
  %3137 = vmatpush.msra.mxu0 0.0
  %3138 = vmatpush.msra.mxu0 0.0
  %3139 = vmatpush.msra.mxu0 0.0
  %3140 = vmatpush.msra.mxu0 0.0
  %3141 = vmatpush.msra.mxu0 0.0
  %3142 = vmatpush.msra.mxu0 0.0
  %3143 = vmatpush.msra.mxu0 0.0
  %3144 = vmatpush.msra.mxu0 0.0
  %v3145 = vand.u32 %v2758, 4294901760
  %3146 = vmatpush.msra.mxu0 %v3145
  %v3147 = vand.u32 %v2752, 4294901760
  %v3148 = vsub.f32 %v2752, %v3147
  %v3149 = vand.u32 %v3148, 4294901760
  %3150 = vmatmul.f32.gmra.mxu0 %v3149
  %v3151 = vpop.f32.mrf.mxu0
  %v3152 = vadd.f32 %v3128, %v3151
  %3153 = vdwg.mxu0
  %3154 = vmatpush.msra.mxu0 0.0
  %3155 = vmatpush.msra.mxu0 0.0
  %3156 = vmatpush.msra.mxu0 0.0
  %3157 = vmatpush.msra.mxu0 0.0
  %3158 = vmatpush.msra.mxu0 0.0
  %3159 = vmatpush.msra.mxu0 0.0
  %3160 = vmatpush.msra.mxu0 0.0
  %3161 = vmatpush.msra.mxu0 0.0
  %3162 = vmatpush.msra.mxu0 0.0
  %3163 = vmatpush.msra.mxu0 0.0
  %3164 = vmatpush.msra.mxu0 0.0
  %3165 = vmatpush.msra.mxu0 0.0
  %3166 = vmatpush.msra.mxu0 0.0
  %3167 = vmatpush.msra.mxu0 0.0
  %3168 = vmatpush.msra.mxu0 0.0
  %v3169 = vand.u32 %v2758, 4294901760
  %v3170 = vsub.f32 %v2758, %v3169
  %v3171 = vand.u32 %v3170, 4294901760
  %3172 = vmatpush.msra.mxu0 %v3171
  %v3173 = vand.u32 %v2752, 4294901760
  %3174 = vmatmul.f32.gmra.mxu0 %v3173
  %v3175 = vpop.f32.mrf.mxu0
  %v3176 = vadd.f32 %v3152, %v3175
  %3177 = vdwg.mxu0
  %3178 = vmatpush.msra.mxu0 0.0
  %3179 = vmatpush.msra.mxu0 0.0
  %3180 = vmatpush.msra.mxu0 0.0
  %3181 = vmatpush.msra.mxu0 0.0
  %3182 = vmatpush.msra.mxu0 0.0
  %3183 = vmatpush.msra.mxu0 0.0
  %3184 = vmatpush.msra.mxu0 0.0
  %3185 = vmatpush.msra.mxu0 0.0
  %3186 = vmatpush.msra.mxu0 0.0
  %3187 = vmatpush.msra.mxu0 0.0
  %3188 = vmatpush.msra.mxu0 0.0
  %3189 = vmatpush.msra.mxu0 0.0
  %3190 = vmatpush.msra.mxu0 0.0
  %3191 = vmatpush.msra.mxu0 0.0
  %3192 = vmatpush.msra.mxu0 0.0
  %v3193 = vand.u32 %v2758, 4294901760
  %3194 = vmatpush.msra.mxu0 %v3193
  %v3195 = vand.u32 %v2752, 4294901760
  %3196 = vmatmul.f32.gmra.mxu0 %v3195
  %v3197 = vpop.f32.mrf.mxu0
  %v3198 = vadd.f32 %v3176, %v3197
  %3199 = vdwg.mxu0
  %3200 = vmatpush.msra.mxu0 0.0
  %3201 = vmatpush.msra.mxu0 0.0
  %3202 = vmatpush.msra.mxu0 0.0
  %3203 = vmatpush.msra.mxu0 0.0
  %3204 = vmatpush.msra.mxu0 0.0
  %3205 = vmatpush.msra.mxu0 0.0
  %3206 = vmatpush.msra.mxu0 0.0
  %3207 = vmatpush.msra.mxu0 0.0
  %3208 = vmatpush.msra.mxu0 0.0
  %3209 = vmatpush.msra.mxu0 0.0
  %3210 = vmatpush.msra.mxu0 0.0
  %3211 = vmatpush.msra.mxu0 0.0
  %3212 = vmatpush.msra.mxu0 0.0
  %3213 = vmatpush.msra.mxu0 0.0
  %3214 = vmatpush.msra.mxu0 0.0
  %v3215 = vand.u32 %v2760, 4294901760
  %3216 = vmatpush.msra.mxu0 %v3215
  %v3217 = vand.u32 %v2752, 4294901760
  %v3218 = vsub.f32 %v2752, %v3217
  %v3219 = vand.u32 %v3218, 4294901760
  %v3220 = vsub.f32 %v3218, %v3219
  %v3221 = vand.u32 %v3220, 4294901760
  %3222 = vmatmul.f32.gmra.mxu0 %v3221
  %v3223 = vpop.f32.mrf.mxu0
  %v3224 = vadd.f32 0.0, %v3223
  %3225 = vdwg.mxu0
  %3226 = vmatpush.msra.mxu0 0.0
  %3227 = vmatpush.msra.mxu0 0.0
  %3228 = vmatpush.msra.mxu0 0.0
  %3229 = vmatpush.msra.mxu0 0.0
  %3230 = vmatpush.msra.mxu0 0.0
  %3231 = vmatpush.msra.mxu0 0.0
  %3232 = vmatpush.msra.mxu0 0.0
  %3233 = vmatpush.msra.mxu0 0.0
  %3234 = vmatpush.msra.mxu0 0.0
  %3235 = vmatpush.msra.mxu0 0.0
  %3236 = vmatpush.msra.mxu0 0.0
  %3237 = vmatpush.msra.mxu0 0.0
  %3238 = vmatpush.msra.mxu0 0.0
  %3239 = vmatpush.msra.mxu0 0.0
  %3240 = vmatpush.msra.mxu0 0.0
  %v3241 = vand.u32 %v2760, 4294901760
  %v3242 = vsub.f32 %v2760, %v3241
  %v3243 = vand.u32 %v3242, 4294901760
  %v3244 = vsub.f32 %v3242, %v3243
  %v3245 = vand.u32 %v3244, 4294901760
  %3246 = vmatpush.msra.mxu0 %v3245
  %v3247 = vand.u32 %v2752, 4294901760
  %3248 = vmatmul.f32.gmra.mxu0 %v3247
  %v3249 = vpop.f32.mrf.mxu0
  %v3250 = vadd.f32 %v3224, %v3249
  %3251 = vdwg.mxu0
  %3252 = vmatpush.msra.mxu0 0.0
  %3253 = vmatpush.msra.mxu0 0.0
  %3254 = vmatpush.msra.mxu0 0.0
  %3255 = vmatpush.msra.mxu0 0.0
  %3256 = vmatpush.msra.mxu0 0.0
  %3257 = vmatpush.msra.mxu0 0.0
  %3258 = vmatpush.msra.mxu0 0.0
  %3259 = vmatpush.msra.mxu0 0.0
  %3260 = vmatpush.msra.mxu0 0.0
  %3261 = vmatpush.msra.mxu0 0.0
  %3262 = vmatpush.msra.mxu0 0.0
  %3263 = vmatpush.msra.mxu0 0.0
  %3264 = vmatpush.msra.mxu0 0.0
  %3265 = vmatpush.msra.mxu0 0.0
  %3266 = vmatpush.msra.mxu0 0.0
  %v3267 = vand.u32 %v2760, 4294901760
  %v3268 = vsub.f32 %v2760, %v3267
  %3269 = vmatpush.msra.mxu0 %v3268
  %v3270 = vand.u32 %v2752, 4294901760
  %v3271 = vsub.f32 %v2752, %v3270
  %3272 = vmatmul.f32.gmra.mxu0 %v3271
  %v3273 = vpop.f32.mrf.mxu0
  %v3274 = vadd.f32 %v3250, %v3273
  %3275 = vdwg.mxu0
  %3276 = vmatpush.msra.mxu0 0.0
  %3277 = vmatpush.msra.mxu0 0.0
  %3278 = vmatpush.msra.mxu0 0.0
  %3279 = vmatpush.msra.mxu0 0.0
  %3280 = vmatpush.msra.mxu0 0.0
  %3281 = vmatpush.msra.mxu0 0.0
  %3282 = vmatpush.msra.mxu0 0.0
  %3283 = vmatpush.msra.mxu0 0.0
  %3284 = vmatpush.msra.mxu0 0.0
  %3285 = vmatpush.msra.mxu0 0.0
  %3286 = vmatpush.msra.mxu0 0.0
  %3287 = vmatpush.msra.mxu0 0.0
  %3288 = vmatpush.msra.mxu0 0.0
  %3289 = vmatpush.msra.mxu0 0.0
  %3290 = vmatpush.msra.mxu0 0.0
  %v3291 = vand.u32 %v2760, 4294901760
  %3292 = vmatpush.msra.mxu0 %v3291
  %v3293 = vand.u32 %v2752, 4294901760
  %v3294 = vsub.f32 %v2752, %v3293
  %v3295 = vand.u32 %v3294, 4294901760
  %3296 = vmatmul.f32.gmra.mxu0 %v3295
  %v3297 = vpop.f32.mrf.mxu0
  %v3298 = vadd.f32 %v3274, %v3297
  %3299 = vdwg.mxu0
  %3300 = vmatpush.msra.mxu0 0.0
  %3301 = vmatpush.msra.mxu0 0.0
  %3302 = vmatpush.msra.mxu0 0.0
  %3303 = vmatpush.msra.mxu0 0.0
  %3304 = vmatpush.msra.mxu0 0.0
  %3305 = vmatpush.msra.mxu0 0.0
  %3306 = vmatpush.msra.mxu0 0.0
  %3307 = vmatpush.msra.mxu0 0.0
  %3308 = vmatpush.msra.mxu0 0.0
  %3309 = vmatpush.msra.mxu0 0.0
  %3310 = vmatpush.msra.mxu0 0.0
  %3311 = vmatpush.msra.mxu0 0.0
  %3312 = vmatpush.msra.mxu0 0.0
  %3313 = vmatpush.msra.mxu0 0.0
  %3314 = vmatpush.msra.mxu0 0.0
  %v3315 = vand.u32 %v2760, 4294901760
  %v3316 = vsub.f32 %v2760, %v3315
  %v3317 = vand.u32 %v3316, 4294901760
  %3318 = vmatpush.msra.mxu0 %v3317
  %v3319 = vand.u32 %v2752, 4294901760
  %3320 = vmatmul.f32.gmra.mxu0 %v3319
  %v3321 = vpop.f32.mrf.mxu0
  %v3322 = vadd.f32 %v3298, %v3321
  %3323 = vdwg.mxu0
  %3324 = vmatpush.msra.mxu0 0.0
  %3325 = vmatpush.msra.mxu0 0.0
  %3326 = vmatpush.msra.mxu0 0.0
  %3327 = vmatpush.msra.mxu0 0.0
  %3328 = vmatpush.msra.mxu0 0.0
  %3329 = vmatpush.msra.mxu0 0.0
  %3330 = vmatpush.msra.mxu0 0.0
  %3331 = vmatpush.msra.mxu0 0.0
  %3332 = vmatpush.msra.mxu0 0.0
  %3333 = vmatpush.msra.mxu0 0.0
  %3334 = vmatpush.msra.mxu0 0.0
  %3335 = vmatpush.msra.mxu0 0.0
  %3336 = vmatpush.msra.mxu0 0.0
  %3337 = vmatpush.msra.mxu0 0.0
  %3338 = vmatpush.msra.mxu0 0.0
  %v3339 = vand.u32 %v2760, 4294901760
  %3340 = vmatpush.msra.mxu0 %v3339
  %v3341 = vand.u32 %v2752, 4294901760
  %3342 = vmatmul.f32.gmra.mxu0 %v3341
  %v3343 = vpop.f32.mrf.mxu0
  %v3344 = vadd.f32 %v3322, %v3343
  %3345 = vdwg.mxu0
  %v3346 = vadd.f32 %v2738, %v2906
  %v3347 = vadd.f32 %v2739, %v3052
  %v3348 = vadd.f32 %v2740, %v3198
  %v3349 = vadd.f32 %v2741, %v3344
  %3350 = vst [vmem:[#allocation1] ss:$2 sm:$0xff] %v162
  %s3351 = scalar_lea.vmem [#allocation1], 16
  %3352 = vst [vmem:[%s3351] ss:$2 sm:$0xff] %v163
  %v3353 = vld.sshfl [vmem:[#allocation1] sm:$0xff pattern:$0x75316420]
  %v3354 = vld.sshfl [vmem:[#allocation1 + $0x8] sm:$0xff pattern:$0x75316420]
  %v3355 = vld.sshfl [vmem:[#allocation1 + $0x10] sm:$0xff pattern:$0x75316420]
  %v3356 = vld.sshfl [vmem:[#allocation1 + $0x18] sm:$0xff pattern:$0x75316420]
  %3357 = vrot.lane.b32.xlu0 %v3353, 127
  %v3358 = vpop.permute.xlu0 %3357
  %3359 = vrot.lane.b32.xlu0 %v3354, 127
  %v3360 = vpop.permute.xlu0 %3359
  %3361 = vrot.lane.b32.xlu0 %v3355, 127
  %v3362 = vpop.permute.xlu0 %3361
  %3363 = vrot.lane.b32.xlu0 %v3356, 127
  %v3364 = vpop.permute.xlu0 %3363
  %vm3365 = vcmask 1039360
  %v3366 = vsel %vm3365, %v3358, %v3360
  %v3367 = vsel %vm3365, %v3360, %v3362
  %v3368 = vsel %vm3365, %v3362, %v3364
  %3373 = vst [vmem:[#allocation1] ss:$2 sm:$0xff] %v162
  %v3374 = vld.sshfl [vmem:[#allocation1] sm:$0xff pattern:$0x75316420]
  %3375 = vrot.lane.b32.xlu0 %v3374, 127
  %v3376 = vpop.permute.xlu0 %3375
  %v3378 = vsel %vm3365, %v3364, %v3376
  %v3379 = vsel %vm51, 1, 0
  %v3380 = vsel %vm52, 1, 0
  %v3381 = vsel %vm53, 1, 0
  %v3382 = vsel %vm54, 1, 0
  %vm3383 = vcmp.eq.s32.totalorder %v3379, 1
  %vm3384 = vcmp.eq.s32.totalorder %v3380, 1
  %vm3385 = vcmp.eq.s32.totalorder %v3381, 1
  %vm3386 = vcmp.eq.s32.totalorder %v3382, 1
  %v3387 = vsel %vm3383, %v3366, 0.0
  %v3388 = vsel %vm3384, %v3367, 0.0
  %v3389 = vsel %vm3385, %v3368, 0.0
  %v3390 = vsel %vm3386, %v3378, 0.0
  %s3391 = scalar_lea.vmem %s5, 20
  %v3392 = vld [vmem:[%s3391] sm:$0xf]
  %v3394 = vsel %vm251, %v3392, 0
  %v3397 = vsel %vm86, %v3387, 0
  %v3400 = vsel %vm86, %v3388, 0
  %v3403 = vsel %vm86, %v3389, 0
  %v3406 = vsel %vm86, %v3390, 0
  %3408 = vmatpush.msra.mxu0 0.0
  %3409 = vmatpush.msra.mxu0 0.0
  %3410 = vmatpush.msra.mxu0 0.0
  %3411 = vmatpush.msra.mxu0 0.0
  %3412 = vmatpush.msra.mxu0 0.0
  %3413 = vmatpush.msra.mxu0 0.0
  %3414 = vmatpush.msra.mxu0 0.0
  %3415 = vmatpush.msra.mxu0 0.0
  %3416 = vmatpush.msra.mxu0 0.0
  %3417 = vmatpush.msra.mxu0 0.0
  %3418 = vmatpush.msra.mxu0 0.0
  %3419 = vmatpush.msra.mxu0 0.0
  %3420 = vmatpush.msra.mxu0 0.0
  %3421 = vmatpush.msra.mxu0 0.0
  %3422 = vmatpush.msra.mxu0 0.0
  %v3423 = vand.u32 %v3397, 4294901760
  %3424 = vmatpush.msra.mxu0 %v3423
  %v3425 = vand.u32 %v3394, 4294901760
  %v3426 = vsub.f32 %v3394, %v3425
  %v3427 = vand.u32 %v3426, 4294901760
  %v3428 = vsub.f32 %v3426, %v3427
  %v3429 = vand.u32 %v3428, 4294901760
  %3430 = vmatmul.f32.gmra.mxu0 %v3429
  %v3431 = vpop.f32.mrf.mxu0
  %v3432 = vadd.f32 0.0, %v3431
  %3433 = vdwg.mxu0
  %3434 = vmatpush.msra.mxu0 0.0
  %3435 = vmatpush.msra.mxu0 0.0
  %3436 = vmatpush.msra.mxu0 0.0
  %3437 = vmatpush.msra.mxu0 0.0
  %3438 = vmatpush.msra.mxu0 0.0
  %3439 = vmatpush.msra.mxu0 0.0
  %3440 = vmatpush.msra.mxu0 0.0
  %3441 = vmatpush.msra.mxu0 0.0
  %3442 = vmatpush.msra.mxu0 0.0
  %3443 = vmatpush.msra.mxu0 0.0
  %3444 = vmatpush.msra.mxu0 0.0
  %3445 = vmatpush.msra.mxu0 0.0
  %3446 = vmatpush.msra.mxu0 0.0
  %3447 = vmatpush.msra.mxu0 0.0
  %3448 = vmatpush.msra.mxu0 0.0
  %v3449 = vand.u32 %v3397, 4294901760
  %v3450 = vsub.f32 %v3397, %v3449
  %v3451 = vand.u32 %v3450, 4294901760
  %v3452 = vsub.f32 %v3450, %v3451
  %v3453 = vand.u32 %v3452, 4294901760
  %3454 = vmatpush.msra.mxu0 %v3453
  %v3455 = vand.u32 %v3394, 4294901760
  %3456 = vmatmul.f32.gmra.mxu0 %v3455
  %v3457 = vpop.f32.mrf.mxu0
  %v3458 = vadd.f32 %v3432, %v3457
  %3459 = vdwg.mxu0
  %3460 = vmatpush.msra.mxu0 0.0
  %3461 = vmatpush.msra.mxu0 0.0
  %3462 = vmatpush.msra.mxu0 0.0
  %3463 = vmatpush.msra.mxu0 0.0
  %3464 = vmatpush.msra.mxu0 0.0
  %3465 = vmatpush.msra.mxu0 0.0
  %3466 = vmatpush.msra.mxu0 0.0
  %3467 = vmatpush.msra.mxu0 0.0
  %3468 = vmatpush.msra.mxu0 0.0
  %3469 = vmatpush.msra.mxu0 0.0
  %3470 = vmatpush.msra.mxu0 0.0
  %3471 = vmatpush.msra.mxu0 0.0
  %3472 = vmatpush.msra.mxu0 0.0
  %3473 = vmatpush.msra.mxu0 0.0
  %3474 = vmatpush.msra.mxu0 0.0
  %v3475 = vand.u32 %v3397, 4294901760
  %v3476 = vsub.f32 %v3397, %v3475
  %3477 = vmatpush.msra.mxu0 %v3476
  %v3478 = vand.u32 %v3394, 4294901760
  %v3479 = vsub.f32 %v3394, %v3478
  %3480 = vmatmul.f32.gmra.mxu0 %v3479
  %v3481 = vpop.f32.mrf.mxu0
  %v3482 = vadd.f32 %v3458, %v3481
  %3483 = vdwg.mxu0
  %3484 = vmatpush.msra.mxu0 0.0
  %3485 = vmatpush.msra.mxu0 0.0
  %3486 = vmatpush.msra.mxu0 0.0
  %3487 = vmatpush.msra.mxu0 0.0
  %3488 = vmatpush.msra.mxu0 0.0
  %3489 = vmatpush.msra.mxu0 0.0
  %3490 = vmatpush.msra.mxu0 0.0
  %3491 = vmatpush.msra.mxu0 0.0
  %3492 = vmatpush.msra.mxu0 0.0
  %3493 = vmatpush.msra.mxu0 0.0
  %3494 = vmatpush.msra.mxu0 0.0
  %3495 = vmatpush.msra.mxu0 0.0
  %3496 = vmatpush.msra.mxu0 0.0
  %3497 = vmatpush.msra.mxu0 0.0
  %3498 = vmatpush.msra.mxu0 0.0
  %v3499 = vand.u32 %v3397, 4294901760
  %3500 = vmatpush.msra.mxu0 %v3499
  %v3501 = vand.u32 %v3394, 4294901760
  %v3502 = vsub.f32 %v3394, %v3501
  %v3503 = vand.u32 %v3502, 4294901760
  %3504 = vmatmul.f32.gmra.mxu0 %v3503
  %v3505 = vpop.f32.mrf.mxu0
  %v3506 = vadd.f32 %v3482, %v3505
  %3507 = vdwg.mxu0
  %3508 = vmatpush.msra.mxu0 0.0
  %3509 = vmatpush.msra.mxu0 0.0
  %3510 = vmatpush.msra.mxu0 0.0
  %3511 = vmatpush.msra.mxu0 0.0
  %3512 = vmatpush.msra.mxu0 0.0
  %3513 = vmatpush.msra.mxu0 0.0
  %3514 = vmatpush.msra.mxu0 0.0
  %3515 = vmatpush.msra.mxu0 0.0
  %3516 = vmatpush.msra.mxu0 0.0
  %3517 = vmatpush.msra.mxu0 0.0
  %3518 = vmatpush.msra.mxu0 0.0
  %3519 = vmatpush.msra.mxu0 0.0
  %3520 = vmatpush.msra.mxu0 0.0
  %3521 = vmatpush.msra.mxu0 0.0
  %3522 = vmatpush.msra.mxu0 0.0
  %v3523 = vand.u32 %v3397, 4294901760
  %v3524 = vsub.f32 %v3397, %v3523
  %v3525 = vand.u32 %v3524, 4294901760
  %3526 = vmatpush.msra.mxu0 %v3525
  %v3527 = vand.u32 %v3394, 4294901760
  %3528 = vmatmul.f32.gmra.mxu0 %v3527
  %v3529 = vpop.f32.mrf.mxu0
  %v3530 = vadd.f32 %v3506, %v3529
  %3531 = vdwg.mxu0
  %3532 = vmatpush.msra.mxu0 0.0
  %3533 = vmatpush.msra.mxu0 0.0
  %3534 = vmatpush.msra.mxu0 0.0
  %3535 = vmatpush.msra.mxu0 0.0
  %3536 = vmatpush.msra.mxu0 0.0
  %3537 = vmatpush.msra.mxu0 0.0
  %3538 = vmatpush.msra.mxu0 0.0
  %3539 = vmatpush.msra.mxu0 0.0
  %3540 = vmatpush.msra.mxu0 0.0
  %3541 = vmatpush.msra.mxu0 0.0
  %3542 = vmatpush.msra.mxu0 0.0
  %3543 = vmatpush.msra.mxu0 0.0
  %3544 = vmatpush.msra.mxu0 0.0
  %3545 = vmatpush.msra.mxu0 0.0
  %3546 = vmatpush.msra.mxu0 0.0
  %v3547 = vand.u32 %v3397, 4294901760
  %3548 = vmatpush.msra.mxu0 %v3547
  %v3549 = vand.u32 %v3394, 4294901760
  %3550 = vmatmul.f32.gmra.mxu0 %v3549
  %v3551 = vpop.f32.mrf.mxu0
  %v3552 = vadd.f32 %v3530, %v3551
  %3553 = vdwg.mxu0
  %3554 = vmatpush.msra.mxu0 0.0
  %3555 = vmatpush.msra.mxu0 0.0
  %3556 = vmatpush.msra.mxu0 0.0
  %3557 = vmatpush.msra.mxu0 0.0
  %3558 = vmatpush.msra.mxu0 0.0
  %3559 = vmatpush.msra.mxu0 0.0
  %3560 = vmatpush.msra.mxu0 0.0
  %3561 = vmatpush.msra.mxu0 0.0
  %3562 = vmatpush.msra.mxu0 0.0
  %3563 = vmatpush.msra.mxu0 0.0
  %3564 = vmatpush.msra.mxu0 0.0
  %3565 = vmatpush.msra.mxu0 0.0
  %3566 = vmatpush.msra.mxu0 0.0
  %3567 = vmatpush.msra.mxu0 0.0
  %3568 = vmatpush.msra.mxu0 0.0
  %v3569 = vand.u32 %v3400, 4294901760
  %3570 = vmatpush.msra.mxu0 %v3569
  %v3571 = vand.u32 %v3394, 4294901760
  %v3572 = vsub.f32 %v3394, %v3571
  %v3573 = vand.u32 %v3572, 4294901760
  %v3574 = vsub.f32 %v3572, %v3573
  %v3575 = vand.u32 %v3574, 4294901760
  %3576 = vmatmul.f32.gmra.mxu0 %v3575
  %v3577 = vpop.f32.mrf.mxu0
  %v3578 = vadd.f32 0.0, %v3577
  %3579 = vdwg.mxu0
  %3580 = vmatpush.msra.mxu0 0.0
  %3581 = vmatpush.msra.mxu0 0.0
  %3582 = vmatpush.msra.mxu0 0.0
  %3583 = vmatpush.msra.mxu0 0.0
  %3584 = vmatpush.msra.mxu0 0.0
  %3585 = vmatpush.msra.mxu0 0.0
  %3586 = vmatpush.msra.mxu0 0.0
  %3587 = vmatpush.msra.mxu0 0.0
  %3588 = vmatpush.msra.mxu0 0.0
  %3589 = vmatpush.msra.mxu0 0.0
  %3590 = vmatpush.msra.mxu0 0.0
  %3591 = vmatpush.msra.mxu0 0.0
  %3592 = vmatpush.msra.mxu0 0.0
  %3593 = vmatpush.msra.mxu0 0.0
  %3594 = vmatpush.msra.mxu0 0.0
  %v3595 = vand.u32 %v3400, 4294901760
  %v3596 = vsub.f32 %v3400, %v3595
  %v3597 = vand.u32 %v3596, 4294901760
  %v3598 = vsub.f32 %v3596, %v3597
  %v3599 = vand.u32 %v3598, 4294901760
  %3600 = vmatpush.msra.mxu0 %v3599
  %v3601 = vand.u32 %v3394, 4294901760
  %3602 = vmatmul.f32.gmra.mxu0 %v3601
  %v3603 = vpop.f32.mrf.mxu0
  %v3604 = vadd.f32 %v3578, %v3603
  %3605 = vdwg.mxu0
  %3606 = vmatpush.msra.mxu0 0.0
  %3607 = vmatpush.msra.mxu0 0.0
  %3608 = vmatpush.msra.mxu0 0.0
  %3609 = vmatpush.msra.mxu0 0.0
  %3610 = vmatpush.msra.mxu0 0.0
  %3611 = vmatpush.msra.mxu0 0.0
  %3612 = vmatpush.msra.mxu0 0.0
  %3613 = vmatpush.msra.mxu0 0.0
  %3614 = vmatpush.msra.mxu0 0.0
  %3615 = vmatpush.msra.mxu0 0.0
  %3616 = vmatpush.msra.mxu0 0.0
  %3617 = vmatpush.msra.mxu0 0.0
  %3618 = vmatpush.msra.mxu0 0.0
  %3619 = vmatpush.msra.mxu0 0.0
  %3620 = vmatpush.msra.mxu0 0.0
  %v3621 = vand.u32 %v3400, 4294901760
  %v3622 = vsub.f32 %v3400, %v3621
  %3623 = vmatpush.msra.mxu0 %v3622
  %v3624 = vand.u32 %v3394, 4294901760
  %v3625 = vsub.f32 %v3394, %v3624
  %3626 = vmatmul.f32.gmra.mxu0 %v3625
  %v3627 = vpop.f32.mrf.mxu0
  %v3628 = vadd.f32 %v3604, %v3627
  %3629 = vdwg.mxu0
  %3630 = vmatpush.msra.mxu0 0.0
  %3631 = vmatpush.msra.mxu0 0.0
  %3632 = vmatpush.msra.mxu0 0.0
  %3633 = vmatpush.msra.mxu0 0.0
  %3634 = vmatpush.msra.mxu0 0.0
  %3635 = vmatpush.msra.mxu0 0.0
  %3636 = vmatpush.msra.mxu0 0.0
  %3637 = vmatpush.msra.mxu0 0.0
  %3638 = vmatpush.msra.mxu0 0.0
  %3639 = vmatpush.msra.mxu0 0.0
  %3640 = vmatpush.msra.mxu0 0.0
  %3641 = vmatpush.msra.mxu0 0.0
  %3642 = vmatpush.msra.mxu0 0.0
  %3643 = vmatpush.msra.mxu0 0.0
  %3644 = vmatpush.msra.mxu0 0.0
  %v3645 = vand.u32 %v3400, 4294901760
  %3646 = vmatpush.msra.mxu0 %v3645
  %v3647 = vand.u32 %v3394, 4294901760
  %v3648 = vsub.f32 %v3394, %v3647
  %v3649 = vand.u32 %v3648, 4294901760
  %3650 = vmatmul.f32.gmra.mxu0 %v3649
  %v3651 = vpop.f32.mrf.mxu0
  %v3652 = vadd.f32 %v3628, %v3651
  %3653 = vdwg.mxu0
  %3654 = vmatpush.msra.mxu0 0.0
  %3655 = vmatpush.msra.mxu0 0.0
  %3656 = vmatpush.msra.mxu0 0.0
  %3657 = vmatpush.msra.mxu0 0.0
  %3658 = vmatpush.msra.mxu0 0.0
  %3659 = vmatpush.msra.mxu0 0.0
  %3660 = vmatpush.msra.mxu0 0.0
  %3661 = vmatpush.msra.mxu0 0.0
  %3662 = vmatpush.msra.mxu0 0.0
  %3663 = vmatpush.msra.mxu0 0.0
  %3664 = vmatpush.msra.mxu0 0.0
  %3665 = vmatpush.msra.mxu0 0.0
  %3666 = vmatpush.msra.mxu0 0.0
  %3667 = vmatpush.msra.mxu0 0.0
  %3668 = vmatpush.msra.mxu0 0.0
  %v3669 = vand.u32 %v3400, 4294901760
  %v3670 = vsub.f32 %v3400, %v3669
  %v3671 = vand.u32 %v3670, 4294901760
  %3672 = vmatpush.msra.mxu0 %v3671
  %v3673 = vand.u32 %v3394, 4294901760
  %3674 = vmatmul.f32.gmra.mxu0 %v3673
  %v3675 = vpop.f32.mrf.mxu0
  %v3676 = vadd.f32 %v3652, %v3675
  %3677 = vdwg.mxu0
  %3678 = vmatpush.msra.mxu0 0.0
  %3679 = vmatpush.msra.mxu0 0.0
  %3680 = vmatpush.msra.mxu0 0.0
  %3681 = vmatpush.msra.mxu0 0.0
  %3682 = vmatpush.msra.mxu0 0.0
  %3683 = vmatpush.msra.mxu0 0.0
  %3684 = vmatpush.msra.mxu0 0.0
  %3685 = vmatpush.msra.mxu0 0.0
  %3686 = vmatpush.msra.mxu0 0.0
  %3687 = vmatpush.msra.mxu0 0.0
  %3688 = vmatpush.msra.mxu0 0.0
  %3689 = vmatpush.msra.mxu0 0.0
  %3690 = vmatpush.msra.mxu0 0.0
  %3691 = vmatpush.msra.mxu0 0.0
  %3692 = vmatpush.msra.mxu0 0.0
  %v3693 = vand.u32 %v3400, 4294901760
  %3694 = vmatpush.msra.mxu0 %v3693
  %v3695 = vand.u32 %v3394, 4294901760
  %3696 = vmatmul.f32.gmra.mxu0 %v3695
  %v3697 = vpop.f32.mrf.mxu0
  %v3698 = vadd.f32 %v3676, %v3697
  %3699 = vdwg.mxu0
  %3700 = vmatpush.msra.mxu0 0.0
  %3701 = vmatpush.msra.mxu0 0.0
  %3702 = vmatpush.msra.mxu0 0.0
  %3703 = vmatpush.msra.mxu0 0.0
  %3704 = vmatpush.msra.mxu0 0.0
  %3705 = vmatpush.msra.mxu0 0.0
  %3706 = vmatpush.msra.mxu0 0.0
  %3707 = vmatpush.msra.mxu0 0.0
  %3708 = vmatpush.msra.mxu0 0.0
  %3709 = vmatpush.msra.mxu0 0.0
  %3710 = vmatpush.msra.mxu0 0.0
  %3711 = vmatpush.msra.mxu0 0.0
  %3712 = vmatpush.msra.mxu0 0.0
  %3713 = vmatpush.msra.mxu0 0.0
  %3714 = vmatpush.msra.mxu0 0.0
  %v3715 = vand.u32 %v3403, 4294901760
  %3716 = vmatpush.msra.mxu0 %v3715
  %v3717 = vand.u32 %v3394, 4294901760
  %v3718 = vsub.f32 %v3394, %v3717
  %v3719 = vand.u32 %v3718, 4294901760
  %v3720 = vsub.f32 %v3718, %v3719
  %v3721 = vand.u32 %v3720, 4294901760
  %3722 = vmatmul.f32.gmra.mxu0 %v3721
  %v3723 = vpop.f32.mrf.mxu0
  %v3724 = vadd.f32 0.0, %v3723
  %3725 = vdwg.mxu0
  %3726 = vmatpush.msra.mxu0 0.0
  %3727 = vmatpush.msra.mxu0 0.0
  %3728 = vmatpush.msra.mxu0 0.0
  %3729 = vmatpush.msra.mxu0 0.0
  %3730 = vmatpush.msra.mxu0 0.0
  %3731 = vmatpush.msra.mxu0 0.0
  %3732 = vmatpush.msra.mxu0 0.0
  %3733 = vmatpush.msra.mxu0 0.0
  %3734 = vmatpush.msra.mxu0 0.0
  %3735 = vmatpush.msra.mxu0 0.0
  %3736 = vmatpush.msra.mxu0 0.0
  %3737 = vmatpush.msra.mxu0 0.0
  %3738 = vmatpush.msra.mxu0 0.0
  %3739 = vmatpush.msra.mxu0 0.0
  %3740 = vmatpush.msra.mxu0 0.0
  %v3741 = vand.u32 %v3403, 4294901760
  %v3742 = vsub.f32 %v3403, %v3741
  %v3743 = vand.u32 %v3742, 4294901760
  %v3744 = vsub.f32 %v3742, %v3743
  %v3745 = vand.u32 %v3744, 4294901760
  %3746 = vmatpush.msra.mxu0 %v3745
  %v3747 = vand.u32 %v3394, 4294901760
  %3748 = vmatmul.f32.gmra.mxu0 %v3747
  %v3749 = vpop.f32.mrf.mxu0
  %v3750 = vadd.f32 %v3724, %v3749
  %3751 = vdwg.mxu0
  %3752 = vmatpush.msra.mxu0 0.0
  %3753 = vmatpush.msra.mxu0 0.0
  %3754 = vmatpush.msra.mxu0 0.0
  %3755 = vmatpush.msra.mxu0 0.0
  %3756 = vmatpush.msra.mxu0 0.0
  %3757 = vmatpush.msra.mxu0 0.0
  %3758 = vmatpush.msra.mxu0 0.0
  %3759 = vmatpush.msra.mxu0 0.0
  %3760 = vmatpush.msra.mxu0 0.0
  %3761 = vmatpush.msra.mxu0 0.0
  %3762 = vmatpush.msra.mxu0 0.0
  %3763 = vmatpush.msra.mxu0 0.0
  %3764 = vmatpush.msra.mxu0 0.0
  %3765 = vmatpush.msra.mxu0 0.0
  %3766 = vmatpush.msra.mxu0 0.0
  %v3767 = vand.u32 %v3403, 4294901760
  %v3768 = vsub.f32 %v3403, %v3767
  %3769 = vmatpush.msra.mxu0 %v3768
  %v3770 = vand.u32 %v3394, 4294901760
  %v3771 = vsub.f32 %v3394, %v3770
  %3772 = vmatmul.f32.gmra.mxu0 %v3771
  %v3773 = vpop.f32.mrf.mxu0
  %v3774 = vadd.f32 %v3750, %v3773
  %3775 = vdwg.mxu0
  %3776 = vmatpush.msra.mxu0 0.0
  %3777 = vmatpush.msra.mxu0 0.0
  %3778 = vmatpush.msra.mxu0 0.0
  %3779 = vmatpush.msra.mxu0 0.0
  %3780 = vmatpush.msra.mxu0 0.0
  %3781 = vmatpush.msra.mxu0 0.0
  %3782 = vmatpush.msra.mxu0 0.0
  %3783 = vmatpush.msra.mxu0 0.0
  %3784 = vmatpush.msra.mxu0 0.0
  %3785 = vmatpush.msra.mxu0 0.0
  %3786 = vmatpush.msra.mxu0 0.0
  %3787 = vmatpush.msra.mxu0 0.0
  %3788 = vmatpush.msra.mxu0 0.0
  %3789 = vmatpush.msra.mxu0 0.0
  %3790 = vmatpush.msra.mxu0 0.0
  %v3791 = vand.u32 %v3403, 4294901760
  %3792 = vmatpush.msra.mxu0 %v3791
  %v3793 = vand.u32 %v3394, 4294901760
  %v3794 = vsub.f32 %v3394, %v3793
  %v3795 = vand.u32 %v3794, 4294901760
  %3796 = vmatmul.f32.gmra.mxu0 %v3795
  %v3797 = vpop.f32.mrf.mxu0
  %v3798 = vadd.f32 %v3774, %v3797
  %3799 = vdwg.mxu0
  %3800 = vmatpush.msra.mxu0 0.0
  %3801 = vmatpush.msra.mxu0 0.0
  %3802 = vmatpush.msra.mxu0 0.0
  %3803 = vmatpush.msra.mxu0 0.0
  %3804 = vmatpush.msra.mxu0 0.0
  %3805 = vmatpush.msra.mxu0 0.0
  %3806 = vmatpush.msra.mxu0 0.0
  %3807 = vmatpush.msra.mxu0 0.0
  %3808 = vmatpush.msra.mxu0 0.0
  %3809 = vmatpush.msra.mxu0 0.0
  %3810 = vmatpush.msra.mxu0 0.0
  %3811 = vmatpush.msra.mxu0 0.0
  %3812 = vmatpush.msra.mxu0 0.0
  %3813 = vmatpush.msra.mxu0 0.0
  %3814 = vmatpush.msra.mxu0 0.0
  %v3815 = vand.u32 %v3403, 4294901760
  %v3816 = vsub.f32 %v3403, %v3815
  %v3817 = vand.u32 %v3816, 4294901760
  %3818 = vmatpush.msra.mxu0 %v3817
  %v3819 = vand.u32 %v3394, 4294901760
  %3820 = vmatmul.f32.gmra.mxu0 %v3819
  %v3821 = vpop.f32.mrf.mxu0
  %v3822 = vadd.f32 %v3798, %v3821
  %3823 = vdwg.mxu0
  %3824 = vmatpush.msra.mxu0 0.0
  %3825 = vmatpush.msra.mxu0 0.0
  %3826 = vmatpush.msra.mxu0 0.0
  %3827 = vmatpush.msra.mxu0 0.0
  %3828 = vmatpush.msra.mxu0 0.0
  %3829 = vmatpush.msra.mxu0 0.0
  %3830 = vmatpush.msra.mxu0 0.0
  %3831 = vmatpush.msra.mxu0 0.0
  %3832 = vmatpush.msra.mxu0 0.0
  %3833 = vmatpush.msra.mxu0 0.0
  %3834 = vmatpush.msra.mxu0 0.0
  %3835 = vmatpush.msra.mxu0 0.0
  %3836 = vmatpush.msra.mxu0 0.0
  %3837 = vmatpush.msra.mxu0 0.0
  %3838 = vmatpush.msra.mxu0 0.0
  %v3839 = vand.u32 %v3403, 4294901760
  %3840 = vmatpush.msra.mxu0 %v3839
  %v3841 = vand.u32 %v3394, 4294901760
  %3842 = vmatmul.f32.gmra.mxu0 %v3841
  %v3843 = vpop.f32.mrf.mxu0
  %v3844 = vadd.f32 %v3822, %v3843
  %3845 = vdwg.mxu0
  %3846 = vmatpush.msra.mxu0 0.0
  %3847 = vmatpush.msra.mxu0 0.0
  %3848 = vmatpush.msra.mxu0 0.0
  %3849 = vmatpush.msra.mxu0 0.0
  %3850 = vmatpush.msra.mxu0 0.0
  %3851 = vmatpush.msra.mxu0 0.0
  %3852 = vmatpush.msra.mxu0 0.0
  %3853 = vmatpush.msra.mxu0 0.0
  %3854 = vmatpush.msra.mxu0 0.0
  %3855 = vmatpush.msra.mxu0 0.0
  %3856 = vmatpush.msra.mxu0 0.0
  %3857 = vmatpush.msra.mxu0 0.0
  %3858 = vmatpush.msra.mxu0 0.0
  %3859 = vmatpush.msra.mxu0 0.0
  %3860 = vmatpush.msra.mxu0 0.0
  %v3861 = vand.u32 %v3406, 4294901760
  %3862 = vmatpush.msra.mxu0 %v3861
  %v3863 = vand.u32 %v3394, 4294901760
  %v3864 = vsub.f32 %v3394, %v3863
  %v3865 = vand.u32 %v3864, 4294901760
  %v3866 = vsub.f32 %v3864, %v3865
  %v3867 = vand.u32 %v3866, 4294901760
  %3868 = vmatmul.f32.gmra.mxu0 %v3867
  %v3869 = vpop.f32.mrf.mxu0
  %v3870 = vadd.f32 0.0, %v3869
  %3871 = vdwg.mxu0
  %3872 = vmatpush.msra.mxu0 0.0
  %3873 = vmatpush.msra.mxu0 0.0
  %3874 = vmatpush.msra.mxu0 0.0
  %3875 = vmatpush.msra.mxu0 0.0
  %3876 = vmatpush.msra.mxu0 0.0
  %3877 = vmatpush.msra.mxu0 0.0
  %3878 = vmatpush.msra.mxu0 0.0
  %3879 = vmatpush.msra.mxu0 0.0
  %3880 = vmatpush.msra.mxu0 0.0
  %3881 = vmatpush.msra.mxu0 0.0
  %3882 = vmatpush.msra.mxu0 0.0
  %3883 = vmatpush.msra.mxu0 0.0
  %3884 = vmatpush.msra.mxu0 0.0
  %3885 = vmatpush.msra.mxu0 0.0
  %3886 = vmatpush.msra.mxu0 0.0
  %v3887 = vand.u32 %v3406, 4294901760
  %v3888 = vsub.f32 %v3406, %v3887
  %v3889 = vand.u32 %v3888, 4294901760
  %v3890 = vsub.f32 %v3888, %v3889
  %v3891 = vand.u32 %v3890, 4294901760
  %3892 = vmatpush.msra.mxu0 %v3891
  %v3893 = vand.u32 %v3394, 4294901760
  %3894 = vmatmul.f32.gmra.mxu0 %v3893
  %v3895 = vpop.f32.mrf.mxu0
  %v3896 = vadd.f32 %v3870, %v3895
  %3897 = vdwg.mxu0
  %3898 = vmatpush.msra.mxu0 0.0
  %3899 = vmatpush.msra.mxu0 0.0
  %3900 = vmatpush.msra.mxu0 0.0
  %3901 = vmatpush.msra.mxu0 0.0
  %3902 = vmatpush.msra.mxu0 0.0
  %3903 = vmatpush.msra.mxu0 0.0
  %3904 = vmatpush.msra.mxu0 0.0
  %3905 = vmatpush.msra.mxu0 0.0
  %3906 = vmatpush.msra.mxu0 0.0
  %3907 = vmatpush.msra.mxu0 0.0
  %3908 = vmatpush.msra.mxu0 0.0
  %3909 = vmatpush.msra.mxu0 0.0
  %3910 = vmatpush.msra.mxu0 0.0
  %3911 = vmatpush.msra.mxu0 0.0
  %3912 = vmatpush.msra.mxu0 0.0
  %v3913 = vand.u32 %v3406, 4294901760
  %v3914 = vsub.f32 %v3406, %v3913
  %3915 = vmatpush.msra.mxu0 %v3914
  %v3916 = vand.u32 %v3394, 4294901760
  %v3917 = vsub.f32 %v3394, %v3916
  %3918 = vmatmul.f32.gmra.mxu0 %v3917
  %v3919 = vpop.f32.mrf.mxu0
  %v3920 = vadd.f32 %v3896, %v3919
  %3921 = vdwg.mxu0
  %3922 = vmatpush.msra.mxu0 0.0
  %3923 = vmatpush.msra.mxu0 0.0
  %3924 = vmatpush.msra.mxu0 0.0
  %3925 = vmatpush.msra.mxu0 0.0
  %3926 = vmatpush.msra.mxu0 0.0
  %3927 = vmatpush.msra.mxu0 0.0
  %3928 = vmatpush.msra.mxu0 0.0
  %3929 = vmatpush.msra.mxu0 0.0
  %3930 = vmatpush.msra.mxu0 0.0
  %3931 = vmatpush.msra.mxu0 0.0
  %3932 = vmatpush.msra.mxu0 0.0
  %3933 = vmatpush.msra.mxu0 0.0
  %3934 = vmatpush.msra.mxu0 0.0
  %3935 = vmatpush.msra.mxu0 0.0
  %3936 = vmatpush.msra.mxu0 0.0
  %v3937 = vand.u32 %v3406, 4294901760
  %3938 = vmatpush.msra.mxu0 %v3937
  %v3939 = vand.u32 %v3394, 4294901760
  %v3940 = vsub.f32 %v3394, %v3939
  %v3941 = vand.u32 %v3940, 4294901760
  %3942 = vmatmul.f32.gmra.mxu0 %v3941
  %v3943 = vpop.f32.mrf.mxu0
  %v3944 = vadd.f32 %v3920, %v3943
  %3945 = vdwg.mxu0
  %3946 = vmatpush.msra.mxu0 0.0
  %3947 = vmatpush.msra.mxu0 0.0
  %3948 = vmatpush.msra.mxu0 0.0
  %3949 = vmatpush.msra.mxu0 0.0
  %3950 = vmatpush.msra.mxu0 0.0
  %3951 = vmatpush.msra.mxu0 0.0
  %3952 = vmatpush.msra.mxu0 0.0
  %3953 = vmatpush.msra.mxu0 0.0
  %3954 = vmatpush.msra.mxu0 0.0
  %3955 = vmatpush.msra.mxu0 0.0
  %3956 = vmatpush.msra.mxu0 0.0
  %3957 = vmatpush.msra.mxu0 0.0
  %3958 = vmatpush.msra.mxu0 0.0
  %3959 = vmatpush.msra.mxu0 0.0
  %3960 = vmatpush.msra.mxu0 0.0
  %v3961 = vand.u32 %v3406, 4294901760
  %v3962 = vsub.f32 %v3406, %v3961
  %v3963 = vand.u32 %v3962, 4294901760
  %3964 = vmatpush.msra.mxu0 %v3963
  %v3965 = vand.u32 %v3394, 4294901760
  %3966 = vmatmul.f32.gmra.mxu0 %v3965
  %v3967 = vpop.f32.mrf.mxu0
  %v3968 = vadd.f32 %v3944, %v3967
  %3969 = vdwg.mxu0
  %3970 = vmatpush.msra.mxu0 0.0
  %3971 = vmatpush.msra.mxu0 0.0
  %3972 = vmatpush.msra.mxu0 0.0
  %3973 = vmatpush.msra.mxu0 0.0
  %3974 = vmatpush.msra.mxu0 0.0
  %3975 = vmatpush.msra.mxu0 0.0
  %3976 = vmatpush.msra.mxu0 0.0
  %3977 = vmatpush.msra.mxu0 0.0
  %3978 = vmatpush.msra.mxu0 0.0
  %3979 = vmatpush.msra.mxu0 0.0
  %3980 = vmatpush.msra.mxu0 0.0
  %3981 = vmatpush.msra.mxu0 0.0
  %3982 = vmatpush.msra.mxu0 0.0
  %3983 = vmatpush.msra.mxu0 0.0
  %3984 = vmatpush.msra.mxu0 0.0
  %v3985 = vand.u32 %v3406, 4294901760
  %3986 = vmatpush.msra.mxu0 %v3985
  %v3987 = vand.u32 %v3394, 4294901760
  %3988 = vmatmul.f32.gmra.mxu0 %v3987
  %v3989 = vpop.f32.mrf.mxu0
  %v3990 = vadd.f32 %v3968, %v3989
  %3991 = vdwg.mxu0
  %v3992 = vadd.f32 %v3346, %v3552
  %v3993 = vadd.f32 %v3347, %v3698
  %v3994 = vadd.f32 %v3348, %v3844
  %v3995 = vadd.f32 %v3349, %v3990
  %3996 = vst [vmem:[#allocation1] ss:$2 sm:$0xff] %v162
  %s3997 = scalar_lea.vmem [#allocation1], 16
  %3998 = vst [vmem:[%s3997] ss:$2 sm:$0xff] %v163
  %v3999 = vld.sshfl [vmem:[#allocation1] sm:$0xff pattern:$0x75316420]
  %v4000 = vld.sshfl [vmem:[#allocation1 + $0x8] sm:$0xff pattern:$0x75316420]
  %v4001 = vld.sshfl [vmem:[#allocation1 + $0x10] sm:$0xff pattern:$0x75316420]
  %v4002 = vld.sshfl [vmem:[#allocation1 + $0x18] sm:$0xff pattern:$0x75316420]
  %4003 = vrot.lane.b32.xlu0 %v3999, 113
  %v4004 = vpop.permute.xlu0 %4003
  %4005 = vrot.lane.b32.xlu0 %v4000, 113
  %v4006 = vpop.permute.xlu0 %4005
  %4007 = vrot.lane.b32.xlu0 %v4001, 113
  %v4008 = vpop.permute.xlu0 %4007
  %4009 = vrot.lane.b32.xlu0 %v4002, 113
  %v4010 = vpop.permute.xlu0 %4009
  %vm4011 = vcmask 924672
  %v4012 = vsel %vm4011, %v4004, %v4006
  %v4013 = vsel %vm4011, %v4006, %v4008
  %v4014 = vsel %vm4011, %v4008, %v4010
  %4019 = vst [vmem:[#allocation1] ss:$2 sm:$0xff] %v162
  %v4020 = vld.sshfl [vmem:[#allocation1] sm:$0xff pattern:$0x75316420]
  %4021 = vrot.lane.b32.xlu0 %v4020, 113
  %v4022 = vpop.permute.xlu0 %4021
  %v4024 = vsel %vm4011, %v4010, %v4022
  %v4025 = vsel %vm63, 1, 0
  %v4026 = vsel %vm64, 1, 0
  %v4027 = vsel %vm65, 1, 0
  %v4028 = vsel %vm66, 1, 0
  %vm4029 = vcmp.eq.s32.totalorder %v4025, 1
  %vm4030 = vcmp.eq.s32.totalorder %v4026, 1
  %vm4031 = vcmp.eq.s32.totalorder %v4027, 1
  %vm4032 = vcmp.eq.s32.totalorder %v4028, 1
  %v4033 = vsel %vm4029, %v4012, 0.0
  %v4034 = vsel %vm4030, %v4013, 0.0
  %v4035 = vsel %vm4031, %v4014, 0.0
  %v4036 = vsel %vm4032, %v4024, 0.0
  %s4037 = scalar_lea.vmem %s5, 24
  %v4038 = vld [vmem:[%s4037] sm:$0xf]
  %v4040 = vsel %vm251, %v4038, 0
  %v4043 = vsel %vm86, %v4033, 0
  %v4046 = vsel %vm86, %v4034, 0
  %v4049 = vsel %vm86, %v4035, 0
  %v4052 = vsel %vm86, %v4036, 0
  %4054 = vmatpush.msra.mxu0 0.0
  %4055 = vmatpush.msra.mxu0 0.0
  %4056 = vmatpush.msra.mxu0 0.0
  %4057 = vmatpush.msra.mxu0 0.0
  %4058 = vmatpush.msra.mxu0 0.0
  %4059 = vmatpush.msra.mxu0 0.0
  %4060 = vmatpush.msra.mxu0 0.0
  %4061 = vmatpush.msra.mxu0 0.0
  %4062 = vmatpush.msra.mxu0 0.0
  %4063 = vmatpush.msra.mxu0 0.0
  %4064 = vmatpush.msra.mxu0 0.0
  %4065 = vmatpush.msra.mxu0 0.0
  %4066 = vmatpush.msra.mxu0 0.0
  %4067 = vmatpush.msra.mxu0 0.0
  %4068 = vmatpush.msra.mxu0 0.0
  %v4069 = vand.u32 %v4043, 4294901760
  %4070 = vmatpush.msra.mxu0 %v4069
  %v4071 = vand.u32 %v4040, 4294901760
  %v4072 = vsub.f32 %v4040, %v4071
  %v4073 = vand.u32 %v4072, 4294901760
  %v4074 = vsub.f32 %v4072, %v4073
  %v4075 = vand.u32 %v4074, 4294901760
  %4076 = vmatmul.f32.gmra.mxu0 %v4075
  %v4077 = vpop.f32.mrf.mxu0
  %v4078 = vadd.f32 0.0, %v4077
  %4079 = vdwg.mxu0
  %4080 = vmatpush.msra.mxu0 0.0
  %4081 = vmatpush.msra.mxu0 0.0
  %4082 = vmatpush.msra.mxu0 0.0
  %4083 = vmatpush.msra.mxu0 0.0
  %4084 = vmatpush.msra.mxu0 0.0
  %4085 = vmatpush.msra.mxu0 0.0
  %4086 = vmatpush.msra.mxu0 0.0
  %4087 = vmatpush.msra.mxu0 0.0
  %4088 = vmatpush.msra.mxu0 0.0
  %4089 = vmatpush.msra.mxu0 0.0
  %4090 = vmatpush.msra.mxu0 0.0
  %4091 = vmatpush.msra.mxu0 0.0
  %4092 = vmatpush.msra.mxu0 0.0
  %4093 = vmatpush.msra.mxu0 0.0
  %4094 = vmatpush.msra.mxu0 0.0
  %v4095 = vand.u32 %v4043, 4294901760
  %v4096 = vsub.f32 %v4043, %v4095
  %v4097 = vand.u32 %v4096, 4294901760
  %v4098 = vsub.f32 %v4096, %v4097
  %v4099 = vand.u32 %v4098, 4294901760
  %4100 = vmatpush.msra.mxu0 %v4099
  %v4101 = vand.u32 %v4040, 4294901760
  %4102 = vmatmul.f32.gmra.mxu0 %v4101
  %v4103 = vpop.f32.mrf.mxu0
  %v4104 = vadd.f32 %v4078, %v4103
  %4105 = vdwg.mxu0
  %4106 = vmatpush.msra.mxu0 0.0
  %4107 = vmatpush.msra.mxu0 0.0
  %4108 = vmatpush.msra.mxu0 0.0
  %4109 = vmatpush.msra.mxu0 0.0
  %4110 = vmatpush.msra.mxu0 0.0
  %4111 = vmatpush.msra.mxu0 0.0
  %4112 = vmatpush.msra.mxu0 0.0
  %4113 = vmatpush.msra.mxu0 0.0
  %4114 = vmatpush.msra.mxu0 0.0
  %4115 = vmatpush.msra.mxu0 0.0
  %4116 = vmatpush.msra.mxu0 0.0
  %4117 = vmatpush.msra.mxu0 0.0
  %4118 = vmatpush.msra.mxu0 0.0
  %4119 = vmatpush.msra.mxu0 0.0
  %4120 = vmatpush.msra.mxu0 0.0
  %v4121 = vand.u32 %v4043, 4294901760
  %v4122 = vsub.f32 %v4043, %v4121
  %4123 = vmatpush.msra.mxu0 %v4122
  %v4124 = vand.u32 %v4040, 4294901760
  %v4125 = vsub.f32 %v4040, %v4124
  %4126 = vmatmul.f32.gmra.mxu0 %v4125
  %v4127 = vpop.f32.mrf.mxu0
  %v4128 = vadd.f32 %v4104, %v4127
  %4129 = vdwg.mxu0
  %4130 = vmatpush.msra.mxu0 0.0
  %4131 = vmatpush.msra.mxu0 0.0
  %4132 = vmatpush.msra.mxu0 0.0
  %4133 = vmatpush.msra.mxu0 0.0
  %4134 = vmatpush.msra.mxu0 0.0
  %4135 = vmatpush.msra.mxu0 0.0
  %4136 = vmatpush.msra.mxu0 0.0
  %4137 = vmatpush.msra.mxu0 0.0
  %4138 = vmatpush.msra.mxu0 0.0
  %4139 = vmatpush.msra.mxu0 0.0
  %4140 = vmatpush.msra.mxu0 0.0
  %4141 = vmatpush.msra.mxu0 0.0
  %4142 = vmatpush.msra.mxu0 0.0
  %4143 = vmatpush.msra.mxu0 0.0
  %4144 = vmatpush.msra.mxu0 0.0
  %v4145 = vand.u32 %v4043, 4294901760
  %4146 = vmatpush.msra.mxu0 %v4145
  %v4147 = vand.u32 %v4040, 4294901760
  %v4148 = vsub.f32 %v4040, %v4147
  %v4149 = vand.u32 %v4148, 4294901760
  %4150 = vmatmul.f32.gmra.mxu0 %v4149
  %v4151 = vpop.f32.mrf.mxu0
  %v4152 = vadd.f32 %v4128, %v4151
  %4153 = vdwg.mxu0
  %4154 = vmatpush.msra.mxu0 0.0
  %4155 = vmatpush.msra.mxu0 0.0
  %4156 = vmatpush.msra.mxu0 0.0
  %4157 = vmatpush.msra.mxu0 0.0
  %4158 = vmatpush.msra.mxu0 0.0
  %4159 = vmatpush.msra.mxu0 0.0
  %4160 = vmatpush.msra.mxu0 0.0
  %4161 = vmatpush.msra.mxu0 0.0
  %4162 = vmatpush.msra.mxu0 0.0
  %4163 = vmatpush.msra.mxu0 0.0
  %4164 = vmatpush.msra.mxu0 0.0
  %4165 = vmatpush.msra.mxu0 0.0
  %4166 = vmatpush.msra.mxu0 0.0
  %4167 = vmatpush.msra.mxu0 0.0
  %4168 = vmatpush.msra.mxu0 0.0
  %v4169 = vand.u32 %v4043, 4294901760
  %v4170 = vsub.f32 %v4043, %v4169
  %v4171 = vand.u32 %v4170, 4294901760
  %4172 = vmatpush.msra.mxu0 %v4171
  %v4173 = vand.u32 %v4040, 4294901760
  %4174 = vmatmul.f32.gmra.mxu0 %v4173
  %v4175 = vpop.f32.mrf.mxu0
  %v4176 = vadd.f32 %v4152, %v4175
  %4177 = vdwg.mxu0
  %4178 = vmatpush.msra.mxu0 0.0
  %4179 = vmatpush.msra.mxu0 0.0
  %4180 = vmatpush.msra.mxu0 0.0
  %4181 = vmatpush.msra.mxu0 0.0
  %4182 = vmatpush.msra.mxu0 0.0
  %4183 = vmatpush.msra.mxu0 0.0
  %4184 = vmatpush.msra.mxu0 0.0
  %4185 = vmatpush.msra.mxu0 0.0
  %4186 = vmatpush.msra.mxu0 0.0
  %4187 = vmatpush.msra.mxu0 0.0
  %4188 = vmatpush.msra.mxu0 0.0
  %4189 = vmatpush.msra.mxu0 0.0
  %4190 = vmatpush.msra.mxu0 0.0
  %4191 = vmatpush.msra.mxu0 0.0
  %4192 = vmatpush.msra.mxu0 0.0
  %v4193 = vand.u32 %v4043, 4294901760
  %4194 = vmatpush.msra.mxu0 %v4193
  %v4195 = vand.u32 %v4040, 4294901760
  %4196 = vmatmul.f32.gmra.mxu0 %v4195
  %v4197 = vpop.f32.mrf.mxu0
  %v4198 = vadd.f32 %v4176, %v4197
  %4199 = vdwg.mxu0
  %4200 = vmatpush.msra.mxu0 0.0
  %4201 = vmatpush.msra.mxu0 0.0
  %4202 = vmatpush.msra.mxu0 0.0
  %4203 = vmatpush.msra.mxu0 0.0
  %4204 = vmatpush.msra.mxu0 0.0
  %4205 = vmatpush.msra.mxu0 0.0
  %4206 = vmatpush.msra.mxu0 0.0
  %4207 = vmatpush.msra.mxu0 0.0
  %4208 = vmatpush.msra.mxu0 0.0
  %4209 = vmatpush.msra.mxu0 0.0
  %4210 = vmatpush.msra.mxu0 0.0
  %4211 = vmatpush.msra.mxu0 0.0
  %4212 = vmatpush.msra.mxu0 0.0
  %4213 = vmatpush.msra.mxu0 0.0
  %4214 = vmatpush.msra.mxu0 0.0
  %v4215 = vand.u32 %v4046, 4294901760
  %4216 = vmatpush.msra.mxu0 %v4215
  %v4217 = vand.u32 %v4040, 4294901760
  %v4218 = vsub.f32 %v4040, %v4217
  %v4219 = vand.u32 %v4218, 4294901760
  %v4220 = vsub.f32 %v4218, %v4219
  %v4221 = vand.u32 %v4220, 4294901760
  %4222 = vmatmul.f32.gmra.mxu0 %v4221
  %v4223 = vpop.f32.mrf.mxu0
  %v4224 = vadd.f32 0.0, %v4223
  %4225 = vdwg.mxu0
  %4226 = vmatpush.msra.mxu0 0.0
  %4227 = vmatpush.msra.mxu0 0.0
  %4228 = vmatpush.msra.mxu0 0.0
  %4229 = vmatpush.msra.mxu0 0.0
  %4230 = vmatpush.msra.mxu0 0.0
  %4231 = vmatpush.msra.mxu0 0.0
  %4232 = vmatpush.msra.mxu0 0.0
  %4233 = vmatpush.msra.mxu0 0.0
  %4234 = vmatpush.msra.mxu0 0.0
  %4235 = vmatpush.msra.mxu0 0.0
  %4236 = vmatpush.msra.mxu0 0.0
  %4237 = vmatpush.msra.mxu0 0.0
  %4238 = vmatpush.msra.mxu0 0.0
  %4239 = vmatpush.msra.mxu0 0.0
  %4240 = vmatpush.msra.mxu0 0.0
  %v4241 = vand.u32 %v4046, 4294901760
  %v4242 = vsub.f32 %v4046, %v4241
  %v4243 = vand.u32 %v4242, 4294901760
  %v4244 = vsub.f32 %v4242, %v4243
  %v4245 = vand.u32 %v4244, 4294901760
  %4246 = vmatpush.msra.mxu0 %v4245
  %v4247 = vand.u32 %v4040, 4294901760
  %4248 = vmatmul.f32.gmra.mxu0 %v4247
  %v4249 = vpop.f32.mrf.mxu0
  %v4250 = vadd.f32 %v4224, %v4249
  %4251 = vdwg.mxu0
  %4252 = vmatpush.msra.mxu0 0.0
  %4253 = vmatpush.msra.mxu0 0.0
  %4254 = vmatpush.msra.mxu0 0.0
  %4255 = vmatpush.msra.mxu0 0.0
  %4256 = vmatpush.msra.mxu0 0.0
  %4257 = vmatpush.msra.mxu0 0.0
  %4258 = vmatpush.msra.mxu0 0.0
  %4259 = vmatpush.msra.mxu0 0.0
  %4260 = vmatpush.msra.mxu0 0.0
  %4261 = vmatpush.msra.mxu0 0.0
  %4262 = vmatpush.msra.mxu0 0.0
  %4263 = vmatpush.msra.mxu0 0.0
  %4264 = vmatpush.msra.mxu0 0.0
  %4265 = vmatpush.msra.mxu0 0.0
  %4266 = vmatpush.msra.mxu0 0.0
  %v4267 = vand.u32 %v4046, 4294901760
  %v4268 = vsub.f32 %v4046, %v4267
  %4269 = vmatpush.msra.mxu0 %v4268
  %v4270 = vand.u32 %v4040, 4294901760
  %v4271 = vsub.f32 %v4040, %v4270
  %4272 = vmatmul.f32.gmra.mxu0 %v4271
  %v4273 = vpop.f32.mrf.mxu0
  %v4274 = vadd.f32 %v4250, %v4273
  %4275 = vdwg.mxu0
  %4276 = vmatpush.msra.mxu0 0.0
  %4277 = vmatpush.msra.mxu0 0.0
  %4278 = vmatpush.msra.mxu0 0.0
  %4279 = vmatpush.msra.mxu0 0.0
  %4280 = vmatpush.msra.mxu0 0.0
  %4281 = vmatpush.msra.mxu0 0.0
  %4282 = vmatpush.msra.mxu0 0.0
  %4283 = vmatpush.msra.mxu0 0.0
  %4284 = vmatpush.msra.mxu0 0.0
  %4285 = vmatpush.msra.mxu0 0.0
  %4286 = vmatpush.msra.mxu0 0.0
  %4287 = vmatpush.msra.mxu0 0.0
  %4288 = vmatpush.msra.mxu0 0.0
  %4289 = vmatpush.msra.mxu0 0.0
  %4290 = vmatpush.msra.mxu0 0.0
  %v4291 = vand.u32 %v4046, 4294901760
  %4292 = vmatpush.msra.mxu0 %v4291
  %v4293 = vand.u32 %v4040, 4294901760
  %v4294 = vsub.f32 %v4040, %v4293
  %v4295 = vand.u32 %v4294, 4294901760
  %4296 = vmatmul.f32.gmra.mxu0 %v4295
  %v4297 = vpop.f32.mrf.mxu0
  %v4298 = vadd.f32 %v4274, %v4297
  %4299 = vdwg.mxu0
  %4300 = vmatpush.msra.mxu0 0.0
  %4301 = vmatpush.msra.mxu0 0.0
  %4302 = vmatpush.msra.mxu0 0.0
  %4303 = vmatpush.msra.mxu0 0.0
  %4304 = vmatpush.msra.mxu0 0.0
  %4305 = vmatpush.msra.mxu0 0.0
  %4306 = vmatpush.msra.mxu0 0.0
  %4307 = vmatpush.msra.mxu0 0.0
  %4308 = vmatpush.msra.mxu0 0.0
  %4309 = vmatpush.msra.mxu0 0.0
  %4310 = vmatpush.msra.mxu0 0.0
  %4311 = vmatpush.msra.mxu0 0.0
  %4312 = vmatpush.msra.mxu0 0.0
  %4313 = vmatpush.msra.mxu0 0.0
  %4314 = vmatpush.msra.mxu0 0.0
  %v4315 = vand.u32 %v4046, 4294901760
  %v4316 = vsub.f32 %v4046, %v4315
  %v4317 = vand.u32 %v4316, 4294901760
  %4318 = vmatpush.msra.mxu0 %v4317
  %v4319 = vand.u32 %v4040, 4294901760
  %4320 = vmatmul.f32.gmra.mxu0 %v4319
  %v4321 = vpop.f32.mrf.mxu0
  %v4322 = vadd.f32 %v4298, %v4321
  %4323 = vdwg.mxu0
  %4324 = vmatpush.msra.mxu0 0.0
  %4325 = vmatpush.msra.mxu0 0.0
  %4326 = vmatpush.msra.mxu0 0.0
  %4327 = vmatpush.msra.mxu0 0.0
  %4328 = vmatpush.msra.mxu0 0.0
  %4329 = vmatpush.msra.mxu0 0.0
  %4330 = vmatpush.msra.mxu0 0.0
  %4331 = vmatpush.msra.mxu0 0.0
  %4332 = vmatpush.msra.mxu0 0.0
  %4333 = vmatpush.msra.mxu0 0.0
  %4334 = vmatpush.msra.mxu0 0.0
  %4335 = vmatpush.msra.mxu0 0.0
  %4336 = vmatpush.msra.mxu0 0.0
  %4337 = vmatpush.msra.mxu0 0.0
  %4338 = vmatpush.msra.mxu0 0.0
  %v4339 = vand.u32 %v4046, 4294901760
  %4340 = vmatpush.msra.mxu0 %v4339
  %v4341 = vand.u32 %v4040, 4294901760
  %4342 = vmatmul.f32.gmra.mxu0 %v4341
  %v4343 = vpop.f32.mrf.mxu0
  %v4344 = vadd.f32 %v4322, %v4343
  %4345 = vdwg.mxu0
  %4346 = vmatpush.msra.mxu0 0.0
  %4347 = vmatpush.msra.mxu0 0.0
  %4348 = vmatpush.msra.mxu0 0.0
  %4349 = vmatpush.msra.mxu0 0.0
  %4350 = vmatpush.msra.mxu0 0.0
  %4351 = vmatpush.msra.mxu0 0.0
  %4352 = vmatpush.msra.mxu0 0.0
  %4353 = vmatpush.msra.mxu0 0.0
  %4354 = vmatpush.msra.mxu0 0.0
  %4355 = vmatpush.msra.mxu0 0.0
  %4356 = vmatpush.msra.mxu0 0.0
  %4357 = vmatpush.msra.mxu0 0.0
  %4358 = vmatpush.msra.mxu0 0.0
  %4359 = vmatpush.msra.mxu0 0.0
  %4360 = vmatpush.msra.mxu0 0.0
  %v4361 = vand.u32 %v4049, 4294901760
  %4362 = vmatpush.msra.mxu0 %v4361
  %v4363 = vand.u32 %v4040, 4294901760
  %v4364 = vsub.f32 %v4040, %v4363
  %v4365 = vand.u32 %v4364, 4294901760
  %v4366 = vsub.f32 %v4364, %v4365
  %v4367 = vand.u32 %v4366, 4294901760
  %4368 = vmatmul.f32.gmra.mxu0 %v4367
  %v4369 = vpop.f32.mrf.mxu0
  %v4370 = vadd.f32 0.0, %v4369
  %4371 = vdwg.mxu0
  %4372 = vmatpush.msra.mxu0 0.0
  %4373 = vmatpush.msra.mxu0 0.0
  %4374 = vmatpush.msra.mxu0 0.0
  %4375 = vmatpush.msra.mxu0 0.0
  %4376 = vmatpush.msra.mxu0 0.0
  %4377 = vmatpush.msra.mxu0 0.0
  %4378 = vmatpush.msra.mxu0 0.0
  %4379 = vmatpush.msra.mxu0 0.0
  %4380 = vmatpush.msra.mxu0 0.0
  %4381 = vmatpush.msra.mxu0 0.0
  %4382 = vmatpush.msra.mxu0 0.0
  %4383 = vmatpush.msra.mxu0 0.0
  %4384 = vmatpush.msra.mxu0 0.0
  %4385 = vmatpush.msra.mxu0 0.0
  %4386 = vmatpush.msra.mxu0 0.0
  %v4387 = vand.u32 %v4049, 4294901760
  %v4388 = vsub.f32 %v4049, %v4387
  %v4389 = vand.u32 %v4388, 4294901760
  %v4390 = vsub.f32 %v4388, %v4389
  %v4391 = vand.u32 %v4390, 4294901760
  %4392 = vmatpush.msra.mxu0 %v4391
  %v4393 = vand.u32 %v4040, 4294901760
  %4394 = vmatmul.f32.gmra.mxu0 %v4393
  %v4395 = vpop.f32.mrf.mxu0
  %v4396 = vadd.f32 %v4370, %v4395
  %4397 = vdwg.mxu0
  %4398 = vmatpush.msra.mxu0 0.0
  %4399 = vmatpush.msra.mxu0 0.0
  %4400 = vmatpush.msra.mxu0 0.0
  %4401 = vmatpush.msra.mxu0 0.0
  %4402 = vmatpush.msra.mxu0 0.0
  %4403 = vmatpush.msra.mxu0 0.0
  %4404 = vmatpush.msra.mxu0 0.0
  %4405 = vmatpush.msra.mxu0 0.0
  %4406 = vmatpush.msra.mxu0 0.0
  %4407 = vmatpush.msra.mxu0 0.0
  %4408 = vmatpush.msra.mxu0 0.0
  %4409 = vmatpush.msra.mxu0 0.0
  %4410 = vmatpush.msra.mxu0 0.0
  %4411 = vmatpush.msra.mxu0 0.0
  %4412 = vmatpush.msra.mxu0 0.0
  %v4413 = vand.u32 %v4049, 4294901760
  %v4414 = vsub.f32 %v4049, %v4413
  %4415 = vmatpush.msra.mxu0 %v4414
  %v4416 = vand.u32 %v4040, 4294901760
  %v4417 = vsub.f32 %v4040, %v4416
  %4418 = vmatmul.f32.gmra.mxu0 %v4417
  %v4419 = vpop.f32.mrf.mxu0
  %v4420 = vadd.f32 %v4396, %v4419
  %4421 = vdwg.mxu0
  %4422 = vmatpush.msra.mxu0 0.0
  %4423 = vmatpush.msra.mxu0 0.0
  %4424 = vmatpush.msra.mxu0 0.0
  %4425 = vmatpush.msra.mxu0 0.0
  %4426 = vmatpush.msra.mxu0 0.0
  %4427 = vmatpush.msra.mxu0 0.0
  %4428 = vmatpush.msra.mxu0 0.0
  %4429 = vmatpush.msra.mxu0 0.0
  %4430 = vmatpush.msra.mxu0 0.0
  %4431 = vmatpush.msra.mxu0 0.0
  %4432 = vmatpush.msra.mxu0 0.0
  %4433 = vmatpush.msra.mxu0 0.0
  %4434 = vmatpush.msra.mxu0 0.0
  %4435 = vmatpush.msra.mxu0 0.0
  %4436 = vmatpush.msra.mxu0 0.0
  %v4437 = vand.u32 %v4049, 4294901760
  %4438 = vmatpush.msra.mxu0 %v4437
  %v4439 = vand.u32 %v4040, 4294901760
  %v4440 = vsub.f32 %v4040, %v4439
  %v4441 = vand.u32 %v4440, 4294901760
  %4442 = vmatmul.f32.gmra.mxu0 %v4441
  %v4443 = vpop.f32.mrf.mxu0
  %v4444 = vadd.f32 %v4420, %v4443
  %4445 = vdwg.mxu0
  %4446 = vmatpush.msra.mxu0 0.0
  %4447 = vmatpush.msra.mxu0 0.0
  %4448 = vmatpush.msra.mxu0 0.0
  %4449 = vmatpush.msra.mxu0 0.0
  %4450 = vmatpush.msra.mxu0 0.0
  %4451 = vmatpush.msra.mxu0 0.0
  %4452 = vmatpush.msra.mxu0 0.0
  %4453 = vmatpush.msra.mxu0 0.0
  %4454 = vmatpush.msra.mxu0 0.0
  %4455 = vmatpush.msra.mxu0 0.0
  %4456 = vmatpush.msra.mxu0 0.0
  %4457 = vmatpush.msra.mxu0 0.0
  %4458 = vmatpush.msra.mxu0 0.0
  %4459 = vmatpush.msra.mxu0 0.0
  %4460 = vmatpush.msra.mxu0 0.0
  %v4461 = vand.u32 %v4049, 4294901760
  %v4462 = vsub.f32 %v4049, %v4461
  %v4463 = vand.u32 %v4462, 4294901760
  %4464 = vmatpush.msra.mxu0 %v4463
  %v4465 = vand.u32 %v4040, 4294901760
  %4466 = vmatmul.f32.gmra.mxu0 %v4465
  %v4467 = vpop.f32.mrf.mxu0
  %v4468 = vadd.f32 %v4444, %v4467
  %4469 = vdwg.mxu0
  %4470 = vmatpush.msra.mxu0 0.0
  %4471 = vmatpush.msra.mxu0 0.0
  %4472 = vmatpush.msra.mxu0 0.0
  %4473 = vmatpush.msra.mxu0 0.0
  %4474 = vmatpush.msra.mxu0 0.0
  %4475 = vmatpush.msra.mxu0 0.0
  %4476 = vmatpush.msra.mxu0 0.0
  %4477 = vmatpush.msra.mxu0 0.0
  %4478 = vmatpush.msra.mxu0 0.0
  %4479 = vmatpush.msra.mxu0 0.0
  %4480 = vmatpush.msra.mxu0 0.0
  %4481 = vmatpush.msra.mxu0 0.0
  %4482 = vmatpush.msra.mxu0 0.0
  %4483 = vmatpush.msra.mxu0 0.0
  %4484 = vmatpush.msra.mxu0 0.0
  %v4485 = vand.u32 %v4049, 4294901760
  %4486 = vmatpush.msra.mxu0 %v4485
  %v4487 = vand.u32 %v4040, 4294901760
  %4488 = vmatmul.f32.gmra.mxu0 %v4487
  %v4489 = vpop.f32.mrf.mxu0
  %v4490 = vadd.f32 %v4468, %v4489
  %4491 = vdwg.mxu0
  %4492 = vmatpush.msra.mxu0 0.0
  %4493 = vmatpush.msra.mxu0 0.0
  %4494 = vmatpush.msra.mxu0 0.0
  %4495 = vmatpush.msra.mxu0 0.0
  %4496 = vmatpush.msra.mxu0 0.0
  %4497 = vmatpush.msra.mxu0 0.0
  %4498 = vmatpush.msra.mxu0 0.0
  %4499 = vmatpush.msra.mxu0 0.0
  %4500 = vmatpush.msra.mxu0 0.0
  %4501 = vmatpush.msra.mxu0 0.0
  %4502 = vmatpush.msra.mxu0 0.0
  %4503 = vmatpush.msra.mxu0 0.0
  %4504 = vmatpush.msra.mxu0 0.0
  %4505 = vmatpush.msra.mxu0 0.0
  %4506 = vmatpush.msra.mxu0 0.0
  %v4507 = vand.u32 %v4052, 4294901760
  %4508 = vmatpush.msra.mxu0 %v4507
  %v4509 = vand.u32 %v4040, 4294901760
  %v4510 = vsub.f32 %v4040, %v4509
  %v4511 = vand.u32 %v4510, 4294901760
  %v4512 = vsub.f32 %v4510, %v4511
  %v4513 = vand.u32 %v4512, 4294901760
  %4514 = vmatmul.f32.gmra.mxu0 %v4513
  %v4515 = vpop.f32.mrf.mxu0
  %v4516 = vadd.f32 0.0, %v4515
  %4517 = vdwg.mxu0
  %4518 = vmatpush.msra.mxu0 0.0
  %4519 = vmatpush.msra.mxu0 0.0
  %4520 = vmatpush.msra.mxu0 0.0
  %4521 = vmatpush.msra.mxu0 0.0
  %4522 = vmatpush.msra.mxu0 0.0
  %4523 = vmatpush.msra.mxu0 0.0
  %4524 = vmatpush.msra.mxu0 0.0
  %4525 = vmatpush.msra.mxu0 0.0
  %4526 = vmatpush.msra.mxu0 0.0
  %4527 = vmatpush.msra.mxu0 0.0
  %4528 = vmatpush.msra.mxu0 0.0
  %4529 = vmatpush.msra.mxu0 0.0
  %4530 = vmatpush.msra.mxu0 0.0
  %4531 = vmatpush.msra.mxu0 0.0
  %4532 = vmatpush.msra.mxu0 0.0
  %v4533 = vand.u32 %v4052, 4294901760
  %v4534 = vsub.f32 %v4052, %v4533
  %v4535 = vand.u32 %v4534, 4294901760
  %v4536 = vsub.f32 %v4534, %v4535
  %v4537 = vand.u32 %v4536, 4294901760
  %4538 = vmatpush.msra.mxu0 %v4537
  %v4539 = vand.u32 %v4040, 4294901760
  %4540 = vmatmul.f32.gmra.mxu0 %v4539
  %v4541 = vpop.f32.mrf.mxu0
  %v4542 = vadd.f32 %v4516, %v4541
  %4543 = vdwg.mxu0
  %4544 = vmatpush.msra.mxu0 0.0
  %4545 = vmatpush.msra.mxu0 0.0
  %4546 = vmatpush.msra.mxu0 0.0
  %4547 = vmatpush.msra.mxu0 0.0
  %4548 = vmatpush.msra.mxu0 0.0
  %4549 = vmatpush.msra.mxu0 0.0
  %4550 = vmatpush.msra.mxu0 0.0
  %4551 = vmatpush.msra.mxu0 0.0
  %4552 = vmatpush.msra.mxu0 0.0
  %4553 = vmatpush.msra.mxu0 0.0
  %4554 = vmatpush.msra.mxu0 0.0
  %4555 = vmatpush.msra.mxu0 0.0
  %4556 = vmatpush.msra.mxu0 0.0
  %4557 = vmatpush.msra.mxu0 0.0
  %4558 = vmatpush.msra.mxu0 0.0
  %v4559 = vand.u32 %v4052, 4294901760
  %v4560 = vsub.f32 %v4052, %v4559
  %4561 = vmatpush.msra.mxu0 %v4560
  %v4562 = vand.u32 %v4040, 4294901760
  %v4563 = vsub.f32 %v4040, %v4562
  %4564 = vmatmul.f32.gmra.mxu0 %v4563
  %v4565 = vpop.f32.mrf.mxu0
  %v4566 = vadd.f32 %v4542, %v4565
  %4567 = vdwg.mxu0
  %4568 = vmatpush.msra.mxu0 0.0
  %4569 = vmatpush.msra.mxu0 0.0
  %4570 = vmatpush.msra.mxu0 0.0
  %4571 = vmatpush.msra.mxu0 0.0
  %4572 = vmatpush.msra.mxu0 0.0
  %4573 = vmatpush.msra.mxu0 0.0
  %4574 = vmatpush.msra.mxu0 0.0
  %4575 = vmatpush.msra.mxu0 0.0
  %4576 = vmatpush.msra.mxu0 0.0
  %4577 = vmatpush.msra.mxu0 0.0
  %4578 = vmatpush.msra.mxu0 0.0
  %4579 = vmatpush.msra.mxu0 0.0
  %4580 = vmatpush.msra.mxu0 0.0
  %4581 = vmatpush.msra.mxu0 0.0
  %4582 = vmatpush.msra.mxu0 0.0
  %v4583 = vand.u32 %v4052, 4294901760
  %4584 = vmatpush.msra.mxu0 %v4583
  %v4585 = vand.u32 %v4040, 4294901760
  %v4586 = vsub.f32 %v4040, %v4585
  %v4587 = vand.u32 %v4586, 4294901760
  %4588 = vmatmul.f32.gmra.mxu0 %v4587
  %v4589 = vpop.f32.mrf.mxu0
  %v4590 = vadd.f32 %v4566, %v4589
  %4591 = vdwg.mxu0
  %4592 = vmatpush.msra.mxu0 0.0
  %4593 = vmatpush.msra.mxu0 0.0
  %4594 = vmatpush.msra.mxu0 0.0
  %4595 = vmatpush.msra.mxu0 0.0
  %4596 = vmatpush.msra.mxu0 0.0
  %4597 = vmatpush.msra.mxu0 0.0
  %4598 = vmatpush.msra.mxu0 0.0
  %4599 = vmatpush.msra.mxu0 0.0
  %4600 = vmatpush.msra.mxu0 0.0
  %4601 = vmatpush.msra.mxu0 0.0
  %4602 = vmatpush.msra.mxu0 0.0
  %4603 = vmatpush.msra.mxu0 0.0
  %4604 = vmatpush.msra.mxu0 0.0
  %4605 = vmatpush.msra.mxu0 0.0
  %4606 = vmatpush.msra.mxu0 0.0
  %v4607 = vand.u32 %v4052, 4294901760
  %v4608 = vsub.f32 %v4052, %v4607
  %v4609 = vand.u32 %v4608, 4294901760
  %4610 = vmatpush.msra.mxu0 %v4609
  %v4611 = vand.u32 %v4040, 4294901760
  %4612 = vmatmul.f32.gmra.mxu0 %v4611
  %v4613 = vpop.f32.mrf.mxu0
  %v4614 = vadd.f32 %v4590, %v4613
  %4615 = vdwg.mxu0
  %4616 = vmatpush.msra.mxu0 0.0
  %4617 = vmatpush.msra.mxu0 0.0
  %4618 = vmatpush.msra.mxu0 0.0
  %4619 = vmatpush.msra.mxu0 0.0
  %4620 = vmatpush.msra.mxu0 0.0
  %4621 = vmatpush.msra.mxu0 0.0
  %4622 = vmatpush.msra.mxu0 0.0
  %4623 = vmatpush.msra.mxu0 0.0
  %4624 = vmatpush.msra.mxu0 0.0
  %4625 = vmatpush.msra.mxu0 0.0
  %4626 = vmatpush.msra.mxu0 0.0
  %4627 = vmatpush.msra.mxu0 0.0
  %4628 = vmatpush.msra.mxu0 0.0
  %4629 = vmatpush.msra.mxu0 0.0
  %4630 = vmatpush.msra.mxu0 0.0
  %v4631 = vand.u32 %v4052, 4294901760
  %4632 = vmatpush.msra.mxu0 %v4631
  %v4633 = vand.u32 %v4040, 4294901760
  %4634 = vmatmul.f32.gmra.mxu0 %v4633
  %v4635 = vpop.f32.mrf.mxu0
  %v4636 = vadd.f32 %v4614, %v4635
  %4637 = vdwg.mxu0
  %v4638 = vadd.f32 %v3992, %v4198
  %v4639 = vadd.f32 %v3993, %v4344
  %v4640 = vadd.f32 %v3994, %v4490
  %v4641 = vadd.f32 %v3995, %v4636
  %4642 = vst [vmem:[#allocation1] ss:$2 sm:$0xff] %v162
  %s4643 = scalar_lea.vmem [#allocation1], 16
  %4644 = vst [vmem:[%s4643] ss:$2 sm:$0xff] %v163
  %v4645 = vld.sshfl [vmem:[#allocation1] sm:$0xff pattern:$0x75316420]
  %v4646 = vld.sshfl [vmem:[#allocation1 + $0x8] sm:$0xff pattern:$0x75316420]
  %v4647 = vld.sshfl [vmem:[#allocation1 + $0x10] sm:$0xff pattern:$0x75316420]
  %v4648 = vld.sshfl [vmem:[#allocation1 + $0x18] sm:$0xff pattern:$0x75316420]
  %4649 = vrot.lane.b32.xlu0 %v4645, 112
  %v4650 = vpop.permute.xlu0 %4649
  %4651 = vrot.lane.b32.xlu0 %v4646, 112
  %v4652 = vpop.permute.xlu0 %4651
  %4653 = vrot.lane.b32.xlu0 %v4647, 112
  %v4654 = vpop.permute.xlu0 %4653
  %4655 = vrot.lane.b32.xlu0 %v4648, 112
  %v4656 = vpop.permute.xlu0 %4655
  %vm4657 = vcmask 916480
  %v4658 = vsel %vm4657, %v4650, %v4652
  %v4659 = vsel %vm4657, %v4652, %v4654
  %v4660 = vsel %vm4657, %v4654, %v4656
  %4665 = vst [vmem:[#allocation1] ss:$2 sm:$0xff] %v162
  %v4666 = vld.sshfl [vmem:[#allocation1] sm:$0xff pattern:$0x75316420]
  %4667 = vrot.lane.b32.xlu0 %v4666, 112
  %v4668 = vpop.permute.xlu0 %4667
  %v4670 = vsel %vm4657, %v4656, %v4668
  %v4671 = vsel %vm43, 1, 0
  %v4672 = vsel %vm44, 1, 0
  %v4673 = vsel %vm45, 1, 0
  %v4674 = vsel %vm46, 1, 0
  %vm4675 = vcmp.eq.s32.totalorder %v4671, 1
  %vm4676 = vcmp.eq.s32.totalorder %v4672, 1
  %vm4677 = vcmp.eq.s32.totalorder %v4673, 1
  %vm4678 = vcmp.eq.s32.totalorder %v4674, 1
  %v4679 = vsel %vm4675, %v4658, 0.0
  %v4680 = vsel %vm4676, %v4659, 0.0
  %v4681 = vsel %vm4677, %v4660, 0.0
  %v4682 = vsel %vm4678, %v4670, 0.0
  %s4683 = scalar_lea.vmem %s5, 28
  %v4684 = vld [vmem:[%s4683] sm:$0xf]
  %v4686 = vsel %vm251, %v4684, 0
  %v4689 = vsel %vm86, %v4679, 0
  %v4692 = vsel %vm86, %v4680, 0
  %v4695 = vsel %vm86, %v4681, 0
  %v4698 = vsel %vm86, %v4682, 0
  %4700 = vmatpush.msra.mxu0 0.0
  %4701 = vmatpush.msra.mxu0 0.0
  %4702 = vmatpush.msra.mxu0 0.0
  %4703 = vmatpush.msra.mxu0 0.0
  %4704 = vmatpush.msra.mxu0 0.0
  %4705 = vmatpush.msra.mxu0 0.0
  %4706 = vmatpush.msra.mxu0 0.0
  %4707 = vmatpush.msra.mxu0 0.0
  %4708 = vmatpush.msra.mxu0 0.0
  %4709 = vmatpush.msra.mxu0 0.0
  %4710 = vmatpush.msra.mxu0 0.0
  %4711 = vmatpush.msra.mxu0 0.0
  %4712 = vmatpush.msra.mxu0 0.0
  %4713 = vmatpush.msra.mxu0 0.0
  %4714 = vmatpush.msra.mxu0 0.0
  %v4715 = vand.u32 %v4689, 4294901760
  %4716 = vmatpush.msra.mxu0 %v4715
  %v4717 = vand.u32 %v4686, 4294901760
  %v4718 = vsub.f32 %v4686, %v4717
  %v4719 = vand.u32 %v4718, 4294901760
  %v4720 = vsub.f32 %v4718, %v4719
  %v4721 = vand.u32 %v4720, 4294901760
  %4722 = vmatmul.f32.gmra.mxu0 %v4721
  %v4723 = vpop.f32.mrf.mxu0
  %v4724 = vadd.f32 0.0, %v4723
  %4725 = vdwg.mxu0
  %4726 = vmatpush.msra.mxu0 0.0
  %4727 = vmatpush.msra.mxu0 0.0
  %4728 = vmatpush.msra.mxu0 0.0
  %4729 = vmatpush.msra.mxu0 0.0
  %4730 = vmatpush.msra.mxu0 0.0
  %4731 = vmatpush.msra.mxu0 0.0
  %4732 = vmatpush.msra.mxu0 0.0
  %4733 = vmatpush.msra.mxu0 0.0
  %4734 = vmatpush.msra.mxu0 0.0
  %4735 = vmatpush.msra.mxu0 0.0
  %4736 = vmatpush.msra.mxu0 0.0
  %4737 = vmatpush.msra.mxu0 0.0
  %4738 = vmatpush.msra.mxu0 0.0
  %4739 = vmatpush.msra.mxu0 0.0
  %4740 = vmatpush.msra.mxu0 0.0
  %v4741 = vand.u32 %v4689, 4294901760
  %v4742 = vsub.f32 %v4689, %v4741
  %v4743 = vand.u32 %v4742, 4294901760
  %v4744 = vsub.f32 %v4742, %v4743
  %v4745 = vand.u32 %v4744, 4294901760
  %4746 = vmatpush.msra.mxu0 %v4745
  %v4747 = vand.u32 %v4686, 4294901760
  %4748 = vmatmul.f32.gmra.mxu0 %v4747
  %v4749 = vpop.f32.mrf.mxu0
  %v4750 = vadd.f32 %v4724, %v4749
  %4751 = vdwg.mxu0
  %4752 = vmatpush.msra.mxu0 0.0
  %4753 = vmatpush.msra.mxu0 0.0
  %4754 = vmatpush.msra.mxu0 0.0
  %4755 = vmatpush.msra.mxu0 0.0
  %4756 = vmatpush.msra.mxu0 0.0
  %4757 = vmatpush.msra.mxu0 0.0
  %4758 = vmatpush.msra.mxu0 0.0
  %4759 = vmatpush.msra.mxu0 0.0
  %4760 = vmatpush.msra.mxu0 0.0
  %4761 = vmatpush.msra.mxu0 0.0
  %4762 = vmatpush.msra.mxu0 0.0
  %4763 = vmatpush.msra.mxu0 0.0
  %4764 = vmatpush.msra.mxu0 0.0
  %4765 = vmatpush.msra.mxu0 0.0
  %4766 = vmatpush.msra.mxu0 0.0
  %v4767 = vand.u32 %v4689, 4294901760
  %v4768 = vsub.f32 %v4689, %v4767
  %4769 = vmatpush.msra.mxu0 %v4768
  %v4770 = vand.u32 %v4686, 4294901760
  %v4771 = vsub.f32 %v4686, %v4770
  %4772 = vmatmul.f32.gmra.mxu0 %v4771
  %v4773 = vpop.f32.mrf.mxu0
  %v4774 = vadd.f32 %v4750, %v4773
  %4775 = vdwg.mxu0
  %4776 = vmatpush.msra.mxu0 0.0
  %4777 = vmatpush.msra.mxu0 0.0
  %4778 = vmatpush.msra.mxu0 0.0
  %4779 = vmatpush.msra.mxu0 0.0
  %4780 = vmatpush.msra.mxu0 0.0
  %4781 = vmatpush.msra.mxu0 0.0
  %4782 = vmatpush.msra.mxu0 0.0
  %4783 = vmatpush.msra.mxu0 0.0
  %4784 = vmatpush.msra.mxu0 0.0
  %4785 = vmatpush.msra.mxu0 0.0
  %4786 = vmatpush.msra.mxu0 0.0
  %4787 = vmatpush.msra.mxu0 0.0
  %4788 = vmatpush.msra.mxu0 0.0
  %4789 = vmatpush.msra.mxu0 0.0
  %4790 = vmatpush.msra.mxu0 0.0
  %v4791 = vand.u32 %v4689, 4294901760
  %4792 = vmatpush.msra.mxu0 %v4791
  %v4793 = vand.u32 %v4686, 4294901760
  %v4794 = vsub.f32 %v4686, %v4793
  %v4795 = vand.u32 %v4794, 4294901760
  %4796 = vmatmul.f32.gmra.mxu0 %v4795
  %v4797 = vpop.f32.mrf.mxu0
  %v4798 = vadd.f32 %v4774, %v4797
  %4799 = vdwg.mxu0
  %4800 = vmatpush.msra.mxu0 0.0
  %4801 = vmatpush.msra.mxu0 0.0
  %4802 = vmatpush.msra.mxu0 0.0
  %4803 = vmatpush.msra.mxu0 0.0
  %4804 = vmatpush.msra.mxu0 0.0
  %4805 = vmatpush.msra.mxu0 0.0
  %4806 = vmatpush.msra.mxu0 0.0
  %4807 = vmatpush.msra.mxu0 0.0
  %4808 = vmatpush.msra.mxu0 0.0
  %4809 = vmatpush.msra.mxu0 0.0
  %4810 = vmatpush.msra.mxu0 0.0
  %4811 = vmatpush.msra.mxu0 0.0
  %4812 = vmatpush.msra.mxu0 0.0
  %4813 = vmatpush.msra.mxu0 0.0
  %4814 = vmatpush.msra.mxu0 0.0
  %v4815 = vand.u32 %v4689, 4294901760
  %v4816 = vsub.f32 %v4689, %v4815
  %v4817 = vand.u32 %v4816, 4294901760
  %4818 = vmatpush.msra.mxu0 %v4817
  %v4819 = vand.u32 %v4686, 4294901760
  %4820 = vmatmul.f32.gmra.mxu0 %v4819
  %v4821 = vpop.f32.mrf.mxu0
  %v4822 = vadd.f32 %v4798, %v4821
  %4823 = vdwg.mxu0
  %4824 = vmatpush.msra.mxu0 0.0
  %4825 = vmatpush.msra.mxu0 0.0
  %4826 = vmatpush.msra.mxu0 0.0
  %4827 = vmatpush.msra.mxu0 0.0
  %4828 = vmatpush.msra.mxu0 0.0
  %4829 = vmatpush.msra.mxu0 0.0
  %4830 = vmatpush.msra.mxu0 0.0
  %4831 = vmatpush.msra.mxu0 0.0
  %4832 = vmatpush.msra.mxu0 0.0
  %4833 = vmatpush.msra.mxu0 0.0
  %4834 = vmatpush.msra.mxu0 0.0
  %4835 = vmatpush.msra.mxu0 0.0
  %4836 = vmatpush.msra.mxu0 0.0
  %4837 = vmatpush.msra.mxu0 0.0
  %4838 = vmatpush.msra.mxu0 0.0
  %v4839 = vand.u32 %v4689, 4294901760
  %4840 = vmatpush.msra.mxu0 %v4839
  %v4841 = vand.u32 %v4686, 4294901760
  %4842 = vmatmul.f32.gmra.mxu0 %v4841
  %v4843 = vpop.f32.mrf.mxu0
  %v4844 = vadd.f32 %v4822, %v4843
  %4845 = vdwg.mxu0
  %4846 = vmatpush.msra.mxu0 0.0
  %4847 = vmatpush.msra.mxu0 0.0
  %4848 = vmatpush.msra.mxu0 0.0
  %4849 = vmatpush.msra.mxu0 0.0
  %4850 = vmatpush.msra.mxu0 0.0
  %4851 = vmatpush.msra.mxu0 0.0
  %4852 = vmatpush.msra.mxu0 0.0
  %4853 = vmatpush.msra.mxu0 0.0
  %4854 = vmatpush.msra.mxu0 0.0
  %4855 = vmatpush.msra.mxu0 0.0
  %4856 = vmatpush.msra.mxu0 0.0
  %4857 = vmatpush.msra.mxu0 0.0
  %4858 = vmatpush.msra.mxu0 0.0
  %4859 = vmatpush.msra.mxu0 0.0
  %4860 = vmatpush.msra.mxu0 0.0
  %v4861 = vand.u32 %v4692, 4294901760
  %4862 = vmatpush.msra.mxu0 %v4861
  %v4863 = vand.u32 %v4686, 4294901760
  %v4864 = vsub.f32 %v4686, %v4863
  %v4865 = vand.u32 %v4864, 4294901760
  %v4866 = vsub.f32 %v4864, %v4865
  %v4867 = vand.u32 %v4866, 4294901760
  %4868 = vmatmul.f32.gmra.mxu0 %v4867
  %v4869 = vpop.f32.mrf.mxu0
  %v4870 = vadd.f32 0.0, %v4869
  %4871 = vdwg.mxu0
  %4872 = vmatpush.msra.mxu0 0.0
  %4873 = vmatpush.msra.mxu0 0.0
  %4874 = vmatpush.msra.mxu0 0.0
  %4875 = vmatpush.msra.mxu0 0.0
  %4876 = vmatpush.msra.mxu0 0.0
  %4877 = vmatpush.msra.mxu0 0.0
  %4878 = vmatpush.msra.mxu0 0.0
  %4879 = vmatpush.msra.mxu0 0.0
  %4880 = vmatpush.msra.mxu0 0.0
  %4881 = vmatpush.msra.mxu0 0.0
  %4882 = vmatpush.msra.mxu0 0.0
  %4883 = vmatpush.msra.mxu0 0.0
  %4884 = vmatpush.msra.mxu0 0.0
  %4885 = vmatpush.msra.mxu0 0.0
  %4886 = vmatpush.msra.mxu0 0.0
  %v4887 = vand.u32 %v4692, 4294901760
  %v4888 = vsub.f32 %v4692, %v4887
  %v4889 = vand.u32 %v4888, 4294901760
  %v4890 = vsub.f32 %v4888, %v4889
  %v4891 = vand.u32 %v4890, 4294901760
  %4892 = vmatpush.msra.mxu0 %v4891
  %v4893 = vand.u32 %v4686, 4294901760
  %4894 = vmatmul.f32.gmra.mxu0 %v4893
  %v4895 = vpop.f32.mrf.mxu0
  %v4896 = vadd.f32 %v4870, %v4895
  %4897 = vdwg.mxu0
  %4898 = vmatpush.msra.mxu0 0.0
  %4899 = vmatpush.msra.mxu0 0.0
  %4900 = vmatpush.msra.mxu0 0.0
  %4901 = vmatpush.msra.mxu0 0.0
  %4902 = vmatpush.msra.mxu0 0.0
  %4903 = vmatpush.msra.mxu0 0.0
  %4904 = vmatpush.msra.mxu0 0.0
  %4905 = vmatpush.msra.mxu0 0.0
  %4906 = vmatpush.msra.mxu0 0.0
  %4907 = vmatpush.msra.mxu0 0.0
  %4908 = vmatpush.msra.mxu0 0.0
  %4909 = vmatpush.msra.mxu0 0.0
  %4910 = vmatpush.msra.mxu0 0.0
  %4911 = vmatpush.msra.mxu0 0.0
  %4912 = vmatpush.msra.mxu0 0.0
  %v4913 = vand.u32 %v4692, 4294901760
  %v4914 = vsub.f32 %v4692, %v4913
  %4915 = vmatpush.msra.mxu0 %v4914
  %v4916 = vand.u32 %v4686, 4294901760
  %v4917 = vsub.f32 %v4686, %v4916
  %4918 = vmatmul.f32.gmra.mxu0 %v4917
  %v4919 = vpop.f32.mrf.mxu0
  %v4920 = vadd.f32 %v4896, %v4919
  %4921 = vdwg.mxu0
  %4922 = vmatpush.msra.mxu0 0.0
  %4923 = vmatpush.msra.mxu0 0.0
  %4924 = vmatpush.msra.mxu0 0.0
  %4925 = vmatpush.msra.mxu0 0.0
  %4926 = vmatpush.msra.mxu0 0.0
  %4927 = vmatpush.msra.mxu0 0.0
  %4928 = vmatpush.msra.mxu0 0.0
  %4929 = vmatpush.msra.mxu0 0.0
  %4930 = vmatpush.msra.mxu0 0.0
  %4931 = vmatpush.msra.mxu0 0.0
  %4932 = vmatpush.msra.mxu0 0.0
  %4933 = vmatpush.msra.mxu0 0.0
  %4934 = vmatpush.msra.mxu0 0.0
  %4935 = vmatpush.msra.mxu0 0.0
  %4936 = vmatpush.msra.mxu0 0.0
  %v4937 = vand.u32 %v4692, 4294901760
  %4938 = vmatpush.msra.mxu0 %v4937
  %v4939 = vand.u32 %v4686, 4294901760
  %v4940 = vsub.f32 %v4686, %v4939
  %v4941 = vand.u32 %v4940, 4294901760
  %4942 = vmatmul.f32.gmra.mxu0 %v4941
  %v4943 = vpop.f32.mrf.mxu0
  %v4944 = vadd.f32 %v4920, %v4943
  %4945 = vdwg.mxu0
  %4946 = vmatpush.msra.mxu0 0.0
  %4947 = vmatpush.msra.mxu0 0.0
  %4948 = vmatpush.msra.mxu0 0.0
  %4949 = vmatpush.msra.mxu0 0.0
  %4950 = vmatpush.msra.mxu0 0.0
  %4951 = vmatpush.msra.mxu0 0.0
  %4952 = vmatpush.msra.mxu0 0.0
  %4953 = vmatpush.msra.mxu0 0.0
  %4954 = vmatpush.msra.mxu0 0.0
  %4955 = vmatpush.msra.mxu0 0.0
  %4956 = vmatpush.msra.mxu0 0.0
  %4957 = vmatpush.msra.mxu0 0.0
  %4958 = vmatpush.msra.mxu0 0.0
  %4959 = vmatpush.msra.mxu0 0.0
  %4960 = vmatpush.msra.mxu0 0.0
  %v4961 = vand.u32 %v4692, 4294901760
  %v4962 = vsub.f32 %v4692, %v4961
  %v4963 = vand.u32 %v4962, 4294901760
  %4964 = vmatpush.msra.mxu0 %v4963
  %v4965 = vand.u32 %v4686, 4294901760
  %4966 = vmatmul.f32.gmra.mxu0 %v4965
  %v4967 = vpop.f32.mrf.mxu0
  %v4968 = vadd.f32 %v4944, %v4967
  %4969 = vdwg.mxu0
  %4970 = vmatpush.msra.mxu0 0.0
  %4971 = vmatpush.msra.mxu0 0.0
  %4972 = vmatpush.msra.mxu0 0.0
  %4973 = vmatpush.msra.mxu0 0.0
  %4974 = vmatpush.msra.mxu0 0.0
  %4975 = vmatpush.msra.mxu0 0.0
  %4976 = vmatpush.msra.mxu0 0.0
  %4977 = vmatpush.msra.mxu0 0.0
  %4978 = vmatpush.msra.mxu0 0.0
  %4979 = vmatpush.msra.mxu0 0.0
  %4980 = vmatpush.msra.mxu0 0.0
  %4981 = vmatpush.msra.mxu0 0.0
  %4982 = vmatpush.msra.mxu0 0.0
  %4983 = vmatpush.msra.mxu0 0.0
  %4984 = vmatpush.msra.mxu0 0.0
  %v4985 = vand.u32 %v4692, 4294901760
  %4986 = vmatpush.msra.mxu0 %v4985
  %v4987 = vand.u32 %v4686, 4294901760
  %4988 = vmatmul.f32.gmra.mxu0 %v4987
  %v4989 = vpop.f32.mrf.mxu0
  %v4990 = vadd.f32 %v4968, %v4989
  %4991 = vdwg.mxu0
  %4992 = vmatpush.msra.mxu0 0.0
  %4993 = vmatpush.msra.mxu0 0.0
  %4994 = vmatpush.msra.mxu0 0.0
  %4995 = vmatpush.msra.mxu0 0.0
  %4996 = vmatpush.msra.mxu0 0.0
  %4997 = vmatpush.msra.mxu0 0.0
  %4998 = vmatpush.msra.mxu0 0.0
  %4999 = vmatpush.msra.mxu0 0.0
  %5000 = vmatpush.msra.mxu0 0.0
  %5001 = vmatpush.msra.mxu0 0.0
  %5002 = vmatpush.msra.mxu0 0.0
  %5003 = vmatpush.msra.mxu0 0.0
  %5004 = vmatpush.msra.mxu0 0.0
  %5005 = vmatpush.msra.mxu0 0.0
  %5006 = vmatpush.msra.mxu0 0.0
  %v5007 = vand.u32 %v4695, 4294901760
  %5008 = vmatpush.msra.mxu0 %v5007
  %v5009 = vand.u32 %v4686, 4294901760
  %v5010 = vsub.f32 %v4686, %v5009
  %v5011 = vand.u32 %v5010, 4294901760
  %v5012 = vsub.f32 %v5010, %v5011
  %v5013 = vand.u32 %v5012, 4294901760
  %5014 = vmatmul.f32.gmra.mxu0 %v5013
  %v5015 = vpop.f32.mrf.mxu0
  %v5016 = vadd.f32 0.0, %v5015
  %5017 = vdwg.mxu0
  %5018 = vmatpush.msra.mxu0 0.0
  %5019 = vmatpush.msra.mxu0 0.0
  %5020 = vmatpush.msra.mxu0 0.0
  %5021 = vmatpush.msra.mxu0 0.0
  %5022 = vmatpush.msra.mxu0 0.0
  %5023 = vmatpush.msra.mxu0 0.0
  %5024 = vmatpush.msra.mxu0 0.0
  %5025 = vmatpush.msra.mxu0 0.0
  %5026 = vmatpush.msra.mxu0 0.0
  %5027 = vmatpush.msra.mxu0 0.0
  %5028 = vmatpush.msra.mxu0 0.0
  %5029 = vmatpush.msra.mxu0 0.0
  %5030 = vmatpush.msra.mxu0 0.0
  %5031 = vmatpush.msra.mxu0 0.0
  %5032 = vmatpush.msra.mxu0 0.0
  %v5033 = vand.u32 %v4695, 4294901760
  %v5034 = vsub.f32 %v4695, %v5033
  %v5035 = vand.u32 %v5034, 4294901760
  %v5036 = vsub.f32 %v5034, %v5035
  %v5037 = vand.u32 %v5036, 4294901760
  %5038 = vmatpush.msra.mxu0 %v5037
  %v5039 = vand.u32 %v4686, 4294901760
  %5040 = vmatmul.f32.gmra.mxu0 %v5039
  %v5041 = vpop.f32.mrf.mxu0
  %v5042 = vadd.f32 %v5016, %v5041
  %5043 = vdwg.mxu0
  %5044 = vmatpush.msra.mxu0 0.0
  %5045 = vmatpush.msra.mxu0 0.0
  %5046 = vmatpush.msra.mxu0 0.0
  %5047 = vmatpush.msra.mxu0 0.0
  %5048 = vmatpush.msra.mxu0 0.0
  %5049 = vmatpush.msra.mxu0 0.0
  %5050 = vmatpush.msra.mxu0 0.0
  %5051 = vmatpush.msra.mxu0 0.0
  %5052 = vmatpush.msra.mxu0 0.0
  %5053 = vmatpush.msra.mxu0 0.0
  %5054 = vmatpush.msra.mxu0 0.0
  %5055 = vmatpush.msra.mxu0 0.0
  %5056 = vmatpush.msra.mxu0 0.0
  %5057 = vmatpush.msra.mxu0 0.0
  %5058 = vmatpush.msra.mxu0 0.0
  %v5059 = vand.u32 %v4695, 4294901760
  %v5060 = vsub.f32 %v4695, %v5059
  %5061 = vmatpush.msra.mxu0 %v5060
  %v5062 = vand.u32 %v4686, 4294901760
  %v5063 = vsub.f32 %v4686, %v5062
  %5064 = vmatmul.f32.gmra.mxu0 %v5063
  %v5065 = vpop.f32.mrf.mxu0
  %v5066 = vadd.f32 %v5042, %v5065
  %5067 = vdwg.mxu0
  %5068 = vmatpush.msra.mxu0 0.0
  %5069 = vmatpush.msra.mxu0 0.0
  %5070 = vmatpush.msra.mxu0 0.0
  %5071 = vmatpush.msra.mxu0 0.0
  %5072 = vmatpush.msra.mxu0 0.0
  %5073 = vmatpush.msra.mxu0 0.0
  %5074 = vmatpush.msra.mxu0 0.0
  %5075 = vmatpush.msra.mxu0 0.0
  %5076 = vmatpush.msra.mxu0 0.0
  %5077 = vmatpush.msra.mxu0 0.0
  %5078 = vmatpush.msra.mxu0 0.0
  %5079 = vmatpush.msra.mxu0 0.0
  %5080 = vmatpush.msra.mxu0 0.0
  %5081 = vmatpush.msra.mxu0 0.0
  %5082 = vmatpush.msra.mxu0 0.0
  %v5083 = vand.u32 %v4695, 4294901760
  %5084 = vmatpush.msra.mxu0 %v5083
  %v5085 = vand.u32 %v4686, 4294901760
  %v5086 = vsub.f32 %v4686, %v5085
  %v5087 = vand.u32 %v5086, 4294901760
  %5088 = vmatmul.f32.gmra.mxu0 %v5087
  %v5089 = vpop.f32.mrf.mxu0
  %v5090 = vadd.f32 %v5066, %v5089
  %5091 = vdwg.mxu0
  %5092 = vmatpush.msra.mxu0 0.0
  %5093 = vmatpush.msra.mxu0 0.0
  %5094 = vmatpush.msra.mxu0 0.0
  %5095 = vmatpush.msra.mxu0 0.0
  %5096 = vmatpush.msra.mxu0 0.0
  %5097 = vmatpush.msra.mxu0 0.0
  %5098 = vmatpush.msra.mxu0 0.0
  %5099 = vmatpush.msra.mxu0 0.0
  %5100 = vmatpush.msra.mxu0 0.0
  %5101 = vmatpush.msra.mxu0 0.0
  %5102 = vmatpush.msra.mxu0 0.0
  %5103 = vmatpush.msra.mxu0 0.0
  %5104 = vmatpush.msra.mxu0 0.0
  %5105 = vmatpush.msra.mxu0 0.0
  %5106 = vmatpush.msra.mxu0 0.0
  %v5107 = vand.u32 %v4695, 4294901760
  %v5108 = vsub.f32 %v4695, %v5107
  %v5109 = vand.u32 %v5108, 4294901760
  %5110 = vmatpush.msra.mxu0 %v5109
  %v5111 = vand.u32 %v4686, 4294901760
  %5112 = vmatmul.f32.gmra.mxu0 %v5111
  %v5113 = vpop.f32.mrf.mxu0
  %v5114 = vadd.f32 %v5090, %v5113
  %5115 = vdwg.mxu0
  %5116 = vmatpush.msra.mxu0 0.0
  %5117 = vmatpush.msra.mxu0 0.0
  %5118 = vmatpush.msra.mxu0 0.0
  %5119 = vmatpush.msra.mxu0 0.0
  %5120 = vmatpush.msra.mxu0 0.0
  %5121 = vmatpush.msra.mxu0 0.0
  %5122 = vmatpush.msra.mxu0 0.0
  %5123 = vmatpush.msra.mxu0 0.0
  %5124 = vmatpush.msra.mxu0 0.0
  %5125 = vmatpush.msra.mxu0 0.0
  %5126 = vmatpush.msra.mxu0 0.0
  %5127 = vmatpush.msra.mxu0 0.0
  %5128 = vmatpush.msra.mxu0 0.0
  %5129 = vmatpush.msra.mxu0 0.0
  %5130 = vmatpush.msra.mxu0 0.0
  %v5131 = vand.u32 %v4695, 4294901760
  %5132 = vmatpush.msra.mxu0 %v5131
  %v5133 = vand.u32 %v4686, 4294901760
  %5134 = vmatmul.f32.gmra.mxu0 %v5133
  %v5135 = vpop.f32.mrf.mxu0
  %v5136 = vadd.f32 %v5114, %v5135
  %5137 = vdwg.mxu0
  %5138 = vmatpush.msra.mxu0 0.0
  %5139 = vmatpush.msra.mxu0 0.0
  %5140 = vmatpush.msra.mxu0 0.0
  %5141 = vmatpush.msra.mxu0 0.0
  %5142 = vmatpush.msra.mxu0 0.0
  %5143 = vmatpush.msra.mxu0 0.0
  %5144 = vmatpush.msra.mxu0 0.0
  %5145 = vmatpush.msra.mxu0 0.0
  %5146 = vmatpush.msra.mxu0 0.0
  %5147 = vmatpush.msra.mxu0 0.0
  %5148 = vmatpush.msra.mxu0 0.0
  %5149 = vmatpush.msra.mxu0 0.0
  %5150 = vmatpush.msra.mxu0 0.0
  %5151 = vmatpush.msra.mxu0 0.0
  %5152 = vmatpush.msra.mxu0 0.0
  %v5153 = vand.u32 %v4698, 4294901760
  %5154 = vmatpush.msra.mxu0 %v5153
  %v5155 = vand.u32 %v4686, 4294901760
  %v5156 = vsub.f32 %v4686, %v5155
  %v5157 = vand.u32 %v5156, 4294901760
  %v5158 = vsub.f32 %v5156, %v5157
  %v5159 = vand.u32 %v5158, 4294901760
  %5160 = vmatmul.f32.gmra.mxu0 %v5159
  %v5161 = vpop.f32.mrf.mxu0
  %v5162 = vadd.f32 0.0, %v5161
  %5163 = vdwg.mxu0
  %5164 = vmatpush.msra.mxu0 0.0
  %5165 = vmatpush.msra.mxu0 0.0
  %5166 = vmatpush.msra.mxu0 0.0
  %5167 = vmatpush.msra.mxu0 0.0
  %5168 = vmatpush.msra.mxu0 0.0
  %5169 = vmatpush.msra.mxu0 0.0
  %5170 = vmatpush.msra.mxu0 0.0
  %5171 = vmatpush.msra.mxu0 0.0
  %5172 = vmatpush.msra.mxu0 0.0
  %5173 = vmatpush.msra.mxu0 0.0
  %5174 = vmatpush.msra.mxu0 0.0
  %5175 = vmatpush.msra.mxu0 0.0
  %5176 = vmatpush.msra.mxu0 0.0
  %5177 = vmatpush.msra.mxu0 0.0
  %5178 = vmatpush.msra.mxu0 0.0
  %v5179 = vand.u32 %v4698, 4294901760
  %v5180 = vsub.f32 %v4698, %v5179
  %v5181 = vand.u32 %v5180, 4294901760
  %v5182 = vsub.f32 %v5180, %v5181
  %v5183 = vand.u32 %v5182, 4294901760
  %5184 = vmatpush.msra.mxu0 %v5183
  %v5185 = vand.u32 %v4686, 4294901760
  %5186 = vmatmul.f32.gmra.mxu0 %v5185
  %v5187 = vpop.f32.mrf.mxu0
  %v5188 = vadd.f32 %v5162, %v5187
  %5189 = vdwg.mxu0
  %5190 = vmatpush.msra.mxu0 0.0
  %5191 = vmatpush.msra.mxu0 0.0
  %5192 = vmatpush.msra.mxu0 0.0
  %5193 = vmatpush.msra.mxu0 0.0
  %5194 = vmatpush.msra.mxu0 0.0
  %5195 = vmatpush.msra.mxu0 0.0
  %5196 = vmatpush.msra.mxu0 0.0
  %5197 = vmatpush.msra.mxu0 0.0
  %5198 = vmatpush.msra.mxu0 0.0
  %5199 = vmatpush.msra.mxu0 0.0
  %5200 = vmatpush.msra.mxu0 0.0
  %5201 = vmatpush.msra.mxu0 0.0
  %5202 = vmatpush.msra.mxu0 0.0
  %5203 = vmatpush.msra.mxu0 0.0
  %5204 = vmatpush.msra.mxu0 0.0
  %v5205 = vand.u32 %v4698, 4294901760
  %v5206 = vsub.f32 %v4698, %v5205
  %5207 = vmatpush.msra.mxu0 %v5206
  %v5208 = vand.u32 %v4686, 4294901760
  %v5209 = vsub.f32 %v4686, %v5208
  %5210 = vmatmul.f32.gmra.mxu0 %v5209
  %v5211 = vpop.f32.mrf.mxu0
  %v5212 = vadd.f32 %v5188, %v5211
  %5213 = vdwg.mxu0
  %5214 = vmatpush.msra.mxu0 0.0
  %5215 = vmatpush.msra.mxu0 0.0
  %5216 = vmatpush.msra.mxu0 0.0
  %5217 = vmatpush.msra.mxu0 0.0
  %5218 = vmatpush.msra.mxu0 0.0
  %5219 = vmatpush.msra.mxu0 0.0
  %5220 = vmatpush.msra.mxu0 0.0
  %5221 = vmatpush.msra.mxu0 0.0
  %5222 = vmatpush.msra.mxu0 0.0
  %5223 = vmatpush.msra.mxu0 0.0
  %5224 = vmatpush.msra.mxu0 0.0
  %5225 = vmatpush.msra.mxu0 0.0
  %5226 = vmatpush.msra.mxu0 0.0
  %5227 = vmatpush.msra.mxu0 0.0
  %5228 = vmatpush.msra.mxu0 0.0
  %v5229 = vand.u32 %v4698, 4294901760
  %5230 = vmatpush.msra.mxu0 %v5229
  %v5231 = vand.u32 %v4686, 4294901760
  %v5232 = vsub.f32 %v4686, %v5231
  %v5233 = vand.u32 %v5232, 4294901760
  %5234 = vmatmul.f32.gmra.mxu0 %v5233
  %v5235 = vpop.f32.mrf.mxu0
  %v5236 = vadd.f32 %v5212, %v5235
  %5237 = vdwg.mxu0
  %5238 = vmatpush.msra.mxu0 0.0
  %5239 = vmatpush.msra.mxu0 0.0
  %5240 = vmatpush.msra.mxu0 0.0
  %5241 = vmatpush.msra.mxu0 0.0
  %5242 = vmatpush.msra.mxu0 0.0
  %5243 = vmatpush.msra.mxu0 0.0
  %5244 = vmatpush.msra.mxu0 0.0
  %5245 = vmatpush.msra.mxu0 0.0
  %5246 = vmatpush.msra.mxu0 0.0
  %5247 = vmatpush.msra.mxu0 0.0
  %5248 = vmatpush.msra.mxu0 0.0
  %5249 = vmatpush.msra.mxu0 0.0
  %5250 = vmatpush.msra.mxu0 0.0
  %5251 = vmatpush.msra.mxu0 0.0
  %5252 = vmatpush.msra.mxu0 0.0
  %v5253 = vand.u32 %v4698, 4294901760
  %v5254 = vsub.f32 %v4698, %v5253
  %v5255 = vand.u32 %v5254, 4294901760
  %5256 = vmatpush.msra.mxu0 %v5255
  %v5257 = vand.u32 %v4686, 4294901760
  %5258 = vmatmul.f32.gmra.mxu0 %v5257
  %v5259 = vpop.f32.mrf.mxu0
  %v5260 = vadd.f32 %v5236, %v5259
  %5261 = vdwg.mxu0
  %5262 = vmatpush.msra.mxu0 0.0
  %5263 = vmatpush.msra.mxu0 0.0
  %5264 = vmatpush.msra.mxu0 0.0
  %5265 = vmatpush.msra.mxu0 0.0
  %5266 = vmatpush.msra.mxu0 0.0
  %5267 = vmatpush.msra.mxu0 0.0
  %5268 = vmatpush.msra.mxu0 0.0
  %5269 = vmatpush.msra.mxu0 0.0
  %5270 = vmatpush.msra.mxu0 0.0
  %5271 = vmatpush.msra.mxu0 0.0
  %5272 = vmatpush.msra.mxu0 0.0
  %5273 = vmatpush.msra.mxu0 0.0
  %5274 = vmatpush.msra.mxu0 0.0
  %5275 = vmatpush.msra.mxu0 0.0
  %5276 = vmatpush.msra.mxu0 0.0
  %v5277 = vand.u32 %v4698, 4294901760
  %5278 = vmatpush.msra.mxu0 %v5277
  %v5279 = vand.u32 %v4686, 4294901760
  %5280 = vmatmul.f32.gmra.mxu0 %v5279
  %v5281 = vpop.f32.mrf.mxu0
  %v5282 = vadd.f32 %v5260, %v5281
  %5283 = vdwg.mxu0
  %v5284 = vadd.f32 %v4638, %v4844
  %v5285 = vadd.f32 %v4639, %v4990
  %v5286 = vadd.f32 %v4640, %v5136
  %v5287 = vadd.f32 %v4641, %v5282
  %5288 = vst [vmem:[#allocation1] ss:$2 sm:$0xff] %v162
  %s5289 = scalar_lea.vmem [#allocation1], 16
  %5290 = vst [vmem:[%s5289] ss:$2 sm:$0xff] %v163
  %v5291 = vld.sshfl [vmem:[#allocation1] sm:$0xff pattern:$0x75316420]
  %v5292 = vld.sshfl [vmem:[#allocation1 + $0x8] sm:$0xff pattern:$0x75316420]
  %v5293 = vld.sshfl [vmem:[#allocation1 + $0x10] sm:$0xff pattern:$0x75316420]
  %v5294 = vld.sshfl [vmem:[#allocation1 + $0x18] sm:$0xff pattern:$0x75316420]
  %5295 = vrot.lane.b32.xlu0 %v5291, 111
  %v5296 = vpop.permute.xlu0 %5295
  %5297 = vrot.lane.b32.xlu0 %v5292, 111
  %v5298 = vpop.permute.xlu0 %5297
  %5299 = vrot.lane.b32.xlu0 %v5293, 111
  %v5300 = vpop.permute.xlu0 %5299
  %5301 = vrot.lane.b32.xlu0 %v5294, 111
  %v5302 = vpop.permute.xlu0 %5301
  %vm5303 = vcmask 908288
  %v5304 = vsel %vm5303, %v5296, %v5298
  %v5305 = vsel %vm5303, %v5298, %v5300
  %v5306 = vsel %vm5303, %v5300, %v5302
  %5311 = vst [vmem:[#allocation1] ss:$2 sm:$0xff] %v162
  %v5312 = vld.sshfl [vmem:[#allocation1] sm:$0xff pattern:$0x75316420]
  %5313 = vrot.lane.b32.xlu0 %v5312, 111
  %v5314 = vpop.permute.xlu0 %5313
  %v5316 = vsel %vm5303, %v5302, %v5314
  %v5317 = vsel %vm67, 1, 0
  %v5318 = vsel %vm68, 1, 0
  %v5319 = vsel %vm69, 1, 0
  %v5320 = vsel %vm70, 1, 0
  %vm5321 = vcmp.eq.s32.totalorder %v5317, 1
  %vm5322 = vcmp.eq.s32.totalorder %v5318, 1
  %vm5323 = vcmp.eq.s32.totalorder %v5319, 1
  %vm5324 = vcmp.eq.s32.totalorder %v5320, 1
  %v5325 = vsel %vm5321, %v5304, 0.0
  %v5326 = vsel %vm5322, %v5305, 0.0
  %v5327 = vsel %vm5323, %v5306, 0.0
  %v5328 = vsel %vm5324, %v5316, 0.0
  %s5329 = scalar_lea.vmem %s5, 32
  %v5330 = vld [vmem:[%s5329] sm:$0xf]
  %v5332 = vsel %vm251, %v5330, 0
  %v5335 = vsel %vm86, %v5325, 0
  %v5338 = vsel %vm86, %v5326, 0
  %v5341 = vsel %vm86, %v5327, 0
  %v5344 = vsel %vm86, %v5328, 0
  %5346 = vmatpush.msra.mxu0 0.0
  %5347 = vmatpush.msra.mxu0 0.0
  %5348 = vmatpush.msra.mxu0 0.0
  %5349 = vmatpush.msra.mxu0 0.0
  %5350 = vmatpush.msra.mxu0 0.0
  %5351 = vmatpush.msra.mxu0 0.0
  %5352 = vmatpush.msra.mxu0 0.0
  %5353 = vmatpush.msra.mxu0 0.0
  %5354 = vmatpush.msra.mxu0 0.0
  %5355 = vmatpush.msra.mxu0 0.0
  %5356 = vmatpush.msra.mxu0 0.0
  %5357 = vmatpush.msra.mxu0 0.0
  %5358 = vmatpush.msra.mxu0 0.0
  %5359 = vmatpush.msra.mxu0 0.0
  %5360 = vmatpush.msra.mxu0 0.0
  %v5361 = vand.u32 %v5335, 4294901760
  %5362 = vmatpush.msra.mxu0 %v5361
  %v5363 = vand.u32 %v5332, 4294901760
  %v5364 = vsub.f32 %v5332, %v5363
  %v5365 = vand.u32 %v5364, 4294901760
  %v5366 = vsub.f32 %v5364, %v5365
  %v5367 = vand.u32 %v5366, 4294901760
  %5368 = vmatmul.f32.gmra.mxu0 %v5367
  %v5369 = vpop.f32.mrf.mxu0
  %v5370 = vadd.f32 0.0, %v5369
  %5371 = vdwg.mxu0
  %5372 = vmatpush.msra.mxu0 0.0
  %5373 = vmatpush.msra.mxu0 0.0
  %5374 = vmatpush.msra.mxu0 0.0
  %5375 = vmatpush.msra.mxu0 0.0
  %5376 = vmatpush.msra.mxu0 0.0
  %5377 = vmatpush.msra.mxu0 0.0
  %5378 = vmatpush.msra.mxu0 0.0
  %5379 = vmatpush.msra.mxu0 0.0
  %5380 = vmatpush.msra.mxu0 0.0
  %5381 = vmatpush.msra.mxu0 0.0
  %5382 = vmatpush.msra.mxu0 0.0
  %5383 = vmatpush.msra.mxu0 0.0
  %5384 = vmatpush.msra.mxu0 0.0
  %5385 = vmatpush.msra.mxu0 0.0
  %5386 = vmatpush.msra.mxu0 0.0
  %v5387 = vand.u32 %v5335, 4294901760
  %v5388 = vsub.f32 %v5335, %v5387
  %v5389 = vand.u32 %v5388, 4294901760
  %v5390 = vsub.f32 %v5388, %v5389
  %v5391 = vand.u32 %v5390, 4294901760
  %5392 = vmatpush.msra.mxu0 %v5391
  %v5393 = vand.u32 %v5332, 4294901760
  %5394 = vmatmul.f32.gmra.mxu0 %v5393
  %v5395 = vpop.f32.mrf.mxu0
  %v5396 = vadd.f32 %v5370, %v5395
  %5397 = vdwg.mxu0
  %5398 = vmatpush.msra.mxu0 0.0
  %5399 = vmatpush.msra.mxu0 0.0
  %5400 = vmatpush.msra.mxu0 0.0
  %5401 = vmatpush.msra.mxu0 0.0
  %5402 = vmatpush.msra.mxu0 0.0
  %5403 = vmatpush.msra.mxu0 0.0
  %5404 = vmatpush.msra.mxu0 0.0
  %5405 = vmatpush.msra.mxu0 0.0
  %5406 = vmatpush.msra.mxu0 0.0
  %5407 = vmatpush.msra.mxu0 0.0
  %5408 = vmatpush.msra.mxu0 0.0
  %5409 = vmatpush.msra.mxu0 0.0
  %5410 = vmatpush.msra.mxu0 0.0
  %5411 = vmatpush.msra.mxu0 0.0
  %5412 = vmatpush.msra.mxu0 0.0
  %v5413 = vand.u32 %v5335, 4294901760
  %v5414 = vsub.f32 %v5335, %v5413
  %5415 = vmatpush.msra.mxu0 %v5414
  %v5416 = vand.u32 %v5332, 4294901760
  %v5417 = vsub.f32 %v5332, %v5416
  %5418 = vmatmul.f32.gmra.mxu0 %v5417
  %v5419 = vpop.f32.mrf.mxu0
  %v5420 = vadd.f32 %v5396, %v5419
  %5421 = vdwg.mxu0
  %5422 = vmatpush.msra.mxu0 0.0
  %5423 = vmatpush.msra.mxu0 0.0
  %5424 = vmatpush.msra.mxu0 0.0
  %5425 = vmatpush.msra.mxu0 0.0
  %5426 = vmatpush.msra.mxu0 0.0
  %5427 = vmatpush.msra.mxu0 0.0
  %5428 = vmatpush.msra.mxu0 0.0
  %5429 = vmatpush.msra.mxu0 0.0
  %5430 = vmatpush.msra.mxu0 0.0
  %5431 = vmatpush.msra.mxu0 0.0
  %5432 = vmatpush.msra.mxu0 0.0
  %5433 = vmatpush.msra.mxu0 0.0
  %5434 = vmatpush.msra.mxu0 0.0
  %5435 = vmatpush.msra.mxu0 0.0
  %5436 = vmatpush.msra.mxu0 0.0
  %v5437 = vand.u32 %v5335, 4294901760
  %5438 = vmatpush.msra.mxu0 %v5437
  %v5439 = vand.u32 %v5332, 4294901760
  %v5440 = vsub.f32 %v5332, %v5439
  %v5441 = vand.u32 %v5440, 4294901760
  %5442 = vmatmul.f32.gmra.mxu0 %v5441
  %v5443 = vpop.f32.mrf.mxu0
  %v5444 = vadd.f32 %v5420, %v5443
  %5445 = vdwg.mxu0
  %5446 = vmatpush.msra.mxu0 0.0
  %5447 = vmatpush.msra.mxu0 0.0
  %5448 = vmatpush.msra.mxu0 0.0
  %5449 = vmatpush.msra.mxu0 0.0
  %5450 = vmatpush.msra.mxu0 0.0
  %5451 = vmatpush.msra.mxu0 0.0
  %5452 = vmatpush.msra.mxu0 0.0
  %5453 = vmatpush.msra.mxu0 0.0
  %5454 = vmatpush.msra.mxu0 0.0
  %5455 = vmatpush.msra.mxu0 0.0
  %5456 = vmatpush.msra.mxu0 0.0
  %5457 = vmatpush.msra.mxu0 0.0
  %5458 = vmatpush.msra.mxu0 0.0
  %5459 = vmatpush.msra.mxu0 0.0
  %5460 = vmatpush.msra.mxu0 0.0
  %v5461 = vand.u32 %v5335, 4294901760
  %v5462 = vsub.f32 %v5335, %v5461
  %v5463 = vand.u32 %v5462, 4294901760
  %5464 = vmatpush.msra.mxu0 %v5463
  %v5465 = vand.u32 %v5332, 4294901760
  %5466 = vmatmul.f32.gmra.mxu0 %v5465
  %v5467 = vpop.f32.mrf.mxu0
  %v5468 = vadd.f32 %v5444, %v5467
  %5469 = vdwg.mxu0
  %5470 = vmatpush.msra.mxu0 0.0
  %5471 = vmatpush.msra.mxu0 0.0
  %5472 = vmatpush.msra.mxu0 0.0
  %5473 = vmatpush.msra.mxu0 0.0
  %5474 = vmatpush.msra.mxu0 0.0
  %5475 = vmatpush.msra.mxu0 0.0
  %5476 = vmatpush.msra.mxu0 0.0
  %5477 = vmatpush.msra.mxu0 0.0
  %5478 = vmatpush.msra.mxu0 0.0
  %5479 = vmatpush.msra.mxu0 0.0
  %5480 = vmatpush.msra.mxu0 0.0
  %5481 = vmatpush.msra.mxu0 0.0
  %5482 = vmatpush.msra.mxu0 0.0
  %5483 = vmatpush.msra.mxu0 0.0
  %5484 = vmatpush.msra.mxu0 0.0
  %v5485 = vand.u32 %v5335, 4294901760
  %5486 = vmatpush.msra.mxu0 %v5485
  %v5487 = vand.u32 %v5332, 4294901760
  %5488 = vmatmul.f32.gmra.mxu0 %v5487
  %v5489 = vpop.f32.mrf.mxu0
  %v5490 = vadd.f32 %v5468, %v5489
  %5491 = vdwg.mxu0
  %5492 = vmatpush.msra.mxu0 0.0
  %5493 = vmatpush.msra.mxu0 0.0
  %5494 = vmatpush.msra.mxu0 0.0
  %5495 = vmatpush.msra.mxu0 0.0
  %5496 = vmatpush.msra.mxu0 0.0
  %5497 = vmatpush.msra.mxu0 0.0
  %5498 = vmatpush.msra.mxu0 0.0
  %5499 = vmatpush.msra.mxu0 0.0
  %5500 = vmatpush.msra.mxu0 0.0
  %5501 = vmatpush.msra.mxu0 0.0
  %5502 = vmatpush.msra.mxu0 0.0
  %5503 = vmatpush.msra.mxu0 0.0
  %5504 = vmatpush.msra.mxu0 0.0
  %5505 = vmatpush.msra.mxu0 0.0
  %5506 = vmatpush.msra.mxu0 0.0
  %v5507 = vand.u32 %v5338, 4294901760
  %5508 = vmatpush.msra.mxu0 %v5507
  %v5509 = vand.u32 %v5332, 4294901760
  %v5510 = vsub.f32 %v5332, %v5509
  %v5511 = vand.u32 %v5510, 4294901760
  %v5512 = vsub.f32 %v5510, %v5511
  %v5513 = vand.u32 %v5512, 4294901760
  %5514 = vmatmul.f32.gmra.mxu0 %v5513
  %v5515 = vpop.f32.mrf.mxu0
  %v5516 = vadd.f32 0.0, %v5515
  %5517 = vdwg.mxu0
  %5518 = vmatpush.msra.mxu0 0.0
  %5519 = vmatpush.msra.mxu0 0.0
  %5520 = vmatpush.msra.mxu0 0.0
  %5521 = vmatpush.msra.mxu0 0.0
  %5522 = vmatpush.msra.mxu0 0.0
  %5523 = vmatpush.msra.mxu0 0.0
  %5524 = vmatpush.msra.mxu0 0.0
  %5525 = vmatpush.msra.mxu0 0.0
  %5526 = vmatpush.msra.mxu0 0.0
  %5527 = vmatpush.msra.mxu0 0.0
  %5528 = vmatpush.msra.mxu0 0.0
  %5529 = vmatpush.msra.mxu0 0.0
  %5530 = vmatpush.msra.mxu0 0.0
  %5531 = vmatpush.msra.mxu0 0.0
  %5532 = vmatpush.msra.mxu0 0.0
  %v5533 = vand.u32 %v5338, 4294901760
  %v5534 = vsub.f32 %v5338, %v5533
  %v5535 = vand.u32 %v5534, 4294901760
  %v5536 = vsub.f32 %v5534, %v5535
  %v5537 = vand.u32 %v5536, 4294901760
  %5538 = vmatpush.msra.mxu0 %v5537
  %v5539 = vand.u32 %v5332, 4294901760
  %5540 = vmatmul.f32.gmra.mxu0 %v5539
  %v5541 = vpop.f32.mrf.mxu0
  %v5542 = vadd.f32 %v5516, %v5541
  %5543 = vdwg.mxu0
  %5544 = vmatpush.msra.mxu0 0.0
  %5545 = vmatpush.msra.mxu0 0.0
  %5546 = vmatpush.msra.mxu0 0.0
  %5547 = vmatpush.msra.mxu0 0.0
  %5548 = vmatpush.msra.mxu0 0.0
  %5549 = vmatpush.msra.mxu0 0.0
  %5550 = vmatpush.msra.mxu0 0.0
  %5551 = vmatpush.msra.mxu0 0.0
  %5552 = vmatpush.msra.mxu0 0.0
  %5553 = vmatpush.msra.mxu0 0.0
  %5554 = vmatpush.msra.mxu0 0.0
  %5555 = vmatpush.msra.mxu0 0.0
  %5556 = vmatpush.msra.mxu0 0.0
  %5557 = vmatpush.msra.mxu0 0.0
  %5558 = vmatpush.msra.mxu0 0.0
  %v5559 = vand.u32 %v5338, 4294901760
  %v5560 = vsub.f32 %v5338, %v5559
  %5561 = vmatpush.msra.mxu0 %v5560
  %v5562 = vand.u32 %v5332, 4294901760
  %v5563 = vsub.f32 %v5332, %v5562
  %5564 = vmatmul.f32.gmra.mxu0 %v5563
  %v5565 = vpop.f32.mrf.mxu0
  %v5566 = vadd.f32 %v5542, %v5565
  %5567 = vdwg.mxu0
  %5568 = vmatpush.msra.mxu0 0.0
  %5569 = vmatpush.msra.mxu0 0.0
  %5570 = vmatpush.msra.mxu0 0.0
  %5571 = vmatpush.msra.mxu0 0.0
  %5572 = vmatpush.msra.mxu0 0.0
  %5573 = vmatpush.msra.mxu0 0.0
  %5574 = vmatpush.msra.mxu0 0.0
  %5575 = vmatpush.msra.mxu0 0.0
  %5576 = vmatpush.msra.mxu0 0.0
  %5577 = vmatpush.msra.mxu0 0.0
  %5578 = vmatpush.msra.mxu0 0.0
  %5579 = vmatpush.msra.mxu0 0.0
  %5580 = vmatpush.msra.mxu0 0.0
  %5581 = vmatpush.msra.mxu0 0.0
  %5582 = vmatpush.msra.mxu0 0.0
  %v5583 = vand.u32 %v5338, 4294901760
  %5584 = vmatpush.msra.mxu0 %v5583
  %v5585 = vand.u32 %v5332, 4294901760
  %v5586 = vsub.f32 %v5332, %v5585
  %v5587 = vand.u32 %v5586, 4294901760
  %5588 = vmatmul.f32.gmra.mxu0 %v5587
  %v5589 = vpop.f32.mrf.mxu0
  %v5590 = vadd.f32 %v5566, %v5589
  %5591 = vdwg.mxu0
  %5592 = vmatpush.msra.mxu0 0.0
  %5593 = vmatpush.msra.mxu0 0.0
  %5594 = vmatpush.msra.mxu0 0.0
  %5595 = vmatpush.msra.mxu0 0.0
  %5596 = vmatpush.msra.mxu0 0.0
  %5597 = vmatpush.msra.mxu0 0.0
  %5598 = vmatpush.msra.mxu0 0.0
  %5599 = vmatpush.msra.mxu0 0.0
  %5600 = vmatpush.msra.mxu0 0.0
  %5601 = vmatpush.msra.mxu0 0.0
  %5602 = vmatpush.msra.mxu0 0.0
  %5603 = vmatpush.msra.mxu0 0.0
  %5604 = vmatpush.msra.mxu0 0.0
  %5605 = vmatpush.msra.mxu0 0.0
  %5606 = vmatpush.msra.mxu0 0.0
  %v5607 = vand.u32 %v5338, 4294901760
  %v5608 = vsub.f32 %v5338, %v5607
  %v5609 = vand.u32 %v5608, 4294901760
  %5610 = vmatpush.msra.mxu0 %v5609
  %v5611 = vand.u32 %v5332, 4294901760
  %5612 = vmatmul.f32.gmra.mxu0 %v5611
  %v5613 = vpop.f32.mrf.mxu0
  %v5614 = vadd.f32 %v5590, %v5613
  %5615 = vdwg.mxu0
  %5616 = vmatpush.msra.mxu0 0.0
  %5617 = vmatpush.msra.mxu0 0.0
  %5618 = vmatpush.msra.mxu0 0.0
  %5619 = vmatpush.msra.mxu0 0.0
  %5620 = vmatpush.msra.mxu0 0.0
  %5621 = vmatpush.msra.mxu0 0.0
  %5622 = vmatpush.msra.mxu0 0.0
  %5623 = vmatpush.msra.mxu0 0.0
  %5624 = vmatpush.msra.mxu0 0.0
  %5625 = vmatpush.msra.mxu0 0.0
  %5626 = vmatpush.msra.mxu0 0.0
  %5627 = vmatpush.msra.mxu0 0.0
  %5628 = vmatpush.msra.mxu0 0.0
  %5629 = vmatpush.msra.mxu0 0.0
  %5630 = vmatpush.msra.mxu0 0.0
  %v5631 = vand.u32 %v5338, 4294901760
  %5632 = vmatpush.msra.mxu0 %v5631
  %v5633 = vand.u32 %v5332, 4294901760
  %5634 = vmatmul.f32.gmra.mxu0 %v5633
  %v5635 = vpop.f32.mrf.mxu0
  %v5636 = vadd.f32 %v5614, %v5635
  %5637 = vdwg.mxu0
  %5638 = vmatpush.msra.mxu0 0.0
  %5639 = vmatpush.msra.mxu0 0.0
  %5640 = vmatpush.msra.mxu0 0.0
  %5641 = vmatpush.msra.mxu0 0.0
  %5642 = vmatpush.msra.mxu0 0.0
  %5643 = vmatpush.msra.mxu0 0.0
  %5644 = vmatpush.msra.mxu0 0.0
  %5645 = vmatpush.msra.mxu0 0.0
  %5646 = vmatpush.msra.mxu0 0.0
  %5647 = vmatpush.msra.mxu0 0.0
  %5648 = vmatpush.msra.mxu0 0.0
  %5649 = vmatpush.msra.mxu0 0.0
  %5650 = vmatpush.msra.mxu0 0.0
  %5651 = vmatpush.msra.mxu0 0.0
  %5652 = vmatpush.msra.mxu0 0.0
  %v5653 = vand.u32 %v5341, 4294901760
  %5654 = vmatpush.msra.mxu0 %v5653
  %v5655 = vand.u32 %v5332, 4294901760
  %v5656 = vsub.f32 %v5332, %v5655
  %v5657 = vand.u32 %v5656, 4294901760
  %v5658 = vsub.f32 %v5656, %v5657
  %v5659 = vand.u32 %v5658, 4294901760
  %5660 = vmatmul.f32.gmra.mxu0 %v5659
  %v5661 = vpop.f32.mrf.mxu0
  %v5662 = vadd.f32 0.0, %v5661
  %5663 = vdwg.mxu0
  %5664 = vmatpush.msra.mxu0 0.0
  %5665 = vmatpush.msra.mxu0 0.0
  %5666 = vmatpush.msra.mxu0 0.0
  %5667 = vmatpush.msra.mxu0 0.0
  %5668 = vmatpush.msra.mxu0 0.0
  %5669 = vmatpush.msra.mxu0 0.0
  %5670 = vmatpush.msra.mxu0 0.0
  %5671 = vmatpush.msra.mxu0 0.0
  %5672 = vmatpush.msra.mxu0 0.0
  %5673 = vmatpush.msra.mxu0 0.0
  %5674 = vmatpush.msra.mxu0 0.0
  %5675 = vmatpush.msra.mxu0 0.0
  %5676 = vmatpush.msra.mxu0 0.0
  %5677 = vmatpush.msra.mxu0 0.0
  %5678 = vmatpush.msra.mxu0 0.0
  %v5679 = vand.u32 %v5341, 4294901760
  %v5680 = vsub.f32 %v5341, %v5679
  %v5681 = vand.u32 %v5680, 4294901760
  %v5682 = vsub.f32 %v5680, %v5681
  %v5683 = vand.u32 %v5682, 4294901760
  %5684 = vmatpush.msra.mxu0 %v5683
  %v5685 = vand.u32 %v5332, 4294901760
  %5686 = vmatmul.f32.gmra.mxu0 %v5685
  %v5687 = vpop.f32.mrf.mxu0
  %v5688 = vadd.f32 %v5662, %v5687
  %5689 = vdwg.mxu0
  %5690 = vmatpush.msra.mxu0 0.0
  %5691 = vmatpush.msra.mxu0 0.0
  %5692 = vmatpush.msra.mxu0 0.0
  %5693 = vmatpush.msra.mxu0 0.0
  %5694 = vmatpush.msra.mxu0 0.0
  %5695 = vmatpush.msra.mxu0 0.0
  %5696 = vmatpush.msra.mxu0 0.0
  %5697 = vmatpush.msra.mxu0 0.0
  %5698 = vmatpush.msra.mxu0 0.0
  %5699 = vmatpush.msra.mxu0 0.0
  %5700 = vmatpush.msra.mxu0 0.0
  %5701 = vmatpush.msra.mxu0 0.0
  %5702 = vmatpush.msra.mxu0 0.0
  %5703 = vmatpush.msra.mxu0 0.0
  %5704 = vmatpush.msra.mxu0 0.0
  %v5705 = vand.u32 %v5341, 4294901760
  %v5706 = vsub.f32 %v5341, %v5705
  %5707 = vmatpush.msra.mxu0 %v5706
  %v5708 = vand.u32 %v5332, 4294901760
  %v5709 = vsub.f32 %v5332, %v5708
  %5710 = vmatmul.f32.gmra.mxu0 %v5709
  %v5711 = vpop.f32.mrf.mxu0
  %v5712 = vadd.f32 %v5688, %v5711
  %5713 = vdwg.mxu0
  %5714 = vmatpush.msra.mxu0 0.0
  %5715 = vmatpush.msra.mxu0 0.0
  %5716 = vmatpush.msra.mxu0 0.0
  %5717 = vmatpush.msra.mxu0 0.0
  %5718 = vmatpush.msra.mxu0 0.0
  %5719 = vmatpush.msra.mxu0 0.0
  %5720 = vmatpush.msra.mxu0 0.0
  %5721 = vmatpush.msra.mxu0 0.0
  %5722 = vmatpush.msra.mxu0 0.0
  %5723 = vmatpush.msra.mxu0 0.0
  %5724 = vmatpush.msra.mxu0 0.0
  %5725 = vmatpush.msra.mxu0 0.0
  %5726 = vmatpush.msra.mxu0 0.0
  %5727 = vmatpush.msra.mxu0 0.0
  %5728 = vmatpush.msra.mxu0 0.0
  %v5729 = vand.u32 %v5341, 4294901760
  %5730 = vmatpush.msra.mxu0 %v5729
  %v5731 = vand.u32 %v5332, 4294901760
  %v5732 = vsub.f32 %v5332, %v5731
  %v5733 = vand.u32 %v5732, 4294901760
  %5734 = vmatmul.f32.gmra.mxu0 %v5733
  %v5735 = vpop.f32.mrf.mxu0
  %v5736 = vadd.f32 %v5712, %v5735
  %5737 = vdwg.mxu0
  %5738 = vmatpush.msra.mxu0 0.0
  %5739 = vmatpush.msra.mxu0 0.0
  %5740 = vmatpush.msra.mxu0 0.0
  %5741 = vmatpush.msra.mxu0 0.0
  %5742 = vmatpush.msra.mxu0 0.0
  %5743 = vmatpush.msra.mxu0 0.0
  %5744 = vmatpush.msra.mxu0 0.0
  %5745 = vmatpush.msra.mxu0 0.0
  %5746 = vmatpush.msra.mxu0 0.0
  %5747 = vmatpush.msra.mxu0 0.0
  %5748 = vmatpush.msra.mxu0 0.0
  %5749 = vmatpush.msra.mxu0 0.0
  %5750 = vmatpush.msra.mxu0 0.0
  %5751 = vmatpush.msra.mxu0 0.0
  %5752 = vmatpush.msra.mxu0 0.0
  %v5753 = vand.u32 %v5341, 4294901760
  %v5754 = vsub.f32 %v5341, %v5753
  %v5755 = vand.u32 %v5754, 4294901760
  %5756 = vmatpush.msra.mxu0 %v5755
  %v5757 = vand.u32 %v5332, 4294901760
  %5758 = vmatmul.f32.gmra.mxu0 %v5757
  %v5759 = vpop.f32.mrf.mxu0
  %v5760 = vadd.f32 %v5736, %v5759
  %5761 = vdwg.mxu0
  %5762 = vmatpush.msra.mxu0 0.0
  %5763 = vmatpush.msra.mxu0 0.0
  %5764 = vmatpush.msra.mxu0 0.0
  %5765 = vmatpush.msra.mxu0 0.0
  %5766 = vmatpush.msra.mxu0 0.0
  %5767 = vmatpush.msra.mxu0 0.0
  %5768 = vmatpush.msra.mxu0 0.0
  %5769 = vmatpush.msra.mxu0 0.0
  %5770 = vmatpush.msra.mxu0 0.0
  %5771 = vmatpush.msra.mxu0 0.0
  %5772 = vmatpush.msra.mxu0 0.0
  %5773 = vmatpush.msra.mxu0 0.0
  %5774 = vmatpush.msra.mxu0 0.0
  %5775 = vmatpush.msra.mxu0 0.0
  %5776 = vmatpush.msra.mxu0 0.0
  %v5777 = vand.u32 %v5341, 4294901760
  %5778 = vmatpush.msra.mxu0 %v5777
  %v5779 = vand.u32 %v5332, 4294901760
  %5780 = vmatmul.f32.gmra.mxu0 %v5779
  %v5781 = vpop.f32.mrf.mxu0
  %v5782 = vadd.f32 %v5760, %v5781
  %5783 = vdwg.mxu0
  %5784 = vmatpush.msra.mxu0 0.0
  %5785 = vmatpush.msra.mxu0 0.0
  %5786 = vmatpush.msra.mxu0 0.0
  %5787 = vmatpush.msra.mxu0 0.0
  %5788 = vmatpush.msra.mxu0 0.0
  %5789 = vmatpush.msra.mxu0 0.0
  %5790 = vmatpush.msra.mxu0 0.0
  %5791 = vmatpush.msra.mxu0 0.0
  %5792 = vmatpush.msra.mxu0 0.0
  %5793 = vmatpush.msra.mxu0 0.0
  %5794 = vmatpush.msra.mxu0 0.0
  %5795 = vmatpush.msra.mxu0 0.0
  %5796 = vmatpush.msra.mxu0 0.0
  %5797 = vmatpush.msra.mxu0 0.0
  %5798 = vmatpush.msra.mxu0 0.0
  %v5799 = vand.u32 %v5344, 4294901760
  %5800 = vmatpush.msra.mxu0 %v5799
  %v5801 = vand.u32 %v5332, 4294901760
  %v5802 = vsub.f32 %v5332, %v5801
  %v5803 = vand.u32 %v5802, 4294901760
  %v5804 = vsub.f32 %v5802, %v5803
  %v5805 = vand.u32 %v5804, 4294901760
  %5806 = vmatmul.f32.gmra.mxu0 %v5805
  %v5807 = vpop.f32.mrf.mxu0
  %v5808 = vadd.f32 0.0, %v5807
  %5809 = vdwg.mxu0
  %5810 = vmatpush.msra.mxu0 0.0
  %5811 = vmatpush.msra.mxu0 0.0
  %5812 = vmatpush.msra.mxu0 0.0
  %5813 = vmatpush.msra.mxu0 0.0
  %5814 = vmatpush.msra.mxu0 0.0
  %5815 = vmatpush.msra.mxu0 0.0
  %5816 = vmatpush.msra.mxu0 0.0
  %5817 = vmatpush.msra.mxu0 0.0
  %5818 = vmatpush.msra.mxu0 0.0
  %5819 = vmatpush.msra.mxu0 0.0
  %5820 = vmatpush.msra.mxu0 0.0
  %5821 = vmatpush.msra.mxu0 0.0
  %5822 = vmatpush.msra.mxu0 0.0
  %5823 = vmatpush.msra.mxu0 0.0
  %5824 = vmatpush.msra.mxu0 0.0
  %v5825 = vand.u32 %v5344, 4294901760
  %v5826 = vsub.f32 %v5344, %v5825
  %v5827 = vand.u32 %v5826, 4294901760
  %v5828 = vsub.f32 %v5826, %v5827
  %v5829 = vand.u32 %v5828, 4294901760
  %5830 = vmatpush.msra.mxu0 %v5829
  %v5831 = vand.u32 %v5332, 4294901760
  %5832 = vmatmul.f32.gmra.mxu0 %v5831
  %v5833 = vpop.f32.mrf.mxu0
  %v5834 = vadd.f32 %v5808, %v5833
  %5835 = vdwg.mxu0
  %5836 = vmatpush.msra.mxu0 0.0
  %5837 = vmatpush.msra.mxu0 0.0
  %5838 = vmatpush.msra.mxu0 0.0
  %5839 = vmatpush.msra.mxu0 0.0
  %5840 = vmatpush.msra.mxu0 0.0
  %5841 = vmatpush.msra.mxu0 0.0
  %5842 = vmatpush.msra.mxu0 0.0
  %5843 = vmatpush.msra.mxu0 0.0
  %5844 = vmatpush.msra.mxu0 0.0
  %5845 = vmatpush.msra.mxu0 0.0
  %5846 = vmatpush.msra.mxu0 0.0
  %5847 = vmatpush.msra.mxu0 0.0
  %5848 = vmatpush.msra.mxu0 0.0
  %5849 = vmatpush.msra.mxu0 0.0
  %5850 = vmatpush.msra.mxu0 0.0
  %v5851 = vand.u32 %v5344, 4294901760
  %v5852 = vsub.f32 %v5344, %v5851
  %5853 = vmatpush.msra.mxu0 %v5852
  %v5854 = vand.u32 %v5332, 4294901760
  %v5855 = vsub.f32 %v5332, %v5854
  %5856 = vmatmul.f32.gmra.mxu0 %v5855
  %v5857 = vpop.f32.mrf.mxu0
  %v5858 = vadd.f32 %v5834, %v5857
  %5859 = vdwg.mxu0
  %5860 = vmatpush.msra.mxu0 0.0
  %5861 = vmatpush.msra.mxu0 0.0
  %5862 = vmatpush.msra.mxu0 0.0
  %5863 = vmatpush.msra.mxu0 0.0
  %5864 = vmatpush.msra.mxu0 0.0
  %5865 = vmatpush.msra.mxu0 0.0
  %5866 = vmatpush.msra.mxu0 0.0
  %5867 = vmatpush.msra.mxu0 0.0
  %5868 = vmatpush.msra.mxu0 0.0
  %5869 = vmatpush.msra.mxu0 0.0
  %5870 = vmatpush.msra.mxu0 0.0
  %5871 = vmatpush.msra.mxu0 0.0
  %5872 = vmatpush.msra.mxu0 0.0
  %5873 = vmatpush.msra.mxu0 0.0
  %5874 = vmatpush.msra.mxu0 0.0
  %v5875 = vand.u32 %v5344, 4294901760
  %5876 = vmatpush.msra.mxu0 %v5875
  %v5877 = vand.u32 %v5332, 4294901760
  %v5878 = vsub.f32 %v5332, %v5877
  %v5879 = vand.u32 %v5878, 4294901760
  %5880 = vmatmul.f32.gmra.mxu0 %v5879
  %v5881 = vpop.f32.mrf.mxu0
  %v5882 = vadd.f32 %v5858, %v5881
  %5883 = vdwg.mxu0
  %5884 = vmatpush.msra.mxu0 0.0
  %5885 = vmatpush.msra.mxu0 0.0
  %5886 = vmatpush.msra.mxu0 0.0
  %5887 = vmatpush.msra.mxu0 0.0
  %5888 = vmatpush.msra.mxu0 0.0
  %5889 = vmatpush.msra.mxu0 0.0
  %5890 = vmatpush.msra.mxu0 0.0
  %5891 = vmatpush.msra.mxu0 0.0
  %5892 = vmatpush.msra.mxu0 0.0
  %5893 = vmatpush.msra.mxu0 0.0
  %5894 = vmatpush.msra.mxu0 0.0
  %5895 = vmatpush.msra.mxu0 0.0
  %5896 = vmatpush.msra.mxu0 0.0
  %5897 = vmatpush.msra.mxu0 0.0
  %5898 = vmatpush.msra.mxu0 0.0
  %v5899 = vand.u32 %v5344, 4294901760
  %v5900 = vsub.f32 %v5344, %v5899
  %v5901 = vand.u32 %v5900, 4294901760
  %5902 = vmatpush.msra.mxu0 %v5901
  %v5903 = vand.u32 %v5332, 4294901760
  %5904 = vmatmul.f32.gmra.mxu0 %v5903
  %v5905 = vpop.f32.mrf.mxu0
  %v5906 = vadd.f32 %v5882, %v5905
  %5907 = vdwg.mxu0
  %5908 = vmatpush.msra.mxu0 0.0
  %5909 = vmatpush.msra.mxu0 0.0
  %5910 = vmatpush.msra.mxu0 0.0
  %5911 = vmatpush.msra.mxu0 0.0
  %5912 = vmatpush.msra.mxu0 0.0
  %5913 = vmatpush.msra.mxu0 0.0
  %5914 = vmatpush.msra.mxu0 0.0
  %5915 = vmatpush.msra.mxu0 0.0
  %5916 = vmatpush.msra.mxu0 0.0
  %5917 = vmatpush.msra.mxu0 0.0
  %5918 = vmatpush.msra.mxu0 0.0
  %5919 = vmatpush.msra.mxu0 0.0
  %5920 = vmatpush.msra.mxu0 0.0
  %5921 = vmatpush.msra.mxu0 0.0
  %5922 = vmatpush.msra.mxu0 0.0
  %v5923 = vand.u32 %v5344, 4294901760
  %5924 = vmatpush.msra.mxu0 %v5923
  %v5925 = vand.u32 %v5332, 4294901760
  %5926 = vmatmul.f32.gmra.mxu0 %v5925
  %v5927 = vpop.f32.mrf.mxu0
  %v5928 = vadd.f32 %v5906, %v5927
  %5929 = vdwg.mxu0
  %v5930 = vadd.f32 %v5284, %v5490
  %v5931 = vadd.f32 %v5285, %v5636
  %v5932 = vadd.f32 %v5286, %v5782
  %v5933 = vadd.f32 %v5287, %v5928
  %v5934 = vsel %vm86, %v5930, 0.0
  %v5935 = vsel %vm86, %v5931, 0.0
  %v5936 = vadd.f32 %v5934, %v5935
  %v5937 = vsel %vm86, %v5932, 0.0
  %v5938 = vadd.f32 %v5936, %v5937
  %v5939 = vsel %vm86, %v5933, 0.0
  %v5940 = vadd.f32 %v5938, %v5939
  %5941 = vadd.xlane.f32.xlu0 %v5940
  %v5942 = vpop.xlane.xlu0 %5941
  %v5943 = vmul.f32 %v5930, %v5930
  %v5944 = vmul.f32 %v5931, %v5931
  %v5945 = vmul.f32 %v5932, %v5932
  %v5946 = vmul.f32 %v5933, %v5933
  %v5947 = vsel %vm86, %v5943, 0.0
  %v5948 = vsel %vm86, %v5944, 0.0
  %v5949 = vadd.f32 %v5947, %v5948
  %v5950 = vsel %vm86, %v5945, 0.0
  %v5951 = vadd.f32 %v5949, %v5950
  %v5952 = vsel %vm86, %v5946, 0.0
  %v5953 = vadd.f32 %v5951, %v5952
  %5954 = vadd.xlane.f32.xlu0 %v5953
  %v5955 = vpop.xlane.xlu0 %5954
  %v5956 = vmul.f32 %v5942, 0.001953125
  %v5957 = vmul.f32 %v5955, 0.001953125
  %v5958 = vmul.f32 %v5956, %v5956
  %v5959 = vsub.f32 %v5957, %v5958
  %v5960 = vld [vmem:[%s3] sm:$0xf]
  %v5961 = vadd.f32 %v5959, 1e-05
  %v5962 = vrsqrt.pop %v5961
  %v5963 = vmul.f32 %v5962, %v5961
  %v5964 = vmul.f32 %v5963, %v5962
  %v5965 = vmul.f32 0.5, %v5964
  %v5966 = vsub.f32 1.5, %v5965
  %v5967 = vmul.f32 %v5962, %v5966
  %vm5968 = vweird.f32 %v5961
  %vm5969 = vweird.f32 %v5962
  %vm5970 = vmor %vm5968, %vm5969
  %v5971 = vsel %vm5970, %v5962, %v5967
  %v5972 = vmul.f32 %v5960, %v5971
  %v5973 = vld [vmem:[%s4] sm:$0xf]
  %v5974 = vmul.f32 %v5956, %v5972
  %v5975 = vsub.f32 %v5973, %v5974
  %5977 = vset.pattern.permute.xlu0 0
  %5978 = vperm.xlu0 %5977, %v5972
  %v5979 = vpop.permute.xlu0 %5978
  %v5981 = vmul.f32 %v5930, %v5979
  %v5982 = vmul.f32 %v5931, %v5979
  %v5983 = vmul.f32 %v5932, %v5979
  %v5984 = vmul.f32 %v5933, %v5979
  %5986 = vset.pattern.permute.xlu0 0
  %5987 = vperm.xlu0 %5986, %v5975
  %v5988 = vpop.permute.xlu0 %5987
  %v5990 = vadd.f32 %v5981, %v5988
  %v5991 = vadd.f32 %v5982, %v5988
  %v5992 = vadd.f32 %v5983, %v5988
  %v5993 = vadd.f32 %v5984, %v5988
  %v5994 = vmax.f32 %v5990, 0.0
  %v5995 = vmax.f32 %v5991, 0.0
  %v5996 = vmax.f32 %v5992, 0.0
  %v5997 = vmax.f32 %v5993, 0.0
  %5999 = vrot.lane.b32.xlu0 %v5997, 17
  %v6000 = vpop.permute.xlu0 %5999
  %6005 = vrot.lane.b32.xlu0 %v5994, 17
  %v6006 = vpop.permute.xlu0 %6005
  %6007 = vrot.lane.b32.xlu0 %v5995, 17
  %v6008 = vpop.permute.xlu0 %6007
  %6009 = vrot.lane.b32.xlu0 %v5996, 17
  %v6010 = vpop.permute.xlu0 %6009
  %v6011 = vsel %vm186, %v6006, %v6008
  %v6012 = vsel %vm186, %v6008, %v6010
  %v6013 = vsel %vm186, %v6010, %v6000
  %v6018 = vsel %vm186, %v6000, %v6006
  %v6019 = vsel %vm199, %v6018, 0.0
  %v6020 = vsel %vm200, %v6011, 0.0
  %v6021 = vsel %vm201, %v6012, 0.0
  %v6022 = vsel %vm202, %v6013, 0.0
  %v6023 = vld [vmem:[%s6] sm:$0xf]
  %6024 = vrot.lane.b32.xlu0 %v5997, 16
  %v6025 = vpop.permute.xlu0 %6024
  %6027 = vrot.lane.b32.xlu0 %v5994, 16
  %v6028 = vpop.permute.xlu0 %6027
  %6029 = vrot.lane.b32.xlu0 %v5995, 16
  %v6030 = vpop.permute.xlu0 %6029
  %6031 = vrot.lane.b32.xlu0 %v5996, 16
  %v6032 = vpop.permute.xlu0 %6031
  %v6033 = vsel %vm228, %v6028, %v6030
  %v6034 = vsel %vm228, %v6030, %v6032
  %v6035 = vsel %vm228, %v6032, %v6025
  %v6040 = vsel %vm228, %v6025, %v6028
  %v6041 = vsel %vm241, %v6040, 0.0
  %v6042 = vsel %vm242, %v6033, 0.0
  %v6043 = vsel %vm243, %v6034, 0.0
  %v6044 = vsel %vm244, %v6035, 0.0
  %s6045 = scalar_lea.vmem %s6, 4
  %v6046 = vld [vmem:[%s6045] sm:$0xf]
  %v6048 = vsel %vm251, %v6046, 0
  %v6051 = vsel %vm86, %v6041, 0
  %v6054 = vsel %vm86, %v6042, 0
  %v6057 = vsel %vm86, %v6043, 0
  %v6060 = vsel %vm86, %v6044, 0
  %6062 = vmatpush.msra.mxu0 0.0
  %6063 = vmatpush.msra.mxu0 0.0
  %6064 = vmatpush.msra.mxu0 0.0
  %6065 = vmatpush.msra.mxu0 0.0
  %6066 = vmatpush.msra.mxu0 0.0
  %6067 = vmatpush.msra.mxu0 0.0
  %6068 = vmatpush.msra.mxu0 0.0
  %6069 = vmatpush.msra.mxu0 0.0
  %6070 = vmatpush.msra.mxu0 0.0
  %6071 = vmatpush.msra.mxu0 0.0
  %6072 = vmatpush.msra.mxu0 0.0
  %6073 = vmatpush.msra.mxu0 0.0
  %6074 = vmatpush.msra.mxu0 0.0
  %6075 = vmatpush.msra.mxu0 0.0
  %6076 = vmatpush.msra.mxu0 0.0
  %v6077 = vand.u32 %v6051, 4294901760
  %6078 = vmatpush.msra.mxu0 %v6077
  %v6079 = vand.u32 %v6048, 4294901760
  %v6080 = vsub.f32 %v6048, %v6079
  %v6081 = vand.u32 %v6080, 4294901760
  %v6082 = vsub.f32 %v6080, %v6081
  %v6083 = vand.u32 %v6082, 4294901760
  %6084 = vmatmul.f32.gmra.mxu0 %v6083
  %v6085 = vpop.f32.mrf.mxu0
  %v6086 = vadd.f32 0.0, %v6085
  %6087 = vdwg.mxu0
  %6088 = vmatpush.msra.mxu0 0.0
  %6089 = vmatpush.msra.mxu0 0.0
  %6090 = vmatpush.msra.mxu0 0.0
  %6091 = vmatpush.msra.mxu0 0.0
  %6092 = vmatpush.msra.mxu0 0.0
  %6093 = vmatpush.msra.mxu0 0.0
  %6094 = vmatpush.msra.mxu0 0.0
  %6095 = vmatpush.msra.mxu0 0.0
  %6096 = vmatpush.msra.mxu0 0.0
  %6097 = vmatpush.msra.mxu0 0.0
  %6098 = vmatpush.msra.mxu0 0.0
  %6099 = vmatpush.msra.mxu0 0.0
  %6100 = vmatpush.msra.mxu0 0.0
  %6101 = vmatpush.msra.mxu0 0.0
  %6102 = vmatpush.msra.mxu0 0.0
  %v6103 = vand.u32 %v6051, 4294901760
  %v6104 = vsub.f32 %v6051, %v6103
  %v6105 = vand.u32 %v6104, 4294901760
  %v6106 = vsub.f32 %v6104, %v6105
  %v6107 = vand.u32 %v6106, 4294901760
  %6108 = vmatpush.msra.mxu0 %v6107
  %v6109 = vand.u32 %v6048, 4294901760
  %6110 = vmatmul.f32.gmra.mxu0 %v6109
  %v6111 = vpop.f32.mrf.mxu0
  %v6112 = vadd.f32 %v6086, %v6111
  %6113 = vdwg.mxu0
  %6114 = vmatpush.msra.mxu0 0.0
  %6115 = vmatpush.msra.mxu0 0.0
  %6116 = vmatpush.msra.mxu0 0.0
  %6117 = vmatpush.msra.mxu0 0.0
  %6118 = vmatpush.msra.mxu0 0.0
  %6119 = vmatpush.msra.mxu0 0.0
  %6120 = vmatpush.msra.mxu0 0.0
  %6121 = vmatpush.msra.mxu0 0.0
  %6122 = vmatpush.msra.mxu0 0.0
  %6123 = vmatpush.msra.mxu0 0.0
  %6124 = vmatpush.msra.mxu0 0.0
  %6125 = vmatpush.msra.mxu0 0.0
  %6126 = vmatpush.msra.mxu0 0.0
  %6127 = vmatpush.msra.mxu0 0.0
  %6128 = vmatpush.msra.mxu0 0.0
  %v6129 = vand.u32 %v6051, 4294901760
  %v6130 = vsub.f32 %v6051, %v6129
  %6131 = vmatpush.msra.mxu0 %v6130
  %v6132 = vand.u32 %v6048, 4294901760
  %v6133 = vsub.f32 %v6048, %v6132
  %6134 = vmatmul.f32.gmra.mxu0 %v6133
  %v6135 = vpop.f32.mrf.mxu0
  %v6136 = vadd.f32 %v6112, %v6135
  %6137 = vdwg.mxu0
  %6138 = vmatpush.msra.mxu0 0.0
  %6139 = vmatpush.msra.mxu0 0.0
  %6140 = vmatpush.msra.mxu0 0.0
  %6141 = vmatpush.msra.mxu0 0.0
  %6142 = vmatpush.msra.mxu0 0.0
  %6143 = vmatpush.msra.mxu0 0.0
  %6144 = vmatpush.msra.mxu0 0.0
  %6145 = vmatpush.msra.mxu0 0.0
  %6146 = vmatpush.msra.mxu0 0.0
  %6147 = vmatpush.msra.mxu0 0.0
  %6148 = vmatpush.msra.mxu0 0.0
  %6149 = vmatpush.msra.mxu0 0.0
  %6150 = vmatpush.msra.mxu0 0.0
  %6151 = vmatpush.msra.mxu0 0.0
  %6152 = vmatpush.msra.mxu0 0.0
  %v6153 = vand.u32 %v6051, 4294901760
  %6154 = vmatpush.msra.mxu0 %v6153
  %v6155 = vand.u32 %v6048, 4294901760
  %v6156 = vsub.f32 %v6048, %v6155
  %v6157 = vand.u32 %v6156, 4294901760
  %6158 = vmatmul.f32.gmra.mxu0 %v6157
  %v6159 = vpop.f32.mrf.mxu0
  %v6160 = vadd.f32 %v6136, %v6159
  %6161 = vdwg.mxu0
  %6162 = vmatpush.msra.mxu0 0.0
  %6163 = vmatpush.msra.mxu0 0.0
  %6164 = vmatpush.msra.mxu0 0.0
  %6165 = vmatpush.msra.mxu0 0.0
  %6166 = vmatpush.msra.mxu0 0.0
  %6167 = vmatpush.msra.mxu0 0.0
  %6168 = vmatpush.msra.mxu0 0.0
  %6169 = vmatpush.msra.mxu0 0.0
  %6170 = vmatpush.msra.mxu0 0.0
  %6171 = vmatpush.msra.mxu0 0.0
  %6172 = vmatpush.msra.mxu0 0.0
  %6173 = vmatpush.msra.mxu0 0.0
  %6174 = vmatpush.msra.mxu0 0.0
  %6175 = vmatpush.msra.mxu0 0.0
  %6176 = vmatpush.msra.mxu0 0.0
  %v6177 = vand.u32 %v6051, 4294901760
  %v6178 = vsub.f32 %v6051, %v6177
  %v6179 = vand.u32 %v6178, 4294901760
  %6180 = vmatpush.msra.mxu0 %v6179
  %v6181 = vand.u32 %v6048, 4294901760
  %6182 = vmatmul.f32.gmra.mxu0 %v6181
  %v6183 = vpop.f32.mrf.mxu0
  %v6184 = vadd.f32 %v6160, %v6183
  %6185 = vdwg.mxu0
  %6186 = vmatpush.msra.mxu0 0.0
  %6187 = vmatpush.msra.mxu0 0.0
  %6188 = vmatpush.msra.mxu0 0.0
  %6189 = vmatpush.msra.mxu0 0.0
  %6190 = vmatpush.msra.mxu0 0.0
  %6191 = vmatpush.msra.mxu0 0.0
  %6192 = vmatpush.msra.mxu0 0.0
  %6193 = vmatpush.msra.mxu0 0.0
  %6194 = vmatpush.msra.mxu0 0.0
  %6195 = vmatpush.msra.mxu0 0.0
  %6196 = vmatpush.msra.mxu0 0.0
  %6197 = vmatpush.msra.mxu0 0.0
  %6198 = vmatpush.msra.mxu0 0.0
  %6199 = vmatpush.msra.mxu0 0.0
  %6200 = vmatpush.msra.mxu0 0.0
  %v6201 = vand.u32 %v6051, 4294901760
  %6202 = vmatpush.msra.mxu0 %v6201
  %v6203 = vand.u32 %v6048, 4294901760
  %6204 = vmatmul.f32.gmra.mxu0 %v6203
  %v6205 = vpop.f32.mrf.mxu0
  %v6206 = vadd.f32 %v6184, %v6205
  %6207 = vdwg.mxu0
  %6208 = vmatpush.msra.mxu0 0.0
  %6209 = vmatpush.msra.mxu0 0.0
  %6210 = vmatpush.msra.mxu0 0.0
  %6211 = vmatpush.msra.mxu0 0.0
  %6212 = vmatpush.msra.mxu0 0.0
  %6213 = vmatpush.msra.mxu0 0.0
  %6214 = vmatpush.msra.mxu0 0.0
  %6215 = vmatpush.msra.mxu0 0.0
  %6216 = vmatpush.msra.mxu0 0.0
  %6217 = vmatpush.msra.mxu0 0.0
  %6218 = vmatpush.msra.mxu0 0.0
  %6219 = vmatpush.msra.mxu0 0.0
  %6220 = vmatpush.msra.mxu0 0.0
  %6221 = vmatpush.msra.mxu0 0.0
  %6222 = vmatpush.msra.mxu0 0.0
  %v6223 = vand.u32 %v6054, 4294901760
  %6224 = vmatpush.msra.mxu0 %v6223
  %v6225 = vand.u32 %v6048, 4294901760
  %v6226 = vsub.f32 %v6048, %v6225
  %v6227 = vand.u32 %v6226, 4294901760
  %v6228 = vsub.f32 %v6226, %v6227
  %v6229 = vand.u32 %v6228, 4294901760
  %6230 = vmatmul.f32.gmra.mxu0 %v6229
  %v6231 = vpop.f32.mrf.mxu0
  %v6232 = vadd.f32 0.0, %v6231
  %6233 = vdwg.mxu0
  %6234 = vmatpush.msra.mxu0 0.0
  %6235 = vmatpush.msra.mxu0 0.0
  %6236 = vmatpush.msra.mxu0 0.0
  %6237 = vmatpush.msra.mxu0 0.0
  %6238 = vmatpush.msra.mxu0 0.0
  %6239 = vmatpush.msra.mxu0 0.0
  %6240 = vmatpush.msra.mxu0 0.0
  %6241 = vmatpush.msra.mxu0 0.0
  %6242 = vmatpush.msra.mxu0 0.0
  %6243 = vmatpush.msra.mxu0 0.0
  %6244 = vmatpush.msra.mxu0 0.0
  %6245 = vmatpush.msra.mxu0 0.0
  %6246 = vmatpush.msra.mxu0 0.0
  %6247 = vmatpush.msra.mxu0 0.0
  %6248 = vmatpush.msra.mxu0 0.0
  %v6249 = vand.u32 %v6054, 4294901760
  %v6250 = vsub.f32 %v6054, %v6249
  %v6251 = vand.u32 %v6250, 4294901760
  %v6252 = vsub.f32 %v6250, %v6251
  %v6253 = vand.u32 %v6252, 4294901760
  %6254 = vmatpush.msra.mxu0 %v6253
  %v6255 = vand.u32 %v6048, 4294901760
  %6256 = vmatmul.f32.gmra.mxu0 %v6255
  %v6257 = vpop.f32.mrf.mxu0
  %v6258 = vadd.f32 %v6232, %v6257
  %6259 = vdwg.mxu0
  %6260 = vmatpush.msra.mxu0 0.0
  %6261 = vmatpush.msra.mxu0 0.0
  %6262 = vmatpush.msra.mxu0 0.0
  %6263 = vmatpush.msra.mxu0 0.0
  %6264 = vmatpush.msra.mxu0 0.0
  %6265 = vmatpush.msra.mxu0 0.0
  %6266 = vmatpush.msra.mxu0 0.0
  %6267 = vmatpush.msra.mxu0 0.0
  %6268 = vmatpush.msra.mxu0 0.0
  %6269 = vmatpush.msra.mxu0 0.0
  %6270 = vmatpush.msra.mxu0 0.0
  %6271 = vmatpush.msra.mxu0 0.0
  %6272 = vmatpush.msra.mxu0 0.0
  %6273 = vmatpush.msra.mxu0 0.0
  %6274 = vmatpush.msra.mxu0 0.0
  %v6275 = vand.u32 %v6054, 4294901760
  %v6276 = vsub.f32 %v6054, %v6275
  %6277 = vmatpush.msra.mxu0 %v6276
  %v6278 = vand.u32 %v6048, 4294901760
  %v6279 = vsub.f32 %v6048, %v6278
  %6280 = vmatmul.f32.gmra.mxu0 %v6279
  %v6281 = vpop.f32.mrf.mxu0
  %v6282 = vadd.f32 %v6258, %v6281
  %6283 = vdwg.mxu0
  %6284 = vmatpush.msra.mxu0 0.0
  %6285 = vmatpush.msra.mxu0 0.0
  %6286 = vmatpush.msra.mxu0 0.0
  %6287 = vmatpush.msra.mxu0 0.0
  %6288 = vmatpush.msra.mxu0 0.0
  %6289 = vmatpush.msra.mxu0 0.0
  %6290 = vmatpush.msra.mxu0 0.0
  %6291 = vmatpush.msra.mxu0 0.0
  %6292 = vmatpush.msra.mxu0 0.0
  %6293 = vmatpush.msra.mxu0 0.0
  %6294 = vmatpush.msra.mxu0 0.0
  %6295 = vmatpush.msra.mxu0 0.0
  %6296 = vmatpush.msra.mxu0 0.0
  %6297 = vmatpush.msra.mxu0 0.0
  %6298 = vmatpush.msra.mxu0 0.0
  %v6299 = vand.u32 %v6054, 4294901760
  %6300 = vmatpush.msra.mxu0 %v6299
  %v6301 = vand.u32 %v6048, 4294901760
  %v6302 = vsub.f32 %v6048, %v6301
  %v6303 = vand.u32 %v6302, 4294901760
  %6304 = vmatmul.f32.gmra.mxu0 %v6303
  %v6305 = vpop.f32.mrf.mxu0
  %v6306 = vadd.f32 %v6282, %v6305
  %6307 = vdwg.mxu0
  %6308 = vmatpush.msra.mxu0 0.0
  %6309 = vmatpush.msra.mxu0 0.0
  %6310 = vmatpush.msra.mxu0 0.0
  %6311 = vmatpush.msra.mxu0 0.0
  %6312 = vmatpush.msra.mxu0 0.0
  %6313 = vmatpush.msra.mxu0 0.0
  %6314 = vmatpush.msra.mxu0 0.0
  %6315 = vmatpush.msra.mxu0 0.0
  %6316 = vmatpush.msra.mxu0 0.0
  %6317 = vmatpush.msra.mxu0 0.0
  %6318 = vmatpush.msra.mxu0 0.0
  %6319 = vmatpush.msra.mxu0 0.0
  %6320 = vmatpush.msra.mxu0 0.0
  %6321 = vmatpush.msra.mxu0 0.0
  %6322 = vmatpush.msra.mxu0 0.0
  %v6323 = vand.u32 %v6054, 4294901760
  %v6324 = vsub.f32 %v6054, %v6323
  %v6325 = vand.u32 %v6324, 4294901760
  %6326 = vmatpush.msra.mxu0 %v6325
  %v6327 = vand.u32 %v6048, 4294901760
  %6328 = vmatmul.f32.gmra.mxu0 %v6327
  %v6329 = vpop.f32.mrf.mxu0
  %v6330 = vadd.f32 %v6306, %v6329
  %6331 = vdwg.mxu0
  %6332 = vmatpush.msra.mxu0 0.0
  %6333 = vmatpush.msra.mxu0 0.0
  %6334 = vmatpush.msra.mxu0 0.0
  %6335 = vmatpush.msra.mxu0 0.0
  %6336 = vmatpush.msra.mxu0 0.0
  %6337 = vmatpush.msra.mxu0 0.0
  %6338 = vmatpush.msra.mxu0 0.0
  %6339 = vmatpush.msra.mxu0 0.0
  %6340 = vmatpush.msra.mxu0 0.0
  %6341 = vmatpush.msra.mxu0 0.0
  %6342 = vmatpush.msra.mxu0 0.0
  %6343 = vmatpush.msra.mxu0 0.0
  %6344 = vmatpush.msra.mxu0 0.0
  %6345 = vmatpush.msra.mxu0 0.0
  %6346 = vmatpush.msra.mxu0 0.0
  %v6347 = vand.u32 %v6054, 4294901760
  %6348 = vmatpush.msra.mxu0 %v6347
  %v6349 = vand.u32 %v6048, 4294901760
  %6350 = vmatmul.f32.gmra.mxu0 %v6349
  %v6351 = vpop.f32.mrf.mxu0
  %v6352 = vadd.f32 %v6330, %v6351
  %6353 = vdwg.mxu0
  %6354 = vmatpush.msra.mxu0 0.0
  %6355 = vmatpush.msra.mxu0 0.0
  %6356 = vmatpush.msra.mxu0 0.0
  %6357 = vmatpush.msra.mxu0 0.0
  %6358 = vmatpush.msra.mxu0 0.0
  %6359 = vmatpush.msra.mxu0 0.0
  %6360 = vmatpush.msra.mxu0 0.0
  %6361 = vmatpush.msra.mxu0 0.0
  %6362 = vmatpush.msra.mxu0 0.0
  %6363 = vmatpush.msra.mxu0 0.0
  %6364 = vmatpush.msra.mxu0 0.0
  %6365 = vmatpush.msra.mxu0 0.0
  %6366 = vmatpush.msra.mxu0 0.0
  %6367 = vmatpush.msra.mxu0 0.0
  %6368 = vmatpush.msra.mxu0 0.0
  %v6369 = vand.u32 %v6057, 4294901760
  %6370 = vmatpush.msra.mxu0 %v6369
  %v6371 = vand.u32 %v6048, 4294901760
  %v6372 = vsub.f32 %v6048, %v6371
  %v6373 = vand.u32 %v6372, 4294901760
  %v6374 = vsub.f32 %v6372, %v6373
  %v6375 = vand.u32 %v6374, 4294901760
  %6376 = vmatmul.f32.gmra.mxu0 %v6375
  %v6377 = vpop.f32.mrf.mxu0
  %v6378 = vadd.f32 0.0, %v6377
  %6379 = vdwg.mxu0
  %6380 = vmatpush.msra.mxu0 0.0
  %6381 = vmatpush.msra.mxu0 0.0
  %6382 = vmatpush.msra.mxu0 0.0
  %6383 = vmatpush.msra.mxu0 0.0
  %6384 = vmatpush.msra.mxu0 0.0
  %6385 = vmatpush.msra.mxu0 0.0
  %6386 = vmatpush.msra.mxu0 0.0
  %6387 = vmatpush.msra.mxu0 0.0
  %6388 = vmatpush.msra.mxu0 0.0
  %6389 = vmatpush.msra.mxu0 0.0
  %6390 = vmatpush.msra.mxu0 0.0
  %6391 = vmatpush.msra.mxu0 0.0
  %6392 = vmatpush.msra.mxu0 0.0
  %6393 = vmatpush.msra.mxu0 0.0
  %6394 = vmatpush.msra.mxu0 0.0
  %v6395 = vand.u32 %v6057, 4294901760
  %v6396 = vsub.f32 %v6057, %v6395
  %v6397 = vand.u32 %v6396, 4294901760
  %v6398 = vsub.f32 %v6396, %v6397
  %v6399 = vand.u32 %v6398, 4294901760
  %6400 = vmatpush.msra.mxu0 %v6399
  %v6401 = vand.u32 %v6048, 4294901760
  %6402 = vmatmul.f32.gmra.mxu0 %v6401
  %v6403 = vpop.f32.mrf.mxu0
  %v6404 = vadd.f32 %v6378, %v6403
  %6405 = vdwg.mxu0
  %6406 = vmatpush.msra.mxu0 0.0
  %6407 = vmatpush.msra.mxu0 0.0
  %6408 = vmatpush.msra.mxu0 0.0
  %6409 = vmatpush.msra.mxu0 0.0
  %6410 = vmatpush.msra.mxu0 0.0
  %6411 = vmatpush.msra.mxu0 0.0
  %6412 = vmatpush.msra.mxu0 0.0
  %6413 = vmatpush.msra.mxu0 0.0
  %6414 = vmatpush.msra.mxu0 0.0
  %6415 = vmatpush.msra.mxu0 0.0
  %6416 = vmatpush.msra.mxu0 0.0
  %6417 = vmatpush.msra.mxu0 0.0
  %6418 = vmatpush.msra.mxu0 0.0
  %6419 = vmatpush.msra.mxu0 0.0
  %6420 = vmatpush.msra.mxu0 0.0
  %v6421 = vand.u32 %v6057, 4294901760
  %v6422 = vsub.f32 %v6057, %v6421
  %6423 = vmatpush.msra.mxu0 %v6422
  %v6424 = vand.u32 %v6048, 4294901760
  %v6425 = vsub.f32 %v6048, %v6424
  %6426 = vmatmul.f32.gmra.mxu0 %v6425
  %v6427 = vpop.f32.mrf.mxu0
  %v6428 = vadd.f32 %v6404, %v6427
  %6429 = vdwg.mxu0
  %6430 = vmatpush.msra.mxu0 0.0
  %6431 = vmatpush.msra.mxu0 0.0
  %6432 = vmatpush.msra.mxu0 0.0
  %6433 = vmatpush.msra.mxu0 0.0
  %6434 = vmatpush.msra.mxu0 0.0
  %6435 = vmatpush.msra.mxu0 0.0
  %6436 = vmatpush.msra.mxu0 0.0
  %6437 = vmatpush.msra.mxu0 0.0
  %6438 = vmatpush.msra.mxu0 0.0
  %6439 = vmatpush.msra.mxu0 0.0
  %6440 = vmatpush.msra.mxu0 0.0
  %6441 = vmatpush.msra.mxu0 0.0
  %6442 = vmatpush.msra.mxu0 0.0
  %6443 = vmatpush.msra.mxu0 0.0
  %6444 = vmatpush.msra.mxu0 0.0
  %v6445 = vand.u32 %v6057, 4294901760
  %6446 = vmatpush.msra.mxu0 %v6445
  %v6447 = vand.u32 %v6048, 4294901760
  %v6448 = vsub.f32 %v6048, %v6447
  %v6449 = vand.u32 %v6448, 4294901760
  %6450 = vmatmul.f32.gmra.mxu0 %v6449
  %v6451 = vpop.f32.mrf.mxu0
  %v6452 = vadd.f32 %v6428, %v6451
  %6453 = vdwg.mxu0
  %6454 = vmatpush.msra.mxu0 0.0
  %6455 = vmatpush.msra.mxu0 0.0
  %6456 = vmatpush.msra.mxu0 0.0
  %6457 = vmatpush.msra.mxu0 0.0
  %6458 = vmatpush.msra.mxu0 0.0
  %6459 = vmatpush.msra.mxu0 0.0
  %6460 = vmatpush.msra.mxu0 0.0
  %6461 = vmatpush.msra.mxu0 0.0
  %6462 = vmatpush.msra.mxu0 0.0
  %6463 = vmatpush.msra.mxu0 0.0
  %6464 = vmatpush.msra.mxu0 0.0
  %6465 = vmatpush.msra.mxu0 0.0
  %6466 = vmatpush.msra.mxu0 0.0
  %6467 = vmatpush.msra.mxu0 0.0
  %6468 = vmatpush.msra.mxu0 0.0
  %v6469 = vand.u32 %v6057, 4294901760
  %v6470 = vsub.f32 %v6057, %v6469
  %v6471 = vand.u32 %v6470, 4294901760
  %6472 = vmatpush.msra.mxu0 %v6471
  %v6473 = vand.u32 %v6048, 4294901760
  %6474 = vmatmul.f32.gmra.mxu0 %v6473
  %v6475 = vpop.f32.mrf.mxu0
  %v6476 = vadd.f32 %v6452, %v6475
  %6477 = vdwg.mxu0
  %6478 = vmatpush.msra.mxu0 0.0
  %6479 = vmatpush.msra.mxu0 0.0
  %6480 = vmatpush.msra.mxu0 0.0
  %6481 = vmatpush.msra.mxu0 0.0
  %6482 = vmatpush.msra.mxu0 0.0
  %6483 = vmatpush.msra.mxu0 0.0
  %6484 = vmatpush.msra.mxu0 0.0
  %6485 = vmatpush.msra.mxu0 0.0
  %6486 = vmatpush.msra.mxu0 0.0
  %6487 = vmatpush.msra.mxu0 0.0
  %6488 = vmatpush.msra.mxu0 0.0
  %6489 = vmatpush.msra.mxu0 0.0
  %6490 = vmatpush.msra.mxu0 0.0
  %6491 = vmatpush.msra.mxu0 0.0
  %6492 = vmatpush.msra.mxu0 0.0
  %v6493 = vand.u32 %v6057, 4294901760
  %6494 = vmatpush.msra.mxu0 %v6493
  %v6495 = vand.u32 %v6048, 4294901760
  %6496 = vmatmul.f32.gmra.mxu0 %v6495
  %v6497 = vpop.f32.mrf.mxu0
  %v6498 = vadd.f32 %v6476, %v6497
  %6499 = vdwg.mxu0
  %6500 = vmatpush.msra.mxu0 0.0
  %6501 = vmatpush.msra.mxu0 0.0
  %6502 = vmatpush.msra.mxu0 0.0
  %6503 = vmatpush.msra.mxu0 0.0
  %6504 = vmatpush.msra.mxu0 0.0
  %6505 = vmatpush.msra.mxu0 0.0
  %6506 = vmatpush.msra.mxu0 0.0
  %6507 = vmatpush.msra.mxu0 0.0
  %6508 = vmatpush.msra.mxu0 0.0
  %6509 = vmatpush.msra.mxu0 0.0
  %6510 = vmatpush.msra.mxu0 0.0
  %6511 = vmatpush.msra.mxu0 0.0
  %6512 = vmatpush.msra.mxu0 0.0
  %6513 = vmatpush.msra.mxu0 0.0
  %6514 = vmatpush.msra.mxu0 0.0
  %v6515 = vand.u32 %v6060, 4294901760
  %6516 = vmatpush.msra.mxu0 %v6515
  %v6517 = vand.u32 %v6048, 4294901760
  %v6518 = vsub.f32 %v6048, %v6517
  %v6519 = vand.u32 %v6518, 4294901760
  %v6520 = vsub.f32 %v6518, %v6519
  %v6521 = vand.u32 %v6520, 4294901760
  %6522 = vmatmul.f32.gmra.mxu0 %v6521
  %v6523 = vpop.f32.mrf.mxu0
  %v6524 = vadd.f32 0.0, %v6523
  %6525 = vdwg.mxu0
  %6526 = vmatpush.msra.mxu0 0.0
  %6527 = vmatpush.msra.mxu0 0.0
  %6528 = vmatpush.msra.mxu0 0.0
  %6529 = vmatpush.msra.mxu0 0.0
  %6530 = vmatpush.msra.mxu0 0.0
  %6531 = vmatpush.msra.mxu0 0.0
  %6532 = vmatpush.msra.mxu0 0.0
  %6533 = vmatpush.msra.mxu0 0.0
  %6534 = vmatpush.msra.mxu0 0.0
  %6535 = vmatpush.msra.mxu0 0.0
  %6536 = vmatpush.msra.mxu0 0.0
  %6537 = vmatpush.msra.mxu0 0.0
  %6538 = vmatpush.msra.mxu0 0.0
  %6539 = vmatpush.msra.mxu0 0.0
  %6540 = vmatpush.msra.mxu0 0.0
  %v6541 = vand.u32 %v6060, 4294901760
  %v6542 = vsub.f32 %v6060, %v6541
  %v6543 = vand.u32 %v6542, 4294901760
  %v6544 = vsub.f32 %v6542, %v6543
  %v6545 = vand.u32 %v6544, 4294901760
  %6546 = vmatpush.msra.mxu0 %v6545
  %v6547 = vand.u32 %v6048, 4294901760
  %6548 = vmatmul.f32.gmra.mxu0 %v6547
  %v6549 = vpop.f32.mrf.mxu0
  %v6550 = vadd.f32 %v6524, %v6549
  %6551 = vdwg.mxu0
  %6552 = vmatpush.msra.mxu0 0.0
  %6553 = vmatpush.msra.mxu0 0.0
  %6554 = vmatpush.msra.mxu0 0.0
  %6555 = vmatpush.msra.mxu0 0.0
  %6556 = vmatpush.msra.mxu0 0.0
  %6557 = vmatpush.msra.mxu0 0.0
  %6558 = vmatpush.msra.mxu0 0.0
  %6559 = vmatpush.msra.mxu0 0.0
  %6560 = vmatpush.msra.mxu0 0.0
  %6561 = vmatpush.msra.mxu0 0.0
  %6562 = vmatpush.msra.mxu0 0.0
  %6563 = vmatpush.msra.mxu0 0.0
  %6564 = vmatpush.msra.mxu0 0.0
  %6565 = vmatpush.msra.mxu0 0.0
  %6566 = vmatpush.msra.mxu0 0.0
  %v6567 = vand.u32 %v6060, 4294901760
  %v6568 = vsub.f32 %v6060, %v6567
  %6569 = vmatpush.msra.mxu0 %v6568
  %v6570 = vand.u32 %v6048, 4294901760
  %v6571 = vsub.f32 %v6048, %v6570
  %6572 = vmatmul.f32.gmra.mxu0 %v6571
  %v6573 = vpop.f32.mrf.mxu0
  %v6574 = vadd.f32 %v6550, %v6573
  %6575 = vdwg.mxu0
  %6576 = vmatpush.msra.mxu0 0.0
  %6577 = vmatpush.msra.mxu0 0.0
  %6578 = vmatpush.msra.mxu0 0.0
  %6579 = vmatpush.msra.mxu0 0.0
  %6580 = vmatpush.msra.mxu0 0.0
  %6581 = vmatpush.msra.mxu0 0.0
  %6582 = vmatpush.msra.mxu0 0.0
  %6583 = vmatpush.msra.mxu0 0.0
  %6584 = vmatpush.msra.mxu0 0.0
  %6585 = vmatpush.msra.mxu0 0.0
  %6586 = vmatpush.msra.mxu0 0.0
  %6587 = vmatpush.msra.mxu0 0.0
  %6588 = vmatpush.msra.mxu0 0.0
  %6589 = vmatpush.msra.mxu0 0.0
  %6590 = vmatpush.msra.mxu0 0.0
  %v6591 = vand.u32 %v6060, 4294901760
  %6592 = vmatpush.msra.mxu0 %v6591
  %v6593 = vand.u32 %v6048, 4294901760
  %v6594 = vsub.f32 %v6048, %v6593
  %v6595 = vand.u32 %v6594, 4294901760
  %6596 = vmatmul.f32.gmra.mxu0 %v6595
  %v6597 = vpop.f32.mrf.mxu0
  %v6598 = vadd.f32 %v6574, %v6597
  %6599 = vdwg.mxu0
  %6600 = vmatpush.msra.mxu0 0.0
  %6601 = vmatpush.msra.mxu0 0.0
  %6602 = vmatpush.msra.mxu0 0.0
  %6603 = vmatpush.msra.mxu0 0.0
  %6604 = vmatpush.msra.mxu0 0.0
  %6605 = vmatpush.msra.mxu0 0.0
  %6606 = vmatpush.msra.mxu0 0.0
  %6607 = vmatpush.msra.mxu0 0.0
  %6608 = vmatpush.msra.mxu0 0.0
  %6609 = vmatpush.msra.mxu0 0.0
  %6610 = vmatpush.msra.mxu0 0.0
  %6611 = vmatpush.msra.mxu0 0.0
  %6612 = vmatpush.msra.mxu0 0.0
  %6613 = vmatpush.msra.mxu0 0.0
  %6614 = vmatpush.msra.mxu0 0.0
  %v6615 = vand.u32 %v6060, 4294901760
  %v6616 = vsub.f32 %v6060, %v6615
  %v6617 = vand.u32 %v6616, 4294901760
  %6618 = vmatpush.msra.mxu0 %v6617
  %v6619 = vand.u32 %v6048, 4294901760
  %6620 = vmatmul.f32.gmra.mxu0 %v6619
  %v6621 = vpop.f32.mrf.mxu0
  %v6622 = vadd.f32 %v6598, %v6621
  %6623 = vdwg.mxu0
  %6624 = vmatpush.msra.mxu0 0.0
  %6625 = vmatpush.msra.mxu0 0.0
  %6626 = vmatpush.msra.mxu0 0.0
  %6627 = vmatpush.msra.mxu0 0.0
  %6628 = vmatpush.msra.mxu0 0.0
  %6629 = vmatpush.msra.mxu0 0.0
  %6630 = vmatpush.msra.mxu0 0.0
  %6631 = vmatpush.msra.mxu0 0.0
  %6632 = vmatpush.msra.mxu0 0.0
  %6633 = vmatpush.msra.mxu0 0.0
  %6634 = vmatpush.msra.mxu0 0.0
  %6635 = vmatpush.msra.mxu0 0.0
  %6636 = vmatpush.msra.mxu0 0.0
  %6637 = vmatpush.msra.mxu0 0.0
  %6638 = vmatpush.msra.mxu0 0.0
  %v6639 = vand.u32 %v6060, 4294901760
  %6640 = vmatpush.msra.mxu0 %v6639
  %v6641 = vand.u32 %v6048, 4294901760
  %6642 = vmatmul.f32.gmra.mxu0 %v6641
  %v6643 = vpop.f32.mrf.mxu0
  %v6644 = vadd.f32 %v6622, %v6643
  %6645 = vdwg.mxu0
  %v6647 = vsel %vm251, %v6023, 0
  %v6650 = vsel %vm86, %v6019, 0
  %v6653 = vsel %vm86, %v6020, 0
  %v6656 = vsel %vm86, %v6021, 0
  %v6659 = vsel %vm86, %v6022, 0
  %6661 = vmatpush.msra.mxu0 0.0
  %6662 = vmatpush.msra.mxu0 0.0
  %6663 = vmatpush.msra.mxu0 0.0
  %6664 = vmatpush.msra.mxu0 0.0
  %6665 = vmatpush.msra.mxu0 0.0
  %6666 = vmatpush.msra.mxu0 0.0
  %6667 = vmatpush.msra.mxu0 0.0
  %6668 = vmatpush.msra.mxu0 0.0
  %6669 = vmatpush.msra.mxu0 0.0
  %6670 = vmatpush.msra.mxu0 0.0
  %6671 = vmatpush.msra.mxu0 0.0
  %6672 = vmatpush.msra.mxu0 0.0
  %6673 = vmatpush.msra.mxu0 0.0
  %6674 = vmatpush.msra.mxu0 0.0
  %6675 = vmatpush.msra.mxu0 0.0
  %v6676 = vand.u32 %v6650, 4294901760
  %6677 = vmatpush.msra.mxu0 %v6676
  %v6678 = vand.u32 %v6647, 4294901760
  %v6679 = vsub.f32 %v6647, %v6678
  %v6680 = vand.u32 %v6679, 4294901760
  %v6681 = vsub.f32 %v6679, %v6680
  %v6682 = vand.u32 %v6681, 4294901760
  %6683 = vmatmul.f32.gmra.mxu0 %v6682
  %v6684 = vpop.f32.mrf.mxu0
  %v6685 = vadd.f32 %v6206, %v6684
  %6686 = vdwg.mxu0
  %6687 = vmatpush.msra.mxu0 0.0
  %6688 = vmatpush.msra.mxu0 0.0
  %6689 = vmatpush.msra.mxu0 0.0
  %6690 = vmatpush.msra.mxu0 0.0
  %6691 = vmatpush.msra.mxu0 0.0
  %6692 = vmatpush.msra.mxu0 0.0
  %6693 = vmatpush.msra.mxu0 0.0
  %6694 = vmatpush.msra.mxu0 0.0
  %6695 = vmatpush.msra.mxu0 0.0
  %6696 = vmatpush.msra.mxu0 0.0
  %6697 = vmatpush.msra.mxu0 0.0
  %6698 = vmatpush.msra.mxu0 0.0
  %6699 = vmatpush.msra.mxu0 0.0
  %6700 = vmatpush.msra.mxu0 0.0
  %6701 = vmatpush.msra.mxu0 0.0
  %v6702 = vand.u32 %v6650, 4294901760
  %v6703 = vsub.f32 %v6650, %v6702
  %v6704 = vand.u32 %v6703, 4294901760
  %v6705 = vsub.f32 %v6703, %v6704
  %v6706 = vand.u32 %v6705, 4294901760
  %6707 = vmatpush.msra.mxu0 %v6706
  %v6708 = vand.u32 %v6647, 4294901760
  %6709 = vmatmul.f32.gmra.mxu0 %v6708
  %v6710 = vpop.f32.mrf.mxu0
  %v6711 = vadd.f32 %v6685, %v6710
  %6712 = vdwg.mxu0
  %6713 = vmatpush.msra.mxu0 0.0
  %6714 = vmatpush.msra.mxu0 0.0
  %6715 = vmatpush.msra.mxu0 0.0
  %6716 = vmatpush.msra.mxu0 0.0
  %6717 = vmatpush.msra.mxu0 0.0
  %6718 = vmatpush.msra.mxu0 0.0
  %6719 = vmatpush.msra.mxu0 0.0
  %6720 = vmatpush.msra.mxu0 0.0
  %6721 = vmatpush.msra.mxu0 0.0
  %6722 = vmatpush.msra.mxu0 0.0
  %6723 = vmatpush.msra.mxu0 0.0
  %6724 = vmatpush.msra.mxu0 0.0
  %6725 = vmatpush.msra.mxu0 0.0
  %6726 = vmatpush.msra.mxu0 0.0
  %6727 = vmatpush.msra.mxu0 0.0
  %v6728 = vand.u32 %v6650, 4294901760
  %v6729 = vsub.f32 %v6650, %v6728
  %6730 = vmatpush.msra.mxu0 %v6729
  %v6731 = vand.u32 %v6647, 4294901760
  %v6732 = vsub.f32 %v6647, %v6731
  %6733 = vmatmul.f32.gmra.mxu0 %v6732
  %v6734 = vpop.f32.mrf.mxu0
  %v6735 = vadd.f32 %v6711, %v6734
  %6736 = vdwg.mxu0
  %6737 = vmatpush.msra.mxu0 0.0
  %6738 = vmatpush.msra.mxu0 0.0
  %6739 = vmatpush.msra.mxu0 0.0
  %6740 = vmatpush.msra.mxu0 0.0
  %6741 = vmatpush.msra.mxu0 0.0
  %6742 = vmatpush.msra.mxu0 0.0
  %6743 = vmatpush.msra.mxu0 0.0
  %6744 = vmatpush.msra.mxu0 0.0
  %6745 = vmatpush.msra.mxu0 0.0
  %6746 = vmatpush.msra.mxu0 0.0
  %6747 = vmatpush.msra.mxu0 0.0
  %6748 = vmatpush.msra.mxu0 0.0
  %6749 = vmatpush.msra.mxu0 0.0
  %6750 = vmatpush.msra.mxu0 0.0
  %6751 = vmatpush.msra.mxu0 0.0
  %v6752 = vand.u32 %v6650, 4294901760
  %6753 = vmatpush.msra.mxu0 %v6752
  %v6754 = vand.u32 %v6647, 4294901760
  %v6755 = vsub.f32 %v6647, %v6754
  %v6756 = vand.u32 %v6755, 4294901760
  %6757 = vmatmul.f32.gmra.mxu0 %v6756
  %v6758 = vpop.f32.mrf.mxu0
  %v6759 = vadd.f32 %v6735, %v6758
  %6760 = vdwg.mxu0
  %6761 = vmatpush.msra.mxu0 0.0
  %6762 = vmatpush.msra.mxu0 0.0
  %6763 = vmatpush.msra.mxu0 0.0
  %6764 = vmatpush.msra.mxu0 0.0
  %6765 = vmatpush.msra.mxu0 0.0
  %6766 = vmatpush.msra.mxu0 0.0
  %6767 = vmatpush.msra.mxu0 0.0
  %6768 = vmatpush.msra.mxu0 0.0
  %6769 = vmatpush.msra.mxu0 0.0
  %6770 = vmatpush.msra.mxu0 0.0
  %6771 = vmatpush.msra.mxu0 0.0
  %6772 = vmatpush.msra.mxu0 0.0
  %6773 = vmatpush.msra.mxu0 0.0
  %6774 = vmatpush.msra.mxu0 0.0
  %6775 = vmatpush.msra.mxu0 0.0
  %v6776 = vand.u32 %v6650, 4294901760
  %v6777 = vsub.f32 %v6650, %v6776
  %v6778 = vand.u32 %v6777, 4294901760
  %6779 = vmatpush.msra.mxu0 %v6778
  %v6780 = vand.u32 %v6647, 4294901760
  %6781 = vmatmul.f32.gmra.mxu0 %v6780
  %v6782 = vpop.f32.mrf.mxu0
  %v6783 = vadd.f32 %v6759, %v6782
  %6784 = vdwg.mxu0
  %6785 = vmatpush.msra.mxu0 0.0
  %6786 = vmatpush.msra.mxu0 0.0
  %6787 = vmatpush.msra.mxu0 0.0
  %6788 = vmatpush.msra.mxu0 0.0
  %6789 = vmatpush.msra.mxu0 0.0
  %6790 = vmatpush.msra.mxu0 0.0
  %6791 = vmatpush.msra.mxu0 0.0
  %6792 = vmatpush.msra.mxu0 0.0
  %6793 = vmatpush.msra.mxu0 0.0
  %6794 = vmatpush.msra.mxu0 0.0
  %6795 = vmatpush.msra.mxu0 0.0
  %6796 = vmatpush.msra.mxu0 0.0
  %6797 = vmatpush.msra.mxu0 0.0
  %6798 = vmatpush.msra.mxu0 0.0
  %6799 = vmatpush.msra.mxu0 0.0
  %v6800 = vand.u32 %v6650, 4294901760
  %6801 = vmatpush.msra.mxu0 %v6800
  %v6802 = vand.u32 %v6647, 4294901760
  %6803 = vmatmul.f32.gmra.mxu0 %v6802
  %v6804 = vpop.f32.mrf.mxu0
  %v6805 = vadd.f32 %v6783, %v6804
  %6806 = vdwg.mxu0
  %6807 = vmatpush.msra.mxu0 0.0
  %6808 = vmatpush.msra.mxu0 0.0
  %6809 = vmatpush.msra.mxu0 0.0
  %6810 = vmatpush.msra.mxu0 0.0
  %6811 = vmatpush.msra.mxu0 0.0
  %6812 = vmatpush.msra.mxu0 0.0
  %6813 = vmatpush.msra.mxu0 0.0
  %6814 = vmatpush.msra.mxu0 0.0
  %6815 = vmatpush.msra.mxu0 0.0
  %6816 = vmatpush.msra.mxu0 0.0
  %6817 = vmatpush.msra.mxu0 0.0
  %6818 = vmatpush.msra.mxu0 0.0
  %6819 = vmatpush.msra.mxu0 0.0
  %6820 = vmatpush.msra.mxu0 0.0
  %6821 = vmatpush.msra.mxu0 0.0
  %v6822 = vand.u32 %v6653, 4294901760
  %6823 = vmatpush.msra.mxu0 %v6822
  %v6824 = vand.u32 %v6647, 4294901760
  %v6825 = vsub.f32 %v6647, %v6824
  %v6826 = vand.u32 %v6825, 4294901760
  %v6827 = vsub.f32 %v6825, %v6826
  %v6828 = vand.u32 %v6827, 4294901760
  %6829 = vmatmul.f32.gmra.mxu0 %v6828
  %v6830 = vpop.f32.mrf.mxu0
  %v6831 = vadd.f32 %v6352, %v6830
  %6832 = vdwg.mxu0
  %6833 = vmatpush.msra.mxu0 0.0
  %6834 = vmatpush.msra.mxu0 0.0
  %6835 = vmatpush.msra.mxu0 0.0
  %6836 = vmatpush.msra.mxu0 0.0
  %6837 = vmatpush.msra.mxu0 0.0
  %6838 = vmatpush.msra.mxu0 0.0
  %6839 = vmatpush.msra.mxu0 0.0
  %6840 = vmatpush.msra.mxu0 0.0
  %6841 = vmatpush.msra.mxu0 0.0
  %6842 = vmatpush.msra.mxu0 0.0
  %6843 = vmatpush.msra.mxu0 0.0
  %6844 = vmatpush.msra.mxu0 0.0
  %6845 = vmatpush.msra.mxu0 0.0
  %6846 = vmatpush.msra.mxu0 0.0
  %6847 = vmatpush.msra.mxu0 0.0
  %v6848 = vand.u32 %v6653, 4294901760
  %v6849 = vsub.f32 %v6653, %v6848
  %v6850 = vand.u32 %v6849, 4294901760
  %v6851 = vsub.f32 %v6849, %v6850
  %v6852 = vand.u32 %v6851, 4294901760
  %6853 = vmatpush.msra.mxu0 %v6852
  %v6854 = vand.u32 %v6647, 4294901760
  %6855 = vmatmul.f32.gmra.mxu0 %v6854
  %v6856 = vpop.f32.mrf.mxu0
  %v6857 = vadd.f32 %v6831, %v6856
  %6858 = vdwg.mxu0
  %6859 = vmatpush.msra.mxu0 0.0
  %6860 = vmatpush.msra.mxu0 0.0
  %6861 = vmatpush.msra.mxu0 0.0
  %6862 = vmatpush.msra.mxu0 0.0
  %6863 = vmatpush.msra.mxu0 0.0
  %6864 = vmatpush.msra.mxu0 0.0
  %6865 = vmatpush.msra.mxu0 0.0
  %6866 = vmatpush.msra.mxu0 0.0
  %6867 = vmatpush.msra.mxu0 0.0
  %6868 = vmatpush.msra.mxu0 0.0
  %6869 = vmatpush.msra.mxu0 0.0
  %6870 = vmatpush.msra.mxu0 0.0
  %6871 = vmatpush.msra.mxu0 0.0
  %6872 = vmatpush.msra.mxu0 0.0
  %6873 = vmatpush.msra.mxu0 0.0
  %v6874 = vand.u32 %v6653, 4294901760
  %v6875 = vsub.f32 %v6653, %v6874
  %6876 = vmatpush.msra.mxu0 %v6875
  %v6877 = vand.u32 %v6647, 4294901760
  %v6878 = vsub.f32 %v6647, %v6877
  %6879 = vmatmul.f32.gmra.mxu0 %v6878
  %v6880 = vpop.f32.mrf.mxu0
  %v6881 = vadd.f32 %v6857, %v6880
  %6882 = vdwg.mxu0
  %6883 = vmatpush.msra.mxu0 0.0
  %6884 = vmatpush.msra.mxu0 0.0
  %6885 = vmatpush.msra.mxu0 0.0
  %6886 = vmatpush.msra.mxu0 0.0
  %6887 = vmatpush.msra.mxu0 0.0
  %6888 = vmatpush.msra.mxu0 0.0
  %6889 = vmatpush.msra.mxu0 0.0
  %6890 = vmatpush.msra.mxu0 0.0
  %6891 = vmatpush.msra.mxu0 0.0
  %6892 = vmatpush.msra.mxu0 0.0
  %6893 = vmatpush.msra.mxu0 0.0
  %6894 = vmatpush.msra.mxu0 0.0
  %6895 = vmatpush.msra.mxu0 0.0
  %6896 = vmatpush.msra.mxu0 0.0
  %6897 = vmatpush.msra.mxu0 0.0
  %v6898 = vand.u32 %v6653, 4294901760
  %6899 = vmatpush.msra.mxu0 %v6898
  %v6900 = vand.u32 %v6647, 4294901760
  %v6901 = vsub.f32 %v6647, %v6900
  %v6902 = vand.u32 %v6901, 4294901760
  %6903 = vmatmul.f32.gmra.mxu0 %v6902
  %v6904 = vpop.f32.mrf.mxu0
  %v6905 = vadd.f32 %v6881, %v6904
  %6906 = vdwg.mxu0
  %6907 = vmatpush.msra.mxu0 0.0
  %6908 = vmatpush.msra.mxu0 0.0
  %6909 = vmatpush.msra.mxu0 0.0
  %6910 = vmatpush.msra.mxu0 0.0
  %6911 = vmatpush.msra.mxu0 0.0
  %6912 = vmatpush.msra.mxu0 0.0
  %6913 = vmatpush.msra.mxu0 0.0
  %6914 = vmatpush.msra.mxu0 0.0
  %6915 = vmatpush.msra.mxu0 0.0
  %6916 = vmatpush.msra.mxu0 0.0
  %6917 = vmatpush.msra.mxu0 0.0
  %6918 = vmatpush.msra.mxu0 0.0
  %6919 = vmatpush.msra.mxu0 0.0
  %6920 = vmatpush.msra.mxu0 0.0
  %6921 = vmatpush.msra.mxu0 0.0
  %v6922 = vand.u32 %v6653, 4294901760
  %v6923 = vsub.f32 %v6653, %v6922
  %v6924 = vand.u32 %v6923, 4294901760
  %6925 = vmatpush.msra.mxu0 %v6924
  %v6926 = vand.u32 %v6647, 4294901760
  %6927 = vmatmul.f32.gmra.mxu0 %v6926
  %v6928 = vpop.f32.mrf.mxu0
  %v6929 = vadd.f32 %v6905, %v6928
  %6930 = vdwg.mxu0
  %6931 = vmatpush.msra.mxu0 0.0
  %6932 = vmatpush.msra.mxu0 0.0
  %6933 = vmatpush.msra.mxu0 0.0
  %6934 = vmatpush.msra.mxu0 0.0
  %6935 = vmatpush.msra.mxu0 0.0
  %6936 = vmatpush.msra.mxu0 0.0
  %6937 = vmatpush.msra.mxu0 0.0
  %6938 = vmatpush.msra.mxu0 0.0
  %6939 = vmatpush.msra.mxu0 0.0
  %6940 = vmatpush.msra.mxu0 0.0
  %6941 = vmatpush.msra.mxu0 0.0
  %6942 = vmatpush.msra.mxu0 0.0
  %6943 = vmatpush.msra.mxu0 0.0
  %6944 = vmatpush.msra.mxu0 0.0
  %6945 = vmatpush.msra.mxu0 0.0
  %v6946 = vand.u32 %v6653, 4294901760
  %6947 = vmatpush.msra.mxu0 %v6946
  %v6948 = vand.u32 %v6647, 4294901760
  %6949 = vmatmul.f32.gmra.mxu0 %v6948
  %v6950 = vpop.f32.mrf.mxu0
  %v6951 = vadd.f32 %v6929, %v6950
  %6952 = vdwg.mxu0
  %6953 = vmatpush.msra.mxu0 0.0
  %6954 = vmatpush.msra.mxu0 0.0
  %6955 = vmatpush.msra.mxu0 0.0
  %6956 = vmatpush.msra.mxu0 0.0
  %6957 = vmatpush.msra.mxu0 0.0
  %6958 = vmatpush.msra.mxu0 0.0
  %6959 = vmatpush.msra.mxu0 0.0
  %6960 = vmatpush.msra.mxu0 0.0
  %6961 = vmatpush.msra.mxu0 0.0
  %6962 = vmatpush.msra.mxu0 0.0
  %6963 = vmatpush.msra.mxu0 0.0
  %6964 = vmatpush.msra.mxu0 0.0
  %6965 = vmatpush.msra.mxu0 0.0
  %6966 = vmatpush.msra.mxu0 0.0
  %6967 = vmatpush.msra.mxu0 0.0
  %v6968 = vand.u32 %v6656, 4294901760
  %6969 = vmatpush.msra.mxu0 %v6968
  %v6970 = vand.u32 %v6647, 4294901760
  %v6971 = vsub.f32 %v6647, %v6970
  %v6972 = vand.u32 %v6971, 4294901760
  %v6973 = vsub.f32 %v6971, %v6972
  %v6974 = vand.u32 %v6973, 4294901760
  %6975 = vmatmul.f32.gmra.mxu0 %v6974
  %v6976 = vpop.f32.mrf.mxu0
  %v6977 = vadd.f32 %v6498, %v6976
  %6978 = vdwg.mxu0
  %6979 = vmatpush.msra.mxu0 0.0
  %6980 = vmatpush.msra.mxu0 0.0
  %6981 = vmatpush.msra.mxu0 0.0
  %6982 = vmatpush.msra.mxu0 0.0
  %6983 = vmatpush.msra.mxu0 0.0
  %6984 = vmatpush.msra.mxu0 0.0
  %6985 = vmatpush.msra.mxu0 0.0
  %6986 = vmatpush.msra.mxu0 0.0
  %6987 = vmatpush.msra.mxu0 0.0
  %6988 = vmatpush.msra.mxu0 0.0
  %6989 = vmatpush.msra.mxu0 0.0
  %6990 = vmatpush.msra.mxu0 0.0
  %6991 = vmatpush.msra.mxu0 0.0
  %6992 = vmatpush.msra.mxu0 0.0
  %6993 = vmatpush.msra.mxu0 0.0
  %v6994 = vand.u32 %v6656, 4294901760
  %v6995 = vsub.f32 %v6656, %v6994
  %v6996 = vand.u32 %v6995, 4294901760
  %v6997 = vsub.f32 %v6995, %v6996
  %v6998 = vand.u32 %v6997, 4294901760
  %6999 = vmatpush.msra.mxu0 %v6998
  %v7000 = vand.u32 %v6647, 4294901760
  %7001 = vmatmul.f32.gmra.mxu0 %v7000
  %v7002 = vpop.f32.mrf.mxu0
  %v7003 = vadd.f32 %v6977, %v7002
  %7004 = vdwg.mxu0
  %7005 = vmatpush.msra.mxu0 0.0
  %7006 = vmatpush.msra.mxu0 0.0
  %7007 = vmatpush.msra.mxu0 0.0
  %7008 = vmatpush.msra.mxu0 0.0
  %7009 = vmatpush.msra.mxu0 0.0
  %7010 = vmatpush.msra.mxu0 0.0
  %7011 = vmatpush.msra.mxu0 0.0
  %7012 = vmatpush.msra.mxu0 0.0
  %7013 = vmatpush.msra.mxu0 0.0
  %7014 = vmatpush.msra.mxu0 0.0
  %7015 = vmatpush.msra.mxu0 0.0
  %7016 = vmatpush.msra.mxu0 0.0
  %7017 = vmatpush.msra.mxu0 0.0
  %7018 = vmatpush.msra.mxu0 0.0
  %7019 = vmatpush.msra.mxu0 0.0
  %v7020 = vand.u32 %v6656, 4294901760
  %v7021 = vsub.f32 %v6656, %v7020
  %7022 = vmatpush.msra.mxu0 %v7021
  %v7023 = vand.u32 %v6647, 4294901760
  %v7024 = vsub.f32 %v6647, %v7023
  %7025 = vmatmul.f32.gmra.mxu0 %v7024
  %v7026 = vpop.f32.mrf.mxu0
  %v7027 = vadd.f32 %v7003, %v7026
  %7028 = vdwg.mxu0
  %7029 = vmatpush.msra.mxu0 0.0
  %7030 = vmatpush.msra.mxu0 0.0
  %7031 = vmatpush.msra.mxu0 0.0
  %7032 = vmatpush.msra.mxu0 0.0
  %7033 = vmatpush.msra.mxu0 0.0
  %7034 = vmatpush.msra.mxu0 0.0
  %7035 = vmatpush.msra.mxu0 0.0
  %7036 = vmatpush.msra.mxu0 0.0
  %7037 = vmatpush.msra.mxu0 0.0
  %7038 = vmatpush.msra.mxu0 0.0
  %7039 = vmatpush.msra.mxu0 0.0
  %7040 = vmatpush.msra.mxu0 0.0
  %7041 = vmatpush.msra.mxu0 0.0
  %7042 = vmatpush.msra.mxu0 0.0
  %7043 = vmatpush.msra.mxu0 0.0
  %v7044 = vand.u32 %v6656, 4294901760
  %7045 = vmatpush.msra.mxu0 %v7044
  %v7046 = vand.u32 %v6647, 4294901760
  %v7047 = vsub.f32 %v6647, %v7046
  %v7048 = vand.u32 %v7047, 4294901760
  %7049 = vmatmul.f32.gmra.mxu0 %v7048
  %v7050 = vpop.f32.mrf.mxu0
  %v7051 = vadd.f32 %v7027, %v7050
  %7052 = vdwg.mxu0
  %7053 = vmatpush.msra.mxu0 0.0
  %7054 = vmatpush.msra.mxu0 0.0
  %7055 = vmatpush.msra.mxu0 0.0
  %7056 = vmatpush.msra.mxu0 0.0
  %7057 = vmatpush.msra.mxu0 0.0
  %7058 = vmatpush.msra.mxu0 0.0
  %7059 = vmatpush.msra.mxu0 0.0
  %7060 = vmatpush.msra.mxu0 0.0
  %7061 = vmatpush.msra.mxu0 0.0
  %7062 = vmatpush.msra.mxu0 0.0
  %7063 = vmatpush.msra.mxu0 0.0
  %7064 = vmatpush.msra.mxu0 0.0
  %7065 = vmatpush.msra.mxu0 0.0
  %7066 = vmatpush.msra.mxu0 0.0
  %7067 = vmatpush.msra.mxu0 0.0
  %v7068 = vand.u32 %v6656, 4294901760
  %v7069 = vsub.f32 %v6656, %v7068
  %v7070 = vand.u32 %v7069, 4294901760
  %7071 = vmatpush.msra.mxu0 %v7070
  %v7072 = vand.u32 %v6647, 4294901760
  %7073 = vmatmul.f32.gmra.mxu0 %v7072
  %v7074 = vpop.f32.mrf.mxu0
  %v7075 = vadd.f32 %v7051, %v7074
  %7076 = vdwg.mxu0
  %7077 = vmatpush.msra.mxu0 0.0
  %7078 = vmatpush.msra.mxu0 0.0
  %7079 = vmatpush.msra.mxu0 0.0
  %7080 = vmatpush.msra.mxu0 0.0
  %7081 = vmatpush.msra.mxu0 0.0
  %7082 = vmatpush.msra.mxu0 0.0
  %7083 = vmatpush.msra.mxu0 0.0
  %7084 = vmatpush.msra.mxu0 0.0
  %7085 = vmatpush.msra.mxu0 0.0
  %7086 = vmatpush.msra.mxu0 0.0
  %7087 = vmatpush.msra.mxu0 0.0
  %7088 = vmatpush.msra.mxu0 0.0
  %7089 = vmatpush.msra.mxu0 0.0
  %7090 = vmatpush.msra.mxu0 0.0
  %7091 = vmatpush.msra.mxu0 0.0
  %v7092 = vand.u32 %v6656, 4294901760
  %7093 = vmatpush.msra.mxu0 %v7092
  %v7094 = vand.u32 %v6647, 4294901760
  %7095 = vmatmul.f32.gmra.mxu0 %v7094
  %v7096 = vpop.f32.mrf.mxu0
  %v7097 = vadd.f32 %v7075, %v7096
  %7098 = vdwg.mxu0
  %7099 = vmatpush.msra.mxu0 0.0
  %7100 = vmatpush.msra.mxu0 0.0
  %7101 = vmatpush.msra.mxu0 0.0
  %7102 = vmatpush.msra.mxu0 0.0
  %7103 = vmatpush.msra.mxu0 0.0
  %7104 = vmatpush.msra.mxu0 0.0
  %7105 = vmatpush.msra.mxu0 0.0
  %7106 = vmatpush.msra.mxu0 0.0
  %7107 = vmatpush.msra.mxu0 0.0
  %7108 = vmatpush.msra.mxu0 0.0
  %7109 = vmatpush.msra.mxu0 0.0
  %7110 = vmatpush.msra.mxu0 0.0
  %7111 = vmatpush.msra.mxu0 0.0
  %7112 = vmatpush.msra.mxu0 0.0
  %7113 = vmatpush.msra.mxu0 0.0
  %v7114 = vand.u32 %v6659, 4294901760
  %7115 = vmatpush.msra.mxu0 %v7114
  %v7116 = vand.u32 %v6647, 4294901760
  %v7117 = vsub.f32 %v6647, %v7116
  %v7118 = vand.u32 %v7117, 4294901760
  %v7119 = vsub.f32 %v7117, %v7118
  %v7120 = vand.u32 %v7119, 4294901760
  %7121 = vmatmul.f32.gmra.mxu0 %v7120
  %v7122 = vpop.f32.mrf.mxu0
  %v7123 = vadd.f32 %v6644, %v7122
  %7124 = vdwg.mxu0
  %7125 = vmatpush.msra.mxu0 0.0
  %7126 = vmatpush.msra.mxu0 0.0
  %7127 = vmatpush.msra.mxu0 0.0
  %7128 = vmatpush.msra.mxu0 0.0
  %7129 = vmatpush.msra.mxu0 0.0
  %7130 = vmatpush.msra.mxu0 0.0
  %7131 = vmatpush.msra.mxu0 0.0
  %7132 = vmatpush.msra.mxu0 0.0
  %7133 = vmatpush.msra.mxu0 0.0
  %7134 = vmatpush.msra.mxu0 0.0
  %7135 = vmatpush.msra.mxu0 0.0
  %7136 = vmatpush.msra.mxu0 0.0
  %7137 = vmatpush.msra.mxu0 0.0
  %7138 = vmatpush.msra.mxu0 0.0
  %7139 = vmatpush.msra.mxu0 0.0
  %v7140 = vand.u32 %v6659, 4294901760
  %v7141 = vsub.f32 %v6659, %v7140
  %v7142 = vand.u32 %v7141, 4294901760
  %v7143 = vsub.f32 %v7141, %v7142
  %v7144 = vand.u32 %v7143, 4294901760
  %7145 = vmatpush.msra.mxu0 %v7144
  %v7146 = vand.u32 %v6647, 4294901760
  %7147 = vmatmul.f32.gmra.mxu0 %v7146
  %v7148 = vpop.f32.mrf.mxu0
  %v7149 = vadd.f32 %v7123, %v7148
  %7150 = vdwg.mxu0
  %7151 = vmatpush.msra.mxu0 0.0
  %7152 = vmatpush.msra.mxu0 0.0
  %7153 = vmatpush.msra.mxu0 0.0
  %7154 = vmatpush.msra.mxu0 0.0
  %7155 = vmatpush.msra.mxu0 0.0
  %7156 = vmatpush.msra.mxu0 0.0
  %7157 = vmatpush.msra.mxu0 0.0
  %7158 = vmatpush.msra.mxu0 0.0
  %7159 = vmatpush.msra.mxu0 0.0
  %7160 = vmatpush.msra.mxu0 0.0
  %7161 = vmatpush.msra.mxu0 0.0
  %7162 = vmatpush.msra.mxu0 0.0
  %7163 = vmatpush.msra.mxu0 0.0
  %7164 = vmatpush.msra.mxu0 0.0
  %7165 = vmatpush.msra.mxu0 0.0
  %v7166 = vand.u32 %v6659, 4294901760
  %v7167 = vsub.f32 %v6659, %v7166
  %7168 = vmatpush.msra.mxu0 %v7167
  %v7169 = vand.u32 %v6647, 4294901760
  %v7170 = vsub.f32 %v6647, %v7169
  %7171 = vmatmul.f32.gmra.mxu0 %v7170
  %v7172 = vpop.f32.mrf.mxu0
  %v7173 = vadd.f32 %v7149, %v7172
  %7174 = vdwg.mxu0
  %7175 = vmatpush.msra.mxu0 0.0
  %7176 = vmatpush.msra.mxu0 0.0
  %7177 = vmatpush.msra.mxu0 0.0
  %7178 = vmatpush.msra.mxu0 0.0
  %7179 = vmatpush.msra.mxu0 0.0
  %7180 = vmatpush.msra.mxu0 0.0
  %7181 = vmatpush.msra.mxu0 0.0
  %7182 = vmatpush.msra.mxu0 0.0
  %7183 = vmatpush.msra.mxu0 0.0
  %7184 = vmatpush.msra.mxu0 0.0
  %7185 = vmatpush.msra.mxu0 0.0
  %7186 = vmatpush.msra.mxu0 0.0
  %7187 = vmatpush.msra.mxu0 0.0
  %7188 = vmatpush.msra.mxu0 0.0
  %7189 = vmatpush.msra.mxu0 0.0
  %v7190 = vand.u32 %v6659, 4294901760
  %7191 = vmatpush.msra.mxu0 %v7190
  %v7192 = vand.u32 %v6647, 4294901760
  %v7193 = vsub.f32 %v6647, %v7192
  %v7194 = vand.u32 %v7193, 4294901760
  %7195 = vmatmul.f32.gmra.mxu0 %v7194
  %v7196 = vpop.f32.mrf.mxu0
  %v7197 = vadd.f32 %v7173, %v7196
  %7198 = vdwg.mxu0
  %7199 = vmatpush.msra.mxu0 0.0
  %7200 = vmatpush.msra.mxu0 0.0
  %7201 = vmatpush.msra.mxu0 0.0
  %7202 = vmatpush.msra.mxu0 0.0
  %7203 = vmatpush.msra.mxu0 0.0
  %7204 = vmatpush.msra.mxu0 0.0
  %7205 = vmatpush.msra.mxu0 0.0
  %7206 = vmatpush.msra.mxu0 0.0
  %7207 = vmatpush.msra.mxu0 0.0
  %7208 = vmatpush.msra.mxu0 0.0
  %7209 = vmatpush.msra.mxu0 0.0
  %7210 = vmatpush.msra.mxu0 0.0
  %7211 = vmatpush.msra.mxu0 0.0
  %7212 = vmatpush.msra.mxu0 0.0
  %7213 = vmatpush.msra.mxu0 0.0
  %v7214 = vand.u32 %v6659, 4294901760
  %v7215 = vsub.f32 %v6659, %v7214
  %v7216 = vand.u32 %v7215, 4294901760
  %7217 = vmatpush.msra.mxu0 %v7216
  %v7218 = vand.u32 %v6647, 4294901760
  %7219 = vmatmul.f32.gmra.mxu0 %v7218
  %v7220 = vpop.f32.mrf.mxu0
  %v7221 = vadd.f32 %v7197, %v7220
  %7222 = vdwg.mxu0
  %7223 = vmatpush.msra.mxu0 0.0
  %7224 = vmatpush.msra.mxu0 0.0
  %7225 = vmatpush.msra.mxu0 0.0
  %7226 = vmatpush.msra.mxu0 0.0
  %7227 = vmatpush.msra.mxu0 0.0
  %7228 = vmatpush.msra.mxu0 0.0
  %7229 = vmatpush.msra.mxu0 0.0
  %7230 = vmatpush.msra.mxu0 0.0
  %7231 = vmatpush.msra.mxu0 0.0
  %7232 = vmatpush.msra.mxu0 0.0
  %7233 = vmatpush.msra.mxu0 0.0
  %7234 = vmatpush.msra.mxu0 0.0
  %7235 = vmatpush.msra.mxu0 0.0
  %7236 = vmatpush.msra.mxu0 0.0
  %7237 = vmatpush.msra.mxu0 0.0
  %v7238 = vand.u32 %v6659, 4294901760
  %7239 = vmatpush.msra.mxu0 %v7238
  %v7240 = vand.u32 %v6647, 4294901760
  %7241 = vmatmul.f32.gmra.mxu0 %v7240
  %v7242 = vpop.f32.mrf.mxu0
  %v7243 = vadd.f32 %v7221, %v7242
  %7244 = vdwg.mxu0
  %7245 = vrot.lane.b32.xlu0 %v5997, 15
  %v7246 = vpop.permute.xlu0 %7245
  %7248 = vrot.lane.b32.xlu0 %v5994, 15
  %v7249 = vpop.permute.xlu0 %7248
  %7250 = vrot.lane.b32.xlu0 %v5995, 15
  %v7251 = vpop.permute.xlu0 %7250
  %7252 = vrot.lane.b32.xlu0 %v5996, 15
  %v7253 = vpop.permute.xlu0 %7252
  %v7254 = vsel %vm1470, %v7249, %v7251
  %v7255 = vsel %vm1470, %v7251, %v7253
  %v7256 = vsel %vm1470, %v7253, %v7246
  %v7261 = vsel %vm1470, %v7246, %v7249
  %v7262 = vsel %vm1483, %v7261, 0.0
  %v7263 = vsel %vm1484, %v7254, 0.0
  %v7264 = vsel %vm1485, %v7255, 0.0
  %v7265 = vsel %vm1486, %v7256, 0.0
  %s7266 = scalar_lea.vmem %s6, 8
  %v7267 = vld [vmem:[%s7266] sm:$0xf]
  %v7269 = vsel %vm251, %v7267, 0
  %v7272 = vsel %vm86, %v7262, 0
  %v7275 = vsel %vm86, %v7263, 0
  %v7278 = vsel %vm86, %v7264, 0
  %v7281 = vsel %vm86, %v7265, 0
  %7283 = vmatpush.msra.mxu0 0.0
  %7284 = vmatpush.msra.mxu0 0.0
  %7285 = vmatpush.msra.mxu0 0.0
  %7286 = vmatpush.msra.mxu0 0.0
  %7287 = vmatpush.msra.mxu0 0.0
  %7288 = vmatpush.msra.mxu0 0.0
  %7289 = vmatpush.msra.mxu0 0.0
  %7290 = vmatpush.msra.mxu0 0.0
  %7291 = vmatpush.msra.mxu0 0.0
  %7292 = vmatpush.msra.mxu0 0.0
  %7293 = vmatpush.msra.mxu0 0.0
  %7294 = vmatpush.msra.mxu0 0.0
  %7295 = vmatpush.msra.mxu0 0.0
  %7296 = vmatpush.msra.mxu0 0.0
  %7297 = vmatpush.msra.mxu0 0.0
  %v7298 = vand.u32 %v7272, 4294901760
  %7299 = vmatpush.msra.mxu0 %v7298
  %v7300 = vand.u32 %v7269, 4294901760
  %v7301 = vsub.f32 %v7269, %v7300
  %v7302 = vand.u32 %v7301, 4294901760
  %v7303 = vsub.f32 %v7301, %v7302
  %v7304 = vand.u32 %v7303, 4294901760
  %7305 = vmatmul.f32.gmra.mxu0 %v7304
  %v7306 = vpop.f32.mrf.mxu0
  %v7307 = vadd.f32 0.0, %v7306
  %7308 = vdwg.mxu0
  %7309 = vmatpush.msra.mxu0 0.0
  %7310 = vmatpush.msra.mxu0 0.0
  %7311 = vmatpush.msra.mxu0 0.0
  %7312 = vmatpush.msra.mxu0 0.0
  %7313 = vmatpush.msra.mxu0 0.0
  %7314 = vmatpush.msra.mxu0 0.0
  %7315 = vmatpush.msra.mxu0 0.0
  %7316 = vmatpush.msra.mxu0 0.0
  %7317 = vmatpush.msra.mxu0 0.0
  %7318 = vmatpush.msra.mxu0 0.0
  %7319 = vmatpush.msra.mxu0 0.0
  %7320 = vmatpush.msra.mxu0 0.0
  %7321 = vmatpush.msra.mxu0 0.0
  %7322 = vmatpush.msra.mxu0 0.0
  %7323 = vmatpush.msra.mxu0 0.0
  %v7324 = vand.u32 %v7272, 4294901760
  %v7325 = vsub.f32 %v7272, %v7324
  %v7326 = vand.u32 %v7325, 4294901760
  %v7327 = vsub.f32 %v7325, %v7326
  %v7328 = vand.u32 %v7327, 4294901760
  %7329 = vmatpush.msra.mxu0 %v7328
  %v7330 = vand.u32 %v7269, 4294901760
  %7331 = vmatmul.f32.gmra.mxu0 %v7330
  %v7332 = vpop.f32.mrf.mxu0
  %v7333 = vadd.f32 %v7307, %v7332
  %7334 = vdwg.mxu0
  %7335 = vmatpush.msra.mxu0 0.0
  %7336 = vmatpush.msra.mxu0 0.0
  %7337 = vmatpush.msra.mxu0 0.0
  %7338 = vmatpush.msra.mxu0 0.0
  %7339 = vmatpush.msra.mxu0 0.0
  %7340 = vmatpush.msra.mxu0 0.0
  %7341 = vmatpush.msra.mxu0 0.0
  %7342 = vmatpush.msra.mxu0 0.0
  %7343 = vmatpush.msra.mxu0 0.0
  %7344 = vmatpush.msra.mxu0 0.0
  %7345 = vmatpush.msra.mxu0 0.0
  %7346 = vmatpush.msra.mxu0 0.0
  %7347 = vmatpush.msra.mxu0 0.0
  %7348 = vmatpush.msra.mxu0 0.0
  %7349 = vmatpush.msra.mxu0 0.0
  %v7350 = vand.u32 %v7272, 4294901760
  %v7351 = vsub.f32 %v7272, %v7350
  %7352 = vmatpush.msra.mxu0 %v7351
  %v7353 = vand.u32 %v7269, 4294901760
  %v7354 = vsub.f32 %v7269, %v7353
  %7355 = vmatmul.f32.gmra.mxu0 %v7354
  %v7356 = vpop.f32.mrf.mxu0
  %v7357 = vadd.f32 %v7333, %v7356
  %7358 = vdwg.mxu0
  %7359 = vmatpush.msra.mxu0 0.0
  %7360 = vmatpush.msra.mxu0 0.0
  %7361 = vmatpush.msra.mxu0 0.0
  %7362 = vmatpush.msra.mxu0 0.0
  %7363 = vmatpush.msra.mxu0 0.0
  %7364 = vmatpush.msra.mxu0 0.0
  %7365 = vmatpush.msra.mxu0 0.0
  %7366 = vmatpush.msra.mxu0 0.0
  %7367 = vmatpush.msra.mxu0 0.0
  %7368 = vmatpush.msra.mxu0 0.0
  %7369 = vmatpush.msra.mxu0 0.0
  %7370 = vmatpush.msra.mxu0 0.0
  %7371 = vmatpush.msra.mxu0 0.0
  %7372 = vmatpush.msra.mxu0 0.0
  %7373 = vmatpush.msra.mxu0 0.0
  %v7374 = vand.u32 %v7272, 4294901760
  %7375 = vmatpush.msra.mxu0 %v7374
  %v7376 = vand.u32 %v7269, 4294901760
  %v7377 = vsub.f32 %v7269, %v7376
  %v7378 = vand.u32 %v7377, 4294901760
  %7379 = vmatmul.f32.gmra.mxu0 %v7378
  %v7380 = vpop.f32.mrf.mxu0
  %v7381 = vadd.f32 %v7357, %v7380
  %7382 = vdwg.mxu0
  %7383 = vmatpush.msra.mxu0 0.0
  %7384 = vmatpush.msra.mxu0 0.0
  %7385 = vmatpush.msra.mxu0 0.0
  %7386 = vmatpush.msra.mxu0 0.0
  %7387 = vmatpush.msra.mxu0 0.0
  %7388 = vmatpush.msra.mxu0 0.0
  %7389 = vmatpush.msra.mxu0 0.0
  %7390 = vmatpush.msra.mxu0 0.0
  %7391 = vmatpush.msra.mxu0 0.0
  %7392 = vmatpush.msra.mxu0 0.0
  %7393 = vmatpush.msra.mxu0 0.0
  %7394 = vmatpush.msra.mxu0 0.0
  %7395 = vmatpush.msra.mxu0 0.0
  %7396 = vmatpush.msra.mxu0 0.0
  %7397 = vmatpush.msra.mxu0 0.0
  %v7398 = vand.u32 %v7272, 4294901760
  %v7399 = vsub.f32 %v7272, %v7398
  %v7400 = vand.u32 %v7399, 4294901760
  %7401 = vmatpush.msra.mxu0 %v7400
  %v7402 = vand.u32 %v7269, 4294901760
  %7403 = vmatmul.f32.gmra.mxu0 %v7402
  %v7404 = vpop.f32.mrf.mxu0
  %v7405 = vadd.f32 %v7381, %v7404
  %7406 = vdwg.mxu0
  %7407 = vmatpush.msra.mxu0 0.0
  %7408 = vmatpush.msra.mxu0 0.0
  %7409 = vmatpush.msra.mxu0 0.0
  %7410 = vmatpush.msra.mxu0 0.0
  %7411 = vmatpush.msra.mxu0 0.0
  %7412 = vmatpush.msra.mxu0 0.0
  %7413 = vmatpush.msra.mxu0 0.0
  %7414 = vmatpush.msra.mxu0 0.0
  %7415 = vmatpush.msra.mxu0 0.0
  %7416 = vmatpush.msra.mxu0 0.0
  %7417 = vmatpush.msra.mxu0 0.0
  %7418 = vmatpush.msra.mxu0 0.0
  %7419 = vmatpush.msra.mxu0 0.0
  %7420 = vmatpush.msra.mxu0 0.0
  %7421 = vmatpush.msra.mxu0 0.0
  %v7422 = vand.u32 %v7272, 4294901760
  %7423 = vmatpush.msra.mxu0 %v7422
  %v7424 = vand.u32 %v7269, 4294901760
  %7425 = vmatmul.f32.gmra.mxu0 %v7424
  %v7426 = vpop.f32.mrf.mxu0
  %v7427 = vadd.f32 %v7405, %v7426
  %7428 = vdwg.mxu0
  %7429 = vmatpush.msra.mxu0 0.0
  %7430 = vmatpush.msra.mxu0 0.0
  %7431 = vmatpush.msra.mxu0 0.0
  %7432 = vmatpush.msra.mxu0 0.0
  %7433 = vmatpush.msra.mxu0 0.0
  %7434 = vmatpush.msra.mxu0 0.0
  %7435 = vmatpush.msra.mxu0 0.0
  %7436 = vmatpush.msra.mxu0 0.0
  %7437 = vmatpush.msra.mxu0 0.0
  %7438 = vmatpush.msra.mxu0 0.0
  %7439 = vmatpush.msra.mxu0 0.0
  %7440 = vmatpush.msra.mxu0 0.0
  %7441 = vmatpush.msra.mxu0 0.0
  %7442 = vmatpush.msra.mxu0 0.0
  %7443 = vmatpush.msra.mxu0 0.0
  %v7444 = vand.u32 %v7275, 4294901760
  %7445 = vmatpush.msra.mxu0 %v7444
  %v7446 = vand.u32 %v7269, 4294901760
  %v7447 = vsub.f32 %v7269, %v7446
  %v7448 = vand.u32 %v7447, 4294901760
  %v7449 = vsub.f32 %v7447, %v7448
  %v7450 = vand.u32 %v7449, 4294901760
  %7451 = vmatmul.f32.gmra.mxu0 %v7450
  %v7452 = vpop.f32.mrf.mxu0
  %v7453 = vadd.f32 0.0, %v7452
  %7454 = vdwg.mxu0
  %7455 = vmatpush.msra.mxu0 0.0
  %7456 = vmatpush.msra.mxu0 0.0
  %7457 = vmatpush.msra.mxu0 0.0
  %7458 = vmatpush.msra.mxu0 0.0
  %7459 = vmatpush.msra.mxu0 0.0
  %7460 = vmatpush.msra.mxu0 0.0
  %7461 = vmatpush.msra.mxu0 0.0
  %7462 = vmatpush.msra.mxu0 0.0
  %7463 = vmatpush.msra.mxu0 0.0
  %7464 = vmatpush.msra.mxu0 0.0
  %7465 = vmatpush.msra.mxu0 0.0
  %7466 = vmatpush.msra.mxu0 0.0
  %7467 = vmatpush.msra.mxu0 0.0
  %7468 = vmatpush.msra.mxu0 0.0
  %7469 = vmatpush.msra.mxu0 0.0
  %v7470 = vand.u32 %v7275, 4294901760
  %v7471 = vsub.f32 %v7275, %v7470
  %v7472 = vand.u32 %v7471, 4294901760
  %v7473 = vsub.f32 %v7471, %v7472
  %v7474 = vand.u32 %v7473, 4294901760
  %7475 = vmatpush.msra.mxu0 %v7474
  %v7476 = vand.u32 %v7269, 4294901760
  %7477 = vmatmul.f32.gmra.mxu0 %v7476
  %v7478 = vpop.f32.mrf.mxu0
  %v7479 = vadd.f32 %v7453, %v7478
  %7480 = vdwg.mxu0
  %7481 = vmatpush.msra.mxu0 0.0
  %7482 = vmatpush.msra.mxu0 0.0
  %7483 = vmatpush.msra.mxu0 0.0
  %7484 = vmatpush.msra.mxu0 0.0
  %7485 = vmatpush.msra.mxu0 0.0
  %7486 = vmatpush.msra.mxu0 0.0
  %7487 = vmatpush.msra.mxu0 0.0
  %7488 = vmatpush.msra.mxu0 0.0
  %7489 = vmatpush.msra.mxu0 0.0
  %7490 = vmatpush.msra.mxu0 0.0
  %7491 = vmatpush.msra.mxu0 0.0
  %7492 = vmatpush.msra.mxu0 0.0
  %7493 = vmatpush.msra.mxu0 0.0
  %7494 = vmatpush.msra.mxu0 0.0
  %7495 = vmatpush.msra.mxu0 0.0
  %v7496 = vand.u32 %v7275, 4294901760
  %v7497 = vsub.f32 %v7275, %v7496
  %7498 = vmatpush.msra.mxu0 %v7497
  %v7499 = vand.u32 %v7269, 4294901760
  %v7500 = vsub.f32 %v7269, %v7499
  %7501 = vmatmul.f32.gmra.mxu0 %v7500
  %v7502 = vpop.f32.mrf.mxu0
  %v7503 = vadd.f32 %v7479, %v7502
  %7504 = vdwg.mxu0
  %7505 = vmatpush.msra.mxu0 0.0
  %7506 = vmatpush.msra.mxu0 0.0
  %7507 = vmatpush.msra.mxu0 0.0
  %7508 = vmatpush.msra.mxu0 0.0
  %7509 = vmatpush.msra.mxu0 0.0
  %7510 = vmatpush.msra.mxu0 0.0
  %7511 = vmatpush.msra.mxu0 0.0
  %7512 = vmatpush.msra.mxu0 0.0
  %7513 = vmatpush.msra.mxu0 0.0
  %7514 = vmatpush.msra.mxu0 0.0
  %7515 = vmatpush.msra.mxu0 0.0
  %7516 = vmatpush.msra.mxu0 0.0
  %7517 = vmatpush.msra.mxu0 0.0
  %7518 = vmatpush.msra.mxu0 0.0
  %7519 = vmatpush.msra.mxu0 0.0
  %v7520 = vand.u32 %v7275, 4294901760
  %7521 = vmatpush.msra.mxu0 %v7520
  %v7522 = vand.u32 %v7269, 4294901760
  %v7523 = vsub.f32 %v7269, %v7522
  %v7524 = vand.u32 %v7523, 4294901760
  %7525 = vmatmul.f32.gmra.mxu0 %v7524
  %v7526 = vpop.f32.mrf.mxu0
  %v7527 = vadd.f32 %v7503, %v7526
  %7528 = vdwg.mxu0
  %7529 = vmatpush.msra.mxu0 0.0
  %7530 = vmatpush.msra.mxu0 0.0
  %7531 = vmatpush.msra.mxu0 0.0
  %7532 = vmatpush.msra.mxu0 0.0
  %7533 = vmatpush.msra.mxu0 0.0
  %7534 = vmatpush.msra.mxu0 0.0
  %7535 = vmatpush.msra.mxu0 0.0
  %7536 = vmatpush.msra.mxu0 0.0
  %7537 = vmatpush.msra.mxu0 0.0
  %7538 = vmatpush.msra.mxu0 0.0
  %7539 = vmatpush.msra.mxu0 0.0
  %7540 = vmatpush.msra.mxu0 0.0
  %7541 = vmatpush.msra.mxu0 0.0
  %7542 = vmatpush.msra.mxu0 0.0
  %7543 = vmatpush.msra.mxu0 0.0
  %v7544 = vand.u32 %v7275, 4294901760
  %v7545 = vsub.f32 %v7275, %v7544
  %v7546 = vand.u32 %v7545, 4294901760
  %7547 = vmatpush.msra.mxu0 %v7546
  %v7548 = vand.u32 %v7269, 4294901760
  %7549 = vmatmul.f32.gmra.mxu0 %v7548
  %v7550 = vpop.f32.mrf.mxu0
  %v7551 = vadd.f32 %v7527, %v7550
  %7552 = vdwg.mxu0
  %7553 = vmatpush.msra.mxu0 0.0
  %7554 = vmatpush.msra.mxu0 0.0
  %7555 = vmatpush.msra.mxu0 0.0
  %7556 = vmatpush.msra.mxu0 0.0
  %7557 = vmatpush.msra.mxu0 0.0
  %7558 = vmatpush.msra.mxu0 0.0
  %7559 = vmatpush.msra.mxu0 0.0
  %7560 = vmatpush.msra.mxu0 0.0
  %7561 = vmatpush.msra.mxu0 0.0
  %7562 = vmatpush.msra.mxu0 0.0
  %7563 = vmatpush.msra.mxu0 0.0
  %7564 = vmatpush.msra.mxu0 0.0
  %7565 = vmatpush.msra.mxu0 0.0
  %7566 = vmatpush.msra.mxu0 0.0
  %7567 = vmatpush.msra.mxu0 0.0
  %v7568 = vand.u32 %v7275, 4294901760
  %7569 = vmatpush.msra.mxu0 %v7568
  %v7570 = vand.u32 %v7269, 4294901760
  %7571 = vmatmul.f32.gmra.mxu0 %v7570
  %v7572 = vpop.f32.mrf.mxu0
  %v7573 = vadd.f32 %v7551, %v7572
  %7574 = vdwg.mxu0
  %7575 = vmatpush.msra.mxu0 0.0
  %7576 = vmatpush.msra.mxu0 0.0
  %7577 = vmatpush.msra.mxu0 0.0
  %7578 = vmatpush.msra.mxu0 0.0
  %7579 = vmatpush.msra.mxu0 0.0
  %7580 = vmatpush.msra.mxu0 0.0
  %7581 = vmatpush.msra.mxu0 0.0
  %7582 = vmatpush.msra.mxu0 0.0
  %7583 = vmatpush.msra.mxu0 0.0
  %7584 = vmatpush.msra.mxu0 0.0
  %7585 = vmatpush.msra.mxu0 0.0
  %7586 = vmatpush.msra.mxu0 0.0
  %7587 = vmatpush.msra.mxu0 0.0
  %7588 = vmatpush.msra.mxu0 0.0
  %7589 = vmatpush.msra.mxu0 0.0
  %v7590 = vand.u32 %v7278, 4294901760
  %7591 = vmatpush.msra.mxu0 %v7590
  %v7592 = vand.u32 %v7269, 4294901760
  %v7593 = vsub.f32 %v7269, %v7592
  %v7594 = vand.u32 %v7593, 4294901760
  %v7595 = vsub.f32 %v7593, %v7594
  %v7596 = vand.u32 %v7595, 4294901760
  %7597 = vmatmul.f32.gmra.mxu0 %v7596
  %v7598 = vpop.f32.mrf.mxu0
  %v7599 = vadd.f32 0.0, %v7598
  %7600 = vdwg.mxu0
  %7601 = vmatpush.msra.mxu0 0.0
  %7602 = vmatpush.msra.mxu0 0.0
  %7603 = vmatpush.msra.mxu0 0.0
  %7604 = vmatpush.msra.mxu0 0.0
  %7605 = vmatpush.msra.mxu0 0.0
  %7606 = vmatpush.msra.mxu0 0.0
  %7607 = vmatpush.msra.mxu0 0.0
  %7608 = vmatpush.msra.mxu0 0.0
  %7609 = vmatpush.msra.mxu0 0.0
  %7610 = vmatpush.msra.mxu0 0.0
  %7611 = vmatpush.msra.mxu0 0.0
  %7612 = vmatpush.msra.mxu0 0.0
  %7613 = vmatpush.msra.mxu0 0.0
  %7614 = vmatpush.msra.mxu0 0.0
  %7615 = vmatpush.msra.mxu0 0.0
  %v7616 = vand.u32 %v7278, 4294901760
  %v7617 = vsub.f32 %v7278, %v7616
  %v7618 = vand.u32 %v7617, 4294901760
  %v7619 = vsub.f32 %v7617, %v7618
  %v7620 = vand.u32 %v7619, 4294901760
  %7621 = vmatpush.msra.mxu0 %v7620
  %v7622 = vand.u32 %v7269, 4294901760
  %7623 = vmatmul.f32.gmra.mxu0 %v7622
  %v7624 = vpop.f32.mrf.mxu0
  %v7625 = vadd.f32 %v7599, %v7624
  %7626 = vdwg.mxu0
  %7627 = vmatpush.msra.mxu0 0.0
  %7628 = vmatpush.msra.mxu0 0.0
  %7629 = vmatpush.msra.mxu0 0.0
  %7630 = vmatpush.msra.mxu0 0.0
  %7631 = vmatpush.msra.mxu0 0.0
  %7632 = vmatpush.msra.mxu0 0.0
  %7633 = vmatpush.msra.mxu0 0.0
  %7634 = vmatpush.msra.mxu0 0.0
  %7635 = vmatpush.msra.mxu0 0.0
  %7636 = vmatpush.msra.mxu0 0.0
  %7637 = vmatpush.msra.mxu0 0.0
  %7638 = vmatpush.msra.mxu0 0.0
  %7639 = vmatpush.msra.mxu0 0.0
  %7640 = vmatpush.msra.mxu0 0.0
  %7641 = vmatpush.msra.mxu0 0.0
  %v7642 = vand.u32 %v7278, 4294901760
  %v7643 = vsub.f32 %v7278, %v7642
  %7644 = vmatpush.msra.mxu0 %v7643
  %v7645 = vand.u32 %v7269, 4294901760
  %v7646 = vsub.f32 %v7269, %v7645
  %7647 = vmatmul.f32.gmra.mxu0 %v7646
  %v7648 = vpop.f32.mrf.mxu0
  %v7649 = vadd.f32 %v7625, %v7648
  %7650 = vdwg.mxu0
  %7651 = vmatpush.msra.mxu0 0.0
  %7652 = vmatpush.msra.mxu0 0.0
  %7653 = vmatpush.msra.mxu0 0.0
  %7654 = vmatpush.msra.mxu0 0.0
  %7655 = vmatpush.msra.mxu0 0.0
  %7656 = vmatpush.msra.mxu0 0.0
  %7657 = vmatpush.msra.mxu0 0.0
  %7658 = vmatpush.msra.mxu0 0.0
  %7659 = vmatpush.msra.mxu0 0.0
  %7660 = vmatpush.msra.mxu0 0.0
  %7661 = vmatpush.msra.mxu0 0.0
  %7662 = vmatpush.msra.mxu0 0.0
  %7663 = vmatpush.msra.mxu0 0.0
  %7664 = vmatpush.msra.mxu0 0.0
  %7665 = vmatpush.msra.mxu0 0.0
  %v7666 = vand.u32 %v7278, 4294901760
  %7667 = vmatpush.msra.mxu0 %v7666
  %v7668 = vand.u32 %v7269, 4294901760
  %v7669 = vsub.f32 %v7269, %v7668
  %v7670 = vand.u32 %v7669, 4294901760
  %7671 = vmatmul.f32.gmra.mxu0 %v7670
  %v7672 = vpop.f32.mrf.mxu0
  %v7673 = vadd.f32 %v7649, %v7672
  %7674 = vdwg.mxu0
  %7675 = vmatpush.msra.mxu0 0.0
  %7676 = vmatpush.msra.mxu0 0.0
  %7677 = vmatpush.msra.mxu0 0.0
  %7678 = vmatpush.msra.mxu0 0.0
  %7679 = vmatpush.msra.mxu0 0.0
  %7680 = vmatpush.msra.mxu0 0.0
  %7681 = vmatpush.msra.mxu0 0.0
  %7682 = vmatpush.msra.mxu0 0.0
  %7683 = vmatpush.msra.mxu0 0.0
  %7684 = vmatpush.msra.mxu0 0.0
  %7685 = vmatpush.msra.mxu0 0.0
  %7686 = vmatpush.msra.mxu0 0.0
  %7687 = vmatpush.msra.mxu0 0.0
  %7688 = vmatpush.msra.mxu0 0.0
  %7689 = vmatpush.msra.mxu0 0.0
  %v7690 = vand.u32 %v7278, 4294901760
  %v7691 = vsub.f32 %v7278, %v7690
  %v7692 = vand.u32 %v7691, 4294901760
  %7693 = vmatpush.msra.mxu0 %v7692
  %v7694 = vand.u32 %v7269, 4294901760
  %7695 = vmatmul.f32.gmra.mxu0 %v7694
  %v7696 = vpop.f32.mrf.mxu0
  %v7697 = vadd.f32 %v7673, %v7696
  %7698 = vdwg.mxu0
  %7699 = vmatpush.msra.mxu0 0.0
  %7700 = vmatpush.msra.mxu0 0.0
  %7701 = vmatpush.msra.mxu0 0.0
  %7702 = vmatpush.msra.mxu0 0.0
  %7703 = vmatpush.msra.mxu0 0.0
  %7704 = vmatpush.msra.mxu0 0.0
  %7705 = vmatpush.msra.mxu0 0.0
  %7706 = vmatpush.msra.mxu0 0.0
  %7707 = vmatpush.msra.mxu0 0.0
  %7708 = vmatpush.msra.mxu0 0.0
  %7709 = vmatpush.msra.mxu0 0.0
  %7710 = vmatpush.msra.mxu0 0.0
  %7711 = vmatpush.msra.mxu0 0.0
  %7712 = vmatpush.msra.mxu0 0.0
  %7713 = vmatpush.msra.mxu0 0.0
  %v7714 = vand.u32 %v7278, 4294901760
  %7715 = vmatpush.msra.mxu0 %v7714
  %v7716 = vand.u32 %v7269, 4294901760
  %7717 = vmatmul.f32.gmra.mxu0 %v7716
  %v7718 = vpop.f32.mrf.mxu0
  %v7719 = vadd.f32 %v7697, %v7718
  %7720 = vdwg.mxu0
  %7721 = vmatpush.msra.mxu0 0.0
  %7722 = vmatpush.msra.mxu0 0.0
  %7723 = vmatpush.msra.mxu0 0.0
  %7724 = vmatpush.msra.mxu0 0.0
  %7725 = vmatpush.msra.mxu0 0.0
  %7726 = vmatpush.msra.mxu0 0.0
  %7727 = vmatpush.msra.mxu0 0.0
  %7728 = vmatpush.msra.mxu0 0.0
  %7729 = vmatpush.msra.mxu0 0.0
  %7730 = vmatpush.msra.mxu0 0.0
  %7731 = vmatpush.msra.mxu0 0.0
  %7732 = vmatpush.msra.mxu0 0.0
  %7733 = vmatpush.msra.mxu0 0.0
  %7734 = vmatpush.msra.mxu0 0.0
  %7735 = vmatpush.msra.mxu0 0.0
  %v7736 = vand.u32 %v7281, 4294901760
  %7737 = vmatpush.msra.mxu0 %v7736
  %v7738 = vand.u32 %v7269, 4294901760
  %v7739 = vsub.f32 %v7269, %v7738
  %v7740 = vand.u32 %v7739, 4294901760
  %v7741 = vsub.f32 %v7739, %v7740
  %v7742 = vand.u32 %v7741, 4294901760
  %7743 = vmatmul.f32.gmra.mxu0 %v7742
  %v7744 = vpop.f32.mrf.mxu0
  %v7745 = vadd.f32 0.0, %v7744
  %7746 = vdwg.mxu0
  %7747 = vmatpush.msra.mxu0 0.0
  %7748 = vmatpush.msra.mxu0 0.0
  %7749 = vmatpush.msra.mxu0 0.0
  %7750 = vmatpush.msra.mxu0 0.0
  %7751 = vmatpush.msra.mxu0 0.0
  %7752 = vmatpush.msra.mxu0 0.0
  %7753 = vmatpush.msra.mxu0 0.0
  %7754 = vmatpush.msra.mxu0 0.0
  %7755 = vmatpush.msra.mxu0 0.0
  %7756 = vmatpush.msra.mxu0 0.0
  %7757 = vmatpush.msra.mxu0 0.0
  %7758 = vmatpush.msra.mxu0 0.0
  %7759 = vmatpush.msra.mxu0 0.0
  %7760 = vmatpush.msra.mxu0 0.0
  %7761 = vmatpush.msra.mxu0 0.0
  %v7762 = vand.u32 %v7281, 4294901760
  %v7763 = vsub.f32 %v7281, %v7762
  %v7764 = vand.u32 %v7763, 4294901760
  %v7765 = vsub.f32 %v7763, %v7764
  %v7766 = vand.u32 %v7765, 4294901760
  %7767 = vmatpush.msra.mxu0 %v7766
  %v7768 = vand.u32 %v7269, 4294901760
  %7769 = vmatmul.f32.gmra.mxu0 %v7768
  %v7770 = vpop.f32.mrf.mxu0
  %v7771 = vadd.f32 %v7745, %v7770
  %7772 = vdwg.mxu0
  %7773 = vmatpush.msra.mxu0 0.0
  %7774 = vmatpush.msra.mxu0 0.0
  %7775 = vmatpush.msra.mxu0 0.0
  %7776 = vmatpush.msra.mxu0 0.0
  %7777 = vmatpush.msra.mxu0 0.0
  %7778 = vmatpush.msra.mxu0 0.0
  %7779 = vmatpush.msra.mxu0 0.0
  %7780 = vmatpush.msra.mxu0 0.0
  %7781 = vmatpush.msra.mxu0 0.0
  %7782 = vmatpush.msra.mxu0 0.0
  %7783 = vmatpush.msra.mxu0 0.0
  %7784 = vmatpush.msra.mxu0 0.0
  %7785 = vmatpush.msra.mxu0 0.0
  %7786 = vmatpush.msra.mxu0 0.0
  %7787 = vmatpush.msra.mxu0 0.0
  %v7788 = vand.u32 %v7281, 4294901760
  %v7789 = vsub.f32 %v7281, %v7788
  %7790 = vmatpush.msra.mxu0 %v7789
  %v7791 = vand.u32 %v7269, 4294901760
  %v7792 = vsub.f32 %v7269, %v7791
  %7793 = vmatmul.f32.gmra.mxu0 %v7792
  %v7794 = vpop.f32.mrf.mxu0
  %v7795 = vadd.f32 %v7771, %v7794
  %7796 = vdwg.mxu0
  %7797 = vmatpush.msra.mxu0 0.0
  %7798 = vmatpush.msra.mxu0 0.0
  %7799 = vmatpush.msra.mxu0 0.0
  %7800 = vmatpush.msra.mxu0 0.0
  %7801 = vmatpush.msra.mxu0 0.0
  %7802 = vmatpush.msra.mxu0 0.0
  %7803 = vmatpush.msra.mxu0 0.0
  %7804 = vmatpush.msra.mxu0 0.0
  %7805 = vmatpush.msra.mxu0 0.0
  %7806 = vmatpush.msra.mxu0 0.0
  %7807 = vmatpush.msra.mxu0 0.0
  %7808 = vmatpush.msra.mxu0 0.0
  %7809 = vmatpush.msra.mxu0 0.0
  %7810 = vmatpush.msra.mxu0 0.0
  %7811 = vmatpush.msra.mxu0 0.0
  %v7812 = vand.u32 %v7281, 4294901760
  %7813 = vmatpush.msra.mxu0 %v7812
  %v7814 = vand.u32 %v7269, 4294901760
  %v7815 = vsub.f32 %v7269, %v7814
  %v7816 = vand.u32 %v7815, 4294901760
  %7817 = vmatmul.f32.gmra.mxu0 %v7816
  %v7818 = vpop.f32.mrf.mxu0
  %v7819 = vadd.f32 %v7795, %v7818
  %7820 = vdwg.mxu0
  %7821 = vmatpush.msra.mxu0 0.0
  %7822 = vmatpush.msra.mxu0 0.0
  %7823 = vmatpush.msra.mxu0 0.0
  %7824 = vmatpush.msra.mxu0 0.0
  %7825 = vmatpush.msra.mxu0 0.0
  %7826 = vmatpush.msra.mxu0 0.0
  %7827 = vmatpush.msra.mxu0 0.0
  %7828 = vmatpush.msra.mxu0 0.0
  %7829 = vmatpush.msra.mxu0 0.0
  %7830 = vmatpush.msra.mxu0 0.0
  %7831 = vmatpush.msra.mxu0 0.0
  %7832 = vmatpush.msra.mxu0 0.0
  %7833 = vmatpush.msra.mxu0 0.0
  %7834 = vmatpush.msra.mxu0 0.0
  %7835 = vmatpush.msra.mxu0 0.0
  %v7836 = vand.u32 %v7281, 4294901760
  %v7837 = vsub.f32 %v7281, %v7836
  %v7838 = vand.u32 %v7837, 4294901760
  %7839 = vmatpush.msra.mxu0 %v7838
  %v7840 = vand.u32 %v7269, 4294901760
  %7841 = vmatmul.f32.gmra.mxu0 %v7840
  %v7842 = vpop.f32.mrf.mxu0
  %v7843 = vadd.f32 %v7819, %v7842
  %7844 = vdwg.mxu0
  %7845 = vmatpush.msra.mxu0 0.0
  %7846 = vmatpush.msra.mxu0 0.0
  %7847 = vmatpush.msra.mxu0 0.0
  %7848 = vmatpush.msra.mxu0 0.0
  %7849 = vmatpush.msra.mxu0 0.0
  %7850 = vmatpush.msra.mxu0 0.0
  %7851 = vmatpush.msra.mxu0 0.0
  %7852 = vmatpush.msra.mxu0 0.0
  %7853 = vmatpush.msra.mxu0 0.0
  %7854 = vmatpush.msra.mxu0 0.0
  %7855 = vmatpush.msra.mxu0 0.0
  %7856 = vmatpush.msra.mxu0 0.0
  %7857 = vmatpush.msra.mxu0 0.0
  %7858 = vmatpush.msra.mxu0 0.0
  %7859 = vmatpush.msra.mxu0 0.0
  %v7860 = vand.u32 %v7281, 4294901760
  %7861 = vmatpush.msra.mxu0 %v7860
  %v7862 = vand.u32 %v7269, 4294901760
  %7863 = vmatmul.f32.gmra.mxu0 %v7862
  %v7864 = vpop.f32.mrf.mxu0
  %v7865 = vadd.f32 %v7843, %v7864
  %7866 = vdwg.mxu0
  %v7867 = vadd.f32 %v6805, %v7427
  %v7868 = vadd.f32 %v6951, %v7573
  %v7869 = vadd.f32 %v7097, %v7719
  %v7870 = vadd.f32 %v7243, %v7865
  %7871 = vrot.lane.b32.xlu0 %v5997, 1
  %v7872 = vpop.permute.xlu0 %7871
  %7874 = vrot.lane.b32.xlu0 %v5994, 1
  %v7875 = vpop.permute.xlu0 %7874
  %7876 = vrot.lane.b32.xlu0 %v5995, 1
  %v7877 = vpop.permute.xlu0 %7876
  %7878 = vrot.lane.b32.xlu0 %v5996, 1
  %v7879 = vpop.permute.xlu0 %7878
  %v7880 = vsel %vm2116, %v7875, %v7877
  %v7881 = vsel %vm2116, %v7877, %v7879
  %v7882 = vsel %vm2116, %v7879, %v7872
  %v7887 = vsel %vm2116, %v7872, %v7875
  %v7888 = vsel %vm2129, %v7887, 0.0
  %v7889 = vsel %vm2130, %v7880, 0.0
  %v7890 = vsel %vm2131, %v7881, 0.0
  %v7891 = vsel %vm2132, %v7882, 0.0
  %s7892 = scalar_lea.vmem %s6, 12
  %v7893 = vld [vmem:[%s7892] sm:$0xf]
  %v7895 = vsel %vm251, %v7893, 0
  %v7898 = vsel %vm86, %v7888, 0
  %v7901 = vsel %vm86, %v7889, 0
  %v7904 = vsel %vm86, %v7890, 0
  %v7907 = vsel %vm86, %v7891, 0
  %7909 = vmatpush.msra.mxu0 0.0
  %7910 = vmatpush.msra.mxu0 0.0
  %7911 = vmatpush.msra.mxu0 0.0
  %7912 = vmatpush.msra.mxu0 0.0
  %7913 = vmatpush.msra.mxu0 0.0
  %7914 = vmatpush.msra.mxu0 0.0
  %7915 = vmatpush.msra.mxu0 0.0
  %7916 = vmatpush.msra.mxu0 0.0
  %7917 = vmatpush.msra.mxu0 0.0
  %7918 = vmatpush.msra.mxu0 0.0
  %7919 = vmatpush.msra.mxu0 0.0
  %7920 = vmatpush.msra.mxu0 0.0
  %7921 = vmatpush.msra.mxu0 0.0
  %7922 = vmatpush.msra.mxu0 0.0
  %7923 = vmatpush.msra.mxu0 0.0
  %v7924 = vand.u32 %v7898, 4294901760
  %7925 = vmatpush.msra.mxu0 %v7924
  %v7926 = vand.u32 %v7895, 4294901760
  %v7927 = vsub.f32 %v7895, %v7926
  %v7928 = vand.u32 %v7927, 4294901760
  %v7929 = vsub.f32 %v7927, %v7928
  %v7930 = vand.u32 %v7929, 4294901760
  %7931 = vmatmul.f32.gmra.mxu0 %v7930
  %v7932 = vpop.f32.mrf.mxu0
  %v7933 = vadd.f32 0.0, %v7932
  %7934 = vdwg.mxu0
  %7935 = vmatpush.msra.mxu0 0.0
  %7936 = vmatpush.msra.mxu0 0.0
  %7937 = vmatpush.msra.mxu0 0.0
  %7938 = vmatpush.msra.mxu0 0.0
  %7939 = vmatpush.msra.mxu0 0.0
  %7940 = vmatpush.msra.mxu0 0.0
  %7941 = vmatpush.msra.mxu0 0.0
  %7942 = vmatpush.msra.mxu0 0.0
  %7943 = vmatpush.msra.mxu0 0.0
  %7944 = vmatpush.msra.mxu0 0.0
  %7945 = vmatpush.msra.mxu0 0.0
  %7946 = vmatpush.msra.mxu0 0.0
  %7947 = vmatpush.msra.mxu0 0.0
  %7948 = vmatpush.msra.mxu0 0.0
  %7949 = vmatpush.msra.mxu0 0.0
  %v7950 = vand.u32 %v7898, 4294901760
  %v7951 = vsub.f32 %v7898, %v7950
  %v7952 = vand.u32 %v7951, 4294901760
  %v7953 = vsub.f32 %v7951, %v7952
  %v7954 = vand.u32 %v7953, 4294901760
  %7955 = vmatpush.msra.mxu0 %v7954
  %v7956 = vand.u32 %v7895, 4294901760
  %7957 = vmatmul.f32.gmra.mxu0 %v7956
  %v7958 = vpop.f32.mrf.mxu0
  %v7959 = vadd.f32 %v7933, %v7958
  %7960 = vdwg.mxu0
  %7961 = vmatpush.msra.mxu0 0.0
  %7962 = vmatpush.msra.mxu0 0.0
  %7963 = vmatpush.msra.mxu0 0.0
  %7964 = vmatpush.msra.mxu0 0.0
  %7965 = vmatpush.msra.mxu0 0.0
  %7966 = vmatpush.msra.mxu0 0.0
  %7967 = vmatpush.msra.mxu0 0.0
  %7968 = vmatpush.msra.mxu0 0.0
  %7969 = vmatpush.msra.mxu0 0.0
  %7970 = vmatpush.msra.mxu0 0.0
  %7971 = vmatpush.msra.mxu0 0.0
  %7972 = vmatpush.msra.mxu0 0.0
  %7973 = vmatpush.msra.mxu0 0.0
  %7974 = vmatpush.msra.mxu0 0.0
  %7975 = vmatpush.msra.mxu0 0.0
  %v7976 = vand.u32 %v7898, 4294901760
  %v7977 = vsub.f32 %v7898, %v7976
  %7978 = vmatpush.msra.mxu0 %v7977
  %v7979 = vand.u32 %v7895, 4294901760
  %v7980 = vsub.f32 %v7895, %v7979
  %7981 = vmatmul.f32.gmra.mxu0 %v7980
  %v7982 = vpop.f32.mrf.mxu0
  %v7983 = vadd.f32 %v7959, %v7982
  %7984 = vdwg.mxu0
  %7985 = vmatpush.msra.mxu0 0.0
  %7986 = vmatpush.msra.mxu0 0.0
  %7987 = vmatpush.msra.mxu0 0.0
  %7988 = vmatpush.msra.mxu0 0.0
  %7989 = vmatpush.msra.mxu0 0.0
  %7990 = vmatpush.msra.mxu0 0.0
  %7991 = vmatpush.msra.mxu0 0.0
  %7992 = vmatpush.msra.mxu0 0.0
  %7993 = vmatpush.msra.mxu0 0.0
  %7994 = vmatpush.msra.mxu0 0.0
  %7995 = vmatpush.msra.mxu0 0.0
  %7996 = vmatpush.msra.mxu0 0.0
  %7997 = vmatpush.msra.mxu0 0.0
  %7998 = vmatpush.msra.mxu0 0.0
  %7999 = vmatpush.msra.mxu0 0.0
  %v8000 = vand.u32 %v7898, 4294901760
  %8001 = vmatpush.msra.mxu0 %v8000
  %v8002 = vand.u32 %v7895, 4294901760
  %v8003 = vsub.f32 %v7895, %v8002
  %v8004 = vand.u32 %v8003, 4294901760
  %8005 = vmatmul.f32.gmra.mxu0 %v8004
  %v8006 = vpop.f32.mrf.mxu0
  %v8007 = vadd.f32 %v7983, %v8006
  %8008 = vdwg.mxu0
  %8009 = vmatpush.msra.mxu0 0.0
  %8010 = vmatpush.msra.mxu0 0.0
  %8011 = vmatpush.msra.mxu0 0.0
  %8012 = vmatpush.msra.mxu0 0.0
  %8013 = vmatpush.msra.mxu0 0.0
  %8014 = vmatpush.msra.mxu0 0.0
  %8015 = vmatpush.msra.mxu0 0.0
  %8016 = vmatpush.msra.mxu0 0.0
  %8017 = vmatpush.msra.mxu0 0.0
  %8018 = vmatpush.msra.mxu0 0.0
  %8019 = vmatpush.msra.mxu0 0.0
  %8020 = vmatpush.msra.mxu0 0.0
  %8021 = vmatpush.msra.mxu0 0.0
  %8022 = vmatpush.msra.mxu0 0.0
  %8023 = vmatpush.msra.mxu0 0.0
  %v8024 = vand.u32 %v7898, 4294901760
  %v8025 = vsub.f32 %v7898, %v8024
  %v8026 = vand.u32 %v8025, 4294901760
  %8027 = vmatpush.msra.mxu0 %v8026
  %v8028 = vand.u32 %v7895, 4294901760
  %8029 = vmatmul.f32.gmra.mxu0 %v8028
  %v8030 = vpop.f32.mrf.mxu0
  %v8031 = vadd.f32 %v8007, %v8030
  %8032 = vdwg.mxu0
  %8033 = vmatpush.msra.mxu0 0.0
  %8034 = vmatpush.msra.mxu0 0.0
  %8035 = vmatpush.msra.mxu0 0.0
  %8036 = vmatpush.msra.mxu0 0.0
  %8037 = vmatpush.msra.mxu0 0.0
  %8038 = vmatpush.msra.mxu0 0.0
  %8039 = vmatpush.msra.mxu0 0.0
  %8040 = vmatpush.msra.mxu0 0.0
  %8041 = vmatpush.msra.mxu0 0.0
  %8042 = vmatpush.msra.mxu0 0.0
  %8043 = vmatpush.msra.mxu0 0.0
  %8044 = vmatpush.msra.mxu0 0.0
  %8045 = vmatpush.msra.mxu0 0.0
  %8046 = vmatpush.msra.mxu0 0.0
  %8047 = vmatpush.msra.mxu0 0.0
  %v8048 = vand.u32 %v7898, 4294901760
  %8049 = vmatpush.msra.mxu0 %v8048
  %v8050 = vand.u32 %v7895, 4294901760
  %8051 = vmatmul.f32.gmra.mxu0 %v8050
  %v8052 = vpop.f32.mrf.mxu0
  %v8053 = vadd.f32 %v8031, %v8052
  %8054 = vdwg.mxu0
  %8055 = vmatpush.msra.mxu0 0.0
  %8056 = vmatpush.msra.mxu0 0.0
  %8057 = vmatpush.msra.mxu0 0.0
  %8058 = vmatpush.msra.mxu0 0.0
  %8059 = vmatpush.msra.mxu0 0.0
  %8060 = vmatpush.msra.mxu0 0.0
  %8061 = vmatpush.msra.mxu0 0.0
  %8062 = vmatpush.msra.mxu0 0.0
  %8063 = vmatpush.msra.mxu0 0.0
  %8064 = vmatpush.msra.mxu0 0.0
  %8065 = vmatpush.msra.mxu0 0.0
  %8066 = vmatpush.msra.mxu0 0.0
  %8067 = vmatpush.msra.mxu0 0.0
  %8068 = vmatpush.msra.mxu0 0.0
  %8069 = vmatpush.msra.mxu0 0.0
  %v8070 = vand.u32 %v7901, 4294901760
  %8071 = vmatpush.msra.mxu0 %v8070
  %v8072 = vand.u32 %v7895, 4294901760
  %v8073 = vsub.f32 %v7895, %v8072
  %v8074 = vand.u32 %v8073, 4294901760
  %v8075 = vsub.f32 %v8073, %v8074
  %v8076 = vand.u32 %v8075, 4294901760
  %8077 = vmatmul.f32.gmra.mxu0 %v8076
  %v8078 = vpop.f32.mrf.mxu0
  %v8079 = vadd.f32 0.0, %v8078
  %8080 = vdwg.mxu0
  %8081 = vmatpush.msra.mxu0 0.0
  %8082 = vmatpush.msra.mxu0 0.0
  %8083 = vmatpush.msra.mxu0 0.0
  %8084 = vmatpush.msra.mxu0 0.0
  %8085 = vmatpush.msra.mxu0 0.0
  %8086 = vmatpush.msra.mxu0 0.0
  %8087 = vmatpush.msra.mxu0 0.0
  %8088 = vmatpush.msra.mxu0 0.0
  %8089 = vmatpush.msra.mxu0 0.0
  %8090 = vmatpush.msra.mxu0 0.0
  %8091 = vmatpush.msra.mxu0 0.0
  %8092 = vmatpush.msra.mxu0 0.0
  %8093 = vmatpush.msra.mxu0 0.0
  %8094 = vmatpush.msra.mxu0 0.0
  %8095 = vmatpush.msra.mxu0 0.0
  %v8096 = vand.u32 %v7901, 4294901760
  %v8097 = vsub.f32 %v7901, %v8096
  %v8098 = vand.u32 %v8097, 4294901760
  %v8099 = vsub.f32 %v8097, %v8098
  %v8100 = vand.u32 %v8099, 4294901760
  %8101 = vmatpush.msra.mxu0 %v8100
  %v8102 = vand.u32 %v7895, 4294901760
  %8103 = vmatmul.f32.gmra.mxu0 %v8102
  %v8104 = vpop.f32.mrf.mxu0
  %v8105 = vadd.f32 %v8079, %v8104
  %8106 = vdwg.mxu0
  %8107 = vmatpush.msra.mxu0 0.0
  %8108 = vmatpush.msra.mxu0 0.0
  %8109 = vmatpush.msra.mxu0 0.0
  %8110 = vmatpush.msra.mxu0 0.0
  %8111 = vmatpush.msra.mxu0 0.0
  %8112 = vmatpush.msra.mxu0 0.0
  %8113 = vmatpush.msra.mxu0 0.0
  %8114 = vmatpush.msra.mxu0 0.0
  %8115 = vmatpush.msra.mxu0 0.0
  %8116 = vmatpush.msra.mxu0 0.0
  %8117 = vmatpush.msra.mxu0 0.0
  %8118 = vmatpush.msra.mxu0 0.0
  %8119 = vmatpush.msra.mxu0 0.0
  %8120 = vmatpush.msra.mxu0 0.0
  %8121 = vmatpush.msra.mxu0 0.0
  %v8122 = vand.u32 %v7901, 4294901760
  %v8123 = vsub.f32 %v7901, %v8122
  %8124 = vmatpush.msra.mxu0 %v8123
  %v8125 = vand.u32 %v7895, 4294901760
  %v8126 = vsub.f32 %v7895, %v8125
  %8127 = vmatmul.f32.gmra.mxu0 %v8126
  %v8128 = vpop.f32.mrf.mxu0
  %v8129 = vadd.f32 %v8105, %v8128
  %8130 = vdwg.mxu0
  %8131 = vmatpush.msra.mxu0 0.0
  %8132 = vmatpush.msra.mxu0 0.0
  %8133 = vmatpush.msra.mxu0 0.0
  %8134 = vmatpush.msra.mxu0 0.0
  %8135 = vmatpush.msra.mxu0 0.0
  %8136 = vmatpush.msra.mxu0 0.0
  %8137 = vmatpush.msra.mxu0 0.0
  %8138 = vmatpush.msra.mxu0 0.0
  %8139 = vmatpush.msra.mxu0 0.0
  %8140 = vmatpush.msra.mxu0 0.0
  %8141 = vmatpush.msra.mxu0 0.0
  %8142 = vmatpush.msra.mxu0 0.0
  %8143 = vmatpush.msra.mxu0 0.0
  %8144 = vmatpush.msra.mxu0 0.0
  %8145 = vmatpush.msra.mxu0 0.0
  %v8146 = vand.u32 %v7901, 4294901760
  %8147 = vmatpush.msra.mxu0 %v8146
  %v8148 = vand.u32 %v7895, 4294901760
  %v8149 = vsub.f32 %v7895, %v8148
  %v8150 = vand.u32 %v8149, 4294901760
  %8151 = vmatmul.f32.gmra.mxu0 %v8150
  %v8152 = vpop.f32.mrf.mxu0
  %v8153 = vadd.f32 %v8129, %v8152
  %8154 = vdwg.mxu0
  %8155 = vmatpush.msra.mxu0 0.0
  %8156 = vmatpush.msra.mxu0 0.0
  %8157 = vmatpush.msra.mxu0 0.0
  %8158 = vmatpush.msra.mxu0 0.0
  %8159 = vmatpush.msra.mxu0 0.0
  %8160 = vmatpush.msra.mxu0 0.0
  %8161 = vmatpush.msra.mxu0 0.0
  %8162 = vmatpush.msra.mxu0 0.0
  %8163 = vmatpush.msra.mxu0 0.0
  %8164 = vmatpush.msra.mxu0 0.0
  %8165 = vmatpush.msra.mxu0 0.0
  %8166 = vmatpush.msra.mxu0 0.0
  %8167 = vmatpush.msra.mxu0 0.0
  %8168 = vmatpush.msra.mxu0 0.0
  %8169 = vmatpush.msra.mxu0 0.0
  %v8170 = vand.u32 %v7901, 4294901760
  %v8171 = vsub.f32 %v7901, %v8170
  %v8172 = vand.u32 %v8171, 4294901760
  %8173 = vmatpush.msra.mxu0 %v8172
  %v8174 = vand.u32 %v7895, 4294901760
  %8175 = vmatmul.f32.gmra.mxu0 %v8174
  %v8176 = vpop.f32.mrf.mxu0
  %v8177 = vadd.f32 %v8153, %v8176
  %8178 = vdwg.mxu0
  %8179 = vmatpush.msra.mxu0 0.0
  %8180 = vmatpush.msra.mxu0 0.0
  %8181 = vmatpush.msra.mxu0 0.0
  %8182 = vmatpush.msra.mxu0 0.0
  %8183 = vmatpush.msra.mxu0 0.0
  %8184 = vmatpush.msra.mxu0 0.0
  %8185 = vmatpush.msra.mxu0 0.0
  %8186 = vmatpush.msra.mxu0 0.0
  %8187 = vmatpush.msra.mxu0 0.0
  %8188 = vmatpush.msra.mxu0 0.0
  %8189 = vmatpush.msra.mxu0 0.0
  %8190 = vmatpush.msra.mxu0 0.0
  %8191 = vmatpush.msra.mxu0 0.0
  %8192 = vmatpush.msra.mxu0 0.0
  %8193 = vmatpush.msra.mxu0 0.0
  %v8194 = vand.u32 %v7901, 4294901760
  %8195 = vmatpush.msra.mxu0 %v8194
  %v8196 = vand.u32 %v7895, 4294901760
  %8197 = vmatmul.f32.gmra.mxu0 %v8196
  %v8198 = vpop.f32.mrf.mxu0
  %v8199 = vadd.f32 %v8177, %v8198
  %8200 = vdwg.mxu0
  %8201 = vmatpush.msra.mxu0 0.0
  %8202 = vmatpush.msra.mxu0 0.0
  %8203 = vmatpush.msra.mxu0 0.0
  %8204 = vmatpush.msra.mxu0 0.0
  %8205 = vmatpush.msra.mxu0 0.0
  %8206 = vmatpush.msra.mxu0 0.0
  %8207 = vmatpush.msra.mxu0 0.0
  %8208 = vmatpush.msra.mxu0 0.0
  %8209 = vmatpush.msra.mxu0 0.0
  %8210 = vmatpush.msra.mxu0 0.0
  %8211 = vmatpush.msra.mxu0 0.0
  %8212 = vmatpush.msra.mxu0 0.0
  %8213 = vmatpush.msra.mxu0 0.0
  %8214 = vmatpush.msra.mxu0 0.0
  %8215 = vmatpush.msra.mxu0 0.0
  %v8216 = vand.u32 %v7904, 4294901760
  %8217 = vmatpush.msra.mxu0 %v8216
  %v8218 = vand.u32 %v7895, 4294901760
  %v8219 = vsub.f32 %v7895, %v8218
  %v8220 = vand.u32 %v8219, 4294901760
  %v8221 = vsub.f32 %v8219, %v8220
  %v8222 = vand.u32 %v8221, 4294901760
  %8223 = vmatmul.f32.gmra.mxu0 %v8222
  %v8224 = vpop.f32.mrf.mxu0
  %v8225 = vadd.f32 0.0, %v8224
  %8226 = vdwg.mxu0
  %8227 = vmatpush.msra.mxu0 0.0
  %8228 = vmatpush.msra.mxu0 0.0
  %8229 = vmatpush.msra.mxu0 0.0
  %8230 = vmatpush.msra.mxu0 0.0
  %8231 = vmatpush.msra.mxu0 0.0
  %8232 = vmatpush.msra.mxu0 0.0
  %8233 = vmatpush.msra.mxu0 0.0
  %8234 = vmatpush.msra.mxu0 0.0
  %8235 = vmatpush.msra.mxu0 0.0
  %8236 = vmatpush.msra.mxu0 0.0
  %8237 = vmatpush.msra.mxu0 0.0
  %8238 = vmatpush.msra.mxu0 0.0
  %8239 = vmatpush.msra.mxu0 0.0
  %8240 = vmatpush.msra.mxu0 0.0
  %8241 = vmatpush.msra.mxu0 0.0
  %v8242 = vand.u32 %v7904, 4294901760
  %v8243 = vsub.f32 %v7904, %v8242
  %v8244 = vand.u32 %v8243, 4294901760
  %v8245 = vsub.f32 %v8243, %v8244
  %v8246 = vand.u32 %v8245, 4294901760
  %8247 = vmatpush.msra.mxu0 %v8246
  %v8248 = vand.u32 %v7895, 4294901760
  %8249 = vmatmul.f32.gmra.mxu0 %v8248
  %v8250 = vpop.f32.mrf.mxu0
  %v8251 = vadd.f32 %v8225, %v8250
  %8252 = vdwg.mxu0
  %8253 = vmatpush.msra.mxu0 0.0
  %8254 = vmatpush.msra.mxu0 0.0
  %8255 = vmatpush.msra.mxu0 0.0
  %8256 = vmatpush.msra.mxu0 0.0
  %8257 = vmatpush.msra.mxu0 0.0
  %8258 = vmatpush.msra.mxu0 0.0
  %8259 = vmatpush.msra.mxu0 0.0
  %8260 = vmatpush.msra.mxu0 0.0
  %8261 = vmatpush.msra.mxu0 0.0
  %8262 = vmatpush.msra.mxu0 0.0
  %8263 = vmatpush.msra.mxu0 0.0
  %8264 = vmatpush.msra.mxu0 0.0
  %8265 = vmatpush.msra.mxu0 0.0
  %8266 = vmatpush.msra.mxu0 0.0
  %8267 = vmatpush.msra.mxu0 0.0
  %v8268 = vand.u32 %v7904, 4294901760
  %v8269 = vsub.f32 %v7904, %v8268
  %8270 = vmatpush.msra.mxu0 %v8269
  %v8271 = vand.u32 %v7895, 4294901760
  %v8272 = vsub.f32 %v7895, %v8271
  %8273 = vmatmul.f32.gmra.mxu0 %v8272
  %v8274 = vpop.f32.mrf.mxu0
  %v8275 = vadd.f32 %v8251, %v8274
  %8276 = vdwg.mxu0
  %8277 = vmatpush.msra.mxu0 0.0
  %8278 = vmatpush.msra.mxu0 0.0
  %8279 = vmatpush.msra.mxu0 0.0
  %8280 = vmatpush.msra.mxu0 0.0
  %8281 = vmatpush.msra.mxu0 0.0
  %8282 = vmatpush.msra.mxu0 0.0
  %8283 = vmatpush.msra.mxu0 0.0
  %8284 = vmatpush.msra.mxu0 0.0
  %8285 = vmatpush.msra.mxu0 0.0
  %8286 = vmatpush.msra.mxu0 0.0
  %8287 = vmatpush.msra.mxu0 0.0
  %8288 = vmatpush.msra.mxu0 0.0
  %8289 = vmatpush.msra.mxu0 0.0
  %8290 = vmatpush.msra.mxu0 0.0
  %8291 = vmatpush.msra.mxu0 0.0
  %v8292 = vand.u32 %v7904, 4294901760
  %8293 = vmatpush.msra.mxu0 %v8292
  %v8294 = vand.u32 %v7895, 4294901760
  %v8295 = vsub.f32 %v7895, %v8294
  %v8296 = vand.u32 %v8295, 4294901760
  %8297 = vmatmul.f32.gmra.mxu0 %v8296
  %v8298 = vpop.f32.mrf.mxu0
  %v8299 = vadd.f32 %v8275, %v8298
  %8300 = vdwg.mxu0
  %8301 = vmatpush.msra.mxu0 0.0
  %8302 = vmatpush.msra.mxu0 0.0
  %8303 = vmatpush.msra.mxu0 0.0
  %8304 = vmatpush.msra.mxu0 0.0
  %8305 = vmatpush.msra.mxu0 0.0
  %8306 = vmatpush.msra.mxu0 0.0
  %8307 = vmatpush.msra.mxu0 0.0
  %8308 = vmatpush.msra.mxu0 0.0
  %8309 = vmatpush.msra.mxu0 0.0
  %8310 = vmatpush.msra.mxu0 0.0
  %8311 = vmatpush.msra.mxu0 0.0
  %8312 = vmatpush.msra.mxu0 0.0
  %8313 = vmatpush.msra.mxu0 0.0
  %8314 = vmatpush.msra.mxu0 0.0
  %8315 = vmatpush.msra.mxu0 0.0
  %v8316 = vand.u32 %v7904, 4294901760
  %v8317 = vsub.f32 %v7904, %v8316
  %v8318 = vand.u32 %v8317, 4294901760
  %8319 = vmatpush.msra.mxu0 %v8318
  %v8320 = vand.u32 %v7895, 4294901760
  %8321 = vmatmul.f32.gmra.mxu0 %v8320
  %v8322 = vpop.f32.mrf.mxu0
  %v8323 = vadd.f32 %v8299, %v8322
  %8324 = vdwg.mxu0
  %8325 = vmatpush.msra.mxu0 0.0
  %8326 = vmatpush.msra.mxu0 0.0
  %8327 = vmatpush.msra.mxu0 0.0
  %8328 = vmatpush.msra.mxu0 0.0
  %8329 = vmatpush.msra.mxu0 0.0
  %8330 = vmatpush.msra.mxu0 0.0
  %8331 = vmatpush.msra.mxu0 0.0
  %8332 = vmatpush.msra.mxu0 0.0
  %8333 = vmatpush.msra.mxu0 0.0
  %8334 = vmatpush.msra.mxu0 0.0
  %8335 = vmatpush.msra.mxu0 0.0
  %8336 = vmatpush.msra.mxu0 0.0
  %8337 = vmatpush.msra.mxu0 0.0
  %8338 = vmatpush.msra.mxu0 0.0
  %8339 = vmatpush.msra.mxu0 0.0
  %v8340 = vand.u32 %v7904, 4294901760
  %8341 = vmatpush.msra.mxu0 %v8340
  %v8342 = vand.u32 %v7895, 4294901760
  %8343 = vmatmul.f32.gmra.mxu0 %v8342
  %v8344 = vpop.f32.mrf.mxu0
  %v8345 = vadd.f32 %v8323, %v8344
  %8346 = vdwg.mxu0
  %8347 = vmatpush.msra.mxu0 0.0
  %8348 = vmatpush.msra.mxu0 0.0
  %8349 = vmatpush.msra.mxu0 0.0
  %8350 = vmatpush.msra.mxu0 0.0
  %8351 = vmatpush.msra.mxu0 0.0
  %8352 = vmatpush.msra.mxu0 0.0
  %8353 = vmatpush.msra.mxu0 0.0
  %8354 = vmatpush.msra.mxu0 0.0
  %8355 = vmatpush.msra.mxu0 0.0
  %8356 = vmatpush.msra.mxu0 0.0
  %8357 = vmatpush.msra.mxu0 0.0
  %8358 = vmatpush.msra.mxu0 0.0
  %8359 = vmatpush.msra.mxu0 0.0
  %8360 = vmatpush.msra.mxu0 0.0
  %8361 = vmatpush.msra.mxu0 0.0
  %v8362 = vand.u32 %v7907, 4294901760
  %8363 = vmatpush.msra.mxu0 %v8362
  %v8364 = vand.u32 %v7895, 4294901760
  %v8365 = vsub.f32 %v7895, %v8364
  %v8366 = vand.u32 %v8365, 4294901760
  %v8367 = vsub.f32 %v8365, %v8366
  %v8368 = vand.u32 %v8367, 4294901760
  %8369 = vmatmul.f32.gmra.mxu0 %v8368
  %v8370 = vpop.f32.mrf.mxu0
  %v8371 = vadd.f32 0.0, %v8370
  %8372 = vdwg.mxu0
  %8373 = vmatpush.msra.mxu0 0.0
  %8374 = vmatpush.msra.mxu0 0.0
  %8375 = vmatpush.msra.mxu0 0.0
  %8376 = vmatpush.msra.mxu0 0.0
  %8377 = vmatpush.msra.mxu0 0.0
  %8378 = vmatpush.msra.mxu0 0.0
  %8379 = vmatpush.msra.mxu0 0.0
  %8380 = vmatpush.msra.mxu0 0.0
  %8381 = vmatpush.msra.mxu0 0.0
  %8382 = vmatpush.msra.mxu0 0.0
  %8383 = vmatpush.msra.mxu0 0.0
  %8384 = vmatpush.msra.mxu0 0.0
  %8385 = vmatpush.msra.mxu0 0.0
  %8386 = vmatpush.msra.mxu0 0.0
  %8387 = vmatpush.msra.mxu0 0.0
  %v8388 = vand.u32 %v7907, 4294901760
  %v8389 = vsub.f32 %v7907, %v8388
  %v8390 = vand.u32 %v8389, 4294901760
  %v8391 = vsub.f32 %v8389, %v8390
  %v8392 = vand.u32 %v8391, 4294901760
  %8393 = vmatpush.msra.mxu0 %v8392
  %v8394 = vand.u32 %v7895, 4294901760
  %8395 = vmatmul.f32.gmra.mxu0 %v8394
  %v8396 = vpop.f32.mrf.mxu0
  %v8397 = vadd.f32 %v8371, %v8396
  %8398 = vdwg.mxu0
  %8399 = vmatpush.msra.mxu0 0.0
  %8400 = vmatpush.msra.mxu0 0.0
  %8401 = vmatpush.msra.mxu0 0.0
  %8402 = vmatpush.msra.mxu0 0.0
  %8403 = vmatpush.msra.mxu0 0.0
  %8404 = vmatpush.msra.mxu0 0.0
  %8405 = vmatpush.msra.mxu0 0.0
  %8406 = vmatpush.msra.mxu0 0.0
  %8407 = vmatpush.msra.mxu0 0.0
  %8408 = vmatpush.msra.mxu0 0.0
  %8409 = vmatpush.msra.mxu0 0.0
  %8410 = vmatpush.msra.mxu0 0.0
  %8411 = vmatpush.msra.mxu0 0.0
  %8412 = vmatpush.msra.mxu0 0.0
  %8413 = vmatpush.msra.mxu0 0.0
  %v8414 = vand.u32 %v7907, 4294901760
  %v8415 = vsub.f32 %v7907, %v8414
  %8416 = vmatpush.msra.mxu0 %v8415
  %v8417 = vand.u32 %v7895, 4294901760
  %v8418 = vsub.f32 %v7895, %v8417
  %8419 = vmatmul.f32.gmra.mxu0 %v8418
  %v8420 = vpop.f32.mrf.mxu0
  %v8421 = vadd.f32 %v8397, %v8420
  %8422 = vdwg.mxu0
  %8423 = vmatpush.msra.mxu0 0.0
  %8424 = vmatpush.msra.mxu0 0.0
  %8425 = vmatpush.msra.mxu0 0.0
  %8426 = vmatpush.msra.mxu0 0.0
  %8427 = vmatpush.msra.mxu0 0.0
  %8428 = vmatpush.msra.mxu0 0.0
  %8429 = vmatpush.msra.mxu0 0.0
  %8430 = vmatpush.msra.mxu0 0.0
  %8431 = vmatpush.msra.mxu0 0.0
  %8432 = vmatpush.msra.mxu0 0.0
  %8433 = vmatpush.msra.mxu0 0.0
  %8434 = vmatpush.msra.mxu0 0.0
  %8435 = vmatpush.msra.mxu0 0.0
  %8436 = vmatpush.msra.mxu0 0.0
  %8437 = vmatpush.msra.mxu0 0.0
  %v8438 = vand.u32 %v7907, 4294901760
  %8439 = vmatpush.msra.mxu0 %v8438
  %v8440 = vand.u32 %v7895, 4294901760
  %v8441 = vsub.f32 %v7895, %v8440
  %v8442 = vand.u32 %v8441, 4294901760
  %8443 = vmatmul.f32.gmra.mxu0 %v8442
  %v8444 = vpop.f32.mrf.mxu0
  %v8445 = vadd.f32 %v8421, %v8444
  %8446 = vdwg.mxu0
  %8447 = vmatpush.msra.mxu0 0.0
  %8448 = vmatpush.msra.mxu0 0.0
  %8449 = vmatpush.msra.mxu0 0.0
  %8450 = vmatpush.msra.mxu0 0.0
  %8451 = vmatpush.msra.mxu0 0.0
  %8452 = vmatpush.msra.mxu0 0.0
  %8453 = vmatpush.msra.mxu0 0.0
  %8454 = vmatpush.msra.mxu0 0.0
  %8455 = vmatpush.msra.mxu0 0.0
  %8456 = vmatpush.msra.mxu0 0.0
  %8457 = vmatpush.msra.mxu0 0.0
  %8458 = vmatpush.msra.mxu0 0.0
  %8459 = vmatpush.msra.mxu0 0.0
  %8460 = vmatpush.msra.mxu0 0.0
  %8461 = vmatpush.msra.mxu0 0.0
  %v8462 = vand.u32 %v7907, 4294901760
  %v8463 = vsub.f32 %v7907, %v8462
  %v8464 = vand.u32 %v8463, 4294901760
  %8465 = vmatpush.msra.mxu0 %v8464
  %v8466 = vand.u32 %v7895, 4294901760
  %8467 = vmatmul.f32.gmra.mxu0 %v8466
  %v8468 = vpop.f32.mrf.mxu0
  %v8469 = vadd.f32 %v8445, %v8468
  %8470 = vdwg.mxu0
  %8471 = vmatpush.msra.mxu0 0.0
  %8472 = vmatpush.msra.mxu0 0.0
  %8473 = vmatpush.msra.mxu0 0.0
  %8474 = vmatpush.msra.mxu0 0.0
  %8475 = vmatpush.msra.mxu0 0.0
  %8476 = vmatpush.msra.mxu0 0.0
  %8477 = vmatpush.msra.mxu0 0.0
  %8478 = vmatpush.msra.mxu0 0.0
  %8479 = vmatpush.msra.mxu0 0.0
  %8480 = vmatpush.msra.mxu0 0.0
  %8481 = vmatpush.msra.mxu0 0.0
  %8482 = vmatpush.msra.mxu0 0.0
  %8483 = vmatpush.msra.mxu0 0.0
  %8484 = vmatpush.msra.mxu0 0.0
  %8485 = vmatpush.msra.mxu0 0.0
  %v8486 = vand.u32 %v7907, 4294901760
  %8487 = vmatpush.msra.mxu0 %v8486
  %v8488 = vand.u32 %v7895, 4294901760
  %8489 = vmatmul.f32.gmra.mxu0 %v8488
  %v8490 = vpop.f32.mrf.mxu0
  %v8491 = vadd.f32 %v8469, %v8490
  %8492 = vdwg.mxu0
  %v8493 = vadd.f32 %v7867, %v8053
  %v8494 = vadd.f32 %v7868, %v8199
  %v8495 = vadd.f32 %v7869, %v8345
  %v8496 = vadd.f32 %v7870, %v8491
  %s8497 = scalar_lea.vmem %s6, 16
  %v8498 = vld [vmem:[%s8497] sm:$0xf]
  %v8500 = vsel %vm251, %v8498, 0
  %v8502 = vsel %vm86, %v5994, 0
  %v8504 = vsel %vm86, %v5995, 0
  %v8506 = vsel %vm86, %v5996, 0
  %v8508 = vsel %vm86, %v5997, 0
  %8510 = vmatpush.msra.mxu0 0.0
  %8511 = vmatpush.msra.mxu0 0.0
  %8512 = vmatpush.msra.mxu0 0.0
  %8513 = vmatpush.msra.mxu0 0.0
  %8514 = vmatpush.msra.mxu0 0.0
  %8515 = vmatpush.msra.mxu0 0.0
  %8516 = vmatpush.msra.mxu0 0.0
  %8517 = vmatpush.msra.mxu0 0.0
  %8518 = vmatpush.msra.mxu0 0.0
  %8519 = vmatpush.msra.mxu0 0.0
  %8520 = vmatpush.msra.mxu0 0.0
  %8521 = vmatpush.msra.mxu0 0.0
  %8522 = vmatpush.msra.mxu0 0.0
  %8523 = vmatpush.msra.mxu0 0.0
  %8524 = vmatpush.msra.mxu0 0.0
  %v8525 = vand.u32 %v8502, 4294901760
  %8526 = vmatpush.msra.mxu0 %v8525
  %v8527 = vand.u32 %v8500, 4294901760
  %v8528 = vsub.f32 %v8500, %v8527
  %v8529 = vand.u32 %v8528, 4294901760
  %v8530 = vsub.f32 %v8528, %v8529
  %v8531 = vand.u32 %v8530, 4294901760
  %8532 = vmatmul.f32.gmra.mxu0 %v8531
  %v8533 = vpop.f32.mrf.mxu0
  %v8534 = vadd.f32 0.0, %v8533
  %8535 = vdwg.mxu0
  %8536 = vmatpush.msra.mxu0 0.0
  %8537 = vmatpush.msra.mxu0 0.0
  %8538 = vmatpush.msra.mxu0 0.0
  %8539 = vmatpush.msra.mxu0 0.0
  %8540 = vmatpush.msra.mxu0 0.0
  %8541 = vmatpush.msra.mxu0 0.0
  %8542 = vmatpush.msra.mxu0 0.0
  %8543 = vmatpush.msra.mxu0 0.0
  %8544 = vmatpush.msra.mxu0 0.0
  %8545 = vmatpush.msra.mxu0 0.0
  %8546 = vmatpush.msra.mxu0 0.0
  %8547 = vmatpush.msra.mxu0 0.0
  %8548 = vmatpush.msra.mxu0 0.0
  %8549 = vmatpush.msra.mxu0 0.0
  %8550 = vmatpush.msra.mxu0 0.0
  %v8551 = vand.u32 %v8502, 4294901760
  %v8552 = vsub.f32 %v8502, %v8551
  %v8553 = vand.u32 %v8552, 4294901760
  %v8554 = vsub.f32 %v8552, %v8553
  %v8555 = vand.u32 %v8554, 4294901760
  %8556 = vmatpush.msra.mxu0 %v8555
  %v8557 = vand.u32 %v8500, 4294901760
  %8558 = vmatmul.f32.gmra.mxu0 %v8557
  %v8559 = vpop.f32.mrf.mxu0
  %v8560 = vadd.f32 %v8534, %v8559
  %8561 = vdwg.mxu0
  %8562 = vmatpush.msra.mxu0 0.0
  %8563 = vmatpush.msra.mxu0 0.0
  %8564 = vmatpush.msra.mxu0 0.0
  %8565 = vmatpush.msra.mxu0 0.0
  %8566 = vmatpush.msra.mxu0 0.0
  %8567 = vmatpush.msra.mxu0 0.0
  %8568 = vmatpush.msra.mxu0 0.0
  %8569 = vmatpush.msra.mxu0 0.0
  %8570 = vmatpush.msra.mxu0 0.0
  %8571 = vmatpush.msra.mxu0 0.0
  %8572 = vmatpush.msra.mxu0 0.0
  %8573 = vmatpush.msra.mxu0 0.0
  %8574 = vmatpush.msra.mxu0 0.0
  %8575 = vmatpush.msra.mxu0 0.0
  %8576 = vmatpush.msra.mxu0 0.0
  %v8577 = vand.u32 %v8502, 4294901760
  %v8578 = vsub.f32 %v8502, %v8577
  %8579 = vmatpush.msra.mxu0 %v8578
  %v8580 = vand.u32 %v8500, 4294901760
  %v8581 = vsub.f32 %v8500, %v8580
  %8582 = vmatmul.f32.gmra.mxu0 %v8581
  %v8583 = vpop.f32.mrf.mxu0
  %v8584 = vadd.f32 %v8560, %v8583
  %8585 = vdwg.mxu0
  %8586 = vmatpush.msra.mxu0 0.0
  %8587 = vmatpush.msra.mxu0 0.0
  %8588 = vmatpush.msra.mxu0 0.0
  %8589 = vmatpush.msra.mxu0 0.0
  %8590 = vmatpush.msra.mxu0 0.0
  %8591 = vmatpush.msra.mxu0 0.0
  %8592 = vmatpush.msra.mxu0 0.0
  %8593 = vmatpush.msra.mxu0 0.0
  %8594 = vmatpush.msra.mxu0 0.0
  %8595 = vmatpush.msra.mxu0 0.0
  %8596 = vmatpush.msra.mxu0 0.0
  %8597 = vmatpush.msra.mxu0 0.0
  %8598 = vmatpush.msra.mxu0 0.0
  %8599 = vmatpush.msra.mxu0 0.0
  %8600 = vmatpush.msra.mxu0 0.0
  %v8601 = vand.u32 %v8502, 4294901760
  %8602 = vmatpush.msra.mxu0 %v8601
  %v8603 = vand.u32 %v8500, 4294901760
  %v8604 = vsub.f32 %v8500, %v8603
  %v8605 = vand.u32 %v8604, 4294901760
  %8606 = vmatmul.f32.gmra.mxu0 %v8605
  %v8607 = vpop.f32.mrf.mxu0
  %v8608 = vadd.f32 %v8584, %v8607
  %8609 = vdwg.mxu0
  %8610 = vmatpush.msra.mxu0 0.0
  %8611 = vmatpush.msra.mxu0 0.0
  %8612 = vmatpush.msra.mxu0 0.0
  %8613 = vmatpush.msra.mxu0 0.0
  %8614 = vmatpush.msra.mxu0 0.0
  %8615 = vmatpush.msra.mxu0 0.0
  %8616 = vmatpush.msra.mxu0 0.0
  %8617 = vmatpush.msra.mxu0 0.0
  %8618 = vmatpush.msra.mxu0 0.0
  %8619 = vmatpush.msra.mxu0 0.0
  %8620 = vmatpush.msra.mxu0 0.0
  %8621 = vmatpush.msra.mxu0 0.0
  %8622 = vmatpush.msra.mxu0 0.0
  %8623 = vmatpush.msra.mxu0 0.0
  %8624 = vmatpush.msra.mxu0 0.0
  %v8625 = vand.u32 %v8502, 4294901760
  %v8626 = vsub.f32 %v8502, %v8625
  %v8627 = vand.u32 %v8626, 4294901760
  %8628 = vmatpush.msra.mxu0 %v8627
  %v8629 = vand.u32 %v8500, 4294901760
  %8630 = vmatmul.f32.gmra.mxu0 %v8629
  %v8631 = vpop.f32.mrf.mxu0
  %v8632 = vadd.f32 %v8608, %v8631
  %8633 = vdwg.mxu0
  %8634 = vmatpush.msra.mxu0 0.0
  %8635 = vmatpush.msra.mxu0 0.0
  %8636 = vmatpush.msra.mxu0 0.0
  %8637 = vmatpush.msra.mxu0 0.0
  %8638 = vmatpush.msra.mxu0 0.0
  %8639 = vmatpush.msra.mxu0 0.0
  %8640 = vmatpush.msra.mxu0 0.0
  %8641 = vmatpush.msra.mxu0 0.0
  %8642 = vmatpush.msra.mxu0 0.0
  %8643 = vmatpush.msra.mxu0 0.0
  %8644 = vmatpush.msra.mxu0 0.0
  %8645 = vmatpush.msra.mxu0 0.0
  %8646 = vmatpush.msra.mxu0 0.0
  %8647 = vmatpush.msra.mxu0 0.0
  %8648 = vmatpush.msra.mxu0 0.0
  %v8649 = vand.u32 %v8502, 4294901760
  %8650 = vmatpush.msra.mxu0 %v8649
  %v8651 = vand.u32 %v8500, 4294901760
  %8652 = vmatmul.f32.gmra.mxu0 %v8651
  %v8653 = vpop.f32.mrf.mxu0
  %v8654 = vadd.f32 %v8632, %v8653
  %8655 = vdwg.mxu0
  %8656 = vmatpush.msra.mxu0 0.0
  %8657 = vmatpush.msra.mxu0 0.0
  %8658 = vmatpush.msra.mxu0 0.0
  %8659 = vmatpush.msra.mxu0 0.0
  %8660 = vmatpush.msra.mxu0 0.0
  %8661 = vmatpush.msra.mxu0 0.0
  %8662 = vmatpush.msra.mxu0 0.0
  %8663 = vmatpush.msra.mxu0 0.0
  %8664 = vmatpush.msra.mxu0 0.0
  %8665 = vmatpush.msra.mxu0 0.0
  %8666 = vmatpush.msra.mxu0 0.0
  %8667 = vmatpush.msra.mxu0 0.0
  %8668 = vmatpush.msra.mxu0 0.0
  %8669 = vmatpush.msra.mxu0 0.0
  %8670 = vmatpush.msra.mxu0 0.0
  %v8671 = vand.u32 %v8504, 4294901760
  %8672 = vmatpush.msra.mxu0 %v8671
  %v8673 = vand.u32 %v8500, 4294901760
  %v8674 = vsub.f32 %v8500, %v8673
  %v8675 = vand.u32 %v8674, 4294901760
  %v8676 = vsub.f32 %v8674, %v8675
  %v8677 = vand.u32 %v8676, 4294901760
  %8678 = vmatmul.f32.gmra.mxu0 %v8677
  %v8679 = vpop.f32.mrf.mxu0
  %v8680 = vadd.f32 0.0, %v8679
  %8681 = vdwg.mxu0
  %8682 = vmatpush.msra.mxu0 0.0
  %8683 = vmatpush.msra.mxu0 0.0
  %8684 = vmatpush.msra.mxu0 0.0
  %8685 = vmatpush.msra.mxu0 0.0
  %8686 = vmatpush.msra.mxu0 0.0
  %8687 = vmatpush.msra.mxu0 0.0
  %8688 = vmatpush.msra.mxu0 0.0
  %8689 = vmatpush.msra.mxu0 0.0
  %8690 = vmatpush.msra.mxu0 0.0
  %8691 = vmatpush.msra.mxu0 0.0
  %8692 = vmatpush.msra.mxu0 0.0
  %8693 = vmatpush.msra.mxu0 0.0
  %8694 = vmatpush.msra.mxu0 0.0
  %8695 = vmatpush.msra.mxu0 0.0
  %8696 = vmatpush.msra.mxu0 0.0
  %v8697 = vand.u32 %v8504, 4294901760
  %v8698 = vsub.f32 %v8504, %v8697
  %v8699 = vand.u32 %v8698, 4294901760
  %v8700 = vsub.f32 %v8698, %v8699
  %v8701 = vand.u32 %v8700, 4294901760
  %8702 = vmatpush.msra.mxu0 %v8701
  %v8703 = vand.u32 %v8500, 4294901760
  %8704 = vmatmul.f32.gmra.mxu0 %v8703
  %v8705 = vpop.f32.mrf.mxu0
  %v8706 = vadd.f32 %v8680, %v8705
  %8707 = vdwg.mxu0
  %8708 = vmatpush.msra.mxu0 0.0
  %8709 = vmatpush.msra.mxu0 0.0
  %8710 = vmatpush.msra.mxu0 0.0
  %8711 = vmatpush.msra.mxu0 0.0
  %8712 = vmatpush.msra.mxu0 0.0
  %8713 = vmatpush.msra.mxu0 0.0
  %8714 = vmatpush.msra.mxu0 0.0
  %8715 = vmatpush.msra.mxu0 0.0
  %8716 = vmatpush.msra.mxu0 0.0
  %8717 = vmatpush.msra.mxu0 0.0
  %8718 = vmatpush.msra.mxu0 0.0
  %8719 = vmatpush.msra.mxu0 0.0
  %8720 = vmatpush.msra.mxu0 0.0
  %8721 = vmatpush.msra.mxu0 0.0
  %8722 = vmatpush.msra.mxu0 0.0
  %v8723 = vand.u32 %v8504, 4294901760
  %v8724 = vsub.f32 %v8504, %v8723
  %8725 = vmatpush.msra.mxu0 %v8724
  %v8726 = vand.u32 %v8500, 4294901760
  %v8727 = vsub.f32 %v8500, %v8726
  %8728 = vmatmul.f32.gmra.mxu0 %v8727
  %v8729 = vpop.f32.mrf.mxu0
  %v8730 = vadd.f32 %v8706, %v8729
  %8731 = vdwg.mxu0
  %8732 = vmatpush.msra.mxu0 0.0
  %8733 = vmatpush.msra.mxu0 0.0
  %8734 = vmatpush.msra.mxu0 0.0
  %8735 = vmatpush.msra.mxu0 0.0
  %8736 = vmatpush.msra.mxu0 0.0
  %8737 = vmatpush.msra.mxu0 0.0
  %8738 = vmatpush.msra.mxu0 0.0
  %8739 = vmatpush.msra.mxu0 0.0
  %8740 = vmatpush.msra.mxu0 0.0
  %8741 = vmatpush.msra.mxu0 0.0
  %8742 = vmatpush.msra.mxu0 0.0
  %8743 = vmatpush.msra.mxu0 0.0
  %8744 = vmatpush.msra.mxu0 0.0
  %8745 = vmatpush.msra.mxu0 0.0
  %8746 = vmatpush.msra.mxu0 0.0
  %v8747 = vand.u32 %v8504, 4294901760
  %8748 = vmatpush.msra.mxu0 %v8747
  %v8749 = vand.u32 %v8500, 4294901760
  %v8750 = vsub.f32 %v8500, %v8749
  %v8751 = vand.u32 %v8750, 4294901760
  %8752 = vmatmul.f32.gmra.mxu0 %v8751
  %v8753 = vpop.f32.mrf.mxu0
  %v8754 = vadd.f32 %v8730, %v8753
  %8755 = vdwg.mxu0
  %8756 = vmatpush.msra.mxu0 0.0
  %8757 = vmatpush.msra.mxu0 0.0
  %8758 = vmatpush.msra.mxu0 0.0
  %8759 = vmatpush.msra.mxu0 0.0
  %8760 = vmatpush.msra.mxu0 0.0
  %8761 = vmatpush.msra.mxu0 0.0
  %8762 = vmatpush.msra.mxu0 0.0
  %8763 = vmatpush.msra.mxu0 0.0
  %8764 = vmatpush.msra.mxu0 0.0
  %8765 = vmatpush.msra.mxu0 0.0
  %8766 = vmatpush.msra.mxu0 0.0
  %8767 = vmatpush.msra.mxu0 0.0
  %8768 = vmatpush.msra.mxu0 0.0
  %8769 = vmatpush.msra.mxu0 0.0
  %8770 = vmatpush.msra.mxu0 0.0
  %v8771 = vand.u32 %v8504, 4294901760
  %v8772 = vsub.f32 %v8504, %v8771
  %v8773 = vand.u32 %v8772, 4294901760
  %8774 = vmatpush.msra.mxu0 %v8773
  %v8775 = vand.u32 %v8500, 4294901760
  %8776 = vmatmul.f32.gmra.mxu0 %v8775
  %v8777 = vpop.f32.mrf.mxu0
  %v8778 = vadd.f32 %v8754, %v8777
  %8779 = vdwg.mxu0
  %8780 = vmatpush.msra.mxu0 0.0
  %8781 = vmatpush.msra.mxu0 0.0
  %8782 = vmatpush.msra.mxu0 0.0
  %8783 = vmatpush.msra.mxu0 0.0
  %8784 = vmatpush.msra.mxu0 0.0
  %8785 = vmatpush.msra.mxu0 0.0
  %8786 = vmatpush.msra.mxu0 0.0
  %8787 = vmatpush.msra.mxu0 0.0
  %8788 = vmatpush.msra.mxu0 0.0
  %8789 = vmatpush.msra.mxu0 0.0
  %8790 = vmatpush.msra.mxu0 0.0
  %8791 = vmatpush.msra.mxu0 0.0
  %8792 = vmatpush.msra.mxu0 0.0
  %8793 = vmatpush.msra.mxu0 0.0
  %8794 = vmatpush.msra.mxu0 0.0
  %v8795 = vand.u32 %v8504, 4294901760
  %8796 = vmatpush.msra.mxu0 %v8795
  %v8797 = vand.u32 %v8500, 4294901760
  %8798 = vmatmul.f32.gmra.mxu0 %v8797
  %v8799 = vpop.f32.mrf.mxu0
  %v8800 = vadd.f32 %v8778, %v8799
  %8801 = vdwg.mxu0
  %8802 = vmatpush.msra.mxu0 0.0
  %8803 = vmatpush.msra.mxu0 0.0
  %8804 = vmatpush.msra.mxu0 0.0
  %8805 = vmatpush.msra.mxu0 0.0
  %8806 = vmatpush.msra.mxu0 0.0
  %8807 = vmatpush.msra.mxu0 0.0
  %8808 = vmatpush.msra.mxu0 0.0
  %8809 = vmatpush.msra.mxu0 0.0
  %8810 = vmatpush.msra.mxu0 0.0
  %8811 = vmatpush.msra.mxu0 0.0
  %8812 = vmatpush.msra.mxu0 0.0
  %8813 = vmatpush.msra.mxu0 0.0
  %8814 = vmatpush.msra.mxu0 0.0
  %8815 = vmatpush.msra.mxu0 0.0
  %8816 = vmatpush.msra.mxu0 0.0
  %v8817 = vand.u32 %v8506, 4294901760
  %8818 = vmatpush.msra.mxu0 %v8817
  %v8819 = vand.u32 %v8500, 4294901760
  %v8820 = vsub.f32 %v8500, %v8819
  %v8821 = vand.u32 %v8820, 4294901760
  %v8822 = vsub.f32 %v8820, %v8821
  %v8823 = vand.u32 %v8822, 4294901760
  %8824 = vmatmul.f32.gmra.mxu0 %v8823
  %v8825 = vpop.f32.mrf.mxu0
  %v8826 = vadd.f32 0.0, %v8825
  %8827 = vdwg.mxu0
  %8828 = vmatpush.msra.mxu0 0.0
  %8829 = vmatpush.msra.mxu0 0.0
  %8830 = vmatpush.msra.mxu0 0.0
  %8831 = vmatpush.msra.mxu0 0.0
  %8832 = vmatpush.msra.mxu0 0.0
  %8833 = vmatpush.msra.mxu0 0.0
  %8834 = vmatpush.msra.mxu0 0.0
  %8835 = vmatpush.msra.mxu0 0.0
  %8836 = vmatpush.msra.mxu0 0.0
  %8837 = vmatpush.msra.mxu0 0.0
  %8838 = vmatpush.msra.mxu0 0.0
  %8839 = vmatpush.msra.mxu0 0.0
  %8840 = vmatpush.msra.mxu0 0.0
  %8841 = vmatpush.msra.mxu0 0.0
  %8842 = vmatpush.msra.mxu0 0.0
  %v8843 = vand.u32 %v8506, 4294901760
  %v8844 = vsub.f32 %v8506, %v8843
  %v8845 = vand.u32 %v8844, 4294901760
  %v8846 = vsub.f32 %v8844, %v8845
  %v8847 = vand.u32 %v8846, 4294901760
  %8848 = vmatpush.msra.mxu0 %v8847
  %v8849 = vand.u32 %v8500, 4294901760
  %8850 = vmatmul.f32.gmra.mxu0 %v8849
  %v8851 = vpop.f32.mrf.mxu0
  %v8852 = vadd.f32 %v8826, %v8851
  %8853 = vdwg.mxu0
  %8854 = vmatpush.msra.mxu0 0.0
  %8855 = vmatpush.msra.mxu0 0.0
  %8856 = vmatpush.msra.mxu0 0.0
  %8857 = vmatpush.msra.mxu0 0.0
  %8858 = vmatpush.msra.mxu0 0.0
  %8859 = vmatpush.msra.mxu0 0.0
  %8860 = vmatpush.msra.mxu0 0.0
  %8861 = vmatpush.msra.mxu0 0.0
  %8862 = vmatpush.msra.mxu0 0.0
  %8863 = vmatpush.msra.mxu0 0.0
  %8864 = vmatpush.msra.mxu0 0.0
  %8865 = vmatpush.msra.mxu0 0.0
  %8866 = vmatpush.msra.mxu0 0.0
  %8867 = vmatpush.msra.mxu0 0.0
  %8868 = vmatpush.msra.mxu0 0.0
  %v8869 = vand.u32 %v8506, 4294901760
  %v8870 = vsub.f32 %v8506, %v8869
  %8871 = vmatpush.msra.mxu0 %v8870
  %v8872 = vand.u32 %v8500, 4294901760
  %v8873 = vsub.f32 %v8500, %v8872
  %8874 = vmatmul.f32.gmra.mxu0 %v8873
  %v8875 = vpop.f32.mrf.mxu0
  %v8876 = vadd.f32 %v8852, %v8875
  %8877 = vdwg.mxu0
  %8878 = vmatpush.msra.mxu0 0.0
  %8879 = vmatpush.msra.mxu0 0.0
  %8880 = vmatpush.msra.mxu0 0.0
  %8881 = vmatpush.msra.mxu0 0.0
  %8882 = vmatpush.msra.mxu0 0.0
  %8883 = vmatpush.msra.mxu0 0.0
  %8884 = vmatpush.msra.mxu0 0.0
  %8885 = vmatpush.msra.mxu0 0.0
  %8886 = vmatpush.msra.mxu0 0.0
  %8887 = vmatpush.msra.mxu0 0.0
  %8888 = vmatpush.msra.mxu0 0.0
  %8889 = vmatpush.msra.mxu0 0.0
  %8890 = vmatpush.msra.mxu0 0.0
  %8891 = vmatpush.msra.mxu0 0.0
  %8892 = vmatpush.msra.mxu0 0.0
  %v8893 = vand.u32 %v8506, 4294901760
  %8894 = vmatpush.msra.mxu0 %v8893
  %v8895 = vand.u32 %v8500, 4294901760
  %v8896 = vsub.f32 %v8500, %v8895
  %v8897 = vand.u32 %v8896, 4294901760
  %8898 = vmatmul.f32.gmra.mxu0 %v8897
  %v8899 = vpop.f32.mrf.mxu0
  %v8900 = vadd.f32 %v8876, %v8899
  %8901 = vdwg.mxu0
  %8902 = vmatpush.msra.mxu0 0.0
  %8903 = vmatpush.msra.mxu0 0.0
  %8904 = vmatpush.msra.mxu0 0.0
  %8905 = vmatpush.msra.mxu0 0.0
  %8906 = vmatpush.msra.mxu0 0.0
  %8907 = vmatpush.msra.mxu0 0.0
  %8908 = vmatpush.msra.mxu0 0.0
  %8909 = vmatpush.msra.mxu0 0.0
  %8910 = vmatpush.msra.mxu0 0.0
  %8911 = vmatpush.msra.mxu0 0.0
  %8912 = vmatpush.msra.mxu0 0.0
  %8913 = vmatpush.msra.mxu0 0.0
  %8914 = vmatpush.msra.mxu0 0.0
  %8915 = vmatpush.msra.mxu0 0.0
  %8916 = vmatpush.msra.mxu0 0.0
  %v8917 = vand.u32 %v8506, 4294901760
  %v8918 = vsub.f32 %v8506, %v8917
  %v8919 = vand.u32 %v8918, 4294901760
  %8920 = vmatpush.msra.mxu0 %v8919
  %v8921 = vand.u32 %v8500, 4294901760
  %8922 = vmatmul.f32.gmra.mxu0 %v8921
  %v8923 = vpop.f32.mrf.mxu0
  %v8924 = vadd.f32 %v8900, %v8923
  %8925 = vdwg.mxu0
  %8926 = vmatpush.msra.mxu0 0.0
  %8927 = vmatpush.msra.mxu0 0.0
  %8928 = vmatpush.msra.mxu0 0.0
  %8929 = vmatpush.msra.mxu0 0.0
  %8930 = vmatpush.msra.mxu0 0.0
  %8931 = vmatpush.msra.mxu0 0.0
  %8932 = vmatpush.msra.mxu0 0.0
  %8933 = vmatpush.msra.mxu0 0.0
  %8934 = vmatpush.msra.mxu0 0.0
  %8935 = vmatpush.msra.mxu0 0.0
  %8936 = vmatpush.msra.mxu0 0.0
  %8937 = vmatpush.msra.mxu0 0.0
  %8938 = vmatpush.msra.mxu0 0.0
  %8939 = vmatpush.msra.mxu0 0.0
  %8940 = vmatpush.msra.mxu0 0.0
  %v8941 = vand.u32 %v8506, 4294901760
  %8942 = vmatpush.msra.mxu0 %v8941
  %v8943 = vand.u32 %v8500, 4294901760
  %8944 = vmatmul.f32.gmra.mxu0 %v8943
  %v8945 = vpop.f32.mrf.mxu0
  %v8946 = vadd.f32 %v8924, %v8945
  %8947 = vdwg.mxu0
  %8948 = vmatpush.msra.mxu0 0.0
  %8949 = vmatpush.msra.mxu0 0.0
  %8950 = vmatpush.msra.mxu0 0.0
  %8951 = vmatpush.msra.mxu0 0.0
  %8952 = vmatpush.msra.mxu0 0.0
  %8953 = vmatpush.msra.mxu0 0.0
  %8954 = vmatpush.msra.mxu0 0.0
  %8955 = vmatpush.msra.mxu0 0.0
  %8956 = vmatpush.msra.mxu0 0.0
  %8957 = vmatpush.msra.mxu0 0.0
  %8958 = vmatpush.msra.mxu0 0.0
  %8959 = vmatpush.msra.mxu0 0.0
  %8960 = vmatpush.msra.mxu0 0.0
  %8961 = vmatpush.msra.mxu0 0.0
  %8962 = vmatpush.msra.mxu0 0.0
  %v8963 = vand.u32 %v8508, 4294901760
  %8964 = vmatpush.msra.mxu0 %v8963
  %v8965 = vand.u32 %v8500, 4294901760
  %v8966 = vsub.f32 %v8500, %v8965
  %v8967 = vand.u32 %v8966, 4294901760
  %v8968 = vsub.f32 %v8966, %v8967
  %v8969 = vand.u32 %v8968, 4294901760
  %8970 = vmatmul.f32.gmra.mxu0 %v8969
  %v8971 = vpop.f32.mrf.mxu0
  %v8972 = vadd.f32 0.0, %v8971
  %8973 = vdwg.mxu0
  %8974 = vmatpush.msra.mxu0 0.0
  %8975 = vmatpush.msra.mxu0 0.0
  %8976 = vmatpush.msra.mxu0 0.0
  %8977 = vmatpush.msra.mxu0 0.0
  %8978 = vmatpush.msra.mxu0 0.0
  %8979 = vmatpush.msra.mxu0 0.0
  %8980 = vmatpush.msra.mxu0 0.0
  %8981 = vmatpush.msra.mxu0 0.0
  %8982 = vmatpush.msra.mxu0 0.0
  %8983 = vmatpush.msra.mxu0 0.0
  %8984 = vmatpush.msra.mxu0 0.0
  %8985 = vmatpush.msra.mxu0 0.0
  %8986 = vmatpush.msra.mxu0 0.0
  %8987 = vmatpush.msra.mxu0 0.0
  %8988 = vmatpush.msra.mxu0 0.0
  %v8989 = vand.u32 %v8508, 4294901760
  %v8990 = vsub.f32 %v8508, %v8989
  %v8991 = vand.u32 %v8990, 4294901760
  %v8992 = vsub.f32 %v8990, %v8991
  %v8993 = vand.u32 %v8992, 4294901760
  %8994 = vmatpush.msra.mxu0 %v8993
  %v8995 = vand.u32 %v8500, 4294901760
  %8996 = vmatmul.f32.gmra.mxu0 %v8995
  %v8997 = vpop.f32.mrf.mxu0
  %v8998 = vadd.f32 %v8972, %v8997
  %8999 = vdwg.mxu0
  %9000 = vmatpush.msra.mxu0 0.0
  %9001 = vmatpush.msra.mxu0 0.0
  %9002 = vmatpush.msra.mxu0 0.0
  %9003 = vmatpush.msra.mxu0 0.0
  %9004 = vmatpush.msra.mxu0 0.0
  %9005 = vmatpush.msra.mxu0 0.0
  %9006 = vmatpush.msra.mxu0 0.0
  %9007 = vmatpush.msra.mxu0 0.0
  %9008 = vmatpush.msra.mxu0 0.0
  %9009 = vmatpush.msra.mxu0 0.0
  %9010 = vmatpush.msra.mxu0 0.0
  %9011 = vmatpush.msra.mxu0 0.0
  %9012 = vmatpush.msra.mxu0 0.0
  %9013 = vmatpush.msra.mxu0 0.0
  %9014 = vmatpush.msra.mxu0 0.0
  %v9015 = vand.u32 %v8508, 4294901760
  %v9016 = vsub.f32 %v8508, %v9015
  %9017 = vmatpush.msra.mxu0 %v9016
  %v9018 = vand.u32 %v8500, 4294901760
  %v9019 = vsub.f32 %v8500, %v9018
  %9020 = vmatmul.f32.gmra.mxu0 %v9019
  %v9021 = vpop.f32.mrf.mxu0
  %v9022 = vadd.f32 %v8998, %v9021
  %9023 = vdwg.mxu0
  %9024 = vmatpush.msra.mxu0 0.0
  %9025 = vmatpush.msra.mxu0 0.0
  %9026 = vmatpush.msra.mxu0 0.0
  %9027 = vmatpush.msra.mxu0 0.0
  %9028 = vmatpush.msra.mxu0 0.0
  %9029 = vmatpush.msra.mxu0 0.0
  %9030 = vmatpush.msra.mxu0 0.0
  %9031 = vmatpush.msra.mxu0 0.0
  %9032 = vmatpush.msra.mxu0 0.0
  %9033 = vmatpush.msra.mxu0 0.0
  %9034 = vmatpush.msra.mxu0 0.0
  %9035 = vmatpush.msra.mxu0 0.0
  %9036 = vmatpush.msra.mxu0 0.0
  %9037 = vmatpush.msra.mxu0 0.0
  %9038 = vmatpush.msra.mxu0 0.0
  %v9039 = vand.u32 %v8508, 4294901760
  %9040 = vmatpush.msra.mxu0 %v9039
  %v9041 = vand.u32 %v8500, 4294901760
  %v9042 = vsub.f32 %v8500, %v9041
  %v9043 = vand.u32 %v9042, 4294901760
  %9044 = vmatmul.f32.gmra.mxu0 %v9043
  %v9045 = vpop.f32.mrf.mxu0
  %v9046 = vadd.f32 %v9022, %v9045
  %9047 = vdwg.mxu0
  %9048 = vmatpush.msra.mxu0 0.0
  %9049 = vmatpush.msra.mxu0 0.0
  %9050 = vmatpush.msra.mxu0 0.0
  %9051 = vmatpush.msra.mxu0 0.0
  %9052 = vmatpush.msra.mxu0 0.0
  %9053 = vmatpush.msra.mxu0 0.0
  %9054 = vmatpush.msra.mxu0 0.0
  %9055 = vmatpush.msra.mxu0 0.0
  %9056 = vmatpush.msra.mxu0 0.0
  %9057 = vmatpush.msra.mxu0 0.0
  %9058 = vmatpush.msra.mxu0 0.0
  %9059 = vmatpush.msra.mxu0 0.0
  %9060 = vmatpush.msra.mxu0 0.0
  %9061 = vmatpush.msra.mxu0 0.0
  %9062 = vmatpush.msra.mxu0 0.0
  %v9063 = vand.u32 %v8508, 4294901760
  %v9064 = vsub.f32 %v8508, %v9063
  %v9065 = vand.u32 %v9064, 4294901760
  %9066 = vmatpush.msra.mxu0 %v9065
  %v9067 = vand.u32 %v8500, 4294901760
  %9068 = vmatmul.f32.gmra.mxu0 %v9067
  %v9069 = vpop.f32.mrf.mxu0
  %v9070 = vadd.f32 %v9046, %v9069
  %9071 = vdwg.mxu0
  %9072 = vmatpush.msra.mxu0 0.0
  %9073 = vmatpush.msra.mxu0 0.0
  %9074 = vmatpush.msra.mxu0 0.0
  %9075 = vmatpush.msra.mxu0 0.0
  %9076 = vmatpush.msra.mxu0 0.0
  %9077 = vmatpush.msra.mxu0 0.0
  %9078 = vmatpush.msra.mxu0 0.0
  %9079 = vmatpush.msra.mxu0 0.0
  %9080 = vmatpush.msra.mxu0 0.0
  %9081 = vmatpush.msra.mxu0 0.0
  %9082 = vmatpush.msra.mxu0 0.0
  %9083 = vmatpush.msra.mxu0 0.0
  %9084 = vmatpush.msra.mxu0 0.0
  %9085 = vmatpush.msra.mxu0 0.0
  %9086 = vmatpush.msra.mxu0 0.0
  %v9087 = vand.u32 %v8508, 4294901760
  %9088 = vmatpush.msra.mxu0 %v9087
  %v9089 = vand.u32 %v8500, 4294901760
  %9090 = vmatmul.f32.gmra.mxu0 %v9089
  %v9091 = vpop.f32.mrf.mxu0
  %v9092 = vadd.f32 %v9070, %v9091
  %9093 = vdwg.mxu0
  %v9094 = vadd.f32 %v8493, %v8654
  %v9095 = vadd.f32 %v8494, %v8800
  %v9096 = vadd.f32 %v8495, %v8946
  %v9097 = vadd.f32 %v8496, %v9092
  %9098 = vrot.lane.b32.xlu0 %v5994, 127
  %v9099 = vpop.permute.xlu0 %9098
  %9100 = vrot.lane.b32.xlu0 %v5995, 127
  %v9101 = vpop.permute.xlu0 %9100
  %9102 = vrot.lane.b32.xlu0 %v5996, 127
  %v9103 = vpop.permute.xlu0 %9102
  %9104 = vrot.lane.b32.xlu0 %v5997, 127
  %v9105 = vpop.permute.xlu0 %9104
  %v9106 = vsel %vm3365, %v9099, %v9101
  %v9107 = vsel %vm3365, %v9101, %v9103
  %v9108 = vsel %vm3365, %v9103, %v9105
  %v9114 = vsel %vm3365, %v9105, %v9099
  %v9115 = vsel %vm3383, %v9106, 0.0
  %v9116 = vsel %vm3384, %v9107, 0.0
  %v9117 = vsel %vm3385, %v9108, 0.0
  %v9118 = vsel %vm3386, %v9114, 0.0
  %s9119 = scalar_lea.vmem %s6, 20
  %v9120 = vld [vmem:[%s9119] sm:$0xf]
  %v9122 = vsel %vm251, %v9120, 0
  %v9125 = vsel %vm86, %v9115, 0
  %v9128 = vsel %vm86, %v9116, 0
  %v9131 = vsel %vm86, %v9117, 0
  %v9134 = vsel %vm86, %v9118, 0
  %9136 = vmatpush.msra.mxu0 0.0
  %9137 = vmatpush.msra.mxu0 0.0
  %9138 = vmatpush.msra.mxu0 0.0
  %9139 = vmatpush.msra.mxu0 0.0
  %9140 = vmatpush.msra.mxu0 0.0
  %9141 = vmatpush.msra.mxu0 0.0
  %9142 = vmatpush.msra.mxu0 0.0
  %9143 = vmatpush.msra.mxu0 0.0
  %9144 = vmatpush.msra.mxu0 0.0
  %9145 = vmatpush.msra.mxu0 0.0
  %9146 = vmatpush.msra.mxu0 0.0
  %9147 = vmatpush.msra.mxu0 0.0
  %9148 = vmatpush.msra.mxu0 0.0
  %9149 = vmatpush.msra.mxu0 0.0
  %9150 = vmatpush.msra.mxu0 0.0
  %v9151 = vand.u32 %v9125, 4294901760
  %9152 = vmatpush.msra.mxu0 %v9151
  %v9153 = vand.u32 %v9122, 4294901760
  %v9154 = vsub.f32 %v9122, %v9153
  %v9155 = vand.u32 %v9154, 4294901760
  %v9156 = vsub.f32 %v9154, %v9155
  %v9157 = vand.u32 %v9156, 4294901760
  %9158 = vmatmul.f32.gmra.mxu0 %v9157
  %v9159 = vpop.f32.mrf.mxu0
  %v9160 = vadd.f32 0.0, %v9159
  %9161 = vdwg.mxu0
  %9162 = vmatpush.msra.mxu0 0.0
  %9163 = vmatpush.msra.mxu0 0.0
  %9164 = vmatpush.msra.mxu0 0.0
  %9165 = vmatpush.msra.mxu0 0.0
  %9166 = vmatpush.msra.mxu0 0.0
  %9167 = vmatpush.msra.mxu0 0.0
  %9168 = vmatpush.msra.mxu0 0.0
  %9169 = vmatpush.msra.mxu0 0.0
  %9170 = vmatpush.msra.mxu0 0.0
  %9171 = vmatpush.msra.mxu0 0.0
  %9172 = vmatpush.msra.mxu0 0.0
  %9173 = vmatpush.msra.mxu0 0.0
  %9174 = vmatpush.msra.mxu0 0.0
  %9175 = vmatpush.msra.mxu0 0.0
  %9176 = vmatpush.msra.mxu0 0.0
  %v9177 = vand.u32 %v9125, 4294901760
  %v9178 = vsub.f32 %v9125, %v9177
  %v9179 = vand.u32 %v9178, 4294901760
  %v9180 = vsub.f32 %v9178, %v9179
  %v9181 = vand.u32 %v9180, 4294901760
  %9182 = vmatpush.msra.mxu0 %v9181
  %v9183 = vand.u32 %v9122, 4294901760
  %9184 = vmatmul.f32.gmra.mxu0 %v9183
  %v9185 = vpop.f32.mrf.mxu0
  %v9186 = vadd.f32 %v9160, %v9185
  %9187 = vdwg.mxu0
  %9188 = vmatpush.msra.mxu0 0.0
  %9189 = vmatpush.msra.mxu0 0.0
  %9190 = vmatpush.msra.mxu0 0.0
  %9191 = vmatpush.msra.mxu0 0.0
  %9192 = vmatpush.msra.mxu0 0.0
  %9193 = vmatpush.msra.mxu0 0.0
  %9194 = vmatpush.msra.mxu0 0.0
  %9195 = vmatpush.msra.mxu0 0.0
  %9196 = vmatpush.msra.mxu0 0.0
  %9197 = vmatpush.msra.mxu0 0.0
  %9198 = vmatpush.msra.mxu0 0.0
  %9199 = vmatpush.msra.mxu0 0.0
  %9200 = vmatpush.msra.mxu0 0.0
  %9201 = vmatpush.msra.mxu0 0.0
  %9202 = vmatpush.msra.mxu0 0.0
  %v9203 = vand.u32 %v9125, 4294901760
  %v9204 = vsub.f32 %v9125, %v9203
  %9205 = vmatpush.msra.mxu0 %v9204
  %v9206 = vand.u32 %v9122, 4294901760
  %v9207 = vsub.f32 %v9122, %v9206
  %9208 = vmatmul.f32.gmra.mxu0 %v9207
  %v9209 = vpop.f32.mrf.mxu0
  %v9210 = vadd.f32 %v9186, %v9209
  %9211 = vdwg.mxu0
  %9212 = vmatpush.msra.mxu0 0.0
  %9213 = vmatpush.msra.mxu0 0.0
  %9214 = vmatpush.msra.mxu0 0.0
  %9215 = vmatpush.msra.mxu0 0.0
  %9216 = vmatpush.msra.mxu0 0.0
  %9217 = vmatpush.msra.mxu0 0.0
  %9218 = vmatpush.msra.mxu0 0.0
  %9219 = vmatpush.msra.mxu0 0.0
  %9220 = vmatpush.msra.mxu0 0.0
  %9221 = vmatpush.msra.mxu0 0.0
  %9222 = vmatpush.msra.mxu0 0.0
  %9223 = vmatpush.msra.mxu0 0.0
  %9224 = vmatpush.msra.mxu0 0.0
  %9225 = vmatpush.msra.mxu0 0.0
  %9226 = vmatpush.msra.mxu0 0.0
  %v9227 = vand.u32 %v9125, 4294901760
  %9228 = vmatpush.msra.mxu0 %v9227
  %v9229 = vand.u32 %v9122, 4294901760
  %v9230 = vsub.f32 %v9122, %v9229
  %v9231 = vand.u32 %v9230, 4294901760
  %9232 = vmatmul.f32.gmra.mxu0 %v9231
  %v9233 = vpop.f32.mrf.mxu0
  %v9234 = vadd.f32 %v9210, %v9233
  %9235 = vdwg.mxu0
  %9236 = vmatpush.msra.mxu0 0.0
  %9237 = vmatpush.msra.mxu0 0.0
  %9238 = vmatpush.msra.mxu0 0.0
  %9239 = vmatpush.msra.mxu0 0.0
  %9240 = vmatpush.msra.mxu0 0.0
  %9241 = vmatpush.msra.mxu0 0.0
  %9242 = vmatpush.msra.mxu0 0.0
  %9243 = vmatpush.msra.mxu0 0.0
  %9244 = vmatpush.msra.mxu0 0.0
  %9245 = vmatpush.msra.mxu0 0.0
  %9246 = vmatpush.msra.mxu0 0.0
  %9247 = vmatpush.msra.mxu0 0.0
  %9248 = vmatpush.msra.mxu0 0.0
  %9249 = vmatpush.msra.mxu0 0.0
  %9250 = vmatpush.msra.mxu0 0.0
  %v9251 = vand.u32 %v9125, 4294901760
  %v9252 = vsub.f32 %v9125, %v9251
  %v9253 = vand.u32 %v9252, 4294901760
  %9254 = vmatpush.msra.mxu0 %v9253
  %v9255 = vand.u32 %v9122, 4294901760
  %9256 = vmatmul.f32.gmra.mxu0 %v9255
  %v9257 = vpop.f32.mrf.mxu0
  %v9258 = vadd.f32 %v9234, %v9257
  %9259 = vdwg.mxu0
  %9260 = vmatpush.msra.mxu0 0.0
  %9261 = vmatpush.msra.mxu0 0.0
  %9262 = vmatpush.msra.mxu0 0.0
  %9263 = vmatpush.msra.mxu0 0.0
  %9264 = vmatpush.msra.mxu0 0.0
  %9265 = vmatpush.msra.mxu0 0.0
  %9266 = vmatpush.msra.mxu0 0.0
  %9267 = vmatpush.msra.mxu0 0.0
  %9268 = vmatpush.msra.mxu0 0.0
  %9269 = vmatpush.msra.mxu0 0.0
  %9270 = vmatpush.msra.mxu0 0.0
  %9271 = vmatpush.msra.mxu0 0.0
  %9272 = vmatpush.msra.mxu0 0.0
  %9273 = vmatpush.msra.mxu0 0.0
  %9274 = vmatpush.msra.mxu0 0.0
  %v9275 = vand.u32 %v9125, 4294901760
  %9276 = vmatpush.msra.mxu0 %v9275
  %v9277 = vand.u32 %v9122, 4294901760
  %9278 = vmatmul.f32.gmra.mxu0 %v9277
  %v9279 = vpop.f32.mrf.mxu0
  %v9280 = vadd.f32 %v9258, %v9279
  %9281 = vdwg.mxu0
  %9282 = vmatpush.msra.mxu0 0.0
  %9283 = vmatpush.msra.mxu0 0.0
  %9284 = vmatpush.msra.mxu0 0.0
  %9285 = vmatpush.msra.mxu0 0.0
  %9286 = vmatpush.msra.mxu0 0.0
  %9287 = vmatpush.msra.mxu0 0.0
  %9288 = vmatpush.msra.mxu0 0.0
  %9289 = vmatpush.msra.mxu0 0.0
  %9290 = vmatpush.msra.mxu0 0.0
  %9291 = vmatpush.msra.mxu0 0.0
  %9292 = vmatpush.msra.mxu0 0.0
  %9293 = vmatpush.msra.mxu0 0.0
  %9294 = vmatpush.msra.mxu0 0.0
  %9295 = vmatpush.msra.mxu0 0.0
  %9296 = vmatpush.msra.mxu0 0.0
  %v9297 = vand.u32 %v9128, 4294901760
  %9298 = vmatpush.msra.mxu0 %v9297
  %v9299 = vand.u32 %v9122, 4294901760
  %v9300 = vsub.f32 %v9122, %v9299
  %v9301 = vand.u32 %v9300, 4294901760
  %v9302 = vsub.f32 %v9300, %v9301
  %v9303 = vand.u32 %v9302, 4294901760
  %9304 = vmatmul.f32.gmra.mxu0 %v9303
  %v9305 = vpop.f32.mrf.mxu0
  %v9306 = vadd.f32 0.0, %v9305
  %9307 = vdwg.mxu0
  %9308 = vmatpush.msra.mxu0 0.0
  %9309 = vmatpush.msra.mxu0 0.0
  %9310 = vmatpush.msra.mxu0 0.0
  %9311 = vmatpush.msra.mxu0 0.0
  %9312 = vmatpush.msra.mxu0 0.0
  %9313 = vmatpush.msra.mxu0 0.0
  %9314 = vmatpush.msra.mxu0 0.0
  %9315 = vmatpush.msra.mxu0 0.0
  %9316 = vmatpush.msra.mxu0 0.0
  %9317 = vmatpush.msra.mxu0 0.0
  %9318 = vmatpush.msra.mxu0 0.0
  %9319 = vmatpush.msra.mxu0 0.0
  %9320 = vmatpush.msra.mxu0 0.0
  %9321 = vmatpush.msra.mxu0 0.0
  %9322 = vmatpush.msra.mxu0 0.0
  %v9323 = vand.u32 %v9128, 4294901760
  %v9324 = vsub.f32 %v9128, %v9323
  %v9325 = vand.u32 %v9324, 4294901760
  %v9326 = vsub.f32 %v9324, %v9325
  %v9327 = vand.u32 %v9326, 4294901760
  %9328 = vmatpush.msra.mxu0 %v9327
  %v9329 = vand.u32 %v9122, 4294901760
  %9330 = vmatmul.f32.gmra.mxu0 %v9329
  %v9331 = vpop.f32.mrf.mxu0
  %v9332 = vadd.f32 %v9306, %v9331
  %9333 = vdwg.mxu0
  %9334 = vmatpush.msra.mxu0 0.0
  %9335 = vmatpush.msra.mxu0 0.0
  %9336 = vmatpush.msra.mxu0 0.0
  %9337 = vmatpush.msra.mxu0 0.0
  %9338 = vmatpush.msra.mxu0 0.0
  %9339 = vmatpush.msra.mxu0 0.0
  %9340 = vmatpush.msra.mxu0 0.0
  %9341 = vmatpush.msra.mxu0 0.0
  %9342 = vmatpush.msra.mxu0 0.0
  %9343 = vmatpush.msra.mxu0 0.0
  %9344 = vmatpush.msra.mxu0 0.0
  %9345 = vmatpush.msra.mxu0 0.0
  %9346 = vmatpush.msra.mxu0 0.0
  %9347 = vmatpush.msra.mxu0 0.0
  %9348 = vmatpush.msra.mxu0 0.0
  %v9349 = vand.u32 %v9128, 4294901760
  %v9350 = vsub.f32 %v9128, %v9349
  %9351 = vmatpush.msra.mxu0 %v9350
  %v9352 = vand.u32 %v9122, 4294901760
  %v9353 = vsub.f32 %v9122, %v9352
  %9354 = vmatmul.f32.gmra.mxu0 %v9353
  %v9355 = vpop.f32.mrf.mxu0
  %v9356 = vadd.f32 %v9332, %v9355
  %9357 = vdwg.mxu0
  %9358 = vmatpush.msra.mxu0 0.0
  %9359 = vmatpush.msra.mxu0 0.0
  %9360 = vmatpush.msra.mxu0 0.0
  %9361 = vmatpush.msra.mxu0 0.0
  %9362 = vmatpush.msra.mxu0 0.0
  %9363 = vmatpush.msra.mxu0 0.0
  %9364 = vmatpush.msra.mxu0 0.0
  %9365 = vmatpush.msra.mxu0 0.0
  %9366 = vmatpush.msra.mxu0 0.0
  %9367 = vmatpush.msra.mxu0 0.0
  %9368 = vmatpush.msra.mxu0 0.0
  %9369 = vmatpush.msra.mxu0 0.0
  %9370 = vmatpush.msra.mxu0 0.0
  %9371 = vmatpush.msra.mxu0 0.0
  %9372 = vmatpush.msra.mxu0 0.0
  %v9373 = vand.u32 %v9128, 4294901760
  %9374 = vmatpush.msra.mxu0 %v9373
  %v9375 = vand.u32 %v9122, 4294901760
  %v9376 = vsub.f32 %v9122, %v9375
  %v9377 = vand.u32 %v9376, 4294901760
  %9378 = vmatmul.f32.gmra.mxu0 %v9377
  %v9379 = vpop.f32.mrf.mxu0
  %v9380 = vadd.f32 %v9356, %v9379
  %9381 = vdwg.mxu0
  %9382 = vmatpush.msra.mxu0 0.0
  %9383 = vmatpush.msra.mxu0 0.0
  %9384 = vmatpush.msra.mxu0 0.0
  %9385 = vmatpush.msra.mxu0 0.0
  %9386 = vmatpush.msra.mxu0 0.0
  %9387 = vmatpush.msra.mxu0 0.0
  %9388 = vmatpush.msra.mxu0 0.0
  %9389 = vmatpush.msra.mxu0 0.0
  %9390 = vmatpush.msra.mxu0 0.0
  %9391 = vmatpush.msra.mxu0 0.0
  %9392 = vmatpush.msra.mxu0 0.0
  %9393 = vmatpush.msra.mxu0 0.0
  %9394 = vmatpush.msra.mxu0 0.0
  %9395 = vmatpush.msra.mxu0 0.0
  %9396 = vmatpush.msra.mxu0 0.0
  %v9397 = vand.u32 %v9128, 4294901760
  %v9398 = vsub.f32 %v9128, %v9397
  %v9399 = vand.u32 %v9398, 4294901760
  %9400 = vmatpush.msra.mxu0 %v9399
  %v9401 = vand.u32 %v9122, 4294901760
  %9402 = vmatmul.f32.gmra.mxu0 %v9401
  %v9403 = vpop.f32.mrf.mxu0
  %v9404 = vadd.f32 %v9380, %v9403
  %9405 = vdwg.mxu0
  %9406 = vmatpush.msra.mxu0 0.0
  %9407 = vmatpush.msra.mxu0 0.0
  %9408 = vmatpush.msra.mxu0 0.0
  %9409 = vmatpush.msra.mxu0 0.0
  %9410 = vmatpush.msra.mxu0 0.0
  %9411 = vmatpush.msra.mxu0 0.0
  %9412 = vmatpush.msra.mxu0 0.0
  %9413 = vmatpush.msra.mxu0 0.0
  %9414 = vmatpush.msra.mxu0 0.0
  %9415 = vmatpush.msra.mxu0 0.0
  %9416 = vmatpush.msra.mxu0 0.0
  %9417 = vmatpush.msra.mxu0 0.0
  %9418 = vmatpush.msra.mxu0 0.0
  %9419 = vmatpush.msra.mxu0 0.0
  %9420 = vmatpush.msra.mxu0 0.0
  %v9421 = vand.u32 %v9128, 4294901760
  %9422 = vmatpush.msra.mxu0 %v9421
  %v9423 = vand.u32 %v9122, 4294901760
  %9424 = vmatmul.f32.gmra.mxu0 %v9423
  %v9425 = vpop.f32.mrf.mxu0
  %v9426 = vadd.f32 %v9404, %v9425
  %9427 = vdwg.mxu0
  %9428 = vmatpush.msra.mxu0 0.0
  %9429 = vmatpush.msra.mxu0 0.0
  %9430 = vmatpush.msra.mxu0 0.0
  %9431 = vmatpush.msra.mxu0 0.0
  %9432 = vmatpush.msra.mxu0 0.0
  %9433 = vmatpush.msra.mxu0 0.0
  %9434 = vmatpush.msra.mxu0 0.0
  %9435 = vmatpush.msra.mxu0 0.0
  %9436 = vmatpush.msra.mxu0 0.0
  %9437 = vmatpush.msra.mxu0 0.0
  %9438 = vmatpush.msra.mxu0 0.0
  %9439 = vmatpush.msra.mxu0 0.0
  %9440 = vmatpush.msra.mxu0 0.0
  %9441 = vmatpush.msra.mxu0 0.0
  %9442 = vmatpush.msra.mxu0 0.0
  %v9443 = vand.u32 %v9131, 4294901760
  %9444 = vmatpush.msra.mxu0 %v9443
  %v9445 = vand.u32 %v9122, 4294901760
  %v9446 = vsub.f32 %v9122, %v9445
  %v9447 = vand.u32 %v9446, 4294901760
  %v9448 = vsub.f32 %v9446, %v9447
  %v9449 = vand.u32 %v9448, 4294901760
  %9450 = vmatmul.f32.gmra.mxu0 %v9449
  %v9451 = vpop.f32.mrf.mxu0
  %v9452 = vadd.f32 0.0, %v9451
  %9453 = vdwg.mxu0
  %9454 = vmatpush.msra.mxu0 0.0
  %9455 = vmatpush.msra.mxu0 0.0
  %9456 = vmatpush.msra.mxu0 0.0
  %9457 = vmatpush.msra.mxu0 0.0
  %9458 = vmatpush.msra.mxu0 0.0
  %9459 = vmatpush.msra.mxu0 0.0
  %9460 = vmatpush.msra.mxu0 0.0
  %9461 = vmatpush.msra.mxu0 0.0
  %9462 = vmatpush.msra.mxu0 0.0
  %9463 = vmatpush.msra.mxu0 0.0
  %9464 = vmatpush.msra.mxu0 0.0
  %9465 = vmatpush.msra.mxu0 0.0
  %9466 = vmatpush.msra.mxu0 0.0
  %9467 = vmatpush.msra.mxu0 0.0
  %9468 = vmatpush.msra.mxu0 0.0
  %v9469 = vand.u32 %v9131, 4294901760
  %v9470 = vsub.f32 %v9131, %v9469
  %v9471 = vand.u32 %v9470, 4294901760
  %v9472 = vsub.f32 %v9470, %v9471
  %v9473 = vand.u32 %v9472, 4294901760
  %9474 = vmatpush.msra.mxu0 %v9473
  %v9475 = vand.u32 %v9122, 4294901760
  %9476 = vmatmul.f32.gmra.mxu0 %v9475
  %v9477 = vpop.f32.mrf.mxu0
  %v9478 = vadd.f32 %v9452, %v9477
  %9479 = vdwg.mxu0
  %9480 = vmatpush.msra.mxu0 0.0
  %9481 = vmatpush.msra.mxu0 0.0
  %9482 = vmatpush.msra.mxu0 0.0
  %9483 = vmatpush.msra.mxu0 0.0
  %9484 = vmatpush.msra.mxu0 0.0
  %9485 = vmatpush.msra.mxu0 0.0
  %9486 = vmatpush.msra.mxu0 0.0
  %9487 = vmatpush.msra.mxu0 0.0
  %9488 = vmatpush.msra.mxu0 0.0
  %9489 = vmatpush.msra.mxu0 0.0
  %9490 = vmatpush.msra.mxu0 0.0
  %9491 = vmatpush.msra.mxu0 0.0
  %9492 = vmatpush.msra.mxu0 0.0
  %9493 = vmatpush.msra.mxu0 0.0
  %9494 = vmatpush.msra.mxu0 0.0
  %v9495 = vand.u32 %v9131, 4294901760
  %v9496 = vsub.f32 %v9131, %v9495
  %9497 = vmatpush.msra.mxu0 %v9496
  %v9498 = vand.u32 %v9122, 4294901760
  %v9499 = vsub.f32 %v9122, %v9498
  %9500 = vmatmul.f32.gmra.mxu0 %v9499
  %v9501 = vpop.f32.mrf.mxu0
  %v9502 = vadd.f32 %v9478, %v9501
  %9503 = vdwg.mxu0
  %9504 = vmatpush.msra.mxu0 0.0
  %9505 = vmatpush.msra.mxu0 0.0
  %9506 = vmatpush.msra.mxu0 0.0
  %9507 = vmatpush.msra.mxu0 0.0
  %9508 = vmatpush.msra.mxu0 0.0
  %9509 = vmatpush.msra.mxu0 0.0
  %9510 = vmatpush.msra.mxu0 0.0
  %9511 = vmatpush.msra.mxu0 0.0
  %9512 = vmatpush.msra.mxu0 0.0
  %9513 = vmatpush.msra.mxu0 0.0
  %9514 = vmatpush.msra.mxu0 0.0
  %9515 = vmatpush.msra.mxu0 0.0
  %9516 = vmatpush.msra.mxu0 0.0
  %9517 = vmatpush.msra.mxu0 0.0
  %9518 = vmatpush.msra.mxu0 0.0
  %v9519 = vand.u32 %v9131, 4294901760
  %9520 = vmatpush.msra.mxu0 %v9519
  %v9521 = vand.u32 %v9122, 4294901760
  %v9522 = vsub.f32 %v9122, %v9521
  %v9523 = vand.u32 %v9522, 4294901760
  %9524 = vmatmul.f32.gmra.mxu0 %v9523
  %v9525 = vpop.f32.mrf.mxu0
  %v9526 = vadd.f32 %v9502, %v9525
  %9527 = vdwg.mxu0
  %9528 = vmatpush.msra.mxu0 0.0
  %9529 = vmatpush.msra.mxu0 0.0
  %9530 = vmatpush.msra.mxu0 0.0
  %9531 = vmatpush.msra.mxu0 0.0
  %9532 = vmatpush.msra.mxu0 0.0
  %9533 = vmatpush.msra.mxu0 0.0
  %9534 = vmatpush.msra.mxu0 0.0
  %9535 = vmatpush.msra.mxu0 0.0
  %9536 = vmatpush.msra.mxu0 0.0
  %9537 = vmatpush.msra.mxu0 0.0
  %9538 = vmatpush.msra.mxu0 0.0
  %9539 = vmatpush.msra.mxu0 0.0
  %9540 = vmatpush.msra.mxu0 0.0
  %9541 = vmatpush.msra.mxu0 0.0
  %9542 = vmatpush.msra.mxu0 0.0
  %v9543 = vand.u32 %v9131, 4294901760
  %v9544 = vsub.f32 %v9131, %v9543
  %v9545 = vand.u32 %v9544, 4294901760
  %9546 = vmatpush.msra.mxu0 %v9545
  %v9547 = vand.u32 %v9122, 4294901760
  %9548 = vmatmul.f32.gmra.mxu0 %v9547
  %v9549 = vpop.f32.mrf.mxu0
  %v9550 = vadd.f32 %v9526, %v9549
  %9551 = vdwg.mxu0
  %9552 = vmatpush.msra.mxu0 0.0
  %9553 = vmatpush.msra.mxu0 0.0
  %9554 = vmatpush.msra.mxu0 0.0
  %9555 = vmatpush.msra.mxu0 0.0
  %9556 = vmatpush.msra.mxu0 0.0
  %9557 = vmatpush.msra.mxu0 0.0
  %9558 = vmatpush.msra.mxu0 0.0
  %9559 = vmatpush.msra.mxu0 0.0
  %9560 = vmatpush.msra.mxu0 0.0
  %9561 = vmatpush.msra.mxu0 0.0
  %9562 = vmatpush.msra.mxu0 0.0
  %9563 = vmatpush.msra.mxu0 0.0
  %9564 = vmatpush.msra.mxu0 0.0
  %9565 = vmatpush.msra.mxu0 0.0
  %9566 = vmatpush.msra.mxu0 0.0
  %v9567 = vand.u32 %v9131, 4294901760
  %9568 = vmatpush.msra.mxu0 %v9567
  %v9569 = vand.u32 %v9122, 4294901760
  %9570 = vmatmul.f32.gmra.mxu0 %v9569
  %v9571 = vpop.f32.mrf.mxu0
  %v9572 = vadd.f32 %v9550, %v9571
  %9573 = vdwg.mxu0
  %9574 = vmatpush.msra.mxu0 0.0
  %9575 = vmatpush.msra.mxu0 0.0
  %9576 = vmatpush.msra.mxu0 0.0
  %9577 = vmatpush.msra.mxu0 0.0
  %9578 = vmatpush.msra.mxu0 0.0
  %9579 = vmatpush.msra.mxu0 0.0
  %9580 = vmatpush.msra.mxu0 0.0
  %9581 = vmatpush.msra.mxu0 0.0
  %9582 = vmatpush.msra.mxu0 0.0
  %9583 = vmatpush.msra.mxu0 0.0
  %9584 = vmatpush.msra.mxu0 0.0
  %9585 = vmatpush.msra.mxu0 0.0
  %9586 = vmatpush.msra.mxu0 0.0
  %9587 = vmatpush.msra.mxu0 0.0
  %9588 = vmatpush.msra.mxu0 0.0
  %v9589 = vand.u32 %v9134, 4294901760
  %9590 = vmatpush.msra.mxu0 %v9589
  %v9591 = vand.u32 %v9122, 4294901760
  %v9592 = vsub.f32 %v9122, %v9591
  %v9593 = vand.u32 %v9592, 4294901760
  %v9594 = vsub.f32 %v9592, %v9593
  %v9595 = vand.u32 %v9594, 4294901760
  %9596 = vmatmul.f32.gmra.mxu0 %v9595
  %v9597 = vpop.f32.mrf.mxu0
  %v9598 = vadd.f32 0.0, %v9597
  %9599 = vdwg.mxu0
  %9600 = vmatpush.msra.mxu0 0.0
  %9601 = vmatpush.msra.mxu0 0.0
  %9602 = vmatpush.msra.mxu0 0.0
  %9603 = vmatpush.msra.mxu0 0.0
  %9604 = vmatpush.msra.mxu0 0.0
  %9605 = vmatpush.msra.mxu0 0.0
  %9606 = vmatpush.msra.mxu0 0.0
  %9607 = vmatpush.msra.mxu0 0.0
  %9608 = vmatpush.msra.mxu0 0.0
  %9609 = vmatpush.msra.mxu0 0.0
  %9610 = vmatpush.msra.mxu0 0.0
  %9611 = vmatpush.msra.mxu0 0.0
  %9612 = vmatpush.msra.mxu0 0.0
  %9613 = vmatpush.msra.mxu0 0.0
  %9614 = vmatpush.msra.mxu0 0.0
  %v9615 = vand.u32 %v9134, 4294901760
  %v9616 = vsub.f32 %v9134, %v9615
  %v9617 = vand.u32 %v9616, 4294901760
  %v9618 = vsub.f32 %v9616, %v9617
  %v9619 = vand.u32 %v9618, 4294901760
  %9620 = vmatpush.msra.mxu0 %v9619
  %v9621 = vand.u32 %v9122, 4294901760
  %9622 = vmatmul.f32.gmra.mxu0 %v9621
  %v9623 = vpop.f32.mrf.mxu0
  %v9624 = vadd.f32 %v9598, %v9623
  %9625 = vdwg.mxu0
  %9626 = vmatpush.msra.mxu0 0.0
  %9627 = vmatpush.msra.mxu0 0.0
  %9628 = vmatpush.msra.mxu0 0.0
  %9629 = vmatpush.msra.mxu0 0.0
  %9630 = vmatpush.msra.mxu0 0.0
  %9631 = vmatpush.msra.mxu0 0.0
  %9632 = vmatpush.msra.mxu0 0.0
  %9633 = vmatpush.msra.mxu0 0.0
  %9634 = vmatpush.msra.mxu0 0.0
  %9635 = vmatpush.msra.mxu0 0.0
  %9636 = vmatpush.msra.mxu0 0.0
  %9637 = vmatpush.msra.mxu0 0.0
  %9638 = vmatpush.msra.mxu0 0.0
  %9639 = vmatpush.msra.mxu0 0.0
  %9640 = vmatpush.msra.mxu0 0.0
  %v9641 = vand.u32 %v9134, 4294901760
  %v9642 = vsub.f32 %v9134, %v9641
  %9643 = vmatpush.msra.mxu0 %v9642
  %v9644 = vand.u32 %v9122, 4294901760
  %v9645 = vsub.f32 %v9122, %v9644
  %9646 = vmatmul.f32.gmra.mxu0 %v9645
  %v9647 = vpop.f32.mrf.mxu0
  %v9648 = vadd.f32 %v9624, %v9647
  %9649 = vdwg.mxu0
  %9650 = vmatpush.msra.mxu0 0.0
  %9651 = vmatpush.msra.mxu0 0.0
  %9652 = vmatpush.msra.mxu0 0.0
  %9653 = vmatpush.msra.mxu0 0.0
  %9654 = vmatpush.msra.mxu0 0.0
  %9655 = vmatpush.msra.mxu0 0.0
  %9656 = vmatpush.msra.mxu0 0.0
  %9657 = vmatpush.msra.mxu0 0.0
  %9658 = vmatpush.msra.mxu0 0.0
  %9659 = vmatpush.msra.mxu0 0.0
  %9660 = vmatpush.msra.mxu0 0.0
  %9661 = vmatpush.msra.mxu0 0.0
  %9662 = vmatpush.msra.mxu0 0.0
  %9663 = vmatpush.msra.mxu0 0.0
  %9664 = vmatpush.msra.mxu0 0.0
  %v9665 = vand.u32 %v9134, 4294901760
  %9666 = vmatpush.msra.mxu0 %v9665
  %v9667 = vand.u32 %v9122, 4294901760
  %v9668 = vsub.f32 %v9122, %v9667
  %v9669 = vand.u32 %v9668, 4294901760
  %9670 = vmatmul.f32.gmra.mxu0 %v9669
  %v9671 = vpop.f32.mrf.mxu0
  %v9672 = vadd.f32 %v9648, %v9671
  %9673 = vdwg.mxu0
  %9674 = vmatpush.msra.mxu0 0.0
  %9675 = vmatpush.msra.mxu0 0.0
  %9676 = vmatpush.msra.mxu0 0.0
  %9677 = vmatpush.msra.mxu0 0.0
  %9678 = vmatpush.msra.mxu0 0.0
  %9679 = vmatpush.msra.mxu0 0.0
  %9680 = vmatpush.msra.mxu0 0.0
  %9681 = vmatpush.msra.mxu0 0.0
  %9682 = vmatpush.msra.mxu0 0.0
  %9683 = vmatpush.msra.mxu0 0.0
  %9684 = vmatpush.msra.mxu0 0.0
  %9685 = vmatpush.msra.mxu0 0.0
  %9686 = vmatpush.msra.mxu0 0.0
  %9687 = vmatpush.msra.mxu0 0.0
  %9688 = vmatpush.msra.mxu0 0.0
  %v9689 = vand.u32 %v9134, 4294901760
  %v9690 = vsub.f32 %v9134, %v9689
  %v9691 = vand.u32 %v9690, 4294901760
  %9692 = vmatpush.msra.mxu0 %v9691
  %v9693 = vand.u32 %v9122, 4294901760
  %9694 = vmatmul.f32.gmra.mxu0 %v9693
  %v9695 = vpop.f32.mrf.mxu0
  %v9696 = vadd.f32 %v9672, %v9695
  %9697 = vdwg.mxu0
  %9698 = vmatpush.msra.mxu0 0.0
  %9699 = vmatpush.msra.mxu0 0.0
  %9700 = vmatpush.msra.mxu0 0.0
  %9701 = vmatpush.msra.mxu0 0.0
  %9702 = vmatpush.msra.mxu0 0.0
  %9703 = vmatpush.msra.mxu0 0.0
  %9704 = vmatpush.msra.mxu0 0.0
  %9705 = vmatpush.msra.mxu0 0.0
  %9706 = vmatpush.msra.mxu0 0.0
  %9707 = vmatpush.msra.mxu0 0.0
  %9708 = vmatpush.msra.mxu0 0.0
  %9709 = vmatpush.msra.mxu0 0.0
  %9710 = vmatpush.msra.mxu0 0.0
  %9711 = vmatpush.msra.mxu0 0.0
  %9712 = vmatpush.msra.mxu0 0.0
  %v9713 = vand.u32 %v9134, 4294901760
  %9714 = vmatpush.msra.mxu0 %v9713
  %v9715 = vand.u32 %v9122, 4294901760
  %9716 = vmatmul.f32.gmra.mxu0 %v9715
  %v9717 = vpop.f32.mrf.mxu0
  %v9718 = vadd.f32 %v9696, %v9717
  %9719 = vdwg.mxu0
  %v9720 = vadd.f32 %v9094, %v9280
  %v9721 = vadd.f32 %v9095, %v9426
  %v9722 = vadd.f32 %v9096, %v9572
  %v9723 = vadd.f32 %v9097, %v9718
  %9724 = vrot.lane.b32.xlu0 %v5994, 113
  %v9725 = vpop.permute.xlu0 %9724
  %9726 = vrot.lane.b32.xlu0 %v5995, 113
  %v9727 = vpop.permute.xlu0 %9726
  %9728 = vrot.lane.b32.xlu0 %v5996, 113
  %v9729 = vpop.permute.xlu0 %9728
  %9730 = vrot.lane.b32.xlu0 %v5997, 113
  %v9731 = vpop.permute.xlu0 %9730
  %v9732 = vsel %vm4011, %v9725, %v9727
  %v9733 = vsel %vm4011, %v9727, %v9729
  %v9734 = vsel %vm4011, %v9729, %v9731
  %v9740 = vsel %vm4011, %v9731, %v9725
  %v9741 = vsel %vm4029, %v9732, 0.0
  %v9742 = vsel %vm4030, %v9733, 0.0
  %v9743 = vsel %vm4031, %v9734, 0.0
  %v9744 = vsel %vm4032, %v9740, 0.0
  %s9745 = scalar_lea.vmem %s6, 24
  %v9746 = vld [vmem:[%s9745] sm:$0xf]
  %v9748 = vsel %vm251, %v9746, 0
  %v9751 = vsel %vm86, %v9741, 0
  %v9754 = vsel %vm86, %v9742, 0
  %v9757 = vsel %vm86, %v9743, 0
  %v9760 = vsel %vm86, %v9744, 0
  %9762 = vmatpush.msra.mxu0 0.0
  %9763 = vmatpush.msra.mxu0 0.0
  %9764 = vmatpush.msra.mxu0 0.0
  %9765 = vmatpush.msra.mxu0 0.0
  %9766 = vmatpush.msra.mxu0 0.0
  %9767 = vmatpush.msra.mxu0 0.0
  %9768 = vmatpush.msra.mxu0 0.0
  %9769 = vmatpush.msra.mxu0 0.0
  %9770 = vmatpush.msra.mxu0 0.0
  %9771 = vmatpush.msra.mxu0 0.0
  %9772 = vmatpush.msra.mxu0 0.0
  %9773 = vmatpush.msra.mxu0 0.0
  %9774 = vmatpush.msra.mxu0 0.0
  %9775 = vmatpush.msra.mxu0 0.0
  %9776 = vmatpush.msra.mxu0 0.0
  %v9777 = vand.u32 %v9751, 4294901760
  %9778 = vmatpush.msra.mxu0 %v9777
  %v9779 = vand.u32 %v9748, 4294901760
  %v9780 = vsub.f32 %v9748, %v9779
  %v9781 = vand.u32 %v9780, 4294901760
  %v9782 = vsub.f32 %v9780, %v9781
  %v9783 = vand.u32 %v9782, 4294901760
  %9784 = vmatmul.f32.gmra.mxu0 %v9783
  %v9785 = vpop.f32.mrf.mxu0
  %v9786 = vadd.f32 0.0, %v9785
  %9787 = vdwg.mxu0
  %9788 = vmatpush.msra.mxu0 0.0
  %9789 = vmatpush.msra.mxu0 0.0
  %9790 = vmatpush.msra.mxu0 0.0
  %9791 = vmatpush.msra.mxu0 0.0
  %9792 = vmatpush.msra.mxu0 0.0
  %9793 = vmatpush.msra.mxu0 0.0
  %9794 = vmatpush.msra.mxu0 0.0
  %9795 = vmatpush.msra.mxu0 0.0
  %9796 = vmatpush.msra.mxu0 0.0
  %9797 = vmatpush.msra.mxu0 0.0
  %9798 = vmatpush.msra.mxu0 0.0
  %9799 = vmatpush.msra.mxu0 0.0
  %9800 = vmatpush.msra.mxu0 0.0
  %9801 = vmatpush.msra.mxu0 0.0
  %9802 = vmatpush.msra.mxu0 0.0
  %v9803 = vand.u32 %v9751, 4294901760
  %v9804 = vsub.f32 %v9751, %v9803
  %v9805 = vand.u32 %v9804, 4294901760
  %v9806 = vsub.f32 %v9804, %v9805
  %v9807 = vand.u32 %v9806, 4294901760
  %9808 = vmatpush.msra.mxu0 %v9807
  %v9809 = vand.u32 %v9748, 4294901760
  %9810 = vmatmul.f32.gmra.mxu0 %v9809
  %v9811 = vpop.f32.mrf.mxu0
  %v9812 = vadd.f32 %v9786, %v9811
  %9813 = vdwg.mxu0
  %9814 = vmatpush.msra.mxu0 0.0
  %9815 = vmatpush.msra.mxu0 0.0
  %9816 = vmatpush.msra.mxu0 0.0
  %9817 = vmatpush.msra.mxu0 0.0
  %9818 = vmatpush.msra.mxu0 0.0
  %9819 = vmatpush.msra.mxu0 0.0
  %9820 = vmatpush.msra.mxu0 0.0
  %9821 = vmatpush.msra.mxu0 0.0
  %9822 = vmatpush.msra.mxu0 0.0
  %9823 = vmatpush.msra.mxu0 0.0
  %9824 = vmatpush.msra.mxu0 0.0
  %9825 = vmatpush.msra.mxu0 0.0
  %9826 = vmatpush.msra.mxu0 0.0
  %9827 = vmatpush.msra.mxu0 0.0
  %9828 = vmatpush.msra.mxu0 0.0
  %v9829 = vand.u32 %v9751, 4294901760
  %v9830 = vsub.f32 %v9751, %v9829
  %9831 = vmatpush.msra.mxu0 %v9830
  %v9832 = vand.u32 %v9748, 4294901760
  %v9833 = vsub.f32 %v9748, %v9832
  %9834 = vmatmul.f32.gmra.mxu0 %v9833
  %v9835 = vpop.f32.mrf.mxu0
  %v9836 = vadd.f32 %v9812, %v9835
  %9837 = vdwg.mxu0
  %9838 = vmatpush.msra.mxu0 0.0
  %9839 = vmatpush.msra.mxu0 0.0
  %9840 = vmatpush.msra.mxu0 0.0
  %9841 = vmatpush.msra.mxu0 0.0
  %9842 = vmatpush.msra.mxu0 0.0
  %9843 = vmatpush.msra.mxu0 0.0
  %9844 = vmatpush.msra.mxu0 0.0
  %9845 = vmatpush.msra.mxu0 0.0
  %9846 = vmatpush.msra.mxu0 0.0
  %9847 = vmatpush.msra.mxu0 0.0
  %9848 = vmatpush.msra.mxu0 0.0
  %9849 = vmatpush.msra.mxu0 0.0
  %9850 = vmatpush.msra.mxu0 0.0
  %9851 = vmatpush.msra.mxu0 0.0
  %9852 = vmatpush.msra.mxu0 0.0
  %v9853 = vand.u32 %v9751, 4294901760
  %9854 = vmatpush.msra.mxu0 %v9853
  %v9855 = vand.u32 %v9748, 4294901760
  %v9856 = vsub.f32 %v9748, %v9855
  %v9857 = vand.u32 %v9856, 4294901760
  %9858 = vmatmul.f32.gmra.mxu0 %v9857
  %v9859 = vpop.f32.mrf.mxu0
  %v9860 = vadd.f32 %v9836, %v9859
  %9861 = vdwg.mxu0
  %9862 = vmatpush.msra.mxu0 0.0
  %9863 = vmatpush.msra.mxu0 0.0
  %9864 = vmatpush.msra.mxu0 0.0
  %9865 = vmatpush.msra.mxu0 0.0
  %9866 = vmatpush.msra.mxu0 0.0
  %9867 = vmatpush.msra.mxu0 0.0
  %9868 = vmatpush.msra.mxu0 0.0
  %9869 = vmatpush.msra.mxu0 0.0
  %9870 = vmatpush.msra.mxu0 0.0
  %9871 = vmatpush.msra.mxu0 0.0
  %9872 = vmatpush.msra.mxu0 0.0
  %9873 = vmatpush.msra.mxu0 0.0
  %9874 = vmatpush.msra.mxu0 0.0
  %9875 = vmatpush.msra.mxu0 0.0
  %9876 = vmatpush.msra.mxu0 0.0
  %v9877 = vand.u32 %v9751, 4294901760
  %v9878 = vsub.f32 %v9751, %v9877
  %v9879 = vand.u32 %v9878, 4294901760
  %9880 = vmatpush.msra.mxu0 %v9879
  %v9881 = vand.u32 %v9748, 4294901760
  %9882 = vmatmul.f32.gmra.mxu0 %v9881
  %v9883 = vpop.f32.mrf.mxu0
  %v9884 = vadd.f32 %v9860, %v9883
  %9885 = vdwg.mxu0
  %9886 = vmatpush.msra.mxu0 0.0
  %9887 = vmatpush.msra.mxu0 0.0
  %9888 = vmatpush.msra.mxu0 0.0
  %9889 = vmatpush.msra.mxu0 0.0
  %9890 = vmatpush.msra.mxu0 0.0
  %9891 = vmatpush.msra.mxu0 0.0
  %9892 = vmatpush.msra.mxu0 0.0
  %9893 = vmatpush.msra.mxu0 0.0
  %9894 = vmatpush.msra.mxu0 0.0
  %9895 = vmatpush.msra.mxu0 0.0
  %9896 = vmatpush.msra.mxu0 0.0
  %9897 = vmatpush.msra.mxu0 0.0
  %9898 = vmatpush.msra.mxu0 0.0
  %9899 = vmatpush.msra.mxu0 0.0
  %9900 = vmatpush.msra.mxu0 0.0
  %v9901 = vand.u32 %v9751, 4294901760
  %9902 = vmatpush.msra.mxu0 %v9901
  %v9903 = vand.u32 %v9748, 4294901760
  %9904 = vmatmul.f32.gmra.mxu0 %v9903
  %v9905 = vpop.f32.mrf.mxu0
  %v9906 = vadd.f32 %v9884, %v9905
  %9907 = vdwg.mxu0
  %9908 = vmatpush.msra.mxu0 0.0
  %9909 = vmatpush.msra.mxu0 0.0
  %9910 = vmatpush.msra.mxu0 0.0
  %9911 = vmatpush.msra.mxu0 0.0
  %9912 = vmatpush.msra.mxu0 0.0
  %9913 = vmatpush.msra.mxu0 0.0
  %9914 = vmatpush.msra.mxu0 0.0
  %9915 = vmatpush.msra.mxu0 0.0
  %9916 = vmatpush.msra.mxu0 0.0
  %9917 = vmatpush.msra.mxu0 0.0
  %9918 = vmatpush.msra.mxu0 0.0
  %9919 = vmatpush.msra.mxu0 0.0
  %9920 = vmatpush.msra.mxu0 0.0
  %9921 = vmatpush.msra.mxu0 0.0
  %9922 = vmatpush.msra.mxu0 0.0
  %v9923 = vand.u32 %v9754, 4294901760
  %9924 = vmatpush.msra.mxu0 %v9923
  %v9925 = vand.u32 %v9748, 4294901760
  %v9926 = vsub.f32 %v9748, %v9925
  %v9927 = vand.u32 %v9926, 4294901760
  %v9928 = vsub.f32 %v9926, %v9927
  %v9929 = vand.u32 %v9928, 4294901760
  %9930 = vmatmul.f32.gmra.mxu0 %v9929
  %v9931 = vpop.f32.mrf.mxu0
  %v9932 = vadd.f32 0.0, %v9931
  %9933 = vdwg.mxu0
  %9934 = vmatpush.msra.mxu0 0.0
  %9935 = vmatpush.msra.mxu0 0.0
  %9936 = vmatpush.msra.mxu0 0.0
  %9937 = vmatpush.msra.mxu0 0.0
  %9938 = vmatpush.msra.mxu0 0.0
  %9939 = vmatpush.msra.mxu0 0.0
  %9940 = vmatpush.msra.mxu0 0.0
  %9941 = vmatpush.msra.mxu0 0.0
  %9942 = vmatpush.msra.mxu0 0.0
  %9943 = vmatpush.msra.mxu0 0.0
  %9944 = vmatpush.msra.mxu0 0.0
  %9945 = vmatpush.msra.mxu0 0.0
  %9946 = vmatpush.msra.mxu0 0.0
  %9947 = vmatpush.msra.mxu0 0.0
  %9948 = vmatpush.msra.mxu0 0.0
  %v9949 = vand.u32 %v9754, 4294901760
  %v9950 = vsub.f32 %v9754, %v9949
  %v9951 = vand.u32 %v9950, 4294901760
  %v9952 = vsub.f32 %v9950, %v9951
  %v9953 = vand.u32 %v9952, 4294901760
  %9954 = vmatpush.msra.mxu0 %v9953
  %v9955 = vand.u32 %v9748, 4294901760
  %9956 = vmatmul.f32.gmra.mxu0 %v9955
  %v9957 = vpop.f32.mrf.mxu0
  %v9958 = vadd.f32 %v9932, %v9957
  %9959 = vdwg.mxu0
  %9960 = vmatpush.msra.mxu0 0.0
  %9961 = vmatpush.msra.mxu0 0.0
  %9962 = vmatpush.msra.mxu0 0.0
  %9963 = vmatpush.msra.mxu0 0.0
  %9964 = vmatpush.msra.mxu0 0.0
  %9965 = vmatpush.msra.mxu0 0.0
  %9966 = vmatpush.msra.mxu0 0.0
  %9967 = vmatpush.msra.mxu0 0.0
  %9968 = vmatpush.msra.mxu0 0.0
  %9969 = vmatpush.msra.mxu0 0.0
  %9970 = vmatpush.msra.mxu0 0.0
  %9971 = vmatpush.msra.mxu0 0.0
  %9972 = vmatpush.msra.mxu0 0.0
  %9973 = vmatpush.msra.mxu0 0.0
  %9974 = vmatpush.msra.mxu0 0.0
  %v9975 = vand.u32 %v9754, 4294901760
  %v9976 = vsub.f32 %v9754, %v9975
  %9977 = vmatpush.msra.mxu0 %v9976
  %v9978 = vand.u32 %v9748, 4294901760
  %v9979 = vsub.f32 %v9748, %v9978
  %9980 = vmatmul.f32.gmra.mxu0 %v9979
  %v9981 = vpop.f32.mrf.mxu0
  %v9982 = vadd.f32 %v9958, %v9981
  %9983 = vdwg.mxu0
  %9984 = vmatpush.msra.mxu0 0.0
  %9985 = vmatpush.msra.mxu0 0.0
  %9986 = vmatpush.msra.mxu0 0.0
  %9987 = vmatpush.msra.mxu0 0.0
  %9988 = vmatpush.msra.mxu0 0.0
  %9989 = vmatpush.msra.mxu0 0.0
  %9990 = vmatpush.msra.mxu0 0.0
  %9991 = vmatpush.msra.mxu0 0.0
  %9992 = vmatpush.msra.mxu0 0.0
  %9993 = vmatpush.msra.mxu0 0.0
  %9994 = vmatpush.msra.mxu0 0.0
  %9995 = vmatpush.msra.mxu0 0.0
  %9996 = vmatpush.msra.mxu0 0.0
  %9997 = vmatpush.msra.mxu0 0.0
  %9998 = vmatpush.msra.mxu0 0.0
  %v9999 = vand.u32 %v9754, 4294901760
  %10000 = vmatpush.msra.mxu0 %v9999
  %v10001 = vand.u32 %v9748, 4294901760
  %v10002 = vsub.f32 %v9748, %v10001
  %v10003 = vand.u32 %v10002, 4294901760
  %10004 = vmatmul.f32.gmra.mxu0 %v10003
  %v10005 = vpop.f32.mrf.mxu0
  %v10006 = vadd.f32 %v9982, %v10005
  %10007 = vdwg.mxu0
  %10008 = vmatpush.msra.mxu0 0.0
  %10009 = vmatpush.msra.mxu0 0.0
  %10010 = vmatpush.msra.mxu0 0.0
  %10011 = vmatpush.msra.mxu0 0.0
  %10012 = vmatpush.msra.mxu0 0.0
  %10013 = vmatpush.msra.mxu0 0.0
  %10014 = vmatpush.msra.mxu0 0.0
  %10015 = vmatpush.msra.mxu0 0.0
  %10016 = vmatpush.msra.mxu0 0.0
  %10017 = vmatpush.msra.mxu0 0.0
  %10018 = vmatpush.msra.mxu0 0.0
  %10019 = vmatpush.msra.mxu0 0.0
  %10020 = vmatpush.msra.mxu0 0.0
  %10021 = vmatpush.msra.mxu0 0.0
  %10022 = vmatpush.msra.mxu0 0.0
  %v10023 = vand.u32 %v9754, 4294901760
  %v10024 = vsub.f32 %v9754, %v10023
  %v10025 = vand.u32 %v10024, 4294901760
  %10026 = vmatpush.msra.mxu0 %v10025
  %v10027 = vand.u32 %v9748, 4294901760
  %10028 = vmatmul.f32.gmra.mxu0 %v10027
  %v10029 = vpop.f32.mrf.mxu0
  %v10030 = vadd.f32 %v10006, %v10029
  %10031 = vdwg.mxu0
  %10032 = vmatpush.msra.mxu0 0.0
  %10033 = vmatpush.msra.mxu0 0.0
  %10034 = vmatpush.msra.mxu0 0.0
  %10035 = vmatpush.msra.mxu0 0.0
  %10036 = vmatpush.msra.mxu0 0.0
  %10037 = vmatpush.msra.mxu0 0.0
  %10038 = vmatpush.msra.mxu0 0.0
  %10039 = vmatpush.msra.mxu0 0.0
  %10040 = vmatpush.msra.mxu0 0.0
  %10041 = vmatpush.msra.mxu0 0.0
  %10042 = vmatpush.msra.mxu0 0.0
  %10043 = vmatpush.msra.mxu0 0.0
  %10044 = vmatpush.msra.mxu0 0.0
  %10045 = vmatpush.msra.mxu0 0.0
  %10046 = vmatpush.msra.mxu0 0.0
  %v10047 = vand.u32 %v9754, 4294901760
  %10048 = vmatpush.msra.mxu0 %v10047
  %v10049 = vand.u32 %v9748, 4294901760
  %10050 = vmatmul.f32.gmra.mxu0 %v10049
  %v10051 = vpop.f32.mrf.mxu0
  %v10052 = vadd.f32 %v10030, %v10051
  %10053 = vdwg.mxu0
  %10054 = vmatpush.msra.mxu0 0.0
  %10055 = vmatpush.msra.mxu0 0.0
  %10056 = vmatpush.msra.mxu0 0.0
  %10057 = vmatpush.msra.mxu0 0.0
  %10058 = vmatpush.msra.mxu0 0.0
  %10059 = vmatpush.msra.mxu0 0.0
  %10060 = vmatpush.msra.mxu0 0.0
  %10061 = vmatpush.msra.mxu0 0.0
  %10062 = vmatpush.msra.mxu0 0.0
  %10063 = vmatpush.msra.mxu0 0.0
  %10064 = vmatpush.msra.mxu0 0.0
  %10065 = vmatpush.msra.mxu0 0.0
  %10066 = vmatpush.msra.mxu0 0.0
  %10067 = vmatpush.msra.mxu0 0.0
  %10068 = vmatpush.msra.mxu0 0.0
  %v10069 = vand.u32 %v9757, 4294901760
  %10070 = vmatpush.msra.mxu0 %v10069
  %v10071 = vand.u32 %v9748, 4294901760
  %v10072 = vsub.f32 %v9748, %v10071
  %v10073 = vand.u32 %v10072, 4294901760
  %v10074 = vsub.f32 %v10072, %v10073
  %v10075 = vand.u32 %v10074, 4294901760
  %10076 = vmatmul.f32.gmra.mxu0 %v10075
  %v10077 = vpop.f32.mrf.mxu0
  %v10078 = vadd.f32 0.0, %v10077
  %10079 = vdwg.mxu0
  %10080 = vmatpush.msra.mxu0 0.0
  %10081 = vmatpush.msra.mxu0 0.0
  %10082 = vmatpush.msra.mxu0 0.0
  %10083 = vmatpush.msra.mxu0 0.0
  %10084 = vmatpush.msra.mxu0 0.0
  %10085 = vmatpush.msra.mxu0 0.0
  %10086 = vmatpush.msra.mxu0 0.0
  %10087 = vmatpush.msra.mxu0 0.0
  %10088 = vmatpush.msra.mxu0 0.0
  %10089 = vmatpush.msra.mxu0 0.0
  %10090 = vmatpush.msra.mxu0 0.0
  %10091 = vmatpush.msra.mxu0 0.0
  %10092 = vmatpush.msra.mxu0 0.0
  %10093 = vmatpush.msra.mxu0 0.0
  %10094 = vmatpush.msra.mxu0 0.0
  %v10095 = vand.u32 %v9757, 4294901760
  %v10096 = vsub.f32 %v9757, %v10095
  %v10097 = vand.u32 %v10096, 4294901760
  %v10098 = vsub.f32 %v10096, %v10097
  %v10099 = vand.u32 %v10098, 4294901760
  %10100 = vmatpush.msra.mxu0 %v10099
  %v10101 = vand.u32 %v9748, 4294901760
  %10102 = vmatmul.f32.gmra.mxu0 %v10101
  %v10103 = vpop.f32.mrf.mxu0
  %v10104 = vadd.f32 %v10078, %v10103
  %10105 = vdwg.mxu0
  %10106 = vmatpush.msra.mxu0 0.0
  %10107 = vmatpush.msra.mxu0 0.0
  %10108 = vmatpush.msra.mxu0 0.0
  %10109 = vmatpush.msra.mxu0 0.0
  %10110 = vmatpush.msra.mxu0 0.0
  %10111 = vmatpush.msra.mxu0 0.0
  %10112 = vmatpush.msra.mxu0 0.0
  %10113 = vmatpush.msra.mxu0 0.0
  %10114 = vmatpush.msra.mxu0 0.0
  %10115 = vmatpush.msra.mxu0 0.0
  %10116 = vmatpush.msra.mxu0 0.0
  %10117 = vmatpush.msra.mxu0 0.0
  %10118 = vmatpush.msra.mxu0 0.0
  %10119 = vmatpush.msra.mxu0 0.0
  %10120 = vmatpush.msra.mxu0 0.0
  %v10121 = vand.u32 %v9757, 4294901760
  %v10122 = vsub.f32 %v9757, %v10121
  %10123 = vmatpush.msra.mxu0 %v10122
  %v10124 = vand.u32 %v9748, 4294901760
  %v10125 = vsub.f32 %v9748, %v10124
  %10126 = vmatmul.f32.gmra.mxu0 %v10125
  %v10127 = vpop.f32.mrf.mxu0
  %v10128 = vadd.f32 %v10104, %v10127
  %10129 = vdwg.mxu0
  %10130 = vmatpush.msra.mxu0 0.0
  %10131 = vmatpush.msra.mxu0 0.0
  %10132 = vmatpush.msra.mxu0 0.0
  %10133 = vmatpush.msra.mxu0 0.0
  %10134 = vmatpush.msra.mxu0 0.0
  %10135 = vmatpush.msra.mxu0 0.0
  %10136 = vmatpush.msra.mxu0 0.0
  %10137 = vmatpush.msra.mxu0 0.0
  %10138 = vmatpush.msra.mxu0 0.0
  %10139 = vmatpush.msra.mxu0 0.0
  %10140 = vmatpush.msra.mxu0 0.0
  %10141 = vmatpush.msra.mxu0 0.0
  %10142 = vmatpush.msra.mxu0 0.0
  %10143 = vmatpush.msra.mxu0 0.0
  %10144 = vmatpush.msra.mxu0 0.0
  %v10145 = vand.u32 %v9757, 4294901760
  %10146 = vmatpush.msra.mxu0 %v10145
  %v10147 = vand.u32 %v9748, 4294901760
  %v10148 = vsub.f32 %v9748, %v10147
  %v10149 = vand.u32 %v10148, 4294901760
  %10150 = vmatmul.f32.gmra.mxu0 %v10149
  %v10151 = vpop.f32.mrf.mxu0
  %v10152 = vadd.f32 %v10128, %v10151
  %10153 = vdwg.mxu0
  %10154 = vmatpush.msra.mxu0 0.0
  %10155 = vmatpush.msra.mxu0 0.0
  %10156 = vmatpush.msra.mxu0 0.0
  %10157 = vmatpush.msra.mxu0 0.0
  %10158 = vmatpush.msra.mxu0 0.0
  %10159 = vmatpush.msra.mxu0 0.0
  %10160 = vmatpush.msra.mxu0 0.0
  %10161 = vmatpush.msra.mxu0 0.0
  %10162 = vmatpush.msra.mxu0 0.0
  %10163 = vmatpush.msra.mxu0 0.0
  %10164 = vmatpush.msra.mxu0 0.0
  %10165 = vmatpush.msra.mxu0 0.0
  %10166 = vmatpush.msra.mxu0 0.0
  %10167 = vmatpush.msra.mxu0 0.0
  %10168 = vmatpush.msra.mxu0 0.0
  %v10169 = vand.u32 %v9757, 4294901760
  %v10170 = vsub.f32 %v9757, %v10169
  %v10171 = vand.u32 %v10170, 4294901760
  %10172 = vmatpush.msra.mxu0 %v10171
  %v10173 = vand.u32 %v9748, 4294901760
  %10174 = vmatmul.f32.gmra.mxu0 %v10173
  %v10175 = vpop.f32.mrf.mxu0
  %v10176 = vadd.f32 %v10152, %v10175
  %10177 = vdwg.mxu0
  %10178 = vmatpush.msra.mxu0 0.0
  %10179 = vmatpush.msra.mxu0 0.0
  %10180 = vmatpush.msra.mxu0 0.0
  %10181 = vmatpush.msra.mxu0 0.0
  %10182 = vmatpush.msra.mxu0 0.0
  %10183 = vmatpush.msra.mxu0 0.0
  %10184 = vmatpush.msra.mxu0 0.0
  %10185 = vmatpush.msra.mxu0 0.0
  %10186 = vmatpush.msra.mxu0 0.0
  %10187 = vmatpush.msra.mxu0 0.0
  %10188 = vmatpush.msra.mxu0 0.0
  %10189 = vmatpush.msra.mxu0 0.0
  %10190 = vmatpush.msra.mxu0 0.0
  %10191 = vmatpush.msra.mxu0 0.0
  %10192 = vmatpush.msra.mxu0 0.0
  %v10193 = vand.u32 %v9757, 4294901760
  %10194 = vmatpush.msra.mxu0 %v10193
  %v10195 = vand.u32 %v9748, 4294901760
  %10196 = vmatmul.f32.gmra.mxu0 %v10195
  %v10197 = vpop.f32.mrf.mxu0
  %v10198 = vadd.f32 %v10176, %v10197
  %10199 = vdwg.mxu0
  %10200 = vmatpush.msra.mxu0 0.0
  %10201 = vmatpush.msra.mxu0 0.0
  %10202 = vmatpush.msra.mxu0 0.0
  %10203 = vmatpush.msra.mxu0 0.0
  %10204 = vmatpush.msra.mxu0 0.0
  %10205 = vmatpush.msra.mxu0 0.0
  %10206 = vmatpush.msra.mxu0 0.0
  %10207 = vmatpush.msra.mxu0 0.0
  %10208 = vmatpush.msra.mxu0 0.0
  %10209 = vmatpush.msra.mxu0 0.0
  %10210 = vmatpush.msra.mxu0 0.0
  %10211 = vmatpush.msra.mxu0 0.0
  %10212 = vmatpush.msra.mxu0 0.0
  %10213 = vmatpush.msra.mxu0 0.0
  %10214 = vmatpush.msra.mxu0 0.0
  %v10215 = vand.u32 %v9760, 4294901760
  %10216 = vmatpush.msra.mxu0 %v10215
  %v10217 = vand.u32 %v9748, 4294901760
  %v10218 = vsub.f32 %v9748, %v10217
  %v10219 = vand.u32 %v10218, 4294901760
  %v10220 = vsub.f32 %v10218, %v10219
  %v10221 = vand.u32 %v10220, 4294901760
  %10222 = vmatmul.f32.gmra.mxu0 %v10221
  %v10223 = vpop.f32.mrf.mxu0
  %v10224 = vadd.f32 0.0, %v10223
  %10225 = vdwg.mxu0
  %10226 = vmatpush.msra.mxu0 0.0
  %10227 = vmatpush.msra.mxu0 0.0
  %10228 = vmatpush.msra.mxu0 0.0
  %10229 = vmatpush.msra.mxu0 0.0
  %10230 = vmatpush.msra.mxu0 0.0
  %10231 = vmatpush.msra.mxu0 0.0
  %10232 = vmatpush.msra.mxu0 0.0
  %10233 = vmatpush.msra.mxu0 0.0
  %10234 = vmatpush.msra.mxu0 0.0
  %10235 = vmatpush.msra.mxu0 0.0
  %10236 = vmatpush.msra.mxu0 0.0
  %10237 = vmatpush.msra.mxu0 0.0
  %10238 = vmatpush.msra.mxu0 0.0
  %10239 = vmatpush.msra.mxu0 0.0
  %10240 = vmatpush.msra.mxu0 0.0
  %v10241 = vand.u32 %v9760, 4294901760
  %v10242 = vsub.f32 %v9760, %v10241
  %v10243 = vand.u32 %v10242, 4294901760
  %v10244 = vsub.f32 %v10242, %v10243
  %v10245 = vand.u32 %v10244, 4294901760
  %10246 = vmatpush.msra.mxu0 %v10245
  %v10247 = vand.u32 %v9748, 4294901760
  %10248 = vmatmul.f32.gmra.mxu0 %v10247
  %v10249 = vpop.f32.mrf.mxu0
  %v10250 = vadd.f32 %v10224, %v10249
  %10251 = vdwg.mxu0
  %10252 = vmatpush.msra.mxu0 0.0
  %10253 = vmatpush.msra.mxu0 0.0
  %10254 = vmatpush.msra.mxu0 0.0
  %10255 = vmatpush.msra.mxu0 0.0
  %10256 = vmatpush.msra.mxu0 0.0
  %10257 = vmatpush.msra.mxu0 0.0
  %10258 = vmatpush.msra.mxu0 0.0
  %10259 = vmatpush.msra.mxu0 0.0
  %10260 = vmatpush.msra.mxu0 0.0
  %10261 = vmatpush.msra.mxu0 0.0
  %10262 = vmatpush.msra.mxu0 0.0
  %10263 = vmatpush.msra.mxu0 0.0
  %10264 = vmatpush.msra.mxu0 0.0
  %10265 = vmatpush.msra.mxu0 0.0
  %10266 = vmatpush.msra.mxu0 0.0
  %v10267 = vand.u32 %v9760, 4294901760
  %v10268 = vsub.f32 %v9760, %v10267
  %10269 = vmatpush.msra.mxu0 %v10268
  %v10270 = vand.u32 %v9748, 4294901760
  %v10271 = vsub.f32 %v9748, %v10270
  %10272 = vmatmul.f32.gmra.mxu0 %v10271
  %v10273 = vpop.f32.mrf.mxu0
  %v10274 = vadd.f32 %v10250, %v10273
  %10275 = vdwg.mxu0
  %10276 = vmatpush.msra.mxu0 0.0
  %10277 = vmatpush.msra.mxu0 0.0
  %10278 = vmatpush.msra.mxu0 0.0
  %10279 = vmatpush.msra.mxu0 0.0
  %10280 = vmatpush.msra.mxu0 0.0
  %10281 = vmatpush.msra.mxu0 0.0
  %10282 = vmatpush.msra.mxu0 0.0
  %10283 = vmatpush.msra.mxu0 0.0
  %10284 = vmatpush.msra.mxu0 0.0
  %10285 = vmatpush.msra.mxu0 0.0
  %10286 = vmatpush.msra.mxu0 0.0
  %10287 = vmatpush.msra.mxu0 0.0
  %10288 = vmatpush.msra.mxu0 0.0
  %10289 = vmatpush.msra.mxu0 0.0
  %10290 = vmatpush.msra.mxu0 0.0
  %v10291 = vand.u32 %v9760, 4294901760
  %10292 = vmatpush.msra.mxu0 %v10291
  %v10293 = vand.u32 %v9748, 4294901760
  %v10294 = vsub.f32 %v9748, %v10293
  %v10295 = vand.u32 %v10294, 4294901760
  %10296 = vmatmul.f32.gmra.mxu0 %v10295
  %v10297 = vpop.f32.mrf.mxu0
  %v10298 = vadd.f32 %v10274, %v10297
  %10299 = vdwg.mxu0
  %10300 = vmatpush.msra.mxu0 0.0
  %10301 = vmatpush.msra.mxu0 0.0
  %10302 = vmatpush.msra.mxu0 0.0
  %10303 = vmatpush.msra.mxu0 0.0
  %10304 = vmatpush.msra.mxu0 0.0
  %10305 = vmatpush.msra.mxu0 0.0
  %10306 = vmatpush.msra.mxu0 0.0
  %10307 = vmatpush.msra.mxu0 0.0
  %10308 = vmatpush.msra.mxu0 0.0
  %10309 = vmatpush.msra.mxu0 0.0
  %10310 = vmatpush.msra.mxu0 0.0
  %10311 = vmatpush.msra.mxu0 0.0
  %10312 = vmatpush.msra.mxu0 0.0
  %10313 = vmatpush.msra.mxu0 0.0
  %10314 = vmatpush.msra.mxu0 0.0
  %v10315 = vand.u32 %v9760, 4294901760
  %v10316 = vsub.f32 %v9760, %v10315
  %v10317 = vand.u32 %v10316, 4294901760
  %10318 = vmatpush.msra.mxu0 %v10317
  %v10319 = vand.u32 %v9748, 4294901760
  %10320 = vmatmul.f32.gmra.mxu0 %v10319
  %v10321 = vpop.f32.mrf.mxu0
  %v10322 = vadd.f32 %v10298, %v10321
  %10323 = vdwg.mxu0
  %10324 = vmatpush.msra.mxu0 0.0
  %10325 = vmatpush.msra.mxu0 0.0
  %10326 = vmatpush.msra.mxu0 0.0
  %10327 = vmatpush.msra.mxu0 0.0
  %10328 = vmatpush.msra.mxu0 0.0
  %10329 = vmatpush.msra.mxu0 0.0
  %10330 = vmatpush.msra.mxu0 0.0
  %10331 = vmatpush.msra.mxu0 0.0
  %10332 = vmatpush.msra.mxu0 0.0
  %10333 = vmatpush.msra.mxu0 0.0
  %10334 = vmatpush.msra.mxu0 0.0
  %10335 = vmatpush.msra.mxu0 0.0
  %10336 = vmatpush.msra.mxu0 0.0
  %10337 = vmatpush.msra.mxu0 0.0
  %10338 = vmatpush.msra.mxu0 0.0
  %v10339 = vand.u32 %v9760, 4294901760
  %10340 = vmatpush.msra.mxu0 %v10339
  %v10341 = vand.u32 %v9748, 4294901760
  %10342 = vmatmul.f32.gmra.mxu0 %v10341
  %v10343 = vpop.f32.mrf.mxu0
  %v10344 = vadd.f32 %v10322, %v10343
  %10345 = vdwg.mxu0
  %v10346 = vadd.f32 %v9720, %v9906
  %v10347 = vadd.f32 %v9721, %v10052
  %v10348 = vadd.f32 %v9722, %v10198
  %v10349 = vadd.f32 %v9723, %v10344
  %10350 = vrot.lane.b32.xlu0 %v5994, 112
  %v10351 = vpop.permute.xlu0 %10350
  %10352 = vrot.lane.b32.xlu0 %v5995, 112
  %v10353 = vpop.permute.xlu0 %10352
  %10354 = vrot.lane.b32.xlu0 %v5996, 112
  %v10355 = vpop.permute.xlu0 %10354
  %10356 = vrot.lane.b32.xlu0 %v5997, 112
  %v10357 = vpop.permute.xlu0 %10356
  %v10358 = vsel %vm4657, %v10351, %v10353
  %v10359 = vsel %vm4657, %v10353, %v10355
  %v10360 = vsel %vm4657, %v10355, %v10357
  %v10366 = vsel %vm4657, %v10357, %v10351
  %v10367 = vsel %vm4675, %v10358, 0.0
  %v10368 = vsel %vm4676, %v10359, 0.0
  %v10369 = vsel %vm4677, %v10360, 0.0
  %v10370 = vsel %vm4678, %v10366, 0.0
  %s10371 = scalar_lea.vmem %s6, 28
  %v10372 = vld [vmem:[%s10371] sm:$0xf]
  %v10374 = vsel %vm251, %v10372, 0
  %v10377 = vsel %vm86, %v10367, 0
  %v10380 = vsel %vm86, %v10368, 0
  %v10383 = vsel %vm86, %v10369, 0
  %v10386 = vsel %vm86, %v10370, 0
  %10388 = vmatpush.msra.mxu0 0.0
  %10389 = vmatpush.msra.mxu0 0.0
  %10390 = vmatpush.msra.mxu0 0.0
  %10391 = vmatpush.msra.mxu0 0.0
  %10392 = vmatpush.msra.mxu0 0.0
  %10393 = vmatpush.msra.mxu0 0.0
  %10394 = vmatpush.msra.mxu0 0.0
  %10395 = vmatpush.msra.mxu0 0.0
  %10396 = vmatpush.msra.mxu0 0.0
  %10397 = vmatpush.msra.mxu0 0.0
  %10398 = vmatpush.msra.mxu0 0.0
  %10399 = vmatpush.msra.mxu0 0.0
  %10400 = vmatpush.msra.mxu0 0.0
  %10401 = vmatpush.msra.mxu0 0.0
  %10402 = vmatpush.msra.mxu0 0.0
  %v10403 = vand.u32 %v10377, 4294901760
  %10404 = vmatpush.msra.mxu0 %v10403
  %v10405 = vand.u32 %v10374, 4294901760
  %v10406 = vsub.f32 %v10374, %v10405
  %v10407 = vand.u32 %v10406, 4294901760
  %v10408 = vsub.f32 %v10406, %v10407
  %v10409 = vand.u32 %v10408, 4294901760
  %10410 = vmatmul.f32.gmra.mxu0 %v10409
  %v10411 = vpop.f32.mrf.mxu0
  %v10412 = vadd.f32 0.0, %v10411
  %10413 = vdwg.mxu0
  %10414 = vmatpush.msra.mxu0 0.0
  %10415 = vmatpush.msra.mxu0 0.0
  %10416 = vmatpush.msra.mxu0 0.0
  %10417 = vmatpush.msra.mxu0 0.0
  %10418 = vmatpush.msra.mxu0 0.0
  %10419 = vmatpush.msra.mxu0 0.0
  %10420 = vmatpush.msra.mxu0 0.0
  %10421 = vmatpush.msra.mxu0 0.0
  %10422 = vmatpush.msra.mxu0 0.0
  %10423 = vmatpush.msra.mxu0 0.0
  %10424 = vmatpush.msra.mxu0 0.0
  %10425 = vmatpush.msra.mxu0 0.0
  %10426 = vmatpush.msra.mxu0 0.0
  %10427 = vmatpush.msra.mxu0 0.0
  %10428 = vmatpush.msra.mxu0 0.0
  %v10429 = vand.u32 %v10377, 4294901760
  %v10430 = vsub.f32 %v10377, %v10429
  %v10431 = vand.u32 %v10430, 4294901760
  %v10432 = vsub.f32 %v10430, %v10431
  %v10433 = vand.u32 %v10432, 4294901760
  %10434 = vmatpush.msra.mxu0 %v10433
  %v10435 = vand.u32 %v10374, 4294901760
  %10436 = vmatmul.f32.gmra.mxu0 %v10435
  %v10437 = vpop.f32.mrf.mxu0
  %v10438 = vadd.f32 %v10412, %v10437
  %10439 = vdwg.mxu0
  %10440 = vmatpush.msra.mxu0 0.0
  %10441 = vmatpush.msra.mxu0 0.0
  %10442 = vmatpush.msra.mxu0 0.0
  %10443 = vmatpush.msra.mxu0 0.0
  %10444 = vmatpush.msra.mxu0 0.0
  %10445 = vmatpush.msra.mxu0 0.0
  %10446 = vmatpush.msra.mxu0 0.0
  %10447 = vmatpush.msra.mxu0 0.0
  %10448 = vmatpush.msra.mxu0 0.0
  %10449 = vmatpush.msra.mxu0 0.0
  %10450 = vmatpush.msra.mxu0 0.0
  %10451 = vmatpush.msra.mxu0 0.0
  %10452 = vmatpush.msra.mxu0 0.0
  %10453 = vmatpush.msra.mxu0 0.0
  %10454 = vmatpush.msra.mxu0 0.0
  %v10455 = vand.u32 %v10377, 4294901760
  %v10456 = vsub.f32 %v10377, %v10455
  %10457 = vmatpush.msra.mxu0 %v10456
  %v10458 = vand.u32 %v10374, 4294901760
  %v10459 = vsub.f32 %v10374, %v10458
  %10460 = vmatmul.f32.gmra.mxu0 %v10459
  %v10461 = vpop.f32.mrf.mxu0
  %v10462 = vadd.f32 %v10438, %v10461
  %10463 = vdwg.mxu0
  %10464 = vmatpush.msra.mxu0 0.0
  %10465 = vmatpush.msra.mxu0 0.0
  %10466 = vmatpush.msra.mxu0 0.0
  %10467 = vmatpush.msra.mxu0 0.0
  %10468 = vmatpush.msra.mxu0 0.0
  %10469 = vmatpush.msra.mxu0 0.0
  %10470 = vmatpush.msra.mxu0 0.0
  %10471 = vmatpush.msra.mxu0 0.0
  %10472 = vmatpush.msra.mxu0 0.0
  %10473 = vmatpush.msra.mxu0 0.0
  %10474 = vmatpush.msra.mxu0 0.0
  %10475 = vmatpush.msra.mxu0 0.0
  %10476 = vmatpush.msra.mxu0 0.0
  %10477 = vmatpush.msra.mxu0 0.0
  %10478 = vmatpush.msra.mxu0 0.0
  %v10479 = vand.u32 %v10377, 4294901760
  %10480 = vmatpush.msra.mxu0 %v10479
  %v10481 = vand.u32 %v10374, 4294901760
  %v10482 = vsub.f32 %v10374, %v10481
  %v10483 = vand.u32 %v10482, 4294901760
  %10484 = vmatmul.f32.gmra.mxu0 %v10483
  %v10485 = vpop.f32.mrf.mxu0
  %v10486 = vadd.f32 %v10462, %v10485
  %10487 = vdwg.mxu0
  %10488 = vmatpush.msra.mxu0 0.0
  %10489 = vmatpush.msra.mxu0 0.0
  %10490 = vmatpush.msra.mxu0 0.0
  %10491 = vmatpush.msra.mxu0 0.0
  %10492 = vmatpush.msra.mxu0 0.0
  %10493 = vmatpush.msra.mxu0 0.0
  %10494 = vmatpush.msra.mxu0 0.0
  %10495 = vmatpush.msra.mxu0 0.0
  %10496 = vmatpush.msra.mxu0 0.0
  %10497 = vmatpush.msra.mxu0 0.0
  %10498 = vmatpush.msra.mxu0 0.0
  %10499 = vmatpush.msra.mxu0 0.0
  %10500 = vmatpush.msra.mxu0 0.0
  %10501 = vmatpush.msra.mxu0 0.0
  %10502 = vmatpush.msra.mxu0 0.0
  %v10503 = vand.u32 %v10377, 4294901760
  %v10504 = vsub.f32 %v10377, %v10503
  %v10505 = vand.u32 %v10504, 4294901760
  %10506 = vmatpush.msra.mxu0 %v10505
  %v10507 = vand.u32 %v10374, 4294901760
  %10508 = vmatmul.f32.gmra.mxu0 %v10507
  %v10509 = vpop.f32.mrf.mxu0
  %v10510 = vadd.f32 %v10486, %v10509
  %10511 = vdwg.mxu0
  %10512 = vmatpush.msra.mxu0 0.0
  %10513 = vmatpush.msra.mxu0 0.0
  %10514 = vmatpush.msra.mxu0 0.0
  %10515 = vmatpush.msra.mxu0 0.0
  %10516 = vmatpush.msra.mxu0 0.0
  %10517 = vmatpush.msra.mxu0 0.0
  %10518 = vmatpush.msra.mxu0 0.0
  %10519 = vmatpush.msra.mxu0 0.0
  %10520 = vmatpush.msra.mxu0 0.0
  %10521 = vmatpush.msra.mxu0 0.0
  %10522 = vmatpush.msra.mxu0 0.0
  %10523 = vmatpush.msra.mxu0 0.0
  %10524 = vmatpush.msra.mxu0 0.0
  %10525 = vmatpush.msra.mxu0 0.0
  %10526 = vmatpush.msra.mxu0 0.0
  %v10527 = vand.u32 %v10377, 4294901760
  %10528 = vmatpush.msra.mxu0 %v10527
  %v10529 = vand.u32 %v10374, 4294901760
  %10530 = vmatmul.f32.gmra.mxu0 %v10529
  %v10531 = vpop.f32.mrf.mxu0
  %v10532 = vadd.f32 %v10510, %v10531
  %10533 = vdwg.mxu0
  %10534 = vmatpush.msra.mxu0 0.0
  %10535 = vmatpush.msra.mxu0 0.0
  %10536 = vmatpush.msra.mxu0 0.0
  %10537 = vmatpush.msra.mxu0 0.0
  %10538 = vmatpush.msra.mxu0 0.0
  %10539 = vmatpush.msra.mxu0 0.0
  %10540 = vmatpush.msra.mxu0 0.0
  %10541 = vmatpush.msra.mxu0 0.0
  %10542 = vmatpush.msra.mxu0 0.0
  %10543 = vmatpush.msra.mxu0 0.0
  %10544 = vmatpush.msra.mxu0 0.0
  %10545 = vmatpush.msra.mxu0 0.0
  %10546 = vmatpush.msra.mxu0 0.0
  %10547 = vmatpush.msra.mxu0 0.0
  %10548 = vmatpush.msra.mxu0 0.0
  %v10549 = vand.u32 %v10380, 4294901760
  %10550 = vmatpush.msra.mxu0 %v10549
  %v10551 = vand.u32 %v10374, 4294901760
  %v10552 = vsub.f32 %v10374, %v10551
  %v10553 = vand.u32 %v10552, 4294901760
  %v10554 = vsub.f32 %v10552, %v10553
  %v10555 = vand.u32 %v10554, 4294901760
  %10556 = vmatmul.f32.gmra.mxu0 %v10555
  %v10557 = vpop.f32.mrf.mxu0
  %v10558 = vadd.f32 0.0, %v10557
  %10559 = vdwg.mxu0
  %10560 = vmatpush.msra.mxu0 0.0
  %10561 = vmatpush.msra.mxu0 0.0
  %10562 = vmatpush.msra.mxu0 0.0
  %10563 = vmatpush.msra.mxu0 0.0
  %10564 = vmatpush.msra.mxu0 0.0
  %10565 = vmatpush.msra.mxu0 0.0
  %10566 = vmatpush.msra.mxu0 0.0
  %10567 = vmatpush.msra.mxu0 0.0
  %10568 = vmatpush.msra.mxu0 0.0
  %10569 = vmatpush.msra.mxu0 0.0
  %10570 = vmatpush.msra.mxu0 0.0
  %10571 = vmatpush.msra.mxu0 0.0
  %10572 = vmatpush.msra.mxu0 0.0
  %10573 = vmatpush.msra.mxu0 0.0
  %10574 = vmatpush.msra.mxu0 0.0
  %v10575 = vand.u32 %v10380, 4294901760
  %v10576 = vsub.f32 %v10380, %v10575
  %v10577 = vand.u32 %v10576, 4294901760
  %v10578 = vsub.f32 %v10576, %v10577
  %v10579 = vand.u32 %v10578, 4294901760
  %10580 = vmatpush.msra.mxu0 %v10579
  %v10581 = vand.u32 %v10374, 4294901760
  %10582 = vmatmul.f32.gmra.mxu0 %v10581
  %v10583 = vpop.f32.mrf.mxu0
  %v10584 = vadd.f32 %v10558, %v10583
  %10585 = vdwg.mxu0
  %10586 = vmatpush.msra.mxu0 0.0
  %10587 = vmatpush.msra.mxu0 0.0
  %10588 = vmatpush.msra.mxu0 0.0
  %10589 = vmatpush.msra.mxu0 0.0
  %10590 = vmatpush.msra.mxu0 0.0
  %10591 = vmatpush.msra.mxu0 0.0
  %10592 = vmatpush.msra.mxu0 0.0
  %10593 = vmatpush.msra.mxu0 0.0
  %10594 = vmatpush.msra.mxu0 0.0
  %10595 = vmatpush.msra.mxu0 0.0
  %10596 = vmatpush.msra.mxu0 0.0
  %10597 = vmatpush.msra.mxu0 0.0
  %10598 = vmatpush.msra.mxu0 0.0
  %10599 = vmatpush.msra.mxu0 0.0
  %10600 = vmatpush.msra.mxu0 0.0
  %v10601 = vand.u32 %v10380, 4294901760
  %v10602 = vsub.f32 %v10380, %v10601
  %10603 = vmatpush.msra.mxu0 %v10602
  %v10604 = vand.u32 %v10374, 4294901760
  %v10605 = vsub.f32 %v10374, %v10604
  %10606 = vmatmul.f32.gmra.mxu0 %v10605
  %v10607 = vpop.f32.mrf.mxu0
  %v10608 = vadd.f32 %v10584, %v10607
  %10609 = vdwg.mxu0
  %10610 = vmatpush.msra.mxu0 0.0
  %10611 = vmatpush.msra.mxu0 0.0
  %10612 = vmatpush.msra.mxu0 0.0
  %10613 = vmatpush.msra.mxu0 0.0
  %10614 = vmatpush.msra.mxu0 0.0
  %10615 = vmatpush.msra.mxu0 0.0
  %10616 = vmatpush.msra.mxu0 0.0
  %10617 = vmatpush.msra.mxu0 0.0
  %10618 = vmatpush.msra.mxu0 0.0
  %10619 = vmatpush.msra.mxu0 0.0
  %10620 = vmatpush.msra.mxu0 0.0
  %10621 = vmatpush.msra.mxu0 0.0
  %10622 = vmatpush.msra.mxu0 0.0
  %10623 = vmatpush.msra.mxu0 0.0
  %10624 = vmatpush.msra.mxu0 0.0
  %v10625 = vand.u32 %v10380, 4294901760
  %10626 = vmatpush.msra.mxu0 %v10625
  %v10627 = vand.u32 %v10374, 4294901760
  %v10628 = vsub.f32 %v10374, %v10627
  %v10629 = vand.u32 %v10628, 4294901760
  %10630 = vmatmul.f32.gmra.mxu0 %v10629
  %v10631 = vpop.f32.mrf.mxu0
  %v10632 = vadd.f32 %v10608, %v10631
  %10633 = vdwg.mxu0
  %10634 = vmatpush.msra.mxu0 0.0
  %10635 = vmatpush.msra.mxu0 0.0
  %10636 = vmatpush.msra.mxu0 0.0
  %10637 = vmatpush.msra.mxu0 0.0
  %10638 = vmatpush.msra.mxu0 0.0
  %10639 = vmatpush.msra.mxu0 0.0
  %10640 = vmatpush.msra.mxu0 0.0
  %10641 = vmatpush.msra.mxu0 0.0
  %10642 = vmatpush.msra.mxu0 0.0
  %10643 = vmatpush.msra.mxu0 0.0
  %10644 = vmatpush.msra.mxu0 0.0
  %10645 = vmatpush.msra.mxu0 0.0
  %10646 = vmatpush.msra.mxu0 0.0
  %10647 = vmatpush.msra.mxu0 0.0
  %10648 = vmatpush.msra.mxu0 0.0
  %v10649 = vand.u32 %v10380, 4294901760
  %v10650 = vsub.f32 %v10380, %v10649
  %v10651 = vand.u32 %v10650, 4294901760
  %10652 = vmatpush.msra.mxu0 %v10651
  %v10653 = vand.u32 %v10374, 4294901760
  %10654 = vmatmul.f32.gmra.mxu0 %v10653
  %v10655 = vpop.f32.mrf.mxu0
  %v10656 = vadd.f32 %v10632, %v10655
  %10657 = vdwg.mxu0
  %10658 = vmatpush.msra.mxu0 0.0
  %10659 = vmatpush.msra.mxu0 0.0
  %10660 = vmatpush.msra.mxu0 0.0
  %10661 = vmatpush.msra.mxu0 0.0
  %10662 = vmatpush.msra.mxu0 0.0
  %10663 = vmatpush.msra.mxu0 0.0
  %10664 = vmatpush.msra.mxu0 0.0
  %10665 = vmatpush.msra.mxu0 0.0
  %10666 = vmatpush.msra.mxu0 0.0
  %10667 = vmatpush.msra.mxu0 0.0
  %10668 = vmatpush.msra.mxu0 0.0
  %10669 = vmatpush.msra.mxu0 0.0
  %10670 = vmatpush.msra.mxu0 0.0
  %10671 = vmatpush.msra.mxu0 0.0
  %10672 = vmatpush.msra.mxu0 0.0
  %v10673 = vand.u32 %v10380, 4294901760
  %10674 = vmatpush.msra.mxu0 %v10673
  %v10675 = vand.u32 %v10374, 4294901760
  %10676 = vmatmul.f32.gmra.mxu0 %v10675
  %v10677 = vpop.f32.mrf.mxu0
  %v10678 = vadd.f32 %v10656, %v10677
  %10679 = vdwg.mxu0
  %10680 = vmatpush.msra.mxu0 0.0
  %10681 = vmatpush.msra.mxu0 0.0
  %10682 = vmatpush.msra.mxu0 0.0
  %10683 = vmatpush.msra.mxu0 0.0
  %10684 = vmatpush.msra.mxu0 0.0
  %10685 = vmatpush.msra.mxu0 0.0
  %10686 = vmatpush.msra.mxu0 0.0
  %10687 = vmatpush.msra.mxu0 0.0
  %10688 = vmatpush.msra.mxu0 0.0
  %10689 = vmatpush.msra.mxu0 0.0
  %10690 = vmatpush.msra.mxu0 0.0
  %10691 = vmatpush.msra.mxu0 0.0
  %10692 = vmatpush.msra.mxu0 0.0
  %10693 = vmatpush.msra.mxu0 0.0
  %10694 = vmatpush.msra.mxu0 0.0
  %v10695 = vand.u32 %v10383, 4294901760
  %10696 = vmatpush.msra.mxu0 %v10695
  %v10697 = vand.u32 %v10374, 4294901760
  %v10698 = vsub.f32 %v10374, %v10697
  %v10699 = vand.u32 %v10698, 4294901760
  %v10700 = vsub.f32 %v10698, %v10699
  %v10701 = vand.u32 %v10700, 4294901760
  %10702 = vmatmul.f32.gmra.mxu0 %v10701
  %v10703 = vpop.f32.mrf.mxu0
  %v10704 = vadd.f32 0.0, %v10703
  %10705 = vdwg.mxu0
  %10706 = vmatpush.msra.mxu0 0.0
  %10707 = vmatpush.msra.mxu0 0.0
  %10708 = vmatpush.msra.mxu0 0.0
  %10709 = vmatpush.msra.mxu0 0.0
  %10710 = vmatpush.msra.mxu0 0.0
  %10711 = vmatpush.msra.mxu0 0.0
  %10712 = vmatpush.msra.mxu0 0.0
  %10713 = vmatpush.msra.mxu0 0.0
  %10714 = vmatpush.msra.mxu0 0.0
  %10715 = vmatpush.msra.mxu0 0.0
  %10716 = vmatpush.msra.mxu0 0.0
  %10717 = vmatpush.msra.mxu0 0.0
  %10718 = vmatpush.msra.mxu0 0.0
  %10719 = vmatpush.msra.mxu0 0.0
  %10720 = vmatpush.msra.mxu0 0.0
  %v10721 = vand.u32 %v10383, 4294901760
  %v10722 = vsub.f32 %v10383, %v10721
  %v10723 = vand.u32 %v10722, 4294901760
  %v10724 = vsub.f32 %v10722, %v10723
  %v10725 = vand.u32 %v10724, 4294901760
  %10726 = vmatpush.msra.mxu0 %v10725
  %v10727 = vand.u32 %v10374, 4294901760
  %10728 = vmatmul.f32.gmra.mxu0 %v10727
  %v10729 = vpop.f32.mrf.mxu0
  %v10730 = vadd.f32 %v10704, %v10729
  %10731 = vdwg.mxu0
  %10732 = vmatpush.msra.mxu0 0.0
  %10733 = vmatpush.msra.mxu0 0.0
  %10734 = vmatpush.msra.mxu0 0.0
  %10735 = vmatpush.msra.mxu0 0.0
  %10736 = vmatpush.msra.mxu0 0.0
  %10737 = vmatpush.msra.mxu0 0.0
  %10738 = vmatpush.msra.mxu0 0.0
  %10739 = vmatpush.msra.mxu0 0.0
  %10740 = vmatpush.msra.mxu0 0.0
  %10741 = vmatpush.msra.mxu0 0.0
  %10742 = vmatpush.msra.mxu0 0.0
  %10743 = vmatpush.msra.mxu0 0.0
  %10744 = vmatpush.msra.mxu0 0.0
  %10745 = vmatpush.msra.mxu0 0.0
  %10746 = vmatpush.msra.mxu0 0.0
  %v10747 = vand.u32 %v10383, 4294901760
  %v10748 = vsub.f32 %v10383, %v10747
  %10749 = vmatpush.msra.mxu0 %v10748
  %v10750 = vand.u32 %v10374, 4294901760
  %v10751 = vsub.f32 %v10374, %v10750
  %10752 = vmatmul.f32.gmra.mxu0 %v10751
  %v10753 = vpop.f32.mrf.mxu0
  %v10754 = vadd.f32 %v10730, %v10753
  %10755 = vdwg.mxu0
  %10756 = vmatpush.msra.mxu0 0.0
  %10757 = vmatpush.msra.mxu0 0.0
  %10758 = vmatpush.msra.mxu0 0.0
  %10759 = vmatpush.msra.mxu0 0.0
  %10760 = vmatpush.msra.mxu0 0.0
  %10761 = vmatpush.msra.mxu0 0.0
  %10762 = vmatpush.msra.mxu0 0.0
  %10763 = vmatpush.msra.mxu0 0.0
  %10764 = vmatpush.msra.mxu0 0.0
  %10765 = vmatpush.msra.mxu0 0.0
  %10766 = vmatpush.msra.mxu0 0.0
  %10767 = vmatpush.msra.mxu0 0.0
  %10768 = vmatpush.msra.mxu0 0.0
  %10769 = vmatpush.msra.mxu0 0.0
  %10770 = vmatpush.msra.mxu0 0.0
  %v10771 = vand.u32 %v10383, 4294901760
  %10772 = vmatpush.msra.mxu0 %v10771
  %v10773 = vand.u32 %v10374, 4294901760
  %v10774 = vsub.f32 %v10374, %v10773
  %v10775 = vand.u32 %v10774, 4294901760
  %10776 = vmatmul.f32.gmra.mxu0 %v10775
  %v10777 = vpop.f32.mrf.mxu0
  %v10778 = vadd.f32 %v10754, %v10777
  %10779 = vdwg.mxu0
  %10780 = vmatpush.msra.mxu0 0.0
  %10781 = vmatpush.msra.mxu0 0.0
  %10782 = vmatpush.msra.mxu0 0.0
  %10783 = vmatpush.msra.mxu0 0.0
  %10784 = vmatpush.msra.mxu0 0.0
  %10785 = vmatpush.msra.mxu0 0.0
  %10786 = vmatpush.msra.mxu0 0.0
  %10787 = vmatpush.msra.mxu0 0.0
  %10788 = vmatpush.msra.mxu0 0.0
  %10789 = vmatpush.msra.mxu0 0.0
  %10790 = vmatpush.msra.mxu0 0.0
  %10791 = vmatpush.msra.mxu0 0.0
  %10792 = vmatpush.msra.mxu0 0.0
  %10793 = vmatpush.msra.mxu0 0.0
  %10794 = vmatpush.msra.mxu0 0.0
  %v10795 = vand.u32 %v10383, 4294901760
  %v10796 = vsub.f32 %v10383, %v10795
  %v10797 = vand.u32 %v10796, 4294901760
  %10798 = vmatpush.msra.mxu0 %v10797
  %v10799 = vand.u32 %v10374, 4294901760
  %10800 = vmatmul.f32.gmra.mxu0 %v10799
  %v10801 = vpop.f32.mrf.mxu0
  %v10802 = vadd.f32 %v10778, %v10801
  %10803 = vdwg.mxu0
  %10804 = vmatpush.msra.mxu0 0.0
  %10805 = vmatpush.msra.mxu0 0.0
  %10806 = vmatpush.msra.mxu0 0.0
  %10807 = vmatpush.msra.mxu0 0.0
  %10808 = vmatpush.msra.mxu0 0.0
  %10809 = vmatpush.msra.mxu0 0.0
  %10810 = vmatpush.msra.mxu0 0.0
  %10811 = vmatpush.msra.mxu0 0.0
  %10812 = vmatpush.msra.mxu0 0.0
  %10813 = vmatpush.msra.mxu0 0.0
  %10814 = vmatpush.msra.mxu0 0.0
  %10815 = vmatpush.msra.mxu0 0.0
  %10816 = vmatpush.msra.mxu0 0.0
  %10817 = vmatpush.msra.mxu0 0.0
  %10818 = vmatpush.msra.mxu0 0.0
  %v10819 = vand.u32 %v10383, 4294901760
  %10820 = vmatpush.msra.mxu0 %v10819
  %v10821 = vand.u32 %v10374, 4294901760
  %10822 = vmatmul.f32.gmra.mxu0 %v10821
  %v10823 = vpop.f32.mrf.mxu0
  %v10824 = vadd.f32 %v10802, %v10823
  %10825 = vdwg.mxu0
  %10826 = vmatpush.msra.mxu0 0.0
  %10827 = vmatpush.msra.mxu0 0.0
  %10828 = vmatpush.msra.mxu0 0.0
  %10829 = vmatpush.msra.mxu0 0.0
  %10830 = vmatpush.msra.mxu0 0.0
  %10831 = vmatpush.msra.mxu0 0.0
  %10832 = vmatpush.msra.mxu0 0.0
  %10833 = vmatpush.msra.mxu0 0.0
  %10834 = vmatpush.msra.mxu0 0.0
  %10835 = vmatpush.msra.mxu0 0.0
  %10836 = vmatpush.msra.mxu0 0.0
  %10837 = vmatpush.msra.mxu0 0.0
  %10838 = vmatpush.msra.mxu0 0.0
  %10839 = vmatpush.msra.mxu0 0.0
  %10840 = vmatpush.msra.mxu0 0.0
  %v10841 = vand.u32 %v10386, 4294901760
  %10842 = vmatpush.msra.mxu0 %v10841
  %v10843 = vand.u32 %v10374, 4294901760
  %v10844 = vsub.f32 %v10374, %v10843
  %v10845 = vand.u32 %v10844, 4294901760
  %v10846 = vsub.f32 %v10844, %v10845
  %v10847 = vand.u32 %v10846, 4294901760
  %10848 = vmatmul.f32.gmra.mxu0 %v10847
  %v10849 = vpop.f32.mrf.mxu0
  %v10850 = vadd.f32 0.0, %v10849
  %10851 = vdwg.mxu0
  %10852 = vmatpush.msra.mxu0 0.0
  %10853 = vmatpush.msra.mxu0 0.0
  %10854 = vmatpush.msra.mxu0 0.0
  %10855 = vmatpush.msra.mxu0 0.0
  %10856 = vmatpush.msra.mxu0 0.0
  %10857 = vmatpush.msra.mxu0 0.0
  %10858 = vmatpush.msra.mxu0 0.0
  %10859 = vmatpush.msra.mxu0 0.0
  %10860 = vmatpush.msra.mxu0 0.0
  %10861 = vmatpush.msra.mxu0 0.0
  %10862 = vmatpush.msra.mxu0 0.0
  %10863 = vmatpush.msra.mxu0 0.0
  %10864 = vmatpush.msra.mxu0 0.0
  %10865 = vmatpush.msra.mxu0 0.0
  %10866 = vmatpush.msra.mxu0 0.0
  %v10867 = vand.u32 %v10386, 4294901760
  %v10868 = vsub.f32 %v10386, %v10867
  %v10869 = vand.u32 %v10868, 4294901760
  %v10870 = vsub.f32 %v10868, %v10869
  %v10871 = vand.u32 %v10870, 4294901760
  %10872 = vmatpush.msra.mxu0 %v10871
  %v10873 = vand.u32 %v10374, 4294901760
  %10874 = vmatmul.f32.gmra.mxu0 %v10873
  %v10875 = vpop.f32.mrf.mxu0
  %v10876 = vadd.f32 %v10850, %v10875
  %10877 = vdwg.mxu0
  %10878 = vmatpush.msra.mxu0 0.0
  %10879 = vmatpush.msra.mxu0 0.0
  %10880 = vmatpush.msra.mxu0 0.0
  %10881 = vmatpush.msra.mxu0 0.0
  %10882 = vmatpush.msra.mxu0 0.0
  %10883 = vmatpush.msra.mxu0 0.0
  %10884 = vmatpush.msra.mxu0 0.0
  %10885 = vmatpush.msra.mxu0 0.0
  %10886 = vmatpush.msra.mxu0 0.0
  %10887 = vmatpush.msra.mxu0 0.0
  %10888 = vmatpush.msra.mxu0 0.0
  %10889 = vmatpush.msra.mxu0 0.0
  %10890 = vmatpush.msra.mxu0 0.0
  %10891 = vmatpush.msra.mxu0 0.0
  %10892 = vmatpush.msra.mxu0 0.0
  %v10893 = vand.u32 %v10386, 4294901760
  %v10894 = vsub.f32 %v10386, %v10893
  %10895 = vmatpush.msra.mxu0 %v10894
  %v10896 = vand.u32 %v10374, 4294901760
  %v10897 = vsub.f32 %v10374, %v10896
  %10898 = vmatmul.f32.gmra.mxu0 %v10897
  %v10899 = vpop.f32.mrf.mxu0
  %v10900 = vadd.f32 %v10876, %v10899
  %10901 = vdwg.mxu0
  %10902 = vmatpush.msra.mxu0 0.0
  %10903 = vmatpush.msra.mxu0 0.0
  %10904 = vmatpush.msra.mxu0 0.0
  %10905 = vmatpush.msra.mxu0 0.0
  %10906 = vmatpush.msra.mxu0 0.0
  %10907 = vmatpush.msra.mxu0 0.0
  %10908 = vmatpush.msra.mxu0 0.0
  %10909 = vmatpush.msra.mxu0 0.0
  %10910 = vmatpush.msra.mxu0 0.0
  %10911 = vmatpush.msra.mxu0 0.0
  %10912 = vmatpush.msra.mxu0 0.0
  %10913 = vmatpush.msra.mxu0 0.0
  %10914 = vmatpush.msra.mxu0 0.0
  %10915 = vmatpush.msra.mxu0 0.0
  %10916 = vmatpush.msra.mxu0 0.0
  %v10917 = vand.u32 %v10386, 4294901760
  %10918 = vmatpush.msra.mxu0 %v10917
  %v10919 = vand.u32 %v10374, 4294901760
  %v10920 = vsub.f32 %v10374, %v10919
  %v10921 = vand.u32 %v10920, 4294901760
  %10922 = vmatmul.f32.gmra.mxu0 %v10921
  %v10923 = vpop.f32.mrf.mxu0
  %v10924 = vadd.f32 %v10900, %v10923
  %10925 = vdwg.mxu0
  %10926 = vmatpush.msra.mxu0 0.0
  %10927 = vmatpush.msra.mxu0 0.0
  %10928 = vmatpush.msra.mxu0 0.0
  %10929 = vmatpush.msra.mxu0 0.0
  %10930 = vmatpush.msra.mxu0 0.0
  %10931 = vmatpush.msra.mxu0 0.0
  %10932 = vmatpush.msra.mxu0 0.0
  %10933 = vmatpush.msra.mxu0 0.0
  %10934 = vmatpush.msra.mxu0 0.0
  %10935 = vmatpush.msra.mxu0 0.0
  %10936 = vmatpush.msra.mxu0 0.0
  %10937 = vmatpush.msra.mxu0 0.0
  %10938 = vmatpush.msra.mxu0 0.0
  %10939 = vmatpush.msra.mxu0 0.0
  %10940 = vmatpush.msra.mxu0 0.0
  %v10941 = vand.u32 %v10386, 4294901760
  %v10942 = vsub.f32 %v10386, %v10941
  %v10943 = vand.u32 %v10942, 4294901760
  %10944 = vmatpush.msra.mxu0 %v10943
  %v10945 = vand.u32 %v10374, 4294901760
  %10946 = vmatmul.f32.gmra.mxu0 %v10945
  %v10947 = vpop.f32.mrf.mxu0
  %v10948 = vadd.f32 %v10924, %v10947
  %10949 = vdwg.mxu0
  %10950 = vmatpush.msra.mxu0 0.0
  %10951 = vmatpush.msra.mxu0 0.0
  %10952 = vmatpush.msra.mxu0 0.0
  %10953 = vmatpush.msra.mxu0 0.0
  %10954 = vmatpush.msra.mxu0 0.0
  %10955 = vmatpush.msra.mxu0 0.0
  %10956 = vmatpush.msra.mxu0 0.0
  %10957 = vmatpush.msra.mxu0 0.0
  %10958 = vmatpush.msra.mxu0 0.0
  %10959 = vmatpush.msra.mxu0 0.0
  %10960 = vmatpush.msra.mxu0 0.0
  %10961 = vmatpush.msra.mxu0 0.0
  %10962 = vmatpush.msra.mxu0 0.0
  %10963 = vmatpush.msra.mxu0 0.0
  %10964 = vmatpush.msra.mxu0 0.0
  %v10965 = vand.u32 %v10386, 4294901760
  %10966 = vmatpush.msra.mxu0 %v10965
  %v10967 = vand.u32 %v10374, 4294901760
  %10968 = vmatmul.f32.gmra.mxu0 %v10967
  %v10969 = vpop.f32.mrf.mxu0
  %v10970 = vadd.f32 %v10948, %v10969
  %10971 = vdwg.mxu0
  %v10972 = vadd.f32 %v10346, %v10532
  %v10973 = vadd.f32 %v10347, %v10678
  %v10974 = vadd.f32 %v10348, %v10824
  %v10975 = vadd.f32 %v10349, %v10970
  %10976 = vrot.lane.b32.xlu0 %v5994, 111
  %v10977 = vpop.permute.xlu0 %10976
  %10978 = vrot.lane.b32.xlu0 %v5995, 111
  %v10979 = vpop.permute.xlu0 %10978
  %10980 = vrot.lane.b32.xlu0 %v5996, 111
  %v10981 = vpop.permute.xlu0 %10980
  %10982 = vrot.lane.b32.xlu0 %v5997, 111
  %v10983 = vpop.permute.xlu0 %10982
  %v10984 = vsel %vm5303, %v10977, %v10979
  %v10985 = vsel %vm5303, %v10979, %v10981
  %v10986 = vsel %vm5303, %v10981, %v10983
  %v10992 = vsel %vm5303, %v10983, %v10977
  %v10993 = vsel %vm5321, %v10984, 0.0
  %v10994 = vsel %vm5322, %v10985, 0.0
  %v10995 = vsel %vm5323, %v10986, 0.0
  %v10996 = vsel %vm5324, %v10992, 0.0
  %s10997 = scalar_lea.vmem %s6, 32
  %v10998 = vld [vmem:[%s10997] sm:$0xf]
  %v11000 = vsel %vm251, %v10998, 0
  %v11003 = vsel %vm86, %v10993, 0
  %v11006 = vsel %vm86, %v10994, 0
  %v11009 = vsel %vm86, %v10995, 0
  %v11012 = vsel %vm86, %v10996, 0
  %11014 = vmatpush.msra.mxu0 0.0
  %11015 = vmatpush.msra.mxu0 0.0
  %11016 = vmatpush.msra.mxu0 0.0
  %11017 = vmatpush.msra.mxu0 0.0
  %11018 = vmatpush.msra.mxu0 0.0
  %11019 = vmatpush.msra.mxu0 0.0
  %11020 = vmatpush.msra.mxu0 0.0
  %11021 = vmatpush.msra.mxu0 0.0
  %11022 = vmatpush.msra.mxu0 0.0
  %11023 = vmatpush.msra.mxu0 0.0
  %11024 = vmatpush.msra.mxu0 0.0
  %11025 = vmatpush.msra.mxu0 0.0
  %11026 = vmatpush.msra.mxu0 0.0
  %11027 = vmatpush.msra.mxu0 0.0
  %11028 = vmatpush.msra.mxu0 0.0
  %v11029 = vand.u32 %v11003, 4294901760
  %11030 = vmatpush.msra.mxu0 %v11029
  %v11031 = vand.u32 %v11000, 4294901760
  %v11032 = vsub.f32 %v11000, %v11031
  %v11033 = vand.u32 %v11032, 4294901760
  %v11034 = vsub.f32 %v11032, %v11033
  %v11035 = vand.u32 %v11034, 4294901760
  %11036 = vmatmul.f32.gmra.mxu0 %v11035
  %v11037 = vpop.f32.mrf.mxu0
  %v11038 = vadd.f32 0.0, %v11037
  %11039 = vdwg.mxu0
  %11040 = vmatpush.msra.mxu0 0.0
  %11041 = vmatpush.msra.mxu0 0.0
  %11042 = vmatpush.msra.mxu0 0.0
  %11043 = vmatpush.msra.mxu0 0.0
  %11044 = vmatpush.msra.mxu0 0.0
  %11045 = vmatpush.msra.mxu0 0.0
  %11046 = vmatpush.msra.mxu0 0.0
  %11047 = vmatpush.msra.mxu0 0.0
  %11048 = vmatpush.msra.mxu0 0.0
  %11049 = vmatpush.msra.mxu0 0.0
  %11050 = vmatpush.msra.mxu0 0.0
  %11051 = vmatpush.msra.mxu0 0.0
  %11052 = vmatpush.msra.mxu0 0.0
  %11053 = vmatpush.msra.mxu0 0.0
  %11054 = vmatpush.msra.mxu0 0.0
  %v11055 = vand.u32 %v11003, 4294901760
  %v11056 = vsub.f32 %v11003, %v11055
  %v11057 = vand.u32 %v11056, 4294901760
  %v11058 = vsub.f32 %v11056, %v11057
  %v11059 = vand.u32 %v11058, 4294901760
  %11060 = vmatpush.msra.mxu0 %v11059
  %v11061 = vand.u32 %v11000, 4294901760
  %11062 = vmatmul.f32.gmra.mxu0 %v11061
  %v11063 = vpop.f32.mrf.mxu0
  %v11064 = vadd.f32 %v11038, %v11063
  %11065 = vdwg.mxu0
  %11066 = vmatpush.msra.mxu0 0.0
  %11067 = vmatpush.msra.mxu0 0.0
  %11068 = vmatpush.msra.mxu0 0.0
  %11069 = vmatpush.msra.mxu0 0.0
  %11070 = vmatpush.msra.mxu0 0.0
  %11071 = vmatpush.msra.mxu0 0.0
  %11072 = vmatpush.msra.mxu0 0.0
  %11073 = vmatpush.msra.mxu0 0.0
  %11074 = vmatpush.msra.mxu0 0.0
  %11075 = vmatpush.msra.mxu0 0.0
  %11076 = vmatpush.msra.mxu0 0.0
  %11077 = vmatpush.msra.mxu0 0.0
  %11078 = vmatpush.msra.mxu0 0.0
  %11079 = vmatpush.msra.mxu0 0.0
  %11080 = vmatpush.msra.mxu0 0.0
  %v11081 = vand.u32 %v11003, 4294901760
  %v11082 = vsub.f32 %v11003, %v11081
  %11083 = vmatpush.msra.mxu0 %v11082
  %v11084 = vand.u32 %v11000, 4294901760
  %v11085 = vsub.f32 %v11000, %v11084
  %11086 = vmatmul.f32.gmra.mxu0 %v11085
  %v11087 = vpop.f32.mrf.mxu0
  %v11088 = vadd.f32 %v11064, %v11087
  %11089 = vdwg.mxu0
  %11090 = vmatpush.msra.mxu0 0.0
  %11091 = vmatpush.msra.mxu0 0.0
  %11092 = vmatpush.msra.mxu0 0.0
  %11093 = vmatpush.msra.mxu0 0.0
  %11094 = vmatpush.msra.mxu0 0.0
  %11095 = vmatpush.msra.mxu0 0.0
  %11096 = vmatpush.msra.mxu0 0.0
  %11097 = vmatpush.msra.mxu0 0.0
  %11098 = vmatpush.msra.mxu0 0.0
  %11099 = vmatpush.msra.mxu0 0.0
  %11100 = vmatpush.msra.mxu0 0.0
  %11101 = vmatpush.msra.mxu0 0.0
  %11102 = vmatpush.msra.mxu0 0.0
  %11103 = vmatpush.msra.mxu0 0.0
  %11104 = vmatpush.msra.mxu0 0.0
  %v11105 = vand.u32 %v11003, 4294901760
  %11106 = vmatpush.msra.mxu0 %v11105
  %v11107 = vand.u32 %v11000, 4294901760
  %v11108 = vsub.f32 %v11000, %v11107
  %v11109 = vand.u32 %v11108, 4294901760
  %11110 = vmatmul.f32.gmra.mxu0 %v11109
  %v11111 = vpop.f32.mrf.mxu0
  %v11112 = vadd.f32 %v11088, %v11111
  %11113 = vdwg.mxu0
  %11114 = vmatpush.msra.mxu0 0.0
  %11115 = vmatpush.msra.mxu0 0.0
  %11116 = vmatpush.msra.mxu0 0.0
  %11117 = vmatpush.msra.mxu0 0.0
  %11118 = vmatpush.msra.mxu0 0.0
  %11119 = vmatpush.msra.mxu0 0.0
  %11120 = vmatpush.msra.mxu0 0.0
  %11121 = vmatpush.msra.mxu0 0.0
  %11122 = vmatpush.msra.mxu0 0.0
  %11123 = vmatpush.msra.mxu0 0.0
  %11124 = vmatpush.msra.mxu0 0.0
  %11125 = vmatpush.msra.mxu0 0.0
  %11126 = vmatpush.msra.mxu0 0.0
  %11127 = vmatpush.msra.mxu0 0.0
  %11128 = vmatpush.msra.mxu0 0.0
  %v11129 = vand.u32 %v11003, 4294901760
  %v11130 = vsub.f32 %v11003, %v11129
  %v11131 = vand.u32 %v11130, 4294901760
  %11132 = vmatpush.msra.mxu0 %v11131
  %v11133 = vand.u32 %v11000, 4294901760
  %11134 = vmatmul.f32.gmra.mxu0 %v11133
  %v11135 = vpop.f32.mrf.mxu0
  %v11136 = vadd.f32 %v11112, %v11135
  %11137 = vdwg.mxu0
  %11138 = vmatpush.msra.mxu0 0.0
  %11139 = vmatpush.msra.mxu0 0.0
  %11140 = vmatpush.msra.mxu0 0.0
  %11141 = vmatpush.msra.mxu0 0.0
  %11142 = vmatpush.msra.mxu0 0.0
  %11143 = vmatpush.msra.mxu0 0.0
  %11144 = vmatpush.msra.mxu0 0.0
  %11145 = vmatpush.msra.mxu0 0.0
  %11146 = vmatpush.msra.mxu0 0.0
  %11147 = vmatpush.msra.mxu0 0.0
  %11148 = vmatpush.msra.mxu0 0.0
  %11149 = vmatpush.msra.mxu0 0.0
  %11150 = vmatpush.msra.mxu0 0.0
  %11151 = vmatpush.msra.mxu0 0.0
  %11152 = vmatpush.msra.mxu0 0.0
  %v11153 = vand.u32 %v11003, 4294901760
  %11154 = vmatpush.msra.mxu0 %v11153
  %v11155 = vand.u32 %v11000, 4294901760
  %11156 = vmatmul.f32.gmra.mxu0 %v11155
  %v11157 = vpop.f32.mrf.mxu0
  %v11158 = vadd.f32 %v11136, %v11157
  %11159 = vdwg.mxu0
  %11160 = vmatpush.msra.mxu0 0.0
  %11161 = vmatpush.msra.mxu0 0.0
  %11162 = vmatpush.msra.mxu0 0.0
  %11163 = vmatpush.msra.mxu0 0.0
  %11164 = vmatpush.msra.mxu0 0.0
  %11165 = vmatpush.msra.mxu0 0.0
  %11166 = vmatpush.msra.mxu0 0.0
  %11167 = vmatpush.msra.mxu0 0.0
  %11168 = vmatpush.msra.mxu0 0.0
  %11169 = vmatpush.msra.mxu0 0.0
  %11170 = vmatpush.msra.mxu0 0.0
  %11171 = vmatpush.msra.mxu0 0.0
  %11172 = vmatpush.msra.mxu0 0.0
  %11173 = vmatpush.msra.mxu0 0.0
  %11174 = vmatpush.msra.mxu0 0.0
  %v11175 = vand.u32 %v11006, 4294901760
  %11176 = vmatpush.msra.mxu0 %v11175
  %v11177 = vand.u32 %v11000, 4294901760
  %v11178 = vsub.f32 %v11000, %v11177
  %v11179 = vand.u32 %v11178, 4294901760
  %v11180 = vsub.f32 %v11178, %v11179
  %v11181 = vand.u32 %v11180, 4294901760
  %11182 = vmatmul.f32.gmra.mxu0 %v11181
  %v11183 = vpop.f32.mrf.mxu0
  %v11184 = vadd.f32 0.0, %v11183
  %11185 = vdwg.mxu0
  %11186 = vmatpush.msra.mxu0 0.0
  %11187 = vmatpush.msra.mxu0 0.0
  %11188 = vmatpush.msra.mxu0 0.0
  %11189 = vmatpush.msra.mxu0 0.0
  %11190 = vmatpush.msra.mxu0 0.0
  %11191 = vmatpush.msra.mxu0 0.0
  %11192 = vmatpush.msra.mxu0 0.0
  %11193 = vmatpush.msra.mxu0 0.0
  %11194 = vmatpush.msra.mxu0 0.0
  %11195 = vmatpush.msra.mxu0 0.0
  %11196 = vmatpush.msra.mxu0 0.0
  %11197 = vmatpush.msra.mxu0 0.0
  %11198 = vmatpush.msra.mxu0 0.0
  %11199 = vmatpush.msra.mxu0 0.0
  %11200 = vmatpush.msra.mxu0 0.0
  %v11201 = vand.u32 %v11006, 4294901760
  %v11202 = vsub.f32 %v11006, %v11201
  %v11203 = vand.u32 %v11202, 4294901760
  %v11204 = vsub.f32 %v11202, %v11203
  %v11205 = vand.u32 %v11204, 4294901760
  %11206 = vmatpush.msra.mxu0 %v11205
  %v11207 = vand.u32 %v11000, 4294901760
  %11208 = vmatmul.f32.gmra.mxu0 %v11207
  %v11209 = vpop.f32.mrf.mxu0
  %v11210 = vadd.f32 %v11184, %v11209
  %11211 = vdwg.mxu0
  %11212 = vmatpush.msra.mxu0 0.0
  %11213 = vmatpush.msra.mxu0 0.0
  %11214 = vmatpush.msra.mxu0 0.0
  %11215 = vmatpush.msra.mxu0 0.0
  %11216 = vmatpush.msra.mxu0 0.0
  %11217 = vmatpush.msra.mxu0 0.0
  %11218 = vmatpush.msra.mxu0 0.0
  %11219 = vmatpush.msra.mxu0 0.0
  %11220 = vmatpush.msra.mxu0 0.0
  %11221 = vmatpush.msra.mxu0 0.0
  %11222 = vmatpush.msra.mxu0 0.0
  %11223 = vmatpush.msra.mxu0 0.0
  %11224 = vmatpush.msra.mxu0 0.0
  %11225 = vmatpush.msra.mxu0 0.0
  %11226 = vmatpush.msra.mxu0 0.0
  %v11227 = vand.u32 %v11006, 4294901760
  %v11228 = vsub.f32 %v11006, %v11227
  %11229 = vmatpush.msra.mxu0 %v11228
  %v11230 = vand.u32 %v11000, 4294901760
  %v11231 = vsub.f32 %v11000, %v11230
  %11232 = vmatmul.f32.gmra.mxu0 %v11231
  %v11233 = vpop.f32.mrf.mxu0
  %v11234 = vadd.f32 %v11210, %v11233
  %11235 = vdwg.mxu0
  %11236 = vmatpush.msra.mxu0 0.0
  %11237 = vmatpush.msra.mxu0 0.0
  %11238 = vmatpush.msra.mxu0 0.0
  %11239 = vmatpush.msra.mxu0 0.0
  %11240 = vmatpush.msra.mxu0 0.0
  %11241 = vmatpush.msra.mxu0 0.0
  %11242 = vmatpush.msra.mxu0 0.0
  %11243 = vmatpush.msra.mxu0 0.0
  %11244 = vmatpush.msra.mxu0 0.0
  %11245 = vmatpush.msra.mxu0 0.0
  %11246 = vmatpush.msra.mxu0 0.0
  %11247 = vmatpush.msra.mxu0 0.0
  %11248 = vmatpush.msra.mxu0 0.0
  %11249 = vmatpush.msra.mxu0 0.0
  %11250 = vmatpush.msra.mxu0 0.0
  %v11251 = vand.u32 %v11006, 4294901760
  %11252 = vmatpush.msra.mxu0 %v11251
  %v11253 = vand.u32 %v11000, 4294901760
  %v11254 = vsub.f32 %v11000, %v11253
  %v11255 = vand.u32 %v11254, 4294901760
  %11256 = vmatmul.f32.gmra.mxu0 %v11255
  %v11257 = vpop.f32.mrf.mxu0
  %v11258 = vadd.f32 %v11234, %v11257
  %11259 = vdwg.mxu0
  %11260 = vmatpush.msra.mxu0 0.0
  %11261 = vmatpush.msra.mxu0 0.0
  %11262 = vmatpush.msra.mxu0 0.0
  %11263 = vmatpush.msra.mxu0 0.0
  %11264 = vmatpush.msra.mxu0 0.0
  %11265 = vmatpush.msra.mxu0 0.0
  %11266 = vmatpush.msra.mxu0 0.0
  %11267 = vmatpush.msra.mxu0 0.0
  %11268 = vmatpush.msra.mxu0 0.0
  %11269 = vmatpush.msra.mxu0 0.0
  %11270 = vmatpush.msra.mxu0 0.0
  %11271 = vmatpush.msra.mxu0 0.0
  %11272 = vmatpush.msra.mxu0 0.0
  %11273 = vmatpush.msra.mxu0 0.0
  %11274 = vmatpush.msra.mxu0 0.0
  %v11275 = vand.u32 %v11006, 4294901760
  %v11276 = vsub.f32 %v11006, %v11275
  %v11277 = vand.u32 %v11276, 4294901760
  %11278 = vmatpush.msra.mxu0 %v11277
  %v11279 = vand.u32 %v11000, 4294901760
  %11280 = vmatmul.f32.gmra.mxu0 %v11279
  %v11281 = vpop.f32.mrf.mxu0
  %v11282 = vadd.f32 %v11258, %v11281
  %11283 = vdwg.mxu0
  %11284 = vmatpush.msra.mxu0 0.0
  %11285 = vmatpush.msra.mxu0 0.0
  %11286 = vmatpush.msra.mxu0 0.0
  %11287 = vmatpush.msra.mxu0 0.0
  %11288 = vmatpush.msra.mxu0 0.0
  %11289 = vmatpush.msra.mxu0 0.0
  %11290 = vmatpush.msra.mxu0 0.0
  %11291 = vmatpush.msra.mxu0 0.0
  %11292 = vmatpush.msra.mxu0 0.0
  %11293 = vmatpush.msra.mxu0 0.0
  %11294 = vmatpush.msra.mxu0 0.0
  %11295 = vmatpush.msra.mxu0 0.0
  %11296 = vmatpush.msra.mxu0 0.0
  %11297 = vmatpush.msra.mxu0 0.0
  %11298 = vmatpush.msra.mxu0 0.0
  %v11299 = vand.u32 %v11006, 4294901760
  %11300 = vmatpush.msra.mxu0 %v11299
  %v11301 = vand.u32 %v11000, 4294901760
  %11302 = vmatmul.f32.gmra.mxu0 %v11301
  %v11303 = vpop.f32.mrf.mxu0
  %v11304 = vadd.f32 %v11282, %v11303
  %11305 = vdwg.mxu0
  %11306 = vmatpush.msra.mxu0 0.0
  %11307 = vmatpush.msra.mxu0 0.0
  %11308 = vmatpush.msra.mxu0 0.0
  %11309 = vmatpush.msra.mxu0 0.0
  %11310 = vmatpush.msra.mxu0 0.0
  %11311 = vmatpush.msra.mxu0 0.0
  %11312 = vmatpush.msra.mxu0 0.0
  %11313 = vmatpush.msra.mxu0 0.0
  %11314 = vmatpush.msra.mxu0 0.0
  %11315 = vmatpush.msra.mxu0 0.0
  %11316 = vmatpush.msra.mxu0 0.0
  %11317 = vmatpush.msra.mxu0 0.0
  %11318 = vmatpush.msra.mxu0 0.0
  %11319 = vmatpush.msra.mxu0 0.0
  %11320 = vmatpush.msra.mxu0 0.0
  %v11321 = vand.u32 %v11009, 4294901760
  %11322 = vmatpush.msra.mxu0 %v11321
  %v11323 = vand.u32 %v11000, 4294901760
  %v11324 = vsub.f32 %v11000, %v11323
  %v11325 = vand.u32 %v11324, 4294901760
  %v11326 = vsub.f32 %v11324, %v11325
  %v11327 = vand.u32 %v11326, 4294901760
  %11328 = vmatmul.f32.gmra.mxu0 %v11327
  %v11329 = vpop.f32.mrf.mxu0
  %v11330 = vadd.f32 0.0, %v11329
  %11331 = vdwg.mxu0
  %11332 = vmatpush.msra.mxu0 0.0
  %11333 = vmatpush.msra.mxu0 0.0
  %11334 = vmatpush.msra.mxu0 0.0
  %11335 = vmatpush.msra.mxu0 0.0
  %11336 = vmatpush.msra.mxu0 0.0
  %11337 = vmatpush.msra.mxu0 0.0
  %11338 = vmatpush.msra.mxu0 0.0
  %11339 = vmatpush.msra.mxu0 0.0
  %11340 = vmatpush.msra.mxu0 0.0
  %11341 = vmatpush.msra.mxu0 0.0
  %11342 = vmatpush.msra.mxu0 0.0
  %11343 = vmatpush.msra.mxu0 0.0
  %11344 = vmatpush.msra.mxu0 0.0
  %11345 = vmatpush.msra.mxu0 0.0
  %11346 = vmatpush.msra.mxu0 0.0
  %v11347 = vand.u32 %v11009, 4294901760
  %v11348 = vsub.f32 %v11009, %v11347
  %v11349 = vand.u32 %v11348, 4294901760
  %v11350 = vsub.f32 %v11348, %v11349
  %v11351 = vand.u32 %v11350, 4294901760
  %11352 = vmatpush.msra.mxu0 %v11351
  %v11353 = vand.u32 %v11000, 4294901760
  %11354 = vmatmul.f32.gmra.mxu0 %v11353
  %v11355 = vpop.f32.mrf.mxu0
  %v11356 = vadd.f32 %v11330, %v11355
  %11357 = vdwg.mxu0
  %11358 = vmatpush.msra.mxu0 0.0
  %11359 = vmatpush.msra.mxu0 0.0
  %11360 = vmatpush.msra.mxu0 0.0
  %11361 = vmatpush.msra.mxu0 0.0
  %11362 = vmatpush.msra.mxu0 0.0
  %11363 = vmatpush.msra.mxu0 0.0
  %11364 = vmatpush.msra.mxu0 0.0
  %11365 = vmatpush.msra.mxu0 0.0
  %11366 = vmatpush.msra.mxu0 0.0
  %11367 = vmatpush.msra.mxu0 0.0
  %11368 = vmatpush.msra.mxu0 0.0
  %11369 = vmatpush.msra.mxu0 0.0
  %11370 = vmatpush.msra.mxu0 0.0
  %11371 = vmatpush.msra.mxu0 0.0
  %11372 = vmatpush.msra.mxu0 0.0
  %v11373 = vand.u32 %v11009, 4294901760
  %v11374 = vsub.f32 %v11009, %v11373
  %11375 = vmatpush.msra.mxu0 %v11374
  %v11376 = vand.u32 %v11000, 4294901760
  %v11377 = vsub.f32 %v11000, %v11376
  %11378 = vmatmul.f32.gmra.mxu0 %v11377
  %v11379 = vpop.f32.mrf.mxu0
  %v11380 = vadd.f32 %v11356, %v11379
  %11381 = vdwg.mxu0
  %11382 = vmatpush.msra.mxu0 0.0
  %11383 = vmatpush.msra.mxu0 0.0
  %11384 = vmatpush.msra.mxu0 0.0
  %11385 = vmatpush.msra.mxu0 0.0
  %11386 = vmatpush.msra.mxu0 0.0
  %11387 = vmatpush.msra.mxu0 0.0
  %11388 = vmatpush.msra.mxu0 0.0
  %11389 = vmatpush.msra.mxu0 0.0
  %11390 = vmatpush.msra.mxu0 0.0
  %11391 = vmatpush.msra.mxu0 0.0
  %11392 = vmatpush.msra.mxu0 0.0
  %11393 = vmatpush.msra.mxu0 0.0
  %11394 = vmatpush.msra.mxu0 0.0
  %11395 = vmatpush.msra.mxu0 0.0
  %11396 = vmatpush.msra.mxu0 0.0
  %v11397 = vand.u32 %v11009, 4294901760
  %11398 = vmatpush.msra.mxu0 %v11397
  %v11399 = vand.u32 %v11000, 4294901760
  %v11400 = vsub.f32 %v11000, %v11399
  %v11401 = vand.u32 %v11400, 4294901760
  %11402 = vmatmul.f32.gmra.mxu0 %v11401
  %v11403 = vpop.f32.mrf.mxu0
  %v11404 = vadd.f32 %v11380, %v11403
  %11405 = vdwg.mxu0
  %11406 = vmatpush.msra.mxu0 0.0
  %11407 = vmatpush.msra.mxu0 0.0
  %11408 = vmatpush.msra.mxu0 0.0
  %11409 = vmatpush.msra.mxu0 0.0
  %11410 = vmatpush.msra.mxu0 0.0
  %11411 = vmatpush.msra.mxu0 0.0
  %11412 = vmatpush.msra.mxu0 0.0
  %11413 = vmatpush.msra.mxu0 0.0
  %11414 = vmatpush.msra.mxu0 0.0
  %11415 = vmatpush.msra.mxu0 0.0
  %11416 = vmatpush.msra.mxu0 0.0
  %11417 = vmatpush.msra.mxu0 0.0
  %11418 = vmatpush.msra.mxu0 0.0
  %11419 = vmatpush.msra.mxu0 0.0
  %11420 = vmatpush.msra.mxu0 0.0
  %v11421 = vand.u32 %v11009, 4294901760
  %v11422 = vsub.f32 %v11009, %v11421
  %v11423 = vand.u32 %v11422, 4294901760
  %11424 = vmatpush.msra.mxu0 %v11423
  %v11425 = vand.u32 %v11000, 4294901760
  %11426 = vmatmul.f32.gmra.mxu0 %v11425
  %v11427 = vpop.f32.mrf.mxu0
  %v11428 = vadd.f32 %v11404, %v11427
  %11429 = vdwg.mxu0
  %11430 = vmatpush.msra.mxu0 0.0
  %11431 = vmatpush.msra.mxu0 0.0
  %11432 = vmatpush.msra.mxu0 0.0
  %11433 = vmatpush.msra.mxu0 0.0
  %11434 = vmatpush.msra.mxu0 0.0
  %11435 = vmatpush.msra.mxu0 0.0
  %11436 = vmatpush.msra.mxu0 0.0
  %11437 = vmatpush.msra.mxu0 0.0
  %11438 = vmatpush.msra.mxu0 0.0
  %11439 = vmatpush.msra.mxu0 0.0
  %11440 = vmatpush.msra.mxu0 0.0
  %11441 = vmatpush.msra.mxu0 0.0
  %11442 = vmatpush.msra.mxu0 0.0
  %11443 = vmatpush.msra.mxu0 0.0
  %11444 = vmatpush.msra.mxu0 0.0
  %v11445 = vand.u32 %v11009, 4294901760
  %11446 = vmatpush.msra.mxu0 %v11445
  %v11447 = vand.u32 %v11000, 4294901760
  %11448 = vmatmul.f32.gmra.mxu0 %v11447
  %v11449 = vpop.f32.mrf.mxu0
  %v11450 = vadd.f32 %v11428, %v11449
  %11451 = vdwg.mxu0
  %11452 = vmatpush.msra.mxu0 0.0
  %11453 = vmatpush.msra.mxu0 0.0
  %11454 = vmatpush.msra.mxu0 0.0
  %11455 = vmatpush.msra.mxu0 0.0
  %11456 = vmatpush.msra.mxu0 0.0
  %11457 = vmatpush.msra.mxu0 0.0
  %11458 = vmatpush.msra.mxu0 0.0
  %11459 = vmatpush.msra.mxu0 0.0
  %11460 = vmatpush.msra.mxu0 0.0
  %11461 = vmatpush.msra.mxu0 0.0
  %11462 = vmatpush.msra.mxu0 0.0
  %11463 = vmatpush.msra.mxu0 0.0
  %11464 = vmatpush.msra.mxu0 0.0
  %11465 = vmatpush.msra.mxu0 0.0
  %11466 = vmatpush.msra.mxu0 0.0
  %v11467 = vand.u32 %v11012, 4294901760
  %11468 = vmatpush.msra.mxu0 %v11467
  %v11469 = vand.u32 %v11000, 4294901760
  %v11470 = vsub.f32 %v11000, %v11469
  %v11471 = vand.u32 %v11470, 4294901760
  %v11472 = vsub.f32 %v11470, %v11471
  %v11473 = vand.u32 %v11472, 4294901760
  %11474 = vmatmul.f32.gmra.mxu0 %v11473
  %v11475 = vpop.f32.mrf.mxu0
  %v11476 = vadd.f32 0.0, %v11475
  %11477 = vdwg.mxu0
  %11478 = vmatpush.msra.mxu0 0.0
  %11479 = vmatpush.msra.mxu0 0.0
  %11480 = vmatpush.msra.mxu0 0.0
  %11481 = vmatpush.msra.mxu0 0.0
  %11482 = vmatpush.msra.mxu0 0.0
  %11483 = vmatpush.msra.mxu0 0.0
  %11484 = vmatpush.msra.mxu0 0.0
  %11485 = vmatpush.msra.mxu0 0.0
  %11486 = vmatpush.msra.mxu0 0.0
  %11487 = vmatpush.msra.mxu0 0.0
  %11488 = vmatpush.msra.mxu0 0.0
  %11489 = vmatpush.msra.mxu0 0.0
  %11490 = vmatpush.msra.mxu0 0.0
  %11491 = vmatpush.msra.mxu0 0.0
  %11492 = vmatpush.msra.mxu0 0.0
  %v11493 = vand.u32 %v11012, 4294901760
  %v11494 = vsub.f32 %v11012, %v11493
  %v11495 = vand.u32 %v11494, 4294901760
  %v11496 = vsub.f32 %v11494, %v11495
  %v11497 = vand.u32 %v11496, 4294901760
  %11498 = vmatpush.msra.mxu0 %v11497
  %v11499 = vand.u32 %v11000, 4294901760
  %11500 = vmatmul.f32.gmra.mxu0 %v11499
  %v11501 = vpop.f32.mrf.mxu0
  %v11502 = vadd.f32 %v11476, %v11501
  %11503 = vdwg.mxu0
  %11504 = vmatpush.msra.mxu0 0.0
  %11505 = vmatpush.msra.mxu0 0.0
  %11506 = vmatpush.msra.mxu0 0.0
  %11507 = vmatpush.msra.mxu0 0.0
  %11508 = vmatpush.msra.mxu0 0.0
  %11509 = vmatpush.msra.mxu0 0.0
  %11510 = vmatpush.msra.mxu0 0.0
  %11511 = vmatpush.msra.mxu0 0.0
  %11512 = vmatpush.msra.mxu0 0.0
  %11513 = vmatpush.msra.mxu0 0.0
  %11514 = vmatpush.msra.mxu0 0.0
  %11515 = vmatpush.msra.mxu0 0.0
  %11516 = vmatpush.msra.mxu0 0.0
  %11517 = vmatpush.msra.mxu0 0.0
  %11518 = vmatpush.msra.mxu0 0.0
  %v11519 = vand.u32 %v11012, 4294901760
  %v11520 = vsub.f32 %v11012, %v11519
  %11521 = vmatpush.msra.mxu0 %v11520
  %v11522 = vand.u32 %v11000, 4294901760
  %v11523 = vsub.f32 %v11000, %v11522
  %11524 = vmatmul.f32.gmra.mxu0 %v11523
  %v11525 = vpop.f32.mrf.mxu0
  %v11526 = vadd.f32 %v11502, %v11525
  %11527 = vdwg.mxu0
  %11528 = vmatpush.msra.mxu0 0.0
  %11529 = vmatpush.msra.mxu0 0.0
  %11530 = vmatpush.msra.mxu0 0.0
  %11531 = vmatpush.msra.mxu0 0.0
  %11532 = vmatpush.msra.mxu0 0.0
  %11533 = vmatpush.msra.mxu0 0.0
  %11534 = vmatpush.msra.mxu0 0.0
  %11535 = vmatpush.msra.mxu0 0.0
  %11536 = vmatpush.msra.mxu0 0.0
  %11537 = vmatpush.msra.mxu0 0.0
  %11538 = vmatpush.msra.mxu0 0.0
  %11539 = vmatpush.msra.mxu0 0.0
  %11540 = vmatpush.msra.mxu0 0.0
  %11541 = vmatpush.msra.mxu0 0.0
  %11542 = vmatpush.msra.mxu0 0.0
  %v11543 = vand.u32 %v11012, 4294901760
  %11544 = vmatpush.msra.mxu0 %v11543
  %v11545 = vand.u32 %v11000, 4294901760
  %v11546 = vsub.f32 %v11000, %v11545
  %v11547 = vand.u32 %v11546, 4294901760
  %11548 = vmatmul.f32.gmra.mxu0 %v11547
  %v11549 = vpop.f32.mrf.mxu0
  %v11550 = vadd.f32 %v11526, %v11549
  %11551 = vdwg.mxu0
  %11552 = vmatpush.msra.mxu0 0.0
  %11553 = vmatpush.msra.mxu0 0.0
  %11554 = vmatpush.msra.mxu0 0.0
  %11555 = vmatpush.msra.mxu0 0.0
  %11556 = vmatpush.msra.mxu0 0.0
  %11557 = vmatpush.msra.mxu0 0.0
  %11558 = vmatpush.msra.mxu0 0.0
  %11559 = vmatpush.msra.mxu0 0.0
  %11560 = vmatpush.msra.mxu0 0.0
  %11561 = vmatpush.msra.mxu0 0.0
  %11562 = vmatpush.msra.mxu0 0.0
  %11563 = vmatpush.msra.mxu0 0.0
  %11564 = vmatpush.msra.mxu0 0.0
  %11565 = vmatpush.msra.mxu0 0.0
  %11566 = vmatpush.msra.mxu0 0.0
  %v11567 = vand.u32 %v11012, 4294901760
  %v11568 = vsub.f32 %v11012, %v11567
  %v11569 = vand.u32 %v11568, 4294901760
  %11570 = vmatpush.msra.mxu0 %v11569
  %v11571 = vand.u32 %v11000, 4294901760
  %11572 = vmatmul.f32.gmra.mxu0 %v11571
  %v11573 = vpop.f32.mrf.mxu0
  %v11574 = vadd.f32 %v11550, %v11573
  %11575 = vdwg.mxu0
  %11576 = vmatpush.msra.mxu0 0.0
  %11577 = vmatpush.msra.mxu0 0.0
  %11578 = vmatpush.msra.mxu0 0.0
  %11579 = vmatpush.msra.mxu0 0.0
  %11580 = vmatpush.msra.mxu0 0.0
  %11581 = vmatpush.msra.mxu0 0.0
  %11582 = vmatpush.msra.mxu0 0.0
  %11583 = vmatpush.msra.mxu0 0.0
  %11584 = vmatpush.msra.mxu0 0.0
  %11585 = vmatpush.msra.mxu0 0.0
  %11586 = vmatpush.msra.mxu0 0.0
  %11587 = vmatpush.msra.mxu0 0.0
  %11588 = vmatpush.msra.mxu0 0.0
  %11589 = vmatpush.msra.mxu0 0.0
  %11590 = vmatpush.msra.mxu0 0.0
  %v11591 = vand.u32 %v11012, 4294901760
  %11592 = vmatpush.msra.mxu0 %v11591
  %v11593 = vand.u32 %v11000, 4294901760
  %11594 = vmatmul.f32.gmra.mxu0 %v11593
  %v11595 = vpop.f32.mrf.mxu0
  %v11596 = vadd.f32 %v11574, %v11595
  %11597 = vdwg.mxu0
  %v11598 = vadd.f32 %v10972, %v11158
  %v11599 = vadd.f32 %v10973, %v11304
  %v11600 = vadd.f32 %v10974, %v11450
  %v11601 = vadd.f32 %v10975, %v11596
  %11602 = vst [vmem:[#allocation1] ss:$2 sm:$0xff] %v71
  %s11603 = scalar_lea.vmem [#allocation1], 16
  %11604 = vst [vmem:[%s11603] ss:$2 sm:$0xff] %v72
  %v11605 = vld.sshfl [vmem:[#allocation1] sm:$0xff pattern:$0x75316420]
  %v11606 = vld.sshfl [vmem:[#allocation1 + $0x8] sm:$0xff pattern:$0x75316420]
  %v11607 = vld.sshfl [vmem:[#allocation1 + $0x10] sm:$0xff pattern:$0x75316420]
  %v11608 = vld.sshfl [vmem:[#allocation1 + $0x18] sm:$0xff pattern:$0x75316420]
  %v11613 = vadd.f32 %v11598, %v11605
  %v11614 = vadd.f32 %v11599, %v11606
  %v11615 = vadd.f32 %v11600, %v11607
  %v11616 = vadd.f32 %v11601, %v11608
  %v11621 = vrot.slane %v11614, 4
  %v11622 = vrot.slane %v11616, 4
  %v11623 = vsel %vm86, %v11613, %v11621
  %v11624 = vsel %vm86, %v11615, %v11622
  %11627 = vst [vmem:[%s7] sm:$0xff] %v11623
  %11628 = vst [vmem:[%s7 + $0x8] sm:$0xff] %v11624
  // Predicated region
  $region30: #{preact_block_pallas.1} parent=0 // pred_check
    _
  $region31: #{preact_block_pallas.1} parent=0 // pred_check_branch
    %11630 = sbr.rel (0) target = $region33
  $region32: #{preact_block_pallas.1} parent=0 // pred_region
    _
  $region33: #{preact_block_pallas.1} parent=0 // pred_fallthru
    _
  // Predicated region
  $region34: #{preact_block_pallas.1} parent=0 // pred_check
    _
  $region35: #{preact_block_pallas.1} parent=0 // pred_check_branch
    %11632 = sbr.rel (0) target = $region37
  $region36: #{preact_block_pallas.1} parent=0 // pred_region
    _
  $region37: #{preact_block_pallas.1} parent=0 // pred_fallthru
    _

</llo_original>
